<compile_context>
chip_gen: v6e
topology: v6e:2x2x1
jax: 0.10.0
libtpu: 0.0.40
codegen_flags: <defaults>
</compile_context>

<pallas_src>
import numpy as np

import jax
import jax.numpy as jnp
from jax.experimental import pallas as pl
from jax.experimental.pallas import tpu as pltpu


VGG_CFG = [8, "M", 16, "M", 32, 32, "M", 64, 64, "M", 64, 64, "M"]
HIDDEN = 256          # scaled stand-in for 4096
OUTPUT_SIZE = 32      # "output_size" ctor arg
BN_EPS = 1e-5


# ----------------------------- model config -------------------------------------

def _build_layer_cfg(in_ch, in_hw):
    """Per-conv-layer static config: spatial size, channels, and whether a 2x2
    max-pool immediately follows ('M' in the VGG cfg)."""
    cfg, H, cin, i = [], in_hw, in_ch, 0
    while i < len(VGG_CFG):
        c = VGG_CFG[i]
        assert c != "M"
        pooled = (i + 1 < len(VGG_CFG)) and (VGG_CFG[i + 1] == "M")
        cfg.append(dict(H=H, W=H, Cin=cin, Cout=c, pool=pooled))
        cin = c
        if pooled:
            H //= 2
            i += 2
        else:
            i += 1
    return cfg


def init_params(key, output_size=OUTPUT_SIZE, hidden=HIDDEN):
    keys = jax.random.split(key, 16)
    ki = 0
    params = {"convs": []}
    cin = 3
    for c in VGG_CFG:
        if c == "M":
            continue
        # NOTE: conv weights are stored HWIO (kh, kw, cin, cout); real PyTorch OIHW
        # weights would need a transpose before prepare_operands().
        w = 0.05 * jax.random.normal(keys[ki], (3, 3, cin, c), jnp.float32)
        b = jnp.zeros((c,), jnp.float32)
        params["convs"].append((w, b))
        cin = c
        ki += 1
    feat_dim = cin * 7 * 7
    params["fc1_w"] = 0.02 * jax.random.normal(keys[ki], (feat_dim, hidden), jnp.float32); ki += 1
    params["fc1_b"] = jnp.zeros((hidden,), jnp.float32)
    params["fc2_w"] = 0.02 * jax.random.normal(keys[ki], (hidden, hidden), jnp.float32); ki += 1
    params["fc2_b"] = jnp.zeros((hidden,), jnp.float32)
    # self.linear: init_weights() -> normal(0, 0.02), bias 0
    params["lin_w"] = 0.02 * jax.random.normal(keys[ki], (hidden, output_size), jnp.float32); ki += 1
    params["lin_b"] = jnp.zeros((output_size,), jnp.float32)
    # self.bn: default affine init gamma=1, beta=0
    params["bn_gamma"] = jnp.ones((output_size,), jnp.float32)
    params["bn_beta"] = jnp.zeros((output_size,), jnp.float32)
    return params


# ----------------------------- operand preparation -------------------------------
# Done once, outside the hot path: band the conv weights, tile the biases, build the
# 0/1 pooling-selection matrices, and fold avgpool(7x7)+flatten into FC1.

def prepare_operands(params, batch, in_hw=32, in_ch=3):
    cfg = _build_layer_cfg(in_ch, in_hw)
    ops = []
    for l, lc in enumerate(cfg):
        H, W, Cin, Cout, pool = lc["H"], lc["W"], lc["Cin"], lc["Cout"], lc["pool"]
        w, b = params["convs"][l]                       # (3,3,Cin,Cout), (Cout,)
        Wp = W + 2
        # Banded weight: WB[di][(j+dj)*Cin + ci, j*Cout + co] = w[di, dj, ci, co]
        ind = np.zeros((Wp, 3, W), np.float32)
        for dj in range(3):
            for j in range(W):
                ind[j + dj, dj, j] = 1.0
        wb = jnp.einsum("pdq,edio->epiqo", jnp.asarray(ind), w)
        wb = wb.reshape(3, Wp * Cin, W * Cout).astype(jnp.bfloat16)
        bflat = jnp.tile(b, (W,)).reshape(1, W * Cout).astype(jnp.float32)
        ops += [wb, bflat]
        if pool:
            # Lane-direction (W) pair selection: columns 2*jh / 2*jh+1 -> jh.
            N, Nh = W * Cout, (W // 2) * Cout
            s = np.zeros((2, N, Nh), np.float32)
            for jh in range(W // 2):
                for c in range(Cout):
                    s[0, (2 * jh) * Cout + c, jh * Cout + c] = 1.0
                    s[1, (2 * jh + 1) * Cout + c, jh * Cout + c] = 1.0
            # Row-direction (H) pair selection over the packed (batch,row) axis.
            Hp, Hh = H + 2, H // 2
            R = batch * Hp - 2
            r = np.zeros((2, batch * Hh, R), np.float32)
            for bb in range(batch):
                for ih in range(Hh):
                    r[0, bb * Hh + ih, bb * Hp + 2 * ih] = 1.0
                    r[1, bb * Hh + ih, bb * Hp + 2 * ih + 1] = 1.0
            ops += [jnp.asarray(s, jnp.bfloat16), jnp.asarray(r, jnp.bfloat16)]

    # Final feature map is 1x1xC; AdaptiveAvgPool2d((7,7)) replicates it to 49
    # positions and flatten orders them (c, p).  Fold that replication into FC1.
    c_last = cfg[-1]["Cout"]
    fc1r = params["fc1_w"].reshape(c_last, 49, -1).sum(axis=1).astype(jnp.bfloat16)
    ops += [fc1r, params["fc1_b"].reshape(1, -1).astype(jnp.float32)]
    ops += [params["fc2_w"].astype(jnp.bfloat16),
            params["fc2_b"].reshape(1, -1).astype(jnp.float32)]
    ops += [params["lin_w"].astype(jnp.bfloat16),
            params["lin_b"].reshape(1, -1).astype(jnp.float32)]
    ops += [params["bn_gamma"].reshape(1, -1).astype(jnp.float32),
            params["bn_beta"].reshape(1, -1).astype(jnp.float32)]
    return tuple(ops)


# ----------------------------- fused Pallas kernel --------------------------------

def _make_kernel(cfg, batch, eps):
    n_layers = len(cfg)

    def kernel(*refs):
        it = iter(refs)
        x_in = next(it)                                   # (B, H, W*Cin) f32
        layer_refs = []
        for lc in cfg:
            wb = next(it); bf = next(it)
            sw = rw = None
            if lc["pool"]:
                sw = next(it); rw = next(it)
            layer_refs.append((wb, bf, sw, rw))
        fc1w = next(it); fc1b = next(it)
        fc2w = next(it); fc2b = next(it)
        linw = next(it); linb = next(it)
        gamma = next(it); beta = next(it)
        o_ref = next(it)
        xpads = [next(it) for _ in range(n_layers)]       # per-layer padded activations

        # Pack the input image into layer 1's zero-padded scratch.
        lc0 = cfg[0]
        H0, W0, C0 = lc0["H"], lc0["W"], lc0["Cin"]
        Hp0 = H0 + 2
        xpads[0][...] = jnp.zeros(xpads[0].shape, xpads[0].dtype)
        for b in range(batch):
            xpads[0][b * Hp0 + 1: b * Hp0 + 1 + H0, C0:(W0 + 1) * C0] = (
                x_in[b].astype(xpads[0].dtype))

        feat = None
        for l, lc in enumerate(cfg):
            H, W, Cin, Cout, pool = lc["H"], lc["W"], lc["Cin"], lc["Cout"], lc["pool"]
            Hp = H + 2
            R = batch * Hp - 2
            wb, bf, sw, rw = layer_refs[l]
            xp = xpads[l]

            # conv3x3 (pad=1): 3 row-shifted banded matmuls, bf16 MXU / f32 accum.
            acc = jnp.dot(xp[0:R, :], wb[0], preferred_element_type=jnp.float32)
            acc = acc + jnp.dot(xp[1:R + 1, :], wb[1], preferred_element_type=jnp.float32)
            acc = acc + jnp.dot(xp[2:R + 2, :], wb[2], preferred_element_type=jnp.float32)
            acc = jnp.maximum(acc + bf[...], 0.0)         # bias + ReLU in f32

            if pool:
                # 2x2 max-pool via selection matmuls (W pairs) + (H pairs) and max.
                accb = acc.astype(jnp.bfloat16)
                zw = jnp.maximum(
                    jnp.dot(accb, sw[0], preferred_element_type=jnp.float32),
                    jnp.dot(accb, sw[1], preferred_element_type=jnp.float32))
                zwb = zw.astype(jnp.bfloat16)
                pooled = jnp.maximum(
                    jnp.dot(rw[0], zwb, preferred_element_type=jnp.float32),
                    jnp.dot(rw[1], zwb, preferred_element_type=jnp.float32))
                Ho, Wo = H // 2, W // 2                   # pooled: (B*Ho, Wo*Cout)
            else:
                Ho, Wo = H, W

            if l + 1 < n_layers:
                nxt = xpads[l + 1]
                Hp2 = Ho + 2
                nxt[...] = jnp.zeros(nxt.shape, nxt.dtype)
                for b in range(batch):
                    if pool:
                        blk = pooled[b * Ho:(b + 1) * Ho, :]
                    else:
                        blk = acc[b * Hp:b * Hp + H, :]
                    nxt[b * Hp2 + 1: b * Hp2 + 1 + Ho, Cout:(Wo + 1) * Cout] = (
                        blk.astype(nxt.dtype))
            else:
                feat = pooled                             # final 1x1 map -> (B, Cout)

        # classifier: Linear -> ReLU -> Dropout -> Linear -> ReLU -> Dropout
        h = jnp.dot(feat.astype(jnp.bfloat16), fc1w[...], preferred_element_type=jnp.float32)
        h = jnp.maximum(h + fc1b[...], 0.0)
        # TODO(synk): nn.Dropout(p=0.5) applied as identity (eval semantics); PyTorch's
        #             train-mode RNG stream cannot be reproduced here.
        h = jnp.dot(h.astype(jnp.bfloat16), fc2w[...], preferred_element_type=jnp.float32)
        h = jnp.maximum(h + fc2b[...], 0.0)

        # imfeatures = Variable(imfeatures.data) -> detach; numerically a no-op.
        # self.bn(self.linear(imfeatures))
        y = jnp.dot(h.astype(jnp.bfloat16), linw[...], preferred_element_type=jnp.float32)
        y = y + linb[...]
        # BatchNorm1d: training-mode batch statistics, biased variance.
        # TODO(synk): running_mean/var are not tracked/returned (stateless forward).
        mean = jnp.mean(y, axis=0, keepdims=True)
        var = jnp.mean(jnp.square(y - mean), axis=0, keepdims=True)
        o_ref[...] = ((y - mean) * jax.lax.rsqrt(var + eps) * gamma[...] + beta[...]
                      ).astype(o_ref.dtype)

    return kernel


def image_encoder_cnn_forward(ops, image_nchw):
    B, C, H, W = image_nchw.shape
    cfg = _build_layer_cfg(C, H)
    assert cfg[-1]["pool"] and cfg[-1]["H"] == 2, "final VGG feature map must be 1x1"
    # NCHW -> (B, H, W*C) row layout used by the kernel (one-time input transform).
    x2d = jnp.transpose(image_nchw, (0, 2, 3, 1)).reshape(B, H, W * C).astype(jnp.float32)
    out_dim = ops[-1].shape[-1]
    scratch = [pltpu.VMEM((B * (lc["H"] + 2), (lc["W"] + 2) * lc["Cin"]), jnp.bfloat16)
               for lc in cfg]
    return pl.pallas_call(
        _make_kernel(cfg, B, BN_EPS),
        out_shape=jax.ShapeDtypeStruct((B, out_dim), jnp.float32),
        scratch_shapes=scratch,
    )(x2d, *ops)


# --------------------------------- main -------------------------------------------

if __name__ == "__main__":
    key = jax.random.PRNGKey(0)
    k_params, k_img = jax.random.split(key)

    params = init_params(k_params)
    image = jax.random.normal(k_img, (2, 3, 32, 32), jnp.float32)   # NCHW, like PyTorch

    ops = prepare_operands(params, batch=image.shape[0],
                           in_hw=image.shape[2], in_ch=image.shape[1])

    out = jax.jit(image_encoder_cnn_forward)(ops, image)
    out = jax.block_until_ready(out)

    assert out.shape == (2, OUTPUT_SIZE)
    assert bool(jnp.all(jnp.isfinite(out)))
    print("KERNEL_OK")
</pallas_src>

<mosaic_0001>
module attributes {stable_mosaic.version = 11 : i64} {
  func.func @kernel(%arg0: memref<2x32x96xf32, #tpu.memory_space<vmem>>, %arg1: memref<3x102x256xbf16, #tpu.memory_space<vmem>>, %arg2: memref<1x256xf32, #tpu.memory_space<vmem>>, %arg3: memref<2x256x128xbf16, #tpu.memory_space<vmem>>, %arg4: memref<2x32x66xbf16, #tpu.memory_space<vmem>>, %arg5: memref<3x144x256xbf16, #tpu.memory_space<vmem>>, %arg6: memref<1x256xf32, #tpu.memory_space<vmem>>, %arg7: memref<2x256x128xbf16, #tpu.memory_space<vmem>>, %arg8: memref<2x16x34xbf16, #tpu.memory_space<vmem>>, %arg9: memref<3x160x256xbf16, #tpu.memory_space<vmem>>, %arg10: memref<1x256xf32, #tpu.memory_space<vmem>>, %arg11: memref<3x320x256xbf16, #tpu.memory_space<vmem>>, %arg12: memref<1x256xf32, #tpu.memory_space<vmem>>, %arg13: memref<2x256x128xbf16, #tpu.memory_space<vmem>>, %arg14: memref<2x8x18xbf16, #tpu.memory_space<vmem>>, %arg15: memref<3x192x256xbf16, #tpu.memory_space<vmem>>, %arg16: memref<1x256xf32, #tpu.memory_space<vmem>>, %arg17: memref<3x384x256xbf16, #tpu.memory_space<vmem>>, %arg18: memref<1x256xf32, #tpu.memory_space<vmem>>, %arg19: memref<2x256x128xbf16, #tpu.memory_space<vmem>>, %arg20: memref<2x4x10xbf16, #tpu.memory_space<vmem>>, %arg21: memref<3x256x128xbf16, #tpu.memory_space<vmem>>, %arg22: memref<1x128xf32, #tpu.memory_space<vmem>>, %arg23: memref<3x256x128xbf16, #tpu.memory_space<vmem>>, %arg24: memref<1x128xf32, #tpu.memory_space<vmem>>, %arg25: memref<2x128x64xbf16, #tpu.memory_space<vmem>>, %arg26: memref<2x2x6xbf16, #tpu.memory_space<vmem>>, %arg27: memref<64x256xbf16, #tpu.memory_space<vmem>>, %arg28: memref<1x256xf32, #tpu.memory_space<vmem>>, %arg29: memref<256x256xbf16, #tpu.memory_space<vmem>>, %arg30: memref<1x256xf32, #tpu.memory_space<vmem>>, %arg31: memref<256x32xbf16, #tpu.memory_space<vmem>>, %arg32: memref<1x32xf32, #tpu.memory_space<vmem>>, %arg33: memref<1x32xf32, #tpu.memory_space<vmem>>, %arg34: memref<1x32xf32, #tpu.memory_space<vmem>>, %arg35: memref<2x32xf32, #tpu.memory_space<vmem>>, %arg36: memref<68x102xbf16, #tpu.memory_space<vmem>>, %arg37: memref<36x144xbf16, #tpu.memory_space<vmem>>, %arg38: memref<20x160xbf16, #tpu.memory_space<vmem>>, %arg39: memref<20x320xbf16, #tpu.memory_space<vmem>>, %arg40: memref<12x192xbf16, #tpu.memory_space<vmem>>, %arg41: memref<12x384xbf16, #tpu.memory_space<vmem>>, %arg42: memref<8x256xbf16, #tpu.memory_space<vmem>>, %arg43: memref<8x256xbf16, #tpu.memory_space<vmem>>) attributes {dimension_semantics = [], scalar_prefetch = 0 : i64, scratch_operands = 8 : i64, tpu.core_type = #tpu.core_type<tc>} {
    %cst = arith.constant 0.000000e+00 : bf16
    %0 = vector.broadcast %cst : bf16 to vector<68x102xbf16>
    %c0 = arith.constant 0 : index
    %c0_0 = arith.constant 0 : index
    %1 = vector.load %arg36[%c0, %c0_0] : memref<68x102xbf16, #tpu.memory_space<vmem>>, vector<68x102xbf16>
    tpu.vector_store %arg36[%c0, %c0_0], %0 {strides = array<i32>} : memref<68x102xbf16, #tpu.memory_space<vmem>>, vector<68x102xbf16>,
    %c0_1 = arith.constant 0 : index
    %c0_2 = arith.constant 0 : index
    %c0_3 = arith.constant 0 : index
    %2 = vector.load %arg0[%c0_1, %c0_2, %c0_3] : memref<2x32x96xf32, #tpu.memory_space<vmem>>, vector<1x32x96xf32>
    %3 = vector.shape_cast %2 : vector<1x32x96xf32> to vector<32x96xf32>
    %4 = arith.truncf %3 : vector<32x96xf32> to vector<32x96xbf16>
    %c1 = arith.constant 1 : index
    %c3 = arith.constant 3 : index
    %5 = vector.load %arg36[%c1, %c3] : memref<68x102xbf16, #tpu.memory_space<vmem>>, vector<32x96xbf16>
    tpu.vector_store %arg36[%c1, %c3], %4 {strides = array<i32>} : memref<68x102xbf16, #tpu.memory_space<vmem>>, vector<32x96xbf16>,
    %c1_4 = arith.constant 1 : index
    %c0_5 = arith.constant 0 : index
    %c0_6 = arith.constant 0 : index
    %6 = vector.load %arg0[%c1_4, %c0_5, %c0_6] : memref<2x32x96xf32, #tpu.memory_space<vmem>>, vector<1x32x96xf32>
    %7 = vector.shape_cast %6 : vector<1x32x96xf32> to vector<32x96xf32>
    %8 = arith.truncf %7 : vector<32x96xf32> to vector<32x96xbf16>
    %c35 = arith.constant 35 : index
    %c3_7 = arith.constant 3 : index
    %9 = vector.load %arg36[%c35, %c3_7] : memref<68x102xbf16, #tpu.memory_space<vmem>>, vector<32x96xbf16>
    tpu.vector_store %arg36[%c35, %c3_7], %8 {strides = array<i32>} : memref<68x102xbf16, #tpu.memory_space<vmem>>, vector<32x96xbf16>,
    %c0_8 = arith.constant 0 : index
    %c0_9 = arith.constant 0 : index
    %10 = vector.load %arg36[%c0_8, %c0_9] : memref<68x102xbf16, #tpu.memory_space<vmem>>, vector<66x102xbf16>
    %c0_10 = arith.constant 0 : index
    %c0_11 = arith.constant 0 : index
    %c0_12 = arith.constant 0 : index
    %11 = vector.load %arg1[%c0_10, %c0_11, %c0_12] : memref<3x102x256xbf16, #tpu.memory_space<vmem>>, vector<1x102x256xbf16>
    %12 = vector.shape_cast %11 : vector<1x102x256xbf16> to vector<102x256xbf16>
    %cst_13 = arith.constant dense<0.000000e+00> : vector<66x256xf32>
    %13 = tpu.matmul %10, %12, %cst_13 {dimension_numbers = #tpu.dot_dimension_numbers<[1], [0], [0], [1], [0, 0, 1, 1], [], []>} : vector<66x102xbf16>, vector<102x256xbf16>, vector<66x256xf32> -> vector<66x256xf32>
    %c1_14 = arith.constant 1 : index
    %c0_15 = arith.constant 0 : index
    %14 = vector.load %arg36[%c1_14, %c0_15] : memref<68x102xbf16, #tpu.memory_space<vmem>>, vector<66x102xbf16>
    %c1_16 = arith.constant 1 : index
    %c0_17 = arith.constant 0 : index
    %c0_18 = arith.constant 0 : index
    %15 = vector.load %arg1[%c1_16, %c0_17, %c0_18] : memref<3x102x256xbf16, #tpu.memory_space<vmem>>, vector<1x102x256xbf16>
    %16 = vector.shape_cast %15 : vector<1x102x256xbf16> to vector<102x256xbf16>
    %cst_19 = arith.constant dense<0.000000e+00> : vector<66x256xf32>
    %17 = tpu.matmul %14, %16, %cst_19 {dimension_numbers = #tpu.dot_dimension_numbers<[1], [0], [0], [1], [0, 0, 1, 1], [], []>} : vector<66x102xbf16>, vector<102x256xbf16>, vector<66x256xf32> -> vector<66x256xf32>
    %18 = arith.addf %13, %17 : vector<66x256xf32>
    %c2 = arith.constant 2 : index
    %c0_20 = arith.constant 0 : index
    %19 = vector.load %arg36[%c2, %c0_20] : memref<68x102xbf16, #tpu.memory_space<vmem>>, vector<66x102xbf16>
    %c2_21 = arith.constant 2 : index
    %c0_22 = arith.constant 0 : index
    %c0_23 = arith.constant 0 : index
    %20 = vector.load %arg1[%c2_21, %c0_22, %c0_23] : memref<3x102x256xbf16, #tpu.memory_space<vmem>>, vector<1x102x256xbf16>
    %21 = vector.shape_cast %20 : vector<1x102x256xbf16> to vector<102x256xbf16>
    %cst_24 = arith.constant dense<0.000000e+00> : vector<66x256xf32>
    %22 = tpu.matmul %19, %21, %cst_24 {dimension_numbers = #tpu.dot_dimension_numbers<[1], [0], [0], [1], [0, 0, 1, 1], [], []>} : vector<66x102xbf16>, vector<102x256xbf16>, vector<66x256xf32> -> vector<66x256xf32>
    %23 = arith.addf %18, %22 : vector<66x256xf32>
    %c0_25 = arith.constant 0 : index
    %c0_26 = arith.constant 0 : index
    %24 = vector.load %arg2[%c0_25, %c0_26] : memref<1x256xf32, #tpu.memory_space<vmem>>, vector<1x256xf32>
    %25 = vector.broadcast %24 : vector<1x256xf32> to vector<66x256xf32>
    %26 = arith.addf %23, %25 : vector<66x256xf32>
    %cst_27 = arith.constant 0.000000e+00 : f32
    %27 = vector.broadcast %cst_27 : f32 to vector<66x256xf32>
    %28 = arith.maximumf %26, %27 : vector<66x256xf32>
    %29 = arith.truncf %28 : vector<66x256xf32> to vector<66x256xbf16>
    %c0_28 = arith.constant 0 : index
    %c0_29 = arith.constant 0 : index
    %c0_30 = arith.constant 0 : index
    %30 = vector.load %arg3[%c0_28, %c0_29, %c0_30] : memref<2x256x128xbf16, #tpu.memory_space<vmem>>, vector<1x256x128xbf16>
    %31 = vector.shape_cast %30 : vector<1x256x128xbf16> to vector<256x128xbf16>
    %cst_31 = arith.constant dense<0.000000e+00> : vector<66x128xf32>
    %32 = tpu.matmul %29, %31, %cst_31 {dimension_numbers = #tpu.dot_dimension_numbers<[1], [0], [0], [1], [0, 0, 1, 1], [], []>} : vector<66x256xbf16>, vector<256x128xbf16>, vector<66x128xf32> -> vector<66x128xf32>
    %c1_32 = arith.constant 1 : index
    %c0_33 = arith.constant 0 : index
    %c0_34 = arith.constant 0 : index
    %33 = vector.load %arg3[%c1_32, %c0_33, %c0_34] : memref<2x256x128xbf16, #tpu.memory_space<vmem>>, vector<1x256x128xbf16>
    %34 = vector.shape_cast %33 : vector<1x256x128xbf16> to vector<256x128xbf16>
    %cst_35 = arith.constant dense<0.000000e+00> : vector<66x128xf32>
    %35 = tpu.matmul %29, %34, %cst_35 {dimension_numbers = #tpu.dot_dimension_numbers<[1], [0], [0], [1], [0, 0, 1, 1], [], []>} : vector<66x256xbf16>, vector<256x128xbf16>, vector<66x128xf32> -> vector<66x128xf32>
    %36 = arith.maximumf %32, %35 : vector<66x128xf32>
    %37 = arith.truncf %36 : vector<66x128xf32> to vector<66x128xbf16>
    %c0_36 = arith.constant 0 : index
    %c0_37 = arith.constant 0 : index
    %c0_38 = arith.constant 0 : index
    %38 = vector.load %arg4[%c0_36, %c0_37, %c0_38] : memref<2x32x66xbf16, #tpu.memory_space<vmem>>, vector<1x32x66xbf16>
    %39 = vector.shape_cast %38 : vector<1x32x66xbf16> to vector<32x66xbf16>
    %cst_39 = arith.constant dense<0.000000e+00> : vector<32x128xf32>
    %40 = tpu.matmul %39, %37, %cst_39 {dimension_numbers = #tpu.dot_dimension_numbers<[1], [0], [0], [1], [0, 0, 1, 1], [], []>} : vector<32x66xbf16>, vector<66x128xbf16>, vector<32x128xf32> -> vector<32x128xf32>
    %c1_40 = arith.constant 1 : index
    %c0_41 = arith.constant 0 : index
    %c0_42 = arith.constant 0 : index
    %41 = vector.load %arg4[%c1_40, %c0_41, %c0_42] : memref<2x32x66xbf16, #tpu.memory_space<vmem>>, vector<1x32x66xbf16>
    %42 = vector.shape_cast %41 : vector<1x32x66xbf16> to vector<32x66xbf16>
    %cst_43 = arith.constant dense<0.000000e+00> : vector<32x128xf32>
    %43 = tpu.matmul %42, %37, %cst_43 {dimension_numbers = #tpu.dot_dimension_numbers<[1], [0], [0], [1], [0, 0, 1, 1], [], []>} : vector<32x66xbf16>, vector<66x128xbf16>, vector<32x128xf32> -> vector<32x128xf32>
    %44 = arith.maximumf %40, %43 : vector<32x128xf32>
    %cst_44 = arith.constant 0.000000e+00 : bf16
    %45 = vector.broadcast %cst_44 : bf16 to vector<36x144xbf16>
    %c0_45 = arith.constant 0 : index
    %c0_46 = arith.constant 0 : index
    %46 = vector.load %arg37[%c0_45, %c0_46] : memref<36x144xbf16, #tpu.memory_space<vmem>>, vector<36x144xbf16>
    tpu.vector_store %arg37[%c0_45, %c0_46], %45 {strides = array<i32>} : memref<36x144xbf16, #tpu.memory_space<vmem>>, vector<36x144xbf16>,
    %47 = vector.extract_strided_slice %44 {offsets = [0, 0], sizes = [16, 128], strides = [1, 1]} : vector<32x128xf32> to vector<16x128xf32>
    %48 = arith.truncf %47 : vector<16x128xf32> to vector<16x128xbf16>
    %c1_47 = arith.constant 1 : index
    %c8 = arith.constant 8 : index
    %49 = vector.load %arg37[%c1_47, %c8] : memref<36x144xbf16, #tpu.memory_space<vmem>>, vector<16x128xbf16>
    tpu.vector_store %arg37[%c1_47, %c8], %48 {strides = array<i32>} : memref<36x144xbf16, #tpu.memory_space<vmem>>, vector<16x128xbf16>,
    %50 = vector.extract_strided_slice %44 {offsets = [16, 0], sizes = [16, 128], strides = [1, 1]} : vector<32x128xf32> to vector<16x128xf32>
    %51 = arith.truncf %50 : vector<16x128xf32> to vector<16x128xbf16>
    %c19 = arith.constant 19 : index
    %c8_48 = arith.constant 8 : index
    %52 = vector.load %arg37[%c19, %c8_48] : memref<36x144xbf16, #tpu.memory_space<vmem>>, vector<16x128xbf16>
    tpu.vector_store %arg37[%c19, %c8_48], %51 {strides = array<i32>} : memref<36x144xbf16, #tpu.memory_space<vmem>>, vector<16x128xbf16>,
    %c0_49 = arith.constant 0 : index
    %c0_50 = arith.constant 0 : index
    %53 = vector.load %arg37[%c0_49, %c0_50] : memref<36x144xbf16, #tpu.memory_space<vmem>>, vector<34x144xbf16>
    %c0_51 = arith.constant 0 : index
    %c0_52 = arith.constant 0 : index
    %c0_53 = arith.constant 0 : index
    %54 = vector.load %arg5[%c0_51, %c0_52, %c0_53] : memref<3x144x256xbf16, #tpu.memory_space<vmem>>, vector<1x144x256xbf16>
    %55 = vector.shape_cast %54 : vector<1x144x256xbf16> to vector<144x256xbf16>
    %cst_54 = arith.constant dense<0.000000e+00> : vector<34x256xf32>
    %56 = tpu.matmul %53, %55, %cst_54 {dimension_numbers = #tpu.dot_dimension_numbers<[1], [0], [0], [1], [0, 0, 1, 1], [], []>} : vector<34x144xbf16>, vector<144x256xbf16>, vector<34x256xf32> -> vector<34x256xf32>
    %c1_55 = arith.constant 1 : index
    %c0_56 = arith.constant 0 : index
    %57 = vector.load %arg37[%c1_55, %c0_56] : memref<36x144xbf16, #tpu.memory_space<vmem>>, vector<34x144xbf16>
    %c1_57 = arith.constant 1 : index
    %c0_58 = arith.constant 0 : index
    %c0_59 = arith.constant 0 : index
    %58 = vector.load %arg5[%c1_57, %c0_58, %c0_59] : memref<3x144x256xbf16, #tpu.memory_space<vmem>>, vector<1x144x256xbf16>
    %59 = vector.shape_cast %58 : vector<1x144x256xbf16> to vector<144x256xbf16>
    %cst_60 = arith.constant dense<0.000000e+00> : vector<34x256xf32>
    %60 = tpu.matmul %57, %59, %cst_60 {dimension_numbers = #tpu.dot_dimension_numbers<[1], [0], [0], [1], [0, 0, 1, 1], [], []>} : vector<34x144xbf16>, vector<144x256xbf16>, vector<34x256xf32> -> vector<34x256xf32>
    %61 = arith.addf %56, %60 : vector<34x256xf32>
    %c2_61 = arith.constant 2 : index
    %c0_62 = arith.constant 0 : index
    %62 = vector.load %arg37[%c2_61, %c0_62] : memref<36x144xbf16, #tpu.memory_space<vmem>>, vector<34x144xbf16>
    %c2_63 = arith.constant 2 : index
    %c0_64 = arith.constant 0 : index
    %c0_65 = arith.constant 0 : index
    %63 = vector.load %arg5[%c2_63, %c0_64, %c0_65] : memref<3x144x256xbf16, #tpu.memory_space<vmem>>, vector<1x144x256xbf16>
    %64 = vector.shape_cast %63 : vector<1x144x256xbf16> to vector<144x256xbf16>
    %cst_66 = arith.constant dense<0.000000e+00> : vector<34x256xf32>
    %65 = tpu.matmul %62, %64, %cst_66 {dimension_numbers = #tpu.dot_dimension_numbers<[1], [0], [0], [1], [0, 0, 1, 1], [], []>} : vector<34x144xbf16>, vector<144x256xbf16>, vector<34x256xf32> -> vector<34x256xf32>
    %66 = arith.addf %61, %65 : vector<34x256xf32>
    %c0_67 = arith.constant 0 : index
    %c0_68 = arith.constant 0 : index
    %67 = vector.load %arg6[%c0_67, %c0_68] : memref<1x256xf32, #tpu.memory_space<vmem>>, vector<1x256xf32>
    %68 = vector.broadcast %67 : vector<1x256xf32> to vector<34x256xf32>
    %69 = arith.addf %66, %68 : vector<34x256xf32>
    %cst_69 = arith.constant 0.000000e+00 : f32
    %70 = vector.broadcast %cst_69 : f32 to vector<34x256xf32>
    %71 = arith.maximumf %69, %70 : vector<34x256xf32>
    %72 = arith.truncf %71 : vector<34x256xf32> to vector<34x256xbf16>
    %c0_70 = arith.constant 0 : index
    %c0_71 = arith.constant 0 : index
    %c0_72 = arith.constant 0 : index
    %73 = vector.load %arg7[%c0_70, %c0_71, %c0_72] : memref<2x256x128xbf16, #tpu.memory_space<vmem>>, vector<1x256x128xbf16>
    %74 = vector.shape_cast %73 : vector<1x256x128xbf16> to vector<256x128xbf16>
    %cst_73 = arith.constant dense<0.000000e+00> : vector<34x128xf32>
    %75 = tpu.matmul %72, %74, %cst_73 {dimension_numbers = #tpu.dot_dimension_numbers<[1], [0], [0], [1], [0, 0, 1, 1], [], []>} : vector<34x256xbf16>, vector<256x128xbf16>, vector<34x128xf32> -> vector<34x128xf32>
    %c1_74 = arith.constant 1 : index
    %c0_75 = arith.constant 0 : index
    %c0_76 = arith.constant 0 : index
    %76 = vector.load %arg7[%c1_74, %c0_75, %c0_76] : memref<2x256x128xbf16, #tpu.memory_space<vmem>>, vector<1x256x128xbf16>
    %77 = vector.shape_cast %76 : vector<1x256x128xbf16> to vector<256x128xbf16>
    %cst_77 = arith.constant dense<0.000000e+00> : vector<34x128xf32>
    %78 = tpu.matmul %72, %77, %cst_77 {dimension_numbers = #tpu.dot_dimension_numbers<[1], [0], [0], [1], [0, 0, 1, 1], [], []>} : vector<34x256xbf16>, vector<256x128xbf16>, vector<34x128xf32> -> vector<34x128xf32>
    %79 = arith.maximumf %75, %78 : vector<34x128xf32>
    %80 = arith.truncf %79 : vector<34x128xf32> to vector<34x128xbf16>
    %c0_78 = arith.constant 0 : index
    %c0_79 = arith.constant 0 : index
    %c0_80 = arith.constant 0 : index
    %81 = vector.load %arg8[%c0_78, %c0_79, %c0_80] : memref<2x16x34xbf16, #tpu.memory_space<vmem>>, vector<1x16x34xbf16>
    %82 = vector.shape_cast %81 : vector<1x16x34xbf16> to vector<16x34xbf16>
    %cst_81 = arith.constant dense<0.000000e+00> : vector<16x128xf32>
    %83 = tpu.matmul %82, %80, %cst_81 {dimension_numbers = #tpu.dot_dimension_numbers<[1], [0], [0], [1], [0, 0, 1, 1], [], []>} : vector<16x34xbf16>, vector<34x128xbf16>, vector<16x128xf32> -> vector<16x128xf32>
    %c1_82 = arith.constant 1 : index
    %c0_83 = arith.constant 0 : index
    %c0_84 = arith.constant 0 : index
    %84 = vector.load %arg8[%c1_82, %c0_83, %c0_84] : memref<2x16x34xbf16, #tpu.memory_space<vmem>>, vector<1x16x34xbf16>
    %85 = vector.shape_cast %84 : vector<1x16x34xbf16> to vector<16x34xbf16>
    %cst_85 = arith.constant dense<0.000000e+00> : vector<16x128xf32>
    %86 = tpu.matmul %85, %80, %cst_85 {dimension_numbers = #tpu.dot_dimension_numbers<[1], [0], [0], [1], [0, 0, 1, 1], [], []>} : vector<16x34xbf16>, vector<34x128xbf16>, vector<16x128xf32> -> vector<16x128xf32>
    %87 = arith.maximumf %83, %86 : vector<16x128xf32>
    %cst_86 = arith.constant 0.000000e+00 : bf16
    %88 = vector.broadcast %cst_86 : bf16 to vector<20x160xbf16>
    %c0_87 = arith.constant 0 : index
    %c0_88 = arith.constant 0 : index
    %89 = vector.load %arg38[%c0_87, %c0_88] : memref<20x160xbf16, #tpu.memory_space<vmem>>, vector<20x160xbf16>
    tpu.vector_store %arg38[%c0_87, %c0_88], %88 {strides = array<i32>} : memref<20x160xbf16, #tpu.memory_space<vmem>>, vector<20x160xbf16>,
    %90 = vector.extract_strided_slice %87 {offsets = [0, 0], sizes = [8, 128], strides = [1, 1]} : vector<16x128xf32> to vector<8x128xf32>
    %91 = arith.truncf %90 : vector<8x128xf32> to vector<8x128xbf16>
    %c1_89 = arith.constant 1 : index
    %c16 = arith.constant 16 : index
    %92 = vector.load %arg38[%c1_89, %c16] : memref<20x160xbf16, #tpu.memory_space<vmem>>, vector<8x128xbf16>
    tpu.vector_store %arg38[%c1_89, %c16], %91 {strides = array<i32>} : memref<20x160xbf16, #tpu.memory_space<vmem>>, vector<8x128xbf16>,
    %93 = vector.extract_strided_slice %87 {offsets = [8, 0], sizes = [8, 128], strides = [1, 1]} : vector<16x128xf32> to vector<8x128xf32>
    %94 = arith.truncf %93 : vector<8x128xf32> to vector<8x128xbf16>
    %c11 = arith.constant 11 : index
    %c16_90 = arith.constant 16 : index
    %95 = vector.load %arg38[%c11, %c16_90] : memref<20x160xbf16, #tpu.memory_space<vmem>>, vector<8x128xbf16>
    tpu.vector_store %arg38[%c11, %c16_90], %94 {strides = array<i32>} : memref<20x160xbf16, #tpu.memory_space<vmem>>, vector<8x128xbf16>,
    %c0_91 = arith.constant 0 : index
    %c0_92 = arith.constant 0 : index
    %96 = vector.load %arg38[%c0_91, %c0_92] : memref<20x160xbf16, #tpu.memory_space<vmem>>, vector<18x160xbf16>
    %c0_93 = arith.constant 0 : index
    %c0_94 = arith.constant 0 : index
    %c0_95 = arith.constant 0 : index
    %97 = vector.load %arg9[%c0_93, %c0_94, %c0_95] : memref<3x160x256xbf16, #tpu.memory_space<vmem>>, vector<1x160x256xbf16>
    %98 = vector.shape_cast %97 : vector<1x160x256xbf16> to vector<160x256xbf16>
    %cst_96 = arith.constant dense<0.000000e+00> : vector<18x256xf32>
    %99 = tpu.matmul %96, %98, %cst_96 {dimension_numbers = #tpu.dot_dimension_numbers<[1], [0], [0], [1], [0, 0, 1, 1], [], []>} : vector<18x160xbf16>, vector<160x256xbf16>, vector<18x256xf32> -> vector<18x256xf32>
    %c1_97 = arith.constant 1 : index
    %c0_98 = arith.constant 0 : index
    %100 = vector.load %arg38[%c1_97, %c0_98] : memref<20x160xbf16, #tpu.memory_space<vmem>>, vector<18x160xbf16>
    %c1_99 = arith.constant 1 : index
    %c0_100 = arith.constant 0 : index
    %c0_101 = arith.constant 0 : index
    %101 = vector.load %arg9[%c1_99, %c0_100, %c0_101] : memref<3x160x256xbf16, #tpu.memory_space<vmem>>, vector<1x160x256xbf16>
    %102 = vector.shape_cast %101 : vector<1x160x256xbf16> to vector<160x256xbf16>
    %cst_102 = arith.constant dense<0.000000e+00> : vector<18x256xf32>
    %103 = tpu.matmul %100, %102, %cst_102 {dimension_numbers = #tpu.dot_dimension_numbers<[1], [0], [0], [1], [0, 0, 1, 1], [], []>} : vector<18x160xbf16>, vector<160x256xbf16>, vector<18x256xf32> -> vector<18x256xf32>
    %104 = arith.addf %99, %103 : vector<18x256xf32>
    %c2_103 = arith.constant 2 : index
    %c0_104 = arith.constant 0 : index
    %105 = vector.load %arg38[%c2_103, %c0_104] : memref<20x160xbf16, #tpu.memory_space<vmem>>, vector<18x160xbf16>
    %c2_105 = arith.constant 2 : index
    %c0_106 = arith.constant 0 : index
    %c0_107 = arith.constant 0 : index
    %106 = vector.load %arg9[%c2_105, %c0_106, %c0_107] : memref<3x160x256xbf16, #tpu.memory_space<vmem>>, vector<1x160x256xbf16>
    %107 = vector.shape_cast %106 : vector<1x160x256xbf16> to vector<160x256xbf16>
    %cst_108 = arith.constant dense<0.000000e+00> : vector<18x256xf32>
    %108 = tpu.matmul %105, %107, %cst_108 {dimension_numbers = #tpu.dot_dimension_numbers<[1], [0], [0], [1], [0, 0, 1, 1], [], []>} : vector<18x160xbf16>, vector<160x256xbf16>, vector<18x256xf32> -> vector<18x256xf32>
    %109 = arith.addf %104, %108 : vector<18x256xf32>
    %c0_109 = arith.constant 0 : index
    %c0_110 = arith.constant 0 : index
    %110 = vector.load %arg10[%c0_109, %c0_110] : memref<1x256xf32, #tpu.memory_space<vmem>>, vector<1x256xf32>
    %111 = vector.broadcast %110 : vector<1x256xf32> to vector<18x256xf32>
    %112 = arith.addf %109, %111 : vector<18x256xf32>
    %cst_111 = arith.constant 0.000000e+00 : f32
    %113 = vector.broadcast %cst_111 : f32 to vector<18x256xf32>
    %114 = arith.maximumf %112, %113 : vector<18x256xf32>
    %cst_112 = arith.constant 0.000000e+00 : bf16
    %115 = vector.broadcast %cst_112 : bf16 to vector<20x320xbf16>
    %c0_113 = arith.constant 0 : index
    %c0_114 = arith.constant 0 : index
    %116 = vector.load %arg39[%c0_113, %c0_114] : memref<20x320xbf16, #tpu.memory_space<vmem>>, vector<20x320xbf16>
    tpu.vector_store %arg39[%c0_113, %c0_114], %115 {strides = array<i32>} : memref<20x320xbf16, #tpu.memory_space<vmem>>, vector<20x320xbf16>,
    %117 = vector.extract_strided_slice %114 {offsets = [0, 0], sizes = [8, 256], strides = [1, 1]} : vector<18x256xf32> to vector<8x256xf32>
    %118 = arith.truncf %117 : vector<8x256xf32> to vector<8x256xbf16>
    %c1_115 = arith.constant 1 : index
    %c32 = arith.constant 32 : index
    %119 = vector.load %arg39[%c1_115, %c32] : memref<20x320xbf16, #tpu.memory_space<vmem>>, vector<8x256xbf16>
    tpu.vector_store %arg39[%c1_115, %c32], %118 {strides = array<i32>} : memref<20x320xbf16, #tpu.memory_space<vmem>>, vector<8x256xbf16>,
    %120 = vector.extract_strided_slice %114 {offsets = [10, 0], sizes = [8, 256], strides = [1, 1]} : vector<18x256xf32> to vector<8x256xf32>
    %121 = arith.truncf %120 : vector<8x256xf32> to vector<8x256xbf16>
    %c11_116 = arith.constant 11 : index
    %c32_117 = arith.constant 32 : index
    %122 = vector.load %arg39[%c11_116, %c32_117] : memref<20x320xbf16, #tpu.memory_space<vmem>>, vector<8x256xbf16>
    tpu.vector_store %arg39[%c11_116, %c32_117], %121 {strides = array<i32>} : memref<20x320xbf16, #tpu.memory_space<vmem>>, vector<8x256xbf16>,
    %c0_118 = arith.constant 0 : index
    %c0_119 = arith.constant 0 : index
    %123 = vector.load %arg39[%c0_118, %c0_119] : memref<20x320xbf16, #tpu.memory_space<vmem>>, vector<18x320xbf16>
    %c0_120 = arith.constant 0 : index
    %c0_121 = arith.constant 0 : index
    %c0_122 = arith.constant 0 : index
    %124 = vector.load %arg11[%c0_120, %c0_121, %c0_122] : memref<3x320x256xbf16, #tpu.memory_space<vmem>>, vector<1x320x256xbf16>
    %125 = vector.shape_cast %124 : vector<1x320x256xbf16> to vector<320x256xbf16>
    %cst_123 = arith.constant dense<0.000000e+00> : vector<18x256xf32>
    %126 = tpu.matmul %123, %125, %cst_123 {dimension_numbers = #tpu.dot_dimension_numbers<[1], [0], [0], [1], [0, 0, 1, 1], [], []>} : vector<18x320xbf16>, vector<320x256xbf16>, vector<18x256xf32> -> vector<18x256xf32>
    %c1_124 = arith.constant 1 : index
    %c0_125 = arith.constant 0 : index
    %127 = vector.load %arg39[%c1_124, %c0_125] : memref<20x320xbf16, #tpu.memory_space<vmem>>, vector<18x320xbf16>
    %c1_126 = arith.constant 1 : index
    %c0_127 = arith.constant 0 : index
    %c0_128 = arith.constant 0 : index
    %128 = vector.load %arg11[%c1_126, %c0_127, %c0_128] : memref<3x320x256xbf16, #tpu.memory_space<vmem>>, vector<1x320x256xbf16>
    %129 = vector.shape_cast %128 : vector<1x320x256xbf16> to vector<320x256xbf16>
    %cst_129 = arith.constant dense<0.000000e+00> : vector<18x256xf32>
    %130 = tpu.matmul %127, %129, %cst_129 {dimension_numbers = #tpu.dot_dimension_numbers<[1], [0], [0], [1], [0, 0, 1, 1], [], []>} : vector<18x320xbf16>, vector<320x256xbf16>, vector<18x256xf32> -> vector<18x256xf32>
    %131 = arith.addf %126, %130 : vector<18x256xf32>
    %c2_130 = arith.constant 2 : index
    %c0_131 = arith.constant 0 : index
    %132 = vector.load %arg39[%c2_130, %c0_131] : memref<20x320xbf16, #tpu.memory_space<vmem>>, vector<18x320xbf16>
    %c2_132 = arith.constant 2 : index
    %c0_133 = arith.constant 0 : index
    %c0_134 = arith.constant 0 : index
    %133 = vector.load %arg11[%c2_132, %c0_133, %c0_134] : memref<3x320x256xbf16, #tpu.memory_space<vmem>>, vector<1x320x256xbf16>
    %134 = vector.shape_cast %133 : vector<1x320x256xbf16> to vector<320x256xbf16>
    %cst_135 = arith.constant dense<0.000000e+00> : vector<18x256xf32>
    %135 = tpu.matmul %132, %134, %cst_135 {dimension_numbers = #tpu.dot_dimension_numbers<[1], [0], [0], [1], [0, 0, 1, 1], [], []>} : vector<18x320xbf16>, vector<320x256xbf16>, vector<18x256xf32> -> vector<18x256xf32>
    %136 = arith.addf %131, %135 : vector<18x256xf32>
    %c0_136 = arith.constant 0 : index
    %c0_137 = arith.constant 0 : index
    %137 = vector.load %arg12[%c0_136, %c0_137] : memref<1x256xf32, #tpu.memory_space<vmem>>, vector<1x256xf32>
    %138 = vector.broadcast %137 : vector<1x256xf32> to vector<18x256xf32>
    %139 = arith.addf %136, %138 : vector<18x256xf32>
    %cst_138 = arith.constant 0.000000e+00 : f32
    %140 = vector.broadcast %cst_138 : f32 to vector<18x256xf32>
    %141 = arith.maximumf %139, %140 : vector<18x256xf32>
    %142 = arith.truncf %141 : vector<18x256xf32> to vector<18x256xbf16>
    %c0_139 = arith.constant 0 : index
    %c0_140 = arith.constant 0 : index
    %c0_141 = arith.constant 0 : index
    %143 = vector.load %arg13[%c0_139, %c0_140, %c0_141] : memref<2x256x128xbf16, #tpu.memory_space<vmem>>, vector<1x256x128xbf16>
    %144 = vector.shape_cast %143 : vector<1x256x128xbf16> to vector<256x128xbf16>
    %cst_142 = arith.constant dense<0.000000e+00> : vector<18x128xf32>
    %145 = tpu.matmul %142, %144, %cst_142 {dimension_numbers = #tpu.dot_dimension_numbers<[1], [0], [0], [1], [0, 0, 1, 1], [], []>} : vector<18x256xbf16>, vector<256x128xbf16>, vector<18x128xf32> -> vector<18x128xf32>
    %c1_143 = arith.constant 1 : index
    %c0_144 = arith.constant 0 : index
    %c0_145 = arith.constant 0 : index
    %146 = vector.load %arg13[%c1_143, %c0_144, %c0_145] : memref<2x256x128xbf16, #tpu.memory_space<vmem>>, vector<1x256x128xbf16>
    %147 = vector.shape_cast %146 : vector<1x256x128xbf16> to vector<256x128xbf16>
    %cst_146 = arith.constant dense<0.000000e+00> : vector<18x128xf32>
    %148 = tpu.matmul %142, %147, %cst_146 {dimension_numbers = #tpu.dot_dimension_numbers<[1], [0], [0], [1], [0, 0, 1, 1], [], []>} : vector<18x256xbf16>, vector<256x128xbf16>, vector<18x128xf32> -> vector<18x128xf32>
    %149 = arith.maximumf %145, %148 : vector<18x128xf32>
    %150 = arith.truncf %149 : vector<18x128xf32> to vector<18x128xbf16>
    %c0_147 = arith.constant 0 : index
    %c0_148 = arith.constant 0 : index
    %c0_149 = arith.constant 0 : index
    %151 = vector.load %arg14[%c0_147, %c0_148, %c0_149] : memref<2x8x18xbf16, #tpu.memory_space<vmem>>, vector<1x8x18xbf16>
    %152 = vector.shape_cast %151 : vector<1x8x18xbf16> to vector<8x18xbf16>
    %cst_150 = arith.constant dense<0.000000e+00> : vector<8x128xf32>
    %153 = tpu.matmul %152, %150, %cst_150 {dimension_numbers = #tpu.dot_dimension_numbers<[1], [0], [0], [1], [0, 0, 1, 1], [], []>} : vector<8x18xbf16>, vector<18x128xbf16>, vector<8x128xf32> -> vector<8x128xf32>
    %c1_151 = arith.constant 1 : index
    %c0_152 = arith.constant 0 : index
    %c0_153 = arith.constant 0 : index
    %154 = vector.load %arg14[%c1_151, %c0_152, %c0_153] : memref<2x8x18xbf16, #tpu.memory_space<vmem>>, vector<1x8x18xbf16>
    %155 = vector.shape_cast %154 : vector<1x8x18xbf16> to vector<8x18xbf16>
    %cst_154 = arith.constant dense<0.000000e+00> : vector<8x128xf32>
    %156 = tpu.matmul %155, %150, %cst_154 {dimension_numbers = #tpu.dot_dimension_numbers<[1], [0], [0], [1], [0, 0, 1, 1], [], []>} : vector<8x18xbf16>, vector<18x128xbf16>, vector<8x128xf32> -> vector<8x128xf32>
    %157 = arith.maximumf %153, %156 : vector<8x128xf32>
    %cst_155 = arith.constant 0.000000e+00 : bf16
    %158 = vector.broadcast %cst_155 : bf16 to vector<12x192xbf16>
    %c0_156 = arith.constant 0 : index
    %c0_157 = arith.constant 0 : index
    %159 = vector.load %arg40[%c0_156, %c0_157] : memref<12x192xbf16, #tpu.memory_space<vmem>>, vector<12x192xbf16>
    tpu.vector_store %arg40[%c0_156, %c0_157], %158 {strides = array<i32>} : memref<12x192xbf16, #tpu.memory_space<vmem>>, vector<12x192xbf16>,
    %160 = vector.extract_strided_slice %157 {offsets = [0, 0], sizes = [4, 128], strides = [1, 1]} : vector<8x128xf32> to vector<4x128xf32>
    %161 = arith.truncf %160 : vector<4x128xf32> to vector<4x128xbf16>
    %c1_158 = arith.constant 1 : index
    %c32_159 = arith.constant 32 : index
    %162 = vector.load %arg40[%c1_158, %c32_159] : memref<12x192xbf16, #tpu.memory_space<vmem>>, vector<4x128xbf16>
    tpu.vector_store %arg40[%c1_158, %c32_159], %161 {strides = array<i32>} : memref<12x192xbf16, #tpu.memory_space<vmem>>, vector<4x128xbf16>,
    %163 = vector.extract_strided_slice %157 {offsets = [4, 0], sizes = [4, 128], strides = [1, 1]} : vector<8x128xf32> to vector<4x128xf32>
    %164 = arith.truncf %163 : vector<4x128xf32> to vector<4x128xbf16>
    %c7 = arith.constant 7 : index
    %c32_160 = arith.constant 32 : index
    %165 = vector.load %arg40[%c7, %c32_160] : memref<12x192xbf16, #tpu.memory_space<vmem>>, vector<4x128xbf16>
    tpu.vector_store %arg40[%c7, %c32_160], %164 {strides = array<i32>} : memref<12x192xbf16, #tpu.memory_space<vmem>>, vector<4x128xbf16>,
    %c0_161 = arith.constant 0 : index
    %c0_162 = arith.constant 0 : index
    %166 = vector.load %arg40[%c0_161, %c0_162] : memref<12x192xbf16, #tpu.memory_space<vmem>>, vector<10x192xbf16>
    %c0_163 = arith.constant 0 : index
    %c0_164 = arith.constant 0 : index
    %c0_165 = arith.constant 0 : index
    %167 = vector.load %arg15[%c0_163, %c0_164, %c0_165] : memref<3x192x256xbf16, #tpu.memory_space<vmem>>, vector<1x192x256xbf16>
    %168 = vector.shape_cast %167 : vector<1x192x256xbf16> to vector<192x256xbf16>
    %cst_166 = arith.constant dense<0.000000e+00> : vector<10x256xf32>
    %169 = tpu.matmul %166, %168, %cst_166 {dimension_numbers = #tpu.dot_dimension_numbers<[1], [0], [0], [1], [0, 0, 1, 1], [], []>} : vector<10x192xbf16>, vector<192x256xbf16>, vector<10x256xf32> -> vector<10x256xf32>
    %c1_167 = arith.constant 1 : index
    %c0_168 = arith.constant 0 : index
    %170 = vector.load %arg40[%c1_167, %c0_168] : memref<12x192xbf16, #tpu.memory_space<vmem>>, vector<10x192xbf16>
    %c1_169 = arith.constant 1 : index
    %c0_170 = arith.constant 0 : index
    %c0_171 = arith.constant 0 : index
    %171 = vector.load %arg15[%c1_169, %c0_170, %c0_171] : memref<3x192x256xbf16, #tpu.memory_space<vmem>>, vector<1x192x256xbf16>
    %172 = vector.shape_cast %171 : vector<1x192x256xbf16> to vector<192x256xbf16>
    %cst_172 = arith.constant dense<0.000000e+00> : vector<10x256xf32>
    %173 = tpu.matmul %170, %172, %cst_172 {dimension_numbers = #tpu.dot_dimension_numbers<[1], [0], [0], [1], [0, 0, 1, 1], [], []>} : vector<10x192xbf16>, vector<192x256xbf16>, vector<10x256xf32> -> vector<10x256xf32>
    %174 = arith.addf %169, %173 : vector<10x256xf32>
    %c2_173 = arith.constant 2 : index
    %c0_174 = arith.constant 0 : index
    %175 = vector.load %arg40[%c2_173, %c0_174] : memref<12x192xbf16, #tpu.memory_space<vmem>>, vector<10x192xbf16>
    %c2_175 = arith.constant 2 : index
    %c0_176 = arith.constant 0 : index
    %c0_177 = arith.constant 0 : index
    %176 = vector.load %arg15[%c2_175, %c0_176, %c0_177] : memref<3x192x256xbf16, #tpu.memory_space<vmem>>, vector<1x192x256xbf16>
    %177 = vector.shape_cast %176 : vector<1x192x256xbf16> to vector<192x256xbf16>
    %cst_178 = arith.constant dense<0.000000e+00> : vector<10x256xf32>
    %178 = tpu.matmul %175, %177, %cst_178 {dimension_numbers = #tpu.dot_dimension_numbers<[1], [0], [0], [1], [0, 0, 1, 1], [], []>} : vector<10x192xbf16>, vector<192x256xbf16>, vector<10x256xf32> -> vector<10x256xf32>
    %179 = arith.addf %174, %178 : vector<10x256xf32>
    %c0_179 = arith.constant 0 : index
    %c0_180 = arith.constant 0 : index
    %180 = vector.load %arg16[%c0_179, %c0_180] : memref<1x256xf32, #tpu.memory_space<vmem>>, vector<1x256xf32>
    %181 = vector.broadcast %180 : vector<1x256xf32> to vector<10x256xf32>
    %182 = arith.addf %179, %181 : vector<10x256xf32>
    %cst_181 = arith.constant 0.000000e+00 : f32
    %183 = vector.broadcast %cst_181 : f32 to vector<10x256xf32>
    %184 = arith.maximumf %182, %183 : vector<10x256xf32>
    %cst_182 = arith.constant 0.000000e+00 : bf16
    %185 = vector.broadcast %cst_182 : bf16 to vector<12x384xbf16>
    %c0_183 = arith.constant 0 : index
    %c0_184 = arith.constant 0 : index
    %186 = vector.load %arg41[%c0_183, %c0_184] : memref<12x384xbf16, #tpu.memory_space<vmem>>, vector<12x384xbf16>
    tpu.vector_store %arg41[%c0_183, %c0_184], %185 {strides = array<i32>} : memref<12x384xbf16, #tpu.memory_space<vmem>>, vector<12x384xbf16>,
    %187 = vector.extract_strided_slice %184 {offsets = [0, 0], sizes = [4, 256], strides = [1, 1]} : vector<10x256xf32> to vector<4x256xf32>
    %188 = arith.truncf %187 : vector<4x256xf32> to vector<4x256xbf16>
    %c1_185 = arith.constant 1 : index
    %c64 = arith.constant 64 : index
    %189 = vector.load %arg41[%c1_185, %c64] : memref<12x384xbf16, #tpu.memory_space<vmem>>, vector<4x256xbf16>
    tpu.vector_store %arg41[%c1_185, %c64], %188 {strides = array<i32>} : memref<12x384xbf16, #tpu.memory_space<vmem>>, vector<4x256xbf16>,
    %190 = vector.extract_strided_slice %184 {offsets = [6, 0], sizes = [4, 256], strides = [1, 1]} : vector<10x256xf32> to vector<4x256xf32>
    %191 = arith.truncf %190 : vector<4x256xf32> to vector<4x256xbf16>
    %c7_186 = arith.constant 7 : index
    %c64_187 = arith.constant 64 : index
    %192 = vector.load %arg41[%c7_186, %c64_187] : memref<12x384xbf16, #tpu.memory_space<vmem>>, vector<4x256xbf16>
    tpu.vector_store %arg41[%c7_186, %c64_187], %191 {strides = array<i32>} : memref<12x384xbf16, #tpu.memory_space<vmem>>, vector<4x256xbf16>,
    %c0_188 = arith.constant 0 : index
    %c0_189 = arith.constant 0 : index
    %193 = vector.load %arg41[%c0_188, %c0_189] : memref<12x384xbf16, #tpu.memory_space<vmem>>, vector<10x384xbf16>
    %c0_190 = arith.constant 0 : index
    %c0_191 = arith.constant 0 : index
    %c0_192 = arith.constant 0 : index
    %194 = vector.load %arg17[%c0_190, %c0_191, %c0_192] : memref<3x384x256xbf16, #tpu.memory_space<vmem>>, vector<1x384x256xbf16>
    %195 = vector.shape_cast %194 : vector<1x384x256xbf16> to vector<384x256xbf16>
    %cst_193 = arith.constant dense<0.000000e+00> : vector<10x256xf32>
    %196 = tpu.matmul %193, %195, %cst_193 {dimension_numbers = #tpu.dot_dimension_numbers<[1], [0], [0], [1], [0, 0, 1, 1], [], []>} : vector<10x384xbf16>, vector<384x256xbf16>, vector<10x256xf32> -> vector<10x256xf32>
    %c1_194 = arith.constant 1 : index
    %c0_195 = arith.constant 0 : index
    %197 = vector.load %arg41[%c1_194, %c0_195] : memref<12x384xbf16, #tpu.memory_space<vmem>>, vector<10x384xbf16>
    %c1_196 = arith.constant 1 : index
    %c0_197 = arith.constant 0 : index
    %c0_198 = arith.constant 0 : index
    %198 = vector.load %arg17[%c1_196, %c0_197, %c0_198] : memref<3x384x256xbf16, #tpu.memory_space<vmem>>, vector<1x384x256xbf16>
    %199 = vector.shape_cast %198 : vector<1x384x256xbf16> to vector<384x256xbf16>
    %cst_199 = arith.constant dense<0.000000e+00> : vector<10x256xf32>
    %200 = tpu.matmul %197, %199, %cst_199 {dimension_numbers = #tpu.dot_dimension_numbers<[1], [0], [0], [1], [0, 0, 1, 1], [], []>} : vector<10x384xbf16>, vector<384x256xbf16>, vector<10x256xf32> -> vector<10x256xf32>
    %201 = arith.addf %196, %200 : vector<10x256xf32>
    %c2_200 = arith.constant 2 : index
    %c0_201 = arith.constant 0 : index
    %202 = vector.load %arg41[%c2_200, %c0_201] : memref<12x384xbf16, #tpu.memory_space<vmem>>, vector<10x384xbf16>
    %c2_202 = arith.constant 2 : index
    %c0_203 = arith.constant 0 : index
    %c0_204 = arith.constant 0 : index
    %203 = vector.load %arg17[%c2_202, %c0_203, %c0_204] : memref<3x384x256xbf16, #tpu.memory_space<vmem>>, vector<1x384x256xbf16>
    %204 = vector.shape_cast %203 : vector<1x384x256xbf16> to vector<384x256xbf16>
    %cst_205 = arith.constant dense<0.000000e+00> : vector<10x256xf32>
    %205 = tpu.matmul %202, %204, %cst_205 {dimension_numbers = #tpu.dot_dimension_numbers<[1], [0], [0], [1], [0, 0, 1, 1], [], []>} : vector<10x384xbf16>, vector<384x256xbf16>, vector<10x256xf32> -> vector<10x256xf32>
    %206 = arith.addf %201, %205 : vector<10x256xf32>
    %c0_206 = arith.constant 0 : index
    %c0_207 = arith.constant 0 : index
    %207 = vector.load %arg18[%c0_206, %c0_207] : memref<1x256xf32, #tpu.memory_space<vmem>>, vector<1x256xf32>
    %208 = vector.broadcast %207 : vector<1x256xf32> to vector<10x256xf32>
    %209 = arith.addf %206, %208 : vector<10x256xf32>
    %cst_208 = arith.constant 0.000000e+00 : f32
    %210 = vector.broadcast %cst_208 : f32 to vector<10x256xf32>
    %211 = arith.maximumf %209, %210 : vector<10x256xf32>
    %212 = arith.truncf %211 : vector<10x256xf32> to vector<10x256xbf16>
    %c0_209 = arith.constant 0 : index
    %c0_210 = arith.constant 0 : index
    %c0_211 = arith.constant 0 : index
    %213 = vector.load %arg19[%c0_209, %c0_210, %c0_211] : memref<2x256x128xbf16, #tpu.memory_space<vmem>>, vector<1x256x128xbf16>
    %214 = vector.shape_cast %213 : vector<1x256x128xbf16> to vector<256x128xbf16>
    %cst_212 = arith.constant dense<0.000000e+00> : vector<10x128xf32>
    %215 = tpu.matmul %212, %214, %cst_212 {dimension_numbers = #tpu.dot_dimension_numbers<[1], [0], [0], [1], [0, 0, 1, 1], [], []>} : vector<10x256xbf16>, vector<256x128xbf16>, vector<10x128xf32> -> vector<10x128xf32>
    %c1_213 = arith.constant 1 : index
    %c0_214 = arith.constant 0 : index
    %c0_215 = arith.constant 0 : index
    %216 = vector.load %arg19[%c1_213, %c0_214, %c0_215] : memref<2x256x128xbf16, #tpu.memory_space<vmem>>, vector<1x256x128xbf16>
    %217 = vector.shape_cast %216 : vector<1x256x128xbf16> to vector<256x128xbf16>
    %cst_216 = arith.constant dense<0.000000e+00> : vector<10x128xf32>
    %218 = tpu.matmul %212, %217, %cst_216 {dimension_numbers = #tpu.dot_dimension_numbers<[1], [0], [0], [1], [0, 0, 1, 1], [], []>} : vector<10x256xbf16>, vector<256x128xbf16>, vector<10x128xf32> -> vector<10x128xf32>
    %219 = arith.maximumf %215, %218 : vector<10x128xf32>
    %220 = arith.truncf %219 : vector<10x128xf32> to vector<10x128xbf16>
    %c0_217 = arith.constant 0 : index
    %c0_218 = arith.constant 0 : index
    %c0_219 = arith.constant 0 : index
    %221 = vector.load %arg20[%c0_217, %c0_218, %c0_219] : memref<2x4x10xbf16, #tpu.memory_space<vmem>>, vector<1x4x10xbf16>
    %222 = vector.shape_cast %221 : vector<1x4x10xbf16> to vector<4x10xbf16>
    %cst_220 = arith.constant dense<0.000000e+00> : vector<4x128xf32>
    %223 = tpu.matmul %222, %220, %cst_220 {dimension_numbers = #tpu.dot_dimension_numbers<[1], [0], [0], [1], [0, 0, 1, 1], [], []>} : vector<4x10xbf16>, vector<10x128xbf16>, vector<4x128xf32> -> vector<4x128xf32>
    %c1_221 = arith.constant 1 : index
    %c0_222 = arith.constant 0 : index
    %c0_223 = arith.constant 0 : index
    %224 = vector.load %arg20[%c1_221, %c0_222, %c0_223] : memref<2x4x10xbf16, #tpu.memory_space<vmem>>, vector<1x4x10xbf16>
    %225 = vector.shape_cast %224 : vector<1x4x10xbf16> to vector<4x10xbf16>
    %cst_224 = arith.constant dense<0.000000e+00> : vector<4x128xf32>
    %226 = tpu.matmul %225, %220, %cst_224 {dimension_numbers = #tpu.dot_dimension_numbers<[1], [0], [0], [1], [0, 0, 1, 1], [], []>} : vector<4x10xbf16>, vector<10x128xbf16>, vector<4x128xf32> -> vector<4x128xf32>
    %227 = arith.maximumf %223, %226 : vector<4x128xf32>
    %cst_225 = arith.constant 0.000000e+00 : bf16
    %228 = vector.broadcast %cst_225 : bf16 to vector<8x256xbf16>
    %c0_226 = arith.constant 0 : index
    %c0_227 = arith.constant 0 : index
    %229 = vector.load %arg42[%c0_226, %c0_227] : memref<8x256xbf16, #tpu.memory_space<vmem>>, vector<8x256xbf16>
    tpu.vector_store %arg42[%c0_226, %c0_227], %228 {strides = array<i32>} : memref<8x256xbf16, #tpu.memory_space<vmem>>, vector<8x256xbf16>,
    %230 = vector.extract_strided_slice %227 {offsets = [0, 0], sizes = [2, 128], strides = [1, 1]} : vector<4x128xf32> to vector<2x128xf32>
    %231 = arith.truncf %230 : vector<2x128xf32> to vector<2x128xbf16>
    %c1_228 = arith.constant 1 : index
    %c64_229 = arith.constant 64 : index
    %232 = vector.load %arg42[%c1_228, %c64_229] : memref<8x256xbf16, #tpu.memory_space<vmem>>, vector<2x128xbf16>
    tpu.vector_store %arg42[%c1_228, %c64_229], %231 {strides = array<i32>} : memref<8x256xbf16, #tpu.memory_space<vmem>>, vector<2x128xbf16>,
    %233 = vector.extract_strided_slice %227 {offsets = [2, 0], sizes = [2, 128], strides = [1, 1]} : vector<4x128xf32> to vector<2x128xf32>
    %234 = arith.truncf %233 : vector<2x128xf32> to vector<2x128xbf16>
    %c5 = arith.constant 5 : index
    %c64_230 = arith.constant 64 : index
    %235 = vector.load %arg42[%c5, %c64_230] : memref<8x256xbf16, #tpu.memory_space<vmem>>, vector<2x128xbf16>
    tpu.vector_store %arg42[%c5, %c64_230], %234 {strides = array<i32>} : memref<8x256xbf16, #tpu.memory_space<vmem>>, vector<2x128xbf16>,
    %c0_231 = arith.constant 0 : index
    %c0_232 = arith.constant 0 : index
    %236 = vector.load %arg42[%c0_231, %c0_232] : memref<8x256xbf16, #tpu.memory_space<vmem>>, vector<6x256xbf16>
    %c0_233 = arith.constant 0 : index
    %c0_234 = arith.constant 0 : index
    %c0_235 = arith.constant 0 : index
    %237 = vector.load %arg21[%c0_233, %c0_234, %c0_235] : memref<3x256x128xbf16, #tpu.memory_space<vmem>>, vector<1x256x128xbf16>
    %238 = vector.shape_cast %237 : vector<1x256x128xbf16> to vector<256x128xbf16>
    %cst_236 = arith.constant dense<0.000000e+00> : vector<6x128xf32>
    %239 = tpu.matmul %236, %238, %cst_236 {dimension_numbers = #tpu.dot_dimension_numbers<[1], [0], [0], [1], [0, 0, 1, 1], [], []>} : vector<6x256xbf16>, vector<256x128xbf16>, vector<6x128xf32> -> vector<6x128xf32>
    %c1_237 = arith.constant 1 : index
    %c0_238 = arith.constant 0 : index
    %240 = vector.load %arg42[%c1_237, %c0_238] : memref<8x256xbf16, #tpu.memory_space<vmem>>, vector<6x256xbf16>
    %c1_239 = arith.constant 1 : index
    %c0_240 = arith.constant 0 : index
    %c0_241 = arith.constant 0 : index
    %241 = vector.load %arg21[%c1_239, %c0_240, %c0_241] : memref<3x256x128xbf16, #tpu.memory_space<vmem>>, vector<1x256x128xbf16>
    %242 = vector.shape_cast %241 : vector<1x256x128xbf16> to vector<256x128xbf16>
    %cst_242 = arith.constant dense<0.000000e+00> : vector<6x128xf32>
    %243 = tpu.matmul %240, %242, %cst_242 {dimension_numbers = #tpu.dot_dimension_numbers<[1], [0], [0], [1], [0, 0, 1, 1], [], []>} : vector<6x256xbf16>, vector<256x128xbf16>, vector<6x128xf32> -> vector<6x128xf32>
    %244 = arith.addf %239, %243 : vector<6x128xf32>
    %c2_243 = arith.constant 2 : index
    %c0_244 = arith.constant 0 : index
    %245 = vector.load %arg42[%c2_243, %c0_244] : memref<8x256xbf16, #tpu.memory_space<vmem>>, vector<6x256xbf16>
    %c2_245 = arith.constant 2 : index
    %c0_246 = arith.constant 0 : index
    %c0_247 = arith.constant 0 : index
    %246 = vector.load %arg21[%c2_245, %c0_246, %c0_247] : memref<3x256x128xbf16, #tpu.memory_space<vmem>>, vector<1x256x128xbf16>
    %247 = vector.shape_cast %246 : vector<1x256x128xbf16> to vector<256x128xbf16>
    %cst_248 = arith.constant dense<0.000000e+00> : vector<6x128xf32>
    %248 = tpu.matmul %245, %247, %cst_248 {dimension_numbers = #tpu.dot_dimension_numbers<[1], [0], [0], [1], [0, 0, 1, 1], [], []>} : vector<6x256xbf16>, vector<256x128xbf16>, vector<6x128xf32> -> vector<6x128xf32>
    %249 = arith.addf %244, %248 : vector<6x128xf32>
    %c0_249 = arith.constant 0 : index
    %c0_250 = arith.constant 0 : index
    %250 = vector.load %arg22[%c0_249, %c0_250] : memref<1x128xf32, #tpu.memory_space<vmem>>, vector<1x128xf32>
    %251 = vector.broadcast %250 : vector<1x128xf32> to vector<6x128xf32>
    %252 = arith.addf %249, %251 : vector<6x128xf32>
    %cst_251 = arith.constant 0.000000e+00 : f32
    %253 = vector.broadcast %cst_251 : f32 to vector<6x128xf32>
    %254 = arith.maximumf %252, %253 : vector<6x128xf32>
    %cst_252 = arith.constant 0.000000e+00 : bf16
    %255 = vector.broadcast %cst_252 : bf16 to vector<8x256xbf16>
    %c0_253 = arith.constant 0 : index
    %c0_254 = arith.constant 0 : index
    %256 = vector.load %arg43[%c0_253, %c0_254] : memref<8x256xbf16, #tpu.memory_space<vmem>>, vector<8x256xbf16>
    tpu.vector_store %arg43[%c0_253, %c0_254], %255 {strides = array<i32>} : memref<8x256xbf16, #tpu.memory_space<vmem>>, vector<8x256xbf16>,
    %257 = vector.extract_strided_slice %254 {offsets = [0, 0], sizes = [2, 128], strides = [1, 1]} : vector<6x128xf32> to vector<2x128xf32>
    %258 = arith.truncf %257 : vector<2x128xf32> to vector<2x128xbf16>
    %c1_255 = arith.constant 1 : index
    %c64_256 = arith.constant 64 : index
    %259 = vector.load %arg43[%c1_255, %c64_256] : memref<8x256xbf16, #tpu.memory_space<vmem>>, vector<2x128xbf16>
    tpu.vector_store %arg43[%c1_255, %c64_256], %258 {strides = array<i32>} : memref<8x256xbf16, #tpu.memory_space<vmem>>, vector<2x128xbf16>,
    %260 = vector.extract_strided_slice %254 {offsets = [4, 0], sizes = [2, 128], strides = [1, 1]} : vector<6x128xf32> to vector<2x128xf32>
    %261 = arith.truncf %260 : vector<2x128xf32> to vector<2x128xbf16>
    %c5_257 = arith.constant 5 : index
    %c64_258 = arith.constant 64 : index
    %262 = vector.load %arg43[%c5_257, %c64_258] : memref<8x256xbf16, #tpu.memory_space<vmem>>, vector<2x128xbf16>
    tpu.vector_store %arg43[%c5_257, %c64_258], %261 {strides = array<i32>} : memref<8x256xbf16, #tpu.memory_space<vmem>>, vector<2x128xbf16>,
    %c0_259 = arith.constant 0 : index
    %c0_260 = arith.constant 0 : index
    %263 = vector.load %arg43[%c0_259, %c0_260] : memref<8x256xbf16, #tpu.memory_space<vmem>>, vector<6x256xbf16>
    %c0_261 = arith.constant 0 : index
    %c0_262 = arith.constant 0 : index
    %c0_263 = arith.constant 0 : index
    %264 = vector.load %arg23[%c0_261, %c0_262, %c0_263] : memref<3x256x128xbf16, #tpu.memory_space<vmem>>, vector<1x256x128xbf16>
    %265 = vector.shape_cast %264 : vector<1x256x128xbf16> to vector<256x128xbf16>
    %cst_264 = arith.constant dense<0.000000e+00> : vector<6x128xf32>
    %266 = tpu.matmul %263, %265, %cst_264 {dimension_numbers = #tpu.dot_dimension_numbers<[1], [0], [0], [1], [0, 0, 1, 1], [], []>} : vector<6x256xbf16>, vector<256x128xbf16>, vector<6x128xf32> -> vector<6x128xf32>
    %c1_265 = arith.constant 1 : index
    %c0_266 = arith.constant 0 : index
    %267 = vector.load %arg43[%c1_265, %c0_266] : memref<8x256xbf16, #tpu.memory_space<vmem>>, vector<6x256xbf16>
    %c1_267 = arith.constant 1 : index
    %c0_268 = arith.constant 0 : index
    %c0_269 = arith.constant 0 : index
    %268 = vector.load %arg23[%c1_267, %c0_268, %c0_269] : memref<3x256x128xbf16, #tpu.memory_space<vmem>>, vector<1x256x128xbf16>
    %269 = vector.shape_cast %268 : vector<1x256x128xbf16> to vector<256x128xbf16>
    %cst_270 = arith.constant dense<0.000000e+00> : vector<6x128xf32>
    %270 = tpu.matmul %267, %269, %cst_270 {dimension_numbers = #tpu.dot_dimension_numbers<[1], [0], [0], [1], [0, 0, 1, 1], [], []>} : vector<6x256xbf16>, vector<256x128xbf16>, vector<6x128xf32> -> vector<6x128xf32>
    %271 = arith.addf %266, %270 : vector<6x128xf32>
    %c2_271 = arith.constant 2 : index
    %c0_272 = arith.constant 0 : index
    %272 = vector.load %arg43[%c2_271, %c0_272] : memref<8x256xbf16, #tpu.memory_space<vmem>>, vector<6x256xbf16>
    %c2_273 = arith.constant 2 : index
    %c0_274 = arith.constant 0 : index
    %c0_275 = arith.constant 0 : index
    %273 = vector.load %arg23[%c2_273, %c0_274, %c0_275] : memref<3x256x128xbf16, #tpu.memory_space<vmem>>, vector<1x256x128xbf16>
    %274 = vector.shape_cast %273 : vector<1x256x128xbf16> to vector<256x128xbf16>
    %cst_276 = arith.constant dense<0.000000e+00> : vector<6x128xf32>
    %275 = tpu.matmul %272, %274, %cst_276 {dimension_numbers = #tpu.dot_dimension_numbers<[1], [0], [0], [1], [0, 0, 1, 1], [], []>} : vector<6x256xbf16>, vector<256x128xbf16>, vector<6x128xf32> -> vector<6x128xf32>
    %276 = arith.addf %271, %275 : vector<6x128xf32>
    %c0_277 = arith.constant 0 : index
    %c0_278 = arith.constant 0 : index
    %277 = vector.load %arg24[%c0_277, %c0_278] : memref<1x128xf32, #tpu.memory_space<vmem>>, vector<1x128xf32>
    %278 = vector.broadcast %277 : vector<1x128xf32> to vector<6x128xf32>
    %279 = arith.addf %276, %278 : vector<6x128xf32>
    %cst_279 = arith.constant 0.000000e+00 : f32
    %280 = vector.broadcast %cst_279 : f32 to vector<6x128xf32>
    %281 = arith.maximumf %279, %280 : vector<6x128xf32>
    %282 = arith.truncf %281 : vector<6x128xf32> to vector<6x128xbf16>
    %c0_280 = arith.constant 0 : index
    %c0_281 = arith.constant 0 : index
    %c0_282 = arith.constant 0 : index
    %283 = vector.load %arg25[%c0_280, %c0_281, %c0_282] : memref<2x128x64xbf16, #tpu.memory_space<vmem>>, vector<1x128x64xbf16>
    %284 = vector.shape_cast %283 : vector<1x128x64xbf16> to vector<128x64xbf16>
    %cst_283 = arith.constant dense<0.000000e+00> : vector<6x64xf32>
    %285 = tpu.matmul %282, %284, %cst_283 {dimension_numbers = #tpu.dot_dimension_numbers<[1], [0], [0], [1], [0, 0, 1, 1], [], []>} : vector<6x128xbf16>, vector<128x64xbf16>, vector<6x64xf32> -> vector<6x64xf32>
    %c1_284 = arith.constant 1 : index
    %c0_285 = arith.constant 0 : index
    %c0_286 = arith.constant 0 : index
    %286 = vector.load %arg25[%c1_284, %c0_285, %c0_286] : memref<2x128x64xbf16, #tpu.memory_space<vmem>>, vector<1x128x64xbf16>
    %287 = vector.shape_cast %286 : vector<1x128x64xbf16> to vector<128x64xbf16>
    %cst_287 = arith.constant dense<0.000000e+00> : vector<6x64xf32>
    %288 = tpu.matmul %282, %287, %cst_287 {dimension_numbers = #tpu.dot_dimension_numbers<[1], [0], [0], [1], [0, 0, 1, 1], [], []>} : vector<6x128xbf16>, vector<128x64xbf16>, vector<6x64xf32> -> vector<6x64xf32>
    %289 = arith.maximumf %285, %288 : vector<6x64xf32>
    %290 = arith.truncf %289 : vector<6x64xf32> to vector<6x64xbf16>
    %c0_288 = arith.constant 0 : index
    %c0_289 = arith.constant 0 : index
    %c0_290 = arith.constant 0 : index
    %291 = vector.load %arg26[%c0_288, %c0_289, %c0_290] : memref<2x2x6xbf16, #tpu.memory_space<vmem>>, vector<1x2x6xbf16>
    %292 = vector.shape_cast %291 : vector<1x2x6xbf16> to vector<2x6xbf16>
    %cst_291 = arith.constant dense<0.000000e+00> : vector<2x64xf32>
    %293 = tpu.matmul %292, %290, %cst_291 {dimension_numbers = #tpu.dot_dimension_numbers<[1], [0], [0], [1], [0, 0, 1, 1], [], []>} : vector<2x6xbf16>, vector<6x64xbf16>, vector<2x64xf32> -> vector<2x64xf32>
    %c1_292 = arith.constant 1 : index
    %c0_293 = arith.constant 0 : index
    %c0_294 = arith.constant 0 : index
    %294 = vector.load %arg26[%c1_292, %c0_293, %c0_294] : memref<2x2x6xbf16, #tpu.memory_space<vmem>>, vector<1x2x6xbf16>
    %295 = vector.shape_cast %294 : vector<1x2x6xbf16> to vector<2x6xbf16>
    %cst_295 = arith.constant dense<0.000000e+00> : vector<2x64xf32>
    %296 = tpu.matmul %295, %290, %cst_295 {dimension_numbers = #tpu.dot_dimension_numbers<[1], [0], [0], [1], [0, 0, 1, 1], [], []>} : vector<2x6xbf16>, vector<6x64xbf16>, vector<2x64xf32> -> vector<2x64xf32>
    %297 = arith.maximumf %293, %296 : vector<2x64xf32>
    %298 = arith.truncf %297 : vector<2x64xf32> to vector<2x64xbf16>
    %c0_296 = arith.constant 0 : index
    %c0_297 = arith.constant 0 : index
    %299 = vector.load %arg27[%c0_296, %c0_297] : memref<64x256xbf16, #tpu.memory_space<vmem>>, vector<64x256xbf16>
    %cst_298 = arith.constant dense<0.000000e+00> : vector<2x256xf32>
    %300 = tpu.matmul %298, %299, %cst_298 {dimension_numbers = #tpu.dot_dimension_numbers<[1], [0], [0], [1], [0, 0, 1, 1], [], []>} : vector<2x64xbf16>, vector<64x256xbf16>, vector<2x256xf32> -> vector<2x256xf32>
    %c0_299 = arith.constant 0 : index
    %c0_300 = arith.constant 0 : index
    %301 = vector.load %arg28[%c0_299, %c0_300] : memref<1x256xf32, #tpu.memory_space<vmem>>, vector<1x256xf32>
    %302 = vector.broadcast %301 : vector<1x256xf32> to vector<2x256xf32>
    %303 = arith.addf %300, %302 : vector<2x256xf32>
    %cst_301 = arith.constant 0.000000e+00 : f32
    %304 = vector.broadcast %cst_301 : f32 to vector<2x256xf32>
    %305 = arith.maximumf %303, %304 : vector<2x256xf32>
    %306 = arith.truncf %305 : vector<2x256xf32> to vector<2x256xbf16>
    %c0_302 = arith.constant 0 : index
    %c0_303 = arith.constant 0 : index
    %307 = vector.load %arg29[%c0_302, %c0_303] : memref<256x256xbf16, #tpu.memory_space<vmem>>, vector<256x256xbf16>
    %cst_304 = arith.constant dense<0.000000e+00> : vector<2x256xf32>
    %308 = tpu.matmul %306, %307, %cst_304 {dimension_numbers = #tpu.dot_dimension_numbers<[1], [0], [0], [1], [0, 0, 1, 1], [], []>} : vector<2x256xbf16>, vector<256x256xbf16>, vector<2x256xf32> -> vector<2x256xf32>
    %c0_305 = arith.constant 0 : index
    %c0_306 = arith.constant 0 : index
    %309 = vector.load %arg30[%c0_305, %c0_306] : memref<1x256xf32, #tpu.memory_space<vmem>>, vector<1x256xf32>
    %310 = vector.broadcast %309 : vector<1x256xf32> to vector<2x256xf32>
    %311 = arith.addf %308, %310 : vector<2x256xf32>
    %cst_307 = arith.constant 0.000000e+00 : f32
    %312 = vector.broadcast %cst_307 : f32 to vector<2x256xf32>
    %313 = arith.maximumf %311, %312 : vector<2x256xf32>
    %314 = arith.truncf %313 : vector<2x256xf32> to vector<2x256xbf16>
    %c0_308 = arith.constant 0 : index
    %c0_309 = arith.constant 0 : index
    %315 = vector.load %arg31[%c0_308, %c0_309] : memref<256x32xbf16, #tpu.memory_space<vmem>>, vector<256x32xbf16>
    %cst_310 = arith.constant dense<0.000000e+00> : vector<2x32xf32>
    %316 = tpu.matmul %314, %315, %cst_310 {dimension_numbers = #tpu.dot_dimension_numbers<[1], [0], [0], [1], [0, 0, 1, 1], [], []>} : vector<2x256xbf16>, vector<256x32xbf16>, vector<2x32xf32> -> vector<2x32xf32>
    %c0_311 = arith.constant 0 : index
    %c0_312 = arith.constant 0 : index
    %317 = vector.load %arg32[%c0_311, %c0_312] : memref<1x32xf32, #tpu.memory_space<vmem>>, vector<1x32xf32>
    %318 = vector.broadcast %317 : vector<1x32xf32> to vector<2x32xf32>
    %319 = arith.addf %316, %318 : vector<2x32xf32>
    %cst_313 = arith.constant dense<0.000000e+00> : vector<32xf32>
    %320 = vector.multi_reduction <add>, %319, %cst_313 [0] : vector<2x32xf32> to vector<32xf32>
    %321 = vector.shape_cast %320 : vector<32xf32> to vector<1x32xf32>
    %cst_314 = arith.constant 2.000000e+00 : f32
    %322 = vector.broadcast %cst_314 : f32 to vector<1x32xf32>
    %323 = arith.divf %321, %322 : vector<1x32xf32>
    %324 = vector.broadcast %323 : vector<1x32xf32> to vector<2x32xf32>
    %325 = arith.subf %319, %324 : vector<2x32xf32>
    %326 = arith.mulf %325, %325 : vector<2x32xf32>
    %cst_315 = arith.constant dense<0.000000e+00> : vector<32xf32>
    %327 = vector.multi_reduction <add>, %326, %cst_315 [0] : vector<2x32xf32> to vector<32xf32>
    %328 = vector.shape_cast %327 : vector<32xf32> to vector<1x32xf32>
    %cst_316 = arith.constant 2.000000e+00 : f32
    %329 = vector.broadcast %cst_316 : f32 to vector<1x32xf32>
    %330 = arith.divf %328, %329 : vector<1x32xf32>
    %331 = vector.broadcast %323 : vector<1x32xf32> to vector<2x32xf32>
    %332 = arith.subf %319, %331 : vector<2x32xf32>
    %cst_317 = arith.constant 9.99999974E-6 : f32
    %333 = vector.broadcast %cst_317 : f32 to vector<1x32xf32>
    %334 = arith.addf %330, %333 : vector<1x32xf32>
    %335 = math.rsqrt %334 : vector<1x32xf32>
    %336 = vector.broadcast %335 : vector<1x32xf32> to vector<2x32xf32>
    %337 = arith.mulf %332, %336 : vector<2x32xf32>
    %c0_318 = arith.constant 0 : index
    %c0_319 = arith.constant 0 : index
    %338 = vector.load %arg33[%c0_318, %c0_319] : memref<1x32xf32, #tpu.memory_space<vmem>>, vector<1x32xf32>
    %339 = vector.broadcast %338 : vector<1x32xf32> to vector<2x32xf32>
    %340 = arith.mulf %337, %339 : vector<2x32xf32>
    %c0_320 = arith.constant 0 : index
    %c0_321 = arith.constant 0 : index
    %341 = vector.load %arg34[%c0_320, %c0_321] : memref<1x32xf32, #tpu.memory_space<vmem>>, vector<1x32xf32>
    %342 = vector.broadcast %341 : vector<1x32xf32> to vector<2x32xf32>
    %343 = arith.addf %340, %342 : vector<2x32xf32>
    %c0_322 = arith.constant 0 : index
    %c0_323 = arith.constant 0 : index
    %344 = vector.load %arg35[%c0_322, %c0_323] : memref<2x32xf32, #tpu.memory_space<vmem>>, vector<2x32xf32>
    tpu.vector_store %arg35[%c0_322, %c0_323], %343 {strides = array<i32>} : memref<2x32xf32, #tpu.memory_space<vmem>>, vector<2x32xf32>,
    return
  }
}

</mosaic_0001>

<llo_original>
// kernel: image_encoder_cnn_forward.1
$region0: #{image_encoder_cnn_forward.1}
  #allocation0 [shape = 'u32[]', space=smem, size = 0x4, offset = 0x4, fixed_abs, tag = 'smem constant byte address 0x4 - core index']
  #allocation1 [shape = 'u32[144,128]{1,0:T(1,128)}', space=vmem, size = 0x12000, scoped, tag = 'internal scratch']
  #allocation2 [shape = 'bf16[68,102]{1,0:T(8,128)(2,1)}', space=vmem, size = 0x4800, scoped, tag = 'scratch operand']
  #allocation3 [shape = 'bf16[36,144]{1,0:T(8,128)(2,1)}', space=vmem, size = 0x5000, scoped, tag = 'scratch operand']
  #allocation4 [shape = 'bf16[20,160]{1,0:T(8,128)(2,1)}', space=vmem, size = 0x3000, scoped, tag = 'scratch operand']
  #allocation5 [shape = 'bf16[20,320]{1,0:T(8,128)(2,1)}', space=vmem, size = 0x4800, scoped, tag = 'scratch operand']
  #allocation6 [shape = 'bf16[12,192]{1,0:T(8,128)(2,1)}', space=vmem, size = 0x2000, scoped, tag = 'scratch operand']
  #allocation7 [shape = 'bf16[12,384]{1,0:T(8,128)(2,1)}', space=vmem, size = 0x3000, scoped, tag = 'scratch operand']
  #allocation8 [shape = 'bf16[8,256]{1,0:T(8,128)(2,1)}', space=vmem, size = 0x1000, scoped, tag = 'scratch operand']
  #allocation9 [shape = 'bf16[8,256]{1,0:T(8,128)(2,1)}', space=vmem, size = 0x1000, scoped, tag = 'scratch operand']
  %s0 = inlined_call_operand.smem [shape: u32[36], index: -1, kind: input, shape index: {}]
  %s1 = sld [smem:[%s0]]
  %s2 = scalar_lea.smem %s0, 1
  %s3 = sld [smem:[%s2]]
  %s4 = scalar_lea.smem %s0, 2
  %s5 = sld [smem:[%s4]]
  %s6 = scalar_lea.smem %s0, 3
  %s7 = sld [smem:[%s6]]
  %s8 = scalar_lea.smem %s0, 4
  %s9 = sld [smem:[%s8]]
  %s10 = scalar_lea.smem %s0, 5
  %s11 = sld [smem:[%s10]]
  %s12 = scalar_lea.smem %s0, 6
  %s13 = sld [smem:[%s12]]
  %s14 = scalar_lea.smem %s0, 7
  %s15 = sld [smem:[%s14]]
  %s16 = scalar_lea.smem %s0, 8
  %s17 = sld [smem:[%s16]]
  %s18 = scalar_lea.smem %s0, 9
  %s19 = sld [smem:[%s18]]
  %s20 = scalar_lea.smem %s0, 10
  %s21 = sld [smem:[%s20]]
  %s22 = scalar_lea.smem %s0, 11
  %s23 = sld [smem:[%s22]]
  %s24 = scalar_lea.smem %s0, 12
  %s25 = sld [smem:[%s24]]
  %s26 = scalar_lea.smem %s0, 13
  %s27 = sld [smem:[%s26]]
  %s28 = scalar_lea.smem %s0, 14
  %s29 = sld [smem:[%s28]]
  %s30 = scalar_lea.smem %s0, 15
  %s31 = sld [smem:[%s30]]
  %s32 = scalar_lea.smem %s0, 16
  %s33 = sld [smem:[%s32]]
  %s34 = scalar_lea.smem %s0, 17
  %s35 = sld [smem:[%s34]]
  %s36 = scalar_lea.smem %s0, 18
  %s37 = sld [smem:[%s36]]
  %s38 = scalar_lea.smem %s0, 19
  %s39 = sld [smem:[%s38]]
  %s40 = scalar_lea.smem %s0, 20
  %s41 = sld [smem:[%s40]]
  %s42 = scalar_lea.smem %s0, 21
  %s43 = sld [smem:[%s42]]
  %s44 = scalar_lea.smem %s0, 22
  %s45 = sld [smem:[%s44]]
  %s46 = scalar_lea.smem %s0, 23
  %s47 = sld [smem:[%s46]]
  %s48 = scalar_lea.smem %s0, 24
  %s49 = sld [smem:[%s48]]
  %s50 = scalar_lea.smem %s0, 25
  %s51 = sld [smem:[%s50]]
  %s52 = scalar_lea.smem %s0, 26
  %s53 = sld [smem:[%s52]]
  %s54 = scalar_lea.smem %s0, 27
  %s55 = sld [smem:[%s54]]
  %s56 = scalar_lea.smem %s0, 28
  %s57 = sld [smem:[%s56]]
  %s58 = scalar_lea.smem %s0, 29
  %s59 = sld [smem:[%s58]]
  %s60 = scalar_lea.smem %s0, 30
  %s61 = sld [smem:[%s60]]
  %s62 = scalar_lea.smem %s0, 31
  %s63 = sld [smem:[%s62]]
  %s64 = scalar_lea.smem %s0, 32
  %s65 = sld [smem:[%s64]]
  %s66 = scalar_lea.smem %s0, 33
  %s67 = sld [smem:[%s66]]
  %s68 = scalar_lea.smem %s0, 34
  %s69 = sld [smem:[%s68]]
  %s70 = scalar_lea.smem %s0, 35
  %s71 = sld [smem:[%s70]]
  %s72 = sld [smem:[#allocation0]]
  $region262: #{image_encoder_cnn_forward.1} parent=0
    _
  %s74 = ssub.s32 1, %s72
  %s75 = scalar_select 0, %s74, %s72
  $region1: #{image_encoder_cnn_forward.1} parent=0
    #allocation10 [shape = 'u8[159744]{0}', space=vmem, size = 0x27000, scoped, tag = 'input window, operand 1, single buffered']
    #allocation11 [shape = 's32[1]{0}', space=sflag, size = 0x4, scoped, tag = 'scoped memory for image_encoder_cnn_forward.1']
    #allocation12 [shape = 's32[1]{0}', space=sflag, size = 0x4, scoped, tag = 'scoped memory for image_encoder_cnn_forward.1']
    #allocation13 [shape = 'u8[1024]{0}', space=vmem, size = 0x400, scoped, tag = 'input window, operand 2, single buffered']
    #allocation14 [shape = 's32[1]{0}', space=sflag, size = 0x4, scoped, tag = 'scoped memory for image_encoder_cnn_forward.1']
    #allocation15 [shape = 'u8[131072]{0}', space=vmem, size = 0x20000, scoped, tag = 'input window, operand 3, single buffered']
    #allocation16 [shape = 'u8[16384]{0}', space=vmem, size = 0x4000, scoped, tag = 'input window, operand 4, single buffered']
    #allocation17 [shape = 's32[1]{0}', space=sflag, size = 0x4, scoped, tag = 'scoped memory for image_encoder_cnn_forward.1']
    #allocation18 [shape = 'u8[221184]{0}', space=vmem, size = 0x36000, scoped, tag = 'input window, operand 5, single buffered']
    #allocation19 [shape = 'u8[1024]{0}', space=vmem, size = 0x400, scoped, tag = 'input window, operand 6, single buffered']
    #allocation20 [shape = 's32[1]{0}', space=sflag, size = 0x4, scoped, tag = 'scoped memory for image_encoder_cnn_forward.1']
    #allocation21 [shape = 'u8[131072]{0}', space=vmem, size = 0x20000, scoped, tag = 'input window, operand 7, single buffered']
    #allocation22 [shape = 'u8[245760]{0}', space=vmem, size = 0x3c000, scoped, tag = 'input window, operand 9, single buffered']
    #allocation23 [shape = 's32[1]{0}', space=sflag, size = 0x4, scoped, tag = 'scoped memory for image_encoder_cnn_forward.1']
    #allocation24 [shape = 'u8[1024]{0}', space=vmem, size = 0x400, scoped, tag = 'input window, operand 10, single buffered']
    #allocation25 [shape = 'u8[1024]{0}', space=vmem, size = 0x400, scoped, tag = 'input window, operand 12, single buffered']
    #allocation26 [shape = 's32[1]{0}', space=sflag, size = 0x4, scoped, tag = 'scoped memory for image_encoder_cnn_forward.1']
    #allocation27 [shape = 'u8[131072]{0}', space=vmem, size = 0x20000, scoped, tag = 'input window, operand 13, single buffered']
    #allocation28 [shape = 'u8[294912]{0}', space=vmem, size = 0x48000, scoped, tag = 'input window, operand 15, single buffered']
    #allocation29 [shape = 's32[1]{0}', space=sflag, size = 0x4, scoped, tag = 'scoped memory for image_encoder_cnn_forward.1']
    #allocation30 [shape = 'u8[1024]{0}', space=vmem, size = 0x400, scoped, tag = 'input window, operand 16, single buffered']
    #allocation31 [shape = 'u8[589824]{0}', space=vmem, size = 0x90000, scoped, tag = 'input window, operand 17, single buffered']
    #allocation32 [shape = 's32[1]{0}', space=sflag, size = 0x4, scoped, tag = 'scoped memory for image_encoder_cnn_forward.1']
    #allocation33 [shape = 'u8[1024]{0}', space=vmem, size = 0x400, scoped, tag = 'input window, operand 18, single buffered']
    #allocation34 [shape = 'u8[131072]{0}', space=vmem, size = 0x20000, scoped, tag = 'input window, operand 19, single buffered']
    #allocation35 [shape = 's32[1]{0}', space=sflag, size = 0x4, scoped, tag = 'scoped memory for image_encoder_cnn_forward.1']
    #allocation36 [shape = 'u8[196608]{0}', space=vmem, size = 0x30000, scoped, tag = 'input window, operand 21, single buffered']
    #allocation37 [shape = 'u8[512]{0}', space=vmem, size = 0x400, scoped, tag = 'input window, operand 22, single buffered']
    #allocation38 [shape = 's32[1]{0}', space=sflag, size = 0x4, scoped, tag = 'scoped memory for image_encoder_cnn_forward.1']
    #allocation39 [shape = 'u8[196608]{0}', space=vmem, size = 0x30000, scoped, tag = 'input window, operand 23, single buffered']
    #allocation40 [shape = 'u8[512]{0}', space=vmem, size = 0x400, scoped, tag = 'input window, operand 24, single buffered']
    #allocation41 [shape = 's32[1]{0}', space=sflag, size = 0x4, scoped, tag = 'scoped memory for image_encoder_cnn_forward.1']
    #allocation42 [shape = 'u8[1024]{0}', space=vmem, size = 0x400, scoped, tag = 'input window, operand 26, single buffered']
    #allocation43 [shape = 'u8[32768]{0}', space=vmem, size = 0x8000, scoped, tag = 'input window, operand 27, single buffered']
    #allocation44 [shape = 's32[1]{0}', space=sflag, size = 0x4, scoped, tag = 'scoped memory for image_encoder_cnn_forward.1']
    #allocation45 [shape = 'u8[1024]{0}', space=vmem, size = 0x400, scoped, tag = 'input window, operand 28, single buffered']
    #allocation46 [shape = 'u8[131072]{0}', space=vmem, size = 0x20000, scoped, tag = 'input window, operand 29, single buffered']
    #allocation47 [shape = 's32[1]{0}', space=sflag, size = 0x4, scoped, tag = 'scoped memory for image_encoder_cnn_forward.1']
    #allocation48 [shape = 'u8[1024]{0}', space=vmem, size = 0x400, scoped, tag = 'input window, operand 30, single buffered']
    #allocation49 [shape = 'u8[512]{0}', space=vmem, size = 0x400, scoped, tag = 'input window, operand 32, single buffered']
    #allocation50 [shape = 's32[1]{0}', space=sflag, size = 0x4, scoped, tag = 'scoped memory for image_encoder_cnn_forward.1']
    #allocation51 [shape = 'u8[512]{0}', space=vmem, size = 0x400, scoped, tag = 'input window, operand 33, single buffered']
    #allocation52 [shape = 'u8[512]{0}', space=vmem, size = 0x400, scoped, tag = 'input window, operand 34, single buffered']
    #allocation53 [shape = 's32[1]{0}', space=sflag, size = 0x4, scoped, tag = 'scoped memory for image_encoder_cnn_forward.1']
    #allocation54 [shape = 'u8[1024]{0}', space=vmem, size = 0x400, scoped, tag = 'output window, operand 0, single buffered']
    %76 = vsyncpa [#allocation11], 0
    %77 = vsyncpa [#allocation14], 0
    %78 = vsyncpa [#allocation17], 0
    %79 = vsyncpa [#allocation20], 0
    %80 = vsyncpa [#allocation23], 0
    %81 = vsyncpa [#allocation26], 0
    %82 = vsyncpa [#allocation29], 0
    %83 = vsyncpa [#allocation32], 0
    %84 = vsyncpa [#allocation35], 0
    %85 = vsyncpa [#allocation38], 0
    %86 = vsyncpa [#allocation41], 0
    %87 = vsyncpa [#allocation44], 0
    %88 = vsyncpa [#allocation47], 0
    %89 = vsyncpa [#allocation50], 0
    %90 = vsyncpa [#allocation53], 0
    %91 = vsyncpa [#allocation12], 0
    // Predicated region
    $region2: #{image_encoder_cnn_forward.1} parent=1 // pred_check
      _
    $region3: #{image_encoder_cnn_forward.1} parent=1 // pred_check_branch
      %93 = sbr.rel (0) target = $region5
    $region4: #{image_encoder_cnn_forward.1} parent=1 // pred_region
      _
    $region5: #{image_encoder_cnn_forward.1} parent=1 // pred_fallthru
      _
    // Predicated region
    $region6: #{image_encoder_cnn_forward.1} parent=1 // pred_check
      _
    $region7: #{image_encoder_cnn_forward.1} parent=1 // pred_check_branch
      %95 = sbr.rel (0) target = $region9
    $region8: #{image_encoder_cnn_forward.1} parent=1 // pred_region
      %s97 = ssub.s32 4992, 4992
      %98 = vsyncadd [#allocation11], %s97
      %s99 = sshll.u32 [#allocation10], 4
      %s100 = int_to_ptr.vmem [resolvable:$true] %s99
      %105 = dma.hbm_to_vmem [thread:$0]  %s3, 4992, %s100, [#allocation11], 128, 128, 8
    $region9: #{image_encoder_cnn_forward.1} parent=1 // pred_fallthru
      _
    // Predicated region
    $region10: #{image_encoder_cnn_forward.1} parent=1 // pred_check
      _
    $region11: #{image_encoder_cnn_forward.1} parent=1 // pred_check_branch
      %107 = sbr.rel (0) target = $region13
    $region12: #{image_encoder_cnn_forward.1} parent=1 // pred_region
      %s109 = ssub.s32 32, 32
      %110 = vsyncadd [#allocation14], %s109
      %s112 = sshll.u32 [#allocation13], 4
      %s113 = int_to_ptr.vmem [resolvable:$true] %s112
      %115 = dma.hbm_to_vmem [thread:$0]  %s5, 32, %s113, [#allocation14]
    $region13: #{image_encoder_cnn_forward.1} parent=1 // pred_fallthru
      _
    // Predicated region
    $region14: #{image_encoder_cnn_forward.1} parent=1 // pred_check
      _
    $region15: #{image_encoder_cnn_forward.1} parent=1 // pred_check_branch
      %117 = sbr.rel (0) target = $region17
    $region16: #{image_encoder_cnn_forward.1} parent=1 // pred_region
      %s119 = ssub.s32 4096, 4096
      %120 = vsyncadd [#allocation14], %s119
      %s121 = sshll.u32 [#allocation15], 4
      %s122 = int_to_ptr.vmem [resolvable:$true] %s121
      %127 = dma.hbm_to_vmem [thread:$0]  %s7, 4096, %s122, [#allocation14], 64, 64, 4
    $region17: #{image_encoder_cnn_forward.1} parent=1 // pred_fallthru
      _
    // Predicated region
    $region18: #{image_encoder_cnn_forward.1} parent=1 // pred_check
      _
    $region19: #{image_encoder_cnn_forward.1} parent=1 // pred_check_branch
      %129 = sbr.rel (0) target = $region21
    $region20: #{image_encoder_cnn_forward.1} parent=1 // pred_region
      %s131 = ssub.s32 512, 512
      %132 = vsyncadd [#allocation17], %s131
      %s133 = sshll.u32 [#allocation16], 4
      %s134 = int_to_ptr.vmem [resolvable:$true] %s133
      %139 = dma.hbm_to_vmem [thread:$0]  %s9, 512, %s134, [#allocation17], 64, 64, 4
    $region21: #{image_encoder_cnn_forward.1} parent=1 // pred_fallthru
      _
    // Predicated region
    $region22: #{image_encoder_cnn_forward.1} parent=1 // pred_check
      _
    $region23: #{image_encoder_cnn_forward.1} parent=1 // pred_check_branch
      %141 = sbr.rel (0) target = $region25
    $region24: #{image_encoder_cnn_forward.1} parent=1 // pred_region
      %s143 = ssub.s32 6912, 6912
      %144 = vsyncadd [#allocation17], %s143
      %s145 = sshll.u32 [#allocation18], 4
      %s146 = int_to_ptr.vmem [resolvable:$true] %s145
      %151 = dma.hbm_to_vmem [thread:$0]  %s11, 6912, %s146, [#allocation17], 128, 128, 8
    $region25: #{image_encoder_cnn_forward.1} parent=1 // pred_fallthru
      _
    // Predicated region
    $region26: #{image_encoder_cnn_forward.1} parent=1 // pred_check
      _
    $region27: #{image_encoder_cnn_forward.1} parent=1 // pred_check_branch
      %153 = sbr.rel (0) target = $region29
    $region28: #{image_encoder_cnn_forward.1} parent=1 // pred_region
      %s155 = ssub.s32 32, 32
      %156 = vsyncadd [#allocation20], %s155
      %s158 = sshll.u32 [#allocation19], 4
      %s159 = int_to_ptr.vmem [resolvable:$true] %s158
      %161 = dma.hbm_to_vmem [thread:$0]  %s13, 32, %s159, [#allocation20]
    $region29: #{image_encoder_cnn_forward.1} parent=1 // pred_fallthru
      _
    // Predicated region
    $region30: #{image_encoder_cnn_forward.1} parent=1 // pred_check
      _
    $region31: #{image_encoder_cnn_forward.1} parent=1 // pred_check_branch
      %163 = sbr.rel (0) target = $region33
    $region32: #{image_encoder_cnn_forward.1} parent=1 // pred_region
      %s165 = ssub.s32 4096, 4096
      %166 = vsyncadd [#allocation20], %s165
      %s167 = sshll.u32 [#allocation21], 4
      %s168 = int_to_ptr.vmem [resolvable:$true] %s167
      %173 = dma.hbm_to_vmem [thread:$0]  %s15, 4096, %s168, [#allocation20], 64, 64, 4
    $region33: #{image_encoder_cnn_forward.1} parent=1 // pred_fallthru
      _
    // Predicated region
    $region34: #{image_encoder_cnn_forward.1} parent=1 // pred_check
      _
    $region35: #{image_encoder_cnn_forward.1} parent=1 // pred_check_branch
      %175 = sbr.rel (0) target = $region37
    $region36: #{image_encoder_cnn_forward.1} parent=1 // pred_region
      _
    $region37: #{image_encoder_cnn_forward.1} parent=1 // pred_fallthru
      _
    // Predicated region
    $region38: #{image_encoder_cnn_forward.1} parent=1 // pred_check
      _
    $region39: #{image_encoder_cnn_forward.1} parent=1 // pred_check_branch
      %177 = sbr.rel (0) target = $region41
    $region40: #{image_encoder_cnn_forward.1} parent=1 // pred_region
      %s179 = ssub.s32 7680, 7680
      %180 = vsyncadd [#allocation23], %s179
      %s181 = sshll.u32 [#allocation22], 4
      %s182 = int_to_ptr.vmem [resolvable:$true] %s181
      %187 = dma.hbm_to_vmem [thread:$0]  %s19, 7680, %s182, [#allocation23], 128, 128, 8
    $region41: #{image_encoder_cnn_forward.1} parent=1 // pred_fallthru
      _
    // Predicated region
    $region42: #{image_encoder_cnn_forward.1} parent=1 // pred_check
      _
    $region43: #{image_encoder_cnn_forward.1} parent=1 // pred_check_branch
      %189 = sbr.rel (0) target = $region45
    $region44: #{image_encoder_cnn_forward.1} parent=1 // pred_region
      %s191 = ssub.s32 32, 32
      %192 = vsyncadd [#allocation23], %s191
      %s194 = sshll.u32 [#allocation24], 4
      %s195 = int_to_ptr.vmem [resolvable:$true] %s194
      %197 = dma.hbm_to_vmem [thread:$0]  %s21, 32, %s195, [#allocation23]
    $region45: #{image_encoder_cnn_forward.1} parent=1 // pred_fallthru
      _
    // Predicated region
    $region46: #{image_encoder_cnn_forward.1} parent=1 // pred_check
      _
    $region47: #{image_encoder_cnn_forward.1} parent=1 // pred_check_branch
      %199 = sbr.rel (0) target = $region49
    $region48: #{image_encoder_cnn_forward.1} parent=1 // pred_region
      _
    $region49: #{image_encoder_cnn_forward.1} parent=1 // pred_fallthru
      _
    // Predicated region
    $region50: #{image_encoder_cnn_forward.1} parent=1 // pred_check
      _
    $region51: #{image_encoder_cnn_forward.1} parent=1 // pred_check_branch
      %201 = sbr.rel (0) target = $region53
    $region52: #{image_encoder_cnn_forward.1} parent=1 // pred_region
      %s203 = ssub.s32 32, 32
      %204 = vsyncadd [#allocation26], %s203
      %s206 = sshll.u32 [#allocation25], 4
      %s207 = int_to_ptr.vmem [resolvable:$true] %s206
      %209 = dma.hbm_to_vmem [thread:$0]  %s25, 32, %s207, [#allocation26]
    $region53: #{image_encoder_cnn_forward.1} parent=1 // pred_fallthru
      _
    // Predicated region
    $region54: #{image_encoder_cnn_forward.1} parent=1 // pred_check
      _
    $region55: #{image_encoder_cnn_forward.1} parent=1 // pred_check_branch
      %211 = sbr.rel (0) target = $region57
    $region56: #{image_encoder_cnn_forward.1} parent=1 // pred_region
      %s213 = ssub.s32 4096, 4096
      %214 = vsyncadd [#allocation26], %s213
      %s215 = sshll.u32 [#allocation27], 4
      %s216 = int_to_ptr.vmem [resolvable:$true] %s215
      %221 = dma.hbm_to_vmem [thread:$0]  %s27, 4096, %s216, [#allocation26], 64, 64, 4
    $region57: #{image_encoder_cnn_forward.1} parent=1 // pred_fallthru
      _
    // Predicated region
    $region58: #{image_encoder_cnn_forward.1} parent=1 // pred_check
      _
    $region59: #{image_encoder_cnn_forward.1} parent=1 // pred_check_branch
      %223 = sbr.rel (0) target = $region61
    $region60: #{image_encoder_cnn_forward.1} parent=1 // pred_region
      _
    $region61: #{image_encoder_cnn_forward.1} parent=1 // pred_fallthru
      _
    // Predicated region
    $region62: #{image_encoder_cnn_forward.1} parent=1 // pred_check
      _
    $region63: #{image_encoder_cnn_forward.1} parent=1 // pred_check_branch
      %225 = sbr.rel (0) target = $region65
    $region64: #{image_encoder_cnn_forward.1} parent=1 // pred_region
      %s227 = ssub.s32 9216, 9216
      %228 = vsyncadd [#allocation29], %s227
      %s229 = sshll.u32 [#allocation28], 4
      %s230 = int_to_ptr.vmem [resolvable:$true] %s229
      %235 = dma.hbm_to_vmem [thread:$0]  %s31, 9216, %s230, [#allocation29], 128, 128, 8
    $region65: #{image_encoder_cnn_forward.1} parent=1 // pred_fallthru
      _
    // Predicated region
    $region66: #{image_encoder_cnn_forward.1} parent=1 // pred_check
      _
    $region67: #{image_encoder_cnn_forward.1} parent=1 // pred_check_branch
      %237 = sbr.rel (0) target = $region69
    $region68: #{image_encoder_cnn_forward.1} parent=1 // pred_region
      %s239 = ssub.s32 32, 32
      %240 = vsyncadd [#allocation29], %s239
      %s242 = sshll.u32 [#allocation30], 4
      %s243 = int_to_ptr.vmem [resolvable:$true] %s242
      %245 = dma.hbm_to_vmem [thread:$0]  %s33, 32, %s243, [#allocation29]
    $region69: #{image_encoder_cnn_forward.1} parent=1 // pred_fallthru
      _
    // Predicated region
    $region70: #{image_encoder_cnn_forward.1} parent=1 // pred_check
      _
    $region71: #{image_encoder_cnn_forward.1} parent=1 // pred_check_branch
      %247 = sbr.rel (0) target = $region73
    $region72: #{image_encoder_cnn_forward.1} parent=1 // pred_region
      %s249 = ssub.s32 18432, 18432
      %250 = vsyncadd [#allocation32], %s249
      %s251 = sshll.u32 [#allocation31], 4
      %s252 = int_to_ptr.vmem [resolvable:$true] %s251
      %257 = dma.hbm_to_vmem [thread:$0]  %s35, 18432, %s252, [#allocation32], 128, 128, 8
    $region73: #{image_encoder_cnn_forward.1} parent=1 // pred_fallthru
      _
    // Predicated region
    $region74: #{image_encoder_cnn_forward.1} parent=1 // pred_check
      _
    $region75: #{image_encoder_cnn_forward.1} parent=1 // pred_check_branch
      %259 = sbr.rel (0) target = $region77
    $region76: #{image_encoder_cnn_forward.1} parent=1 // pred_region
      %s261 = ssub.s32 32, 32
      %262 = vsyncadd [#allocation32], %s261
      %s264 = sshll.u32 [#allocation33], 4
      %s265 = int_to_ptr.vmem [resolvable:$true] %s264
      %267 = dma.hbm_to_vmem [thread:$0]  %s37, 32, %s265, [#allocation32]
    $region77: #{image_encoder_cnn_forward.1} parent=1 // pred_fallthru
      _
    // Predicated region
    $region78: #{image_encoder_cnn_forward.1} parent=1 // pred_check
      _
    $region79: #{image_encoder_cnn_forward.1} parent=1 // pred_check_branch
      %269 = sbr.rel (0) target = $region81
    $region80: #{image_encoder_cnn_forward.1} parent=1 // pred_region
      %s271 = ssub.s32 4096, 4096
      %272 = vsyncadd [#allocation35], %s271
      %s273 = sshll.u32 [#allocation34], 4
      %s274 = int_to_ptr.vmem [resolvable:$true] %s273
      %279 = dma.hbm_to_vmem [thread:$0]  %s39, 4096, %s274, [#allocation35], 64, 64, 4
    $region81: #{image_encoder_cnn_forward.1} parent=1 // pred_fallthru
      _
    // Predicated region
    $region82: #{image_encoder_cnn_forward.1} parent=1 // pred_check
      _
    $region83: #{image_encoder_cnn_forward.1} parent=1 // pred_check_branch
      %281 = sbr.rel (0) target = $region85
    $region84: #{image_encoder_cnn_forward.1} parent=1 // pred_region
      _
    $region85: #{image_encoder_cnn_forward.1} parent=1 // pred_fallthru
      _
    // Predicated region
    $region86: #{image_encoder_cnn_forward.1} parent=1 // pred_check
      _
    $region87: #{image_encoder_cnn_forward.1} parent=1 // pred_check_branch
      %283 = sbr.rel (0) target = $region89
    $region88: #{image_encoder_cnn_forward.1} parent=1 // pred_region
      %s285 = ssub.s32 6144, 6144
      %286 = vsyncadd [#allocation35], %s285
      %s287 = sshll.u32 [#allocation36], 4
      %s288 = int_to_ptr.vmem [resolvable:$true] %s287
      %293 = dma.hbm_to_vmem [thread:$0]  %s43, 6144, %s288, [#allocation35], 64, 64, 4
    $region89: #{image_encoder_cnn_forward.1} parent=1 // pred_fallthru
      _
    // Predicated region
    $region90: #{image_encoder_cnn_forward.1} parent=1 // pred_check
      _
    $region91: #{image_encoder_cnn_forward.1} parent=1 // pred_check_branch
      %295 = sbr.rel (0) target = $region93
    $region92: #{image_encoder_cnn_forward.1} parent=1 // pred_region
      %s297 = ssub.s32 16, 16
      %298 = vsyncadd [#allocation38], %s297
      %s300 = sshll.u32 [#allocation37], 4
      %s301 = int_to_ptr.vmem [resolvable:$true] %s300
      %303 = dma.hbm_to_vmem [thread:$0]  %s45, 16, %s301, [#allocation38]
    $region93: #{image_encoder_cnn_forward.1} parent=1 // pred_fallthru
      _
    // Predicated region
    $region94: #{image_encoder_cnn_forward.1} parent=1 // pred_check
      _
    $region95: #{image_encoder_cnn_forward.1} parent=1 // pred_check_branch
      %305 = sbr.rel (0) target = $region97
    $region96: #{image_encoder_cnn_forward.1} parent=1 // pred_region
      %s307 = ssub.s32 6144, 6144
      %308 = vsyncadd [#allocation38], %s307
      %s309 = sshll.u32 [#allocation39], 4
      %s310 = int_to_ptr.vmem [resolvable:$true] %s309
      %315 = dma.hbm_to_vmem [thread:$0]  %s47, 6144, %s310, [#allocation38], 64, 64, 4
    $region97: #{image_encoder_cnn_forward.1} parent=1 // pred_fallthru
      _
    // Predicated region
    $region98: #{image_encoder_cnn_forward.1} parent=1 // pred_check
      _
    $region99: #{image_encoder_cnn_forward.1} parent=1 // pred_check_branch
      %317 = sbr.rel (0) target = $region101
    $region100: #{image_encoder_cnn_forward.1} parent=1 // pred_region
      %s319 = ssub.s32 16, 16
      %320 = vsyncadd [#allocation41], %s319
      %s322 = sshll.u32 [#allocation40], 4
      %s323 = int_to_ptr.vmem [resolvable:$true] %s322
      %325 = dma.hbm_to_vmem [thread:$0]  %s49, 16, %s323, [#allocation41]
    $region101: #{image_encoder_cnn_forward.1} parent=1 // pred_fallthru
      _
    // Predicated region
    $region102: #{image_encoder_cnn_forward.1} parent=1 // pred_check
      _
    $region103: #{image_encoder_cnn_forward.1} parent=1 // pred_check_branch
      %327 = sbr.rel (0) target = $region105
    $region104: #{image_encoder_cnn_forward.1} parent=1 // pred_region
      _
    $region105: #{image_encoder_cnn_forward.1} parent=1 // pred_fallthru
      _
    // Predicated region
    $region106: #{image_encoder_cnn_forward.1} parent=1 // pred_check
      _
    $region107: #{image_encoder_cnn_forward.1} parent=1 // pred_check_branch
      %329 = sbr.rel (0) target = $region109
    $region108: #{image_encoder_cnn_forward.1} parent=1 // pred_region
      %s331 = ssub.s32 32, 32
      %332 = vsyncadd [#allocation41], %s331
      %s333 = sshll.u32 [#allocation42], 4
      %s334 = int_to_ptr.vmem [resolvable:$true] %s333
      %339 = dma.hbm_to_vmem [thread:$0]  %s53, 32, %s334, [#allocation41], 16, 16, 1
    $region109: #{image_encoder_cnn_forward.1} parent=1 // pred_fallthru
      _
    // Predicated region
    $region110: #{image_encoder_cnn_forward.1} parent=1 // pred_check
      _
    $region111: #{image_encoder_cnn_forward.1} parent=1 // pred_check_branch
      %341 = sbr.rel (0) target = $region113
    $region112: #{image_encoder_cnn_forward.1} parent=1 // pred_region
      %s343 = ssub.s32 1024, 1024
      %344 = vsyncadd [#allocation44], %s343
      %s345 = sshll.u32 [#allocation43], 4
      %s346 = int_to_ptr.vmem [resolvable:$true] %s345
      %351 = dma.hbm_to_vmem [thread:$0]  %s55, 1024, %s346, [#allocation44], 128, 128, 8
    $region113: #{image_encoder_cnn_forward.1} parent=1 // pred_fallthru
      _
    // Predicated region
    $region114: #{image_encoder_cnn_forward.1} parent=1 // pred_check
      _
    $region115: #{image_encoder_cnn_forward.1} parent=1 // pred_check_branch
      %353 = sbr.rel (0) target = $region117
    $region116: #{image_encoder_cnn_forward.1} parent=1 // pred_region
      %s355 = ssub.s32 32, 32
      %356 = vsyncadd [#allocation44], %s355
      %s358 = sshll.u32 [#allocation45], 4
      %s359 = int_to_ptr.vmem [resolvable:$true] %s358
      %361 = dma.hbm_to_vmem [thread:$0]  %s57, 32, %s359, [#allocation44]
    $region117: #{image_encoder_cnn_forward.1} parent=1 // pred_fallthru
      _
    // Predicated region
    $region118: #{image_encoder_cnn_forward.1} parent=1 // pred_check
      _
    $region119: #{image_encoder_cnn_forward.1} parent=1 // pred_check_branch
      %363 = sbr.rel (0) target = $region121
    $region120: #{image_encoder_cnn_forward.1} parent=1 // pred_region
      %s365 = ssub.s32 4096, 4096
      %366 = vsyncadd [#allocation47], %s365
      %s367 = sshll.u32 [#allocation46], 4
      %s368 = int_to_ptr.vmem [resolvable:$true] %s367
      %373 = dma.hbm_to_vmem [thread:$0]  %s59, 4096, %s368, [#allocation47], 128, 128, 8
    $region121: #{image_encoder_cnn_forward.1} parent=1 // pred_fallthru
      _
    // Predicated region
    $region122: #{image_encoder_cnn_forward.1} parent=1 // pred_check
      _
    $region123: #{image_encoder_cnn_forward.1} parent=1 // pred_check_branch
      %375 = sbr.rel (0) target = $region125
    $region124: #{image_encoder_cnn_forward.1} parent=1 // pred_region
      %s377 = ssub.s32 32, 32
      %378 = vsyncadd [#allocation47], %s377
      %s380 = sshll.u32 [#allocation48], 4
      %s381 = int_to_ptr.vmem [resolvable:$true] %s380
      %383 = dma.hbm_to_vmem [thread:$0]  %s61, 32, %s381, [#allocation47]
    $region125: #{image_encoder_cnn_forward.1} parent=1 // pred_fallthru
      _
    // Predicated region
    $region126: #{image_encoder_cnn_forward.1} parent=1 // pred_check
      _
    $region127: #{image_encoder_cnn_forward.1} parent=1 // pred_check_branch
      %385 = sbr.rel (0) target = $region129
    $region128: #{image_encoder_cnn_forward.1} parent=1 // pred_region
      _
    $region129: #{image_encoder_cnn_forward.1} parent=1 // pred_fallthru
      _
    // Predicated region
    $region130: #{image_encoder_cnn_forward.1} parent=1 // pred_check
      _
    $region131: #{image_encoder_cnn_forward.1} parent=1 // pred_check_branch
      %387 = sbr.rel (0) target = $region133
    $region132: #{image_encoder_cnn_forward.1} parent=1 // pred_region
      %s389 = ssub.s32 16, 16
      %390 = vsyncadd [#allocation50], %s389
      %s392 = sshll.u32 [#allocation49], 4
      %s393 = int_to_ptr.vmem [resolvable:$true] %s392
      %395 = dma.hbm_to_vmem [thread:$0]  %s65, 16, %s393, [#allocation50]
    $region133: #{image_encoder_cnn_forward.1} parent=1 // pred_fallthru
      _
    // Predicated region
    $region134: #{image_encoder_cnn_forward.1} parent=1 // pred_check
      _
    $region135: #{image_encoder_cnn_forward.1} parent=1 // pred_check_branch
      %397 = sbr.rel (0) target = $region137
    $region136: #{image_encoder_cnn_forward.1} parent=1 // pred_region
      %s399 = ssub.s32 16, 16
      %400 = vsyncadd [#allocation50], %s399
      %s402 = sshll.u32 [#allocation51], 4
      %s403 = int_to_ptr.vmem [resolvable:$true] %s402
      %405 = dma.hbm_to_vmem [thread:$0]  %s67, 16, %s403, [#allocation50]
    $region137: #{image_encoder_cnn_forward.1} parent=1 // pred_fallthru
      _
    // Predicated region
    $region138: #{image_encoder_cnn_forward.1} parent=1 // pred_check
      _
    $region139: #{image_encoder_cnn_forward.1} parent=1 // pred_check_branch
      %407 = sbr.rel (0) target = $region141
    $region140: #{image_encoder_cnn_forward.1} parent=1 // pred_region
      %s409 = ssub.s32 16, 16
      %410 = vsyncadd [#allocation53], %s409
      %s412 = sshll.u32 [#allocation52], 4
      %s413 = int_to_ptr.vmem [resolvable:$true] %s412
      %415 = dma.hbm_to_vmem [thread:$0]  %s69, 16, %s413, [#allocation53]
    $region141: #{image_encoder_cnn_forward.1} parent=1 // pred_fallthru
      _
    // Predicated region
    $region142: #{image_encoder_cnn_forward.1} parent=1 // pred_check
      _
    $region143: #{image_encoder_cnn_forward.1} parent=1 // pred_check_branch
      %417 = sbr.rel (0) target = $region145
    $region144: #{image_encoder_cnn_forward.1} parent=1 // pred_region
      %418 = dma.done [#allocation11], 4992
    $region145: #{image_encoder_cnn_forward.1} parent=1 // pred_fallthru
      _
    // Predicated region
    $region146: #{image_encoder_cnn_forward.1} parent=1 // pred_check
      _
    $region147: #{image_encoder_cnn_forward.1} parent=1 // pred_check_branch
      %420 = sbr.rel (0) target = $region149
    $region148: #{image_encoder_cnn_forward.1} parent=1 // pred_region
      %421 = dma.done [#allocation14], 32
    $region149: #{image_encoder_cnn_forward.1} parent=1 // pred_fallthru
      _
    // Predicated region
    $region150: #{image_encoder_cnn_forward.1} parent=1 // pred_check
      _
    $region151: #{image_encoder_cnn_forward.1} parent=1 // pred_check_branch
      %423 = sbr.rel (0) target = $region153
    $region152: #{image_encoder_cnn_forward.1} parent=1 // pred_region
      %424 = dma.done [#allocation14], 4096
    $region153: #{image_encoder_cnn_forward.1} parent=1 // pred_fallthru
      _
    // Predicated region
    $region154: #{image_encoder_cnn_forward.1} parent=1 // pred_check
      _
    $region155: #{image_encoder_cnn_forward.1} parent=1 // pred_check_branch
      %426 = sbr.rel (0) target = $region157
    $region156: #{image_encoder_cnn_forward.1} parent=1 // pred_region
      %427 = dma.done [#allocation17], 512
    $region157: #{image_encoder_cnn_forward.1} parent=1 // pred_fallthru
      _
    // Predicated region
    $region158: #{image_encoder_cnn_forward.1} parent=1 // pred_check
      _
    $region159: #{image_encoder_cnn_forward.1} parent=1 // pred_check_branch
      %429 = sbr.rel (0) target = $region161
    $region160: #{image_encoder_cnn_forward.1} parent=1 // pred_region
      %430 = dma.done [#allocation17], 6912
    $region161: #{image_encoder_cnn_forward.1} parent=1 // pred_fallthru
      _
    // Predicated region
    $region162: #{image_encoder_cnn_forward.1} parent=1 // pred_check
      _
    $region163: #{image_encoder_cnn_forward.1} parent=1 // pred_check_branch
      %432 = sbr.rel (0) target = $region165
    $region164: #{image_encoder_cnn_forward.1} parent=1 // pred_region
      %433 = dma.done [#allocation20], 32
    $region165: #{image_encoder_cnn_forward.1} parent=1 // pred_fallthru
      _
    // Predicated region
    $region166: #{image_encoder_cnn_forward.1} parent=1 // pred_check
      _
    $region167: #{image_encoder_cnn_forward.1} parent=1 // pred_check_branch
      %435 = sbr.rel (0) target = $region169
    $region168: #{image_encoder_cnn_forward.1} parent=1 // pred_region
      %436 = dma.done [#allocation20], 4096
    $region169: #{image_encoder_cnn_forward.1} parent=1 // pred_fallthru
      _
    // Predicated region
    $region170: #{image_encoder_cnn_forward.1} parent=1 // pred_check
      _
    $region171: #{image_encoder_cnn_forward.1} parent=1 // pred_check_branch
      %438 = sbr.rel (0) target = $region173
    $region172: #{image_encoder_cnn_forward.1} parent=1 // pred_region
      %439 = dma.done [#allocation23], 7680
    $region173: #{image_encoder_cnn_forward.1} parent=1 // pred_fallthru
      _
    // Predicated region
    $region174: #{image_encoder_cnn_forward.1} parent=1 // pred_check
      _
    $region175: #{image_encoder_cnn_forward.1} parent=1 // pred_check_branch
      %441 = sbr.rel (0) target = $region177
    $region176: #{image_encoder_cnn_forward.1} parent=1 // pred_region
      %442 = dma.done [#allocation23], 32
    $region177: #{image_encoder_cnn_forward.1} parent=1 // pred_fallthru
      _
    // Predicated region
    $region178: #{image_encoder_cnn_forward.1} parent=1 // pred_check
      _
    $region179: #{image_encoder_cnn_forward.1} parent=1 // pred_check_branch
      %444 = sbr.rel (0) target = $region181
    $region180: #{image_encoder_cnn_forward.1} parent=1 // pred_region
      %445 = dma.done [#allocation26], 32
    $region181: #{image_encoder_cnn_forward.1} parent=1 // pred_fallthru
      _
    // Predicated region
    $region182: #{image_encoder_cnn_forward.1} parent=1 // pred_check
      _
    $region183: #{image_encoder_cnn_forward.1} parent=1 // pred_check_branch
      %447 = sbr.rel (0) target = $region185
    $region184: #{image_encoder_cnn_forward.1} parent=1 // pred_region
      %448 = dma.done [#allocation26], 4096
    $region185: #{image_encoder_cnn_forward.1} parent=1 // pred_fallthru
      _
    // Predicated region
    $region186: #{image_encoder_cnn_forward.1} parent=1 // pred_check
      _
    $region187: #{image_encoder_cnn_forward.1} parent=1 // pred_check_branch
      %450 = sbr.rel (0) target = $region189
    $region188: #{image_encoder_cnn_forward.1} parent=1 // pred_region
      %451 = dma.done [#allocation29], 9216
    $region189: #{image_encoder_cnn_forward.1} parent=1 // pred_fallthru
      _
    // Predicated region
    $region190: #{image_encoder_cnn_forward.1} parent=1 // pred_check
      _
    $region191: #{image_encoder_cnn_forward.1} parent=1 // pred_check_branch
      %453 = sbr.rel (0) target = $region193
    $region192: #{image_encoder_cnn_forward.1} parent=1 // pred_region
      %454 = dma.done [#allocation29], 32
    $region193: #{image_encoder_cnn_forward.1} parent=1 // pred_fallthru
      _
    // Predicated region
    $region194: #{image_encoder_cnn_forward.1} parent=1 // pred_check
      _
    $region195: #{image_encoder_cnn_forward.1} parent=1 // pred_check_branch
      %456 = sbr.rel (0) target = $region197
    $region196: #{image_encoder_cnn_forward.1} parent=1 // pred_region
      %457 = dma.done [#allocation32], 18432
    $region197: #{image_encoder_cnn_forward.1} parent=1 // pred_fallthru
      _
    // Predicated region
    $region198: #{image_encoder_cnn_forward.1} parent=1 // pred_check
      _
    $region199: #{image_encoder_cnn_forward.1} parent=1 // pred_check_branch
      %459 = sbr.rel (0) target = $region201
    $region200: #{image_encoder_cnn_forward.1} parent=1 // pred_region
      %460 = dma.done [#allocation32], 32
    $region201: #{image_encoder_cnn_forward.1} parent=1 // pred_fallthru
      _
    // Predicated region
    $region202: #{image_encoder_cnn_forward.1} parent=1 // pred_check
      _
    $region203: #{image_encoder_cnn_forward.1} parent=1 // pred_check_branch
      %462 = sbr.rel (0) target = $region205
    $region204: #{image_encoder_cnn_forward.1} parent=1 // pred_region
      %463 = dma.done [#allocation35], 4096
    $region205: #{image_encoder_cnn_forward.1} parent=1 // pred_fallthru
      _
    // Predicated region
    $region206: #{image_encoder_cnn_forward.1} parent=1 // pred_check
      _
    $region207: #{image_encoder_cnn_forward.1} parent=1 // pred_check_branch
      %465 = sbr.rel (0) target = $region209
    $region208: #{image_encoder_cnn_forward.1} parent=1 // pred_region
      %466 = dma.done [#allocation35], 6144
    $region209: #{image_encoder_cnn_forward.1} parent=1 // pred_fallthru
      _
    // Predicated region
    $region210: #{image_encoder_cnn_forward.1} parent=1 // pred_check
      _
    $region211: #{image_encoder_cnn_forward.1} parent=1 // pred_check_branch
      %468 = sbr.rel (0) target = $region213
    $region212: #{image_encoder_cnn_forward.1} parent=1 // pred_region
      %469 = dma.done [#allocation38], 16
    $region213: #{image_encoder_cnn_forward.1} parent=1 // pred_fallthru
      _
    // Predicated region
    $region214: #{image_encoder_cnn_forward.1} parent=1 // pred_check
      _
    $region215: #{image_encoder_cnn_forward.1} parent=1 // pred_check_branch
      %471 = sbr.rel (0) target = $region217
    $region216: #{image_encoder_cnn_forward.1} parent=1 // pred_region
      %472 = dma.done [#allocation38], 6144
    $region217: #{image_encoder_cnn_forward.1} parent=1 // pred_fallthru
      _
    // Predicated region
    $region218: #{image_encoder_cnn_forward.1} parent=1 // pred_check
      _
    $region219: #{image_encoder_cnn_forward.1} parent=1 // pred_check_branch
      %474 = sbr.rel (0) target = $region221
    $region220: #{image_encoder_cnn_forward.1} parent=1 // pred_region
      %475 = dma.done [#allocation41], 16
    $region221: #{image_encoder_cnn_forward.1} parent=1 // pred_fallthru
      _
    // Predicated region
    $region222: #{image_encoder_cnn_forward.1} parent=1 // pred_check
      _
    $region223: #{image_encoder_cnn_forward.1} parent=1 // pred_check_branch
      %477 = sbr.rel (0) target = $region225
    $region224: #{image_encoder_cnn_forward.1} parent=1 // pred_region
      %478 = dma.done [#allocation41], 32
    $region225: #{image_encoder_cnn_forward.1} parent=1 // pred_fallthru
      _
    // Predicated region
    $region226: #{image_encoder_cnn_forward.1} parent=1 // pred_check
      _
    $region227: #{image_encoder_cnn_forward.1} parent=1 // pred_check_branch
      %480 = sbr.rel (0) target = $region229
    $region228: #{image_encoder_cnn_forward.1} parent=1 // pred_region
      %481 = dma.done [#allocation44], 1024
    $region229: #{image_encoder_cnn_forward.1} parent=1 // pred_fallthru
      _
    // Predicated region
    $region230: #{image_encoder_cnn_forward.1} parent=1 // pred_check
      _
    $region231: #{image_encoder_cnn_forward.1} parent=1 // pred_check_branch
      %483 = sbr.rel (0) target = $region233
    $region232: #{image_encoder_cnn_forward.1} parent=1 // pred_region
      %484 = dma.done [#allocation44], 32
    $region233: #{image_encoder_cnn_forward.1} parent=1 // pred_fallthru
      _
    // Predicated region
    $region234: #{image_encoder_cnn_forward.1} parent=1 // pred_check
      _
    $region235: #{image_encoder_cnn_forward.1} parent=1 // pred_check_branch
      %486 = sbr.rel (0) target = $region237
    $region236: #{image_encoder_cnn_forward.1} parent=1 // pred_region
      %487 = dma.done [#allocation47], 4096
    $region237: #{image_encoder_cnn_forward.1} parent=1 // pred_fallthru
      _
    // Predicated region
    $region238: #{image_encoder_cnn_forward.1} parent=1 // pred_check
      _
    $region239: #{image_encoder_cnn_forward.1} parent=1 // pred_check_branch
      %489 = sbr.rel (0) target = $region241
    $region240: #{image_encoder_cnn_forward.1} parent=1 // pred_region
      %490 = dma.done [#allocation47], 32
    $region241: #{image_encoder_cnn_forward.1} parent=1 // pred_fallthru
      _
    // Predicated region
    $region242: #{image_encoder_cnn_forward.1} parent=1 // pred_check
      _
    $region243: #{image_encoder_cnn_forward.1} parent=1 // pred_check_branch
      %492 = sbr.rel (0) target = $region245
    $region244: #{image_encoder_cnn_forward.1} parent=1 // pred_region
      %493 = dma.done [#allocation50], 16
    $region245: #{image_encoder_cnn_forward.1} parent=1 // pred_fallthru
      _
    // Predicated region
    $region246: #{image_encoder_cnn_forward.1} parent=1 // pred_check
      _
    $region247: #{image_encoder_cnn_forward.1} parent=1 // pred_check_branch
      %495 = sbr.rel (0) target = $region249
    $region248: #{image_encoder_cnn_forward.1} parent=1 // pred_region
      %496 = dma.done [#allocation50], 16
    $region249: #{image_encoder_cnn_forward.1} parent=1 // pred_fallthru
      _
    // Predicated region
    $region250: #{image_encoder_cnn_forward.1} parent=1 // pred_check
      _
    $region251: #{image_encoder_cnn_forward.1} parent=1 // pred_check_branch
      %498 = sbr.rel (0) target = $region253
    $region252: #{image_encoder_cnn_forward.1} parent=1 // pred_region
      %499 = dma.done [#allocation53], 16
    $region253: #{image_encoder_cnn_forward.1} parent=1 // pred_fallthru
      _
    %vm501 = vcmask 830464
    %502 = vst.msk [vmem:[#allocation2] sm:$0xf] %vm501, 0
    %503 = vst.msk [vmem:[#allocation2 + $0x4] sm:$0xf] %vm501, 0
    %504 = vst.msk [vmem:[#allocation2 + $0x8] sm:$0xf] %vm501, 0
    %505 = vst.msk [vmem:[#allocation2 + $0xc] sm:$0xf] %vm501, 0
    %506 = vst.msk [vmem:[#allocation2 + $0x10] sm:$0xf] %vm501, 0
    %507 = vst.msk [vmem:[#allocation2 + $0x14] sm:$0xf] %vm501, 0
    %508 = vst.msk [vmem:[#allocation2 + $0x18] sm:$0xf] %vm501, 0
    %509 = vst.msk [vmem:[#allocation2 + $0x1c] sm:$0xf] %vm501, 0
    %vm510 = vcmask 828416
    %511 = vst.msk [vmem:[#allocation2 + $0x20] sm:$0x3] %vm510, 0
    %v512 = vld [vmem:[%s1] sm:$0xff]
    %v513 = vld [vmem:[%s1 + $0x8] sm:$0xff]
    %v514 = vld [vmem:[%s1 + $0x10] sm:$0xff]
    %v515 = vld [vmem:[%s1 + $0x18] sm:$0xff]
    %v516 = vpack.c.bf16 %v513, %v512
    %v517 = vpack.c.bf16 %v515, %v514
    %v520 = vunpack.c.l.b16 %v516
    %v521 = vunpack.c.h.b16 %v516
    %v522 = vunpack.c.l.b16 %v517
    %v523 = vunpack.c.h.b16 %v517
    %v524 = vpack.c.b16 %v520, %v520
    %v525 = vpack.c.b16 %v521, %v521
    %v526 = vpack.c.b16 %v522, %v522
    %v527 = vpack.c.b16 %v523, %v523
    %vm528 = vsmask.f32 256
    %vm529 = vsmask.f32 4368
    %vm530 = vmor %vm528, %vm529
    %v532 = vshrl.u32 %v524, 16
    %v534 = vrot.slane %v532, 7
    %v535 = vshll.u32 %v524, 16
    %v537 = vor.u32 %v534, %v535
    %v538 = vrot.slane %v534, 4
    %v540 = vshrl.u32 %v525, 16
    %v542 = vrot.slane %v540, 7
    %v543 = vshll.u32 %v525, 16
    %v545 = vor.u32 %v542, %v543
    %v546 = vsel %vm530, %v538, %v545
    %v547 = vrot.slane %v542, 4
    %v549 = vshrl.u32 %v526, 16
    %v551 = vrot.slane %v549, 7
    %v552 = vshll.u32 %v526, 16
    %v554 = vor.u32 %v551, %v552
    %v555 = vsel %vm530, %v547, %v554
    %v556 = vrot.slane %v551, 4
    %v558 = vshrl.u32 %v527, 16
    %v560 = vrot.slane %v558, 7
    %v561 = vshll.u32 %v527, 16
    %v563 = vor.u32 %v560, %v561
    %v564 = vsel %vm530, %v556, %v563
    %v565 = vrot.slane %v560, 4
    %566 = vrot.lane.b32.xlu0 %v537, 3
    %v567 = vpop.permute.xlu0 %566
    %568 = vrot.lane.b32.xlu0 %v546, 3
    %v569 = vpop.permute.xlu0 %568
    %570 = vrot.lane.b32.xlu0 %v555, 3
    %v571 = vpop.permute.xlu0 %570
    %572 = vrot.lane.b32.xlu0 %v564, 3
    %v573 = vpop.permute.xlu0 %572
    %574 = vrot.lane.b32.xlu0 %v565, 3
    %v575 = vpop.permute.xlu0 %574
    %vm581 = vcmask 805912
    %vm582 = vsmask.f32 7938
    %vm583 = vmand %vm581, %vm582
    %v584 = vld [vmem:[#allocation2] sm:$0xf]
    %v585 = vsel %vm583, %v567, %v584
    %586 = vst [vmem:[#allocation2] sm:$0xf] %v585
    %vm587 = vcmask 805912
    %588 = vst.msk [vmem:[#allocation2 + $0x4] sm:$0xf] %vm587, %v569
    %589 = vst.msk [vmem:[#allocation2 + $0x8] sm:$0xf] %vm587, %v571
    %590 = vst.msk [vmem:[#allocation2 + $0xc] sm:$0xf] %vm587, %v573
    %vm591 = vcmask 802840
    %vm592 = vmand %vm591, %vm528
    %v593 = vld [vmem:[#allocation2 + $0x10] sm:$0x1]
    %v594 = vsel %vm592, %v575, %v593
    %595 = vst [vmem:[#allocation2 + $0x10] sm:$0x1] %v594
    %s596 = scalar_lea.vmem %s1, 32
    %v597 = vld [vmem:[%s596] sm:$0xff]
    %v598 = vld [vmem:[%s596 + $0x8] sm:$0xff]
    %v599 = vld [vmem:[%s596 + $0x10] sm:$0xff]
    %v600 = vld [vmem:[%s596 + $0x18] sm:$0xff]
    %v601 = vpack.c.bf16 %v598, %v597
    %v602 = vpack.c.bf16 %v600, %v599
    %v605 = vunpack.c.l.b16 %v601
    %v606 = vunpack.c.h.b16 %v601
    %v607 = vunpack.c.l.b16 %v602
    %v608 = vunpack.c.h.b16 %v602
    %v609 = vpack.c.b16 %v605, %v605
    %v610 = vpack.c.b16 %v606, %v606
    %v611 = vpack.c.b16 %v607, %v607
    %v612 = vpack.c.b16 %v608, %v608
    %vm613 = vsmask.f32 1280
    %vm614 = vsmask.f32 5392
    %vm615 = vmor %vm613, %vm614
    %v617 = vshrl.u32 %v609, 16
    %v619 = vrot.slane %v617, 6
    %v620 = vshll.u32 %v609, 16
    %v622 = vrot.slane %v620, 7
    %v623 = vor.u32 %v619, %v622
    %v624 = vrot.slane %v623, 4
    %v626 = vshrl.u32 %v610, 16
    %v628 = vrot.slane %v626, 6
    %v629 = vshll.u32 %v610, 16
    %v631 = vrot.slane %v629, 7
    %v632 = vor.u32 %v628, %v631
    %v633 = vsel %vm615, %v624, %v632
    %v634 = vrot.slane %v632, 4
    %v636 = vshrl.u32 %v611, 16
    %v638 = vrot.slane %v636, 6
    %v639 = vshll.u32 %v611, 16
    %v641 = vrot.slane %v639, 7
    %v642 = vor.u32 %v638, %v641
    %v643 = vsel %vm615, %v634, %v642
    %v644 = vrot.slane %v642, 4
    %v646 = vshrl.u32 %v612, 16
    %v648 = vrot.slane %v646, 6
    %v649 = vshll.u32 %v612, 16
    %v651 = vrot.slane %v649, 7
    %v652 = vor.u32 %v648, %v651
    %v653 = vsel %vm615, %v644, %v652
    %v654 = vrot.slane %v652, 4
    %655 = vrot.lane.b32.xlu0 %v623, 3
    %v656 = vpop.permute.xlu0 %655
    %657 = vrot.lane.b32.xlu0 %v633, 3
    %v658 = vpop.permute.xlu0 %657
    %659 = vrot.lane.b32.xlu0 %v643, 3
    %v660 = vpop.permute.xlu0 %659
    %661 = vrot.lane.b32.xlu0 %v653, 3
    %v662 = vpop.permute.xlu0 %661
    %663 = vrot.lane.b32.xlu0 %v654, 3
    %v664 = vpop.permute.xlu0 %663
    %vm670 = vcmask 805913
    %vm671 = vsmask.f32 7942
    %vm672 = vmand %vm670, %vm671
    %v673 = vld [vmem:[#allocation2 + $0x10] sm:$0xe]
    %v674 = vsel %vm672, %v656, %v673
    %675 = vst [vmem:[#allocation2 + $0x10] sm:$0xe] %v674
    %676 = vst.msk [vmem:[#allocation2 + $0x14] sm:$0xf] %vm587, %v658
    %677 = vst.msk [vmem:[#allocation2 + $0x18] sm:$0xf] %vm587, %v660
    %678 = vst.msk [vmem:[#allocation2 + $0x1c] sm:$0xf] %vm587, %v662
    %vm679 = vcmask 803864
    %vm680 = vmand %vm679, %vm613
    %v681 = vld [vmem:[#allocation2 + $0x20] sm:$0x3]
    %v682 = vsel %vm680, %v664, %v681
    %683 = vst [vmem:[#allocation2 + $0x20] sm:$0x3] %v682
    %v684 = vld [vmem:[#allocation2] sm:$0xf]
    %v685 = vld [vmem:[#allocation2 + $0x4] sm:$0xf]
    %v686 = vld [vmem:[#allocation2 + $0x8] sm:$0xf]
    %v687 = vld [vmem:[#allocation2 + $0xc] sm:$0xf]
    %v688 = vld [vmem:[#allocation2 + $0x10] sm:$0xf]
    %v689 = vld [vmem:[#allocation2 + $0x14] sm:$0xf]
    %v690 = vld [vmem:[#allocation2 + $0x18] sm:$0xf]
    %v691 = vld [vmem:[#allocation2 + $0x1c] sm:$0xf]
    %v692 = vld [vmem:[#allocation2 + $0x20] sm:$0x1]
    %v693 = vld [vmem:[#allocation10] sm:$0xff]
    %v694 = vld [vmem:[#allocation10 + $0x8] sm:$0xff]
    %v695 = vld [vmem:[#allocation10 + $0x10] sm:$0xff]
    %v696 = vld [vmem:[#allocation10 + $0x18] sm:$0xff]
    %v697 = vld [vmem:[#allocation10 + $0x20] sm:$0xff]
    %v698 = vld [vmem:[#allocation10 + $0x28] sm:$0xff]
    %v699 = vld [vmem:[#allocation10 + $0x30] sm:$0xff]
    %v700 = vld [vmem:[#allocation10 + $0x38] sm:$0xff]
    %v701 = vld [vmem:[#allocation10 + $0x40] sm:$0xff]
    %v702 = vld [vmem:[#allocation10 + $0x48] sm:$0xff]
    %v703 = vld [vmem:[#allocation10 + $0x50] sm:$0xff]
    %v704 = vld [vmem:[#allocation10 + $0x58] sm:$0xff]
    %v705 = vld [vmem:[#allocation10 + $0x60] sm:$0x77]
    %v706 = vld [vmem:[#allocation2 + $0x20] sm:$0x3]
    %s707 = scalar_lea.vmem [#allocation10], 104
    %v708 = vld [vmem:[%s707] sm:$0xff]
    %v709 = vld [vmem:[%s707 + $0x8] sm:$0xff]
    %v710 = vld [vmem:[%s707 + $0x10] sm:$0xff]
    %v711 = vld [vmem:[%s707 + $0x18] sm:$0xff]
    %v712 = vld [vmem:[%s707 + $0x20] sm:$0xff]
    %v713 = vld [vmem:[%s707 + $0x28] sm:$0xff]
    %v714 = vld [vmem:[%s707 + $0x30] sm:$0xff]
    %v715 = vld [vmem:[%s707 + $0x38] sm:$0xff]
    %v716 = vld [vmem:[%s707 + $0x40] sm:$0xff]
    %v717 = vld [vmem:[%s707 + $0x48] sm:$0xff]
    %v718 = vld [vmem:[%s707 + $0x50] sm:$0xff]
    %v719 = vld [vmem:[%s707 + $0x58] sm:$0xff]
    %v720 = vld [vmem:[%s707 + $0x60] sm:$0x77]
    %v730 = vunpack.c.l.b16 %v684
    %v731 = vunpack.c.l.b16 %v685
    %v732 = vunpack.c.l.b16 %v686
    %v733 = vunpack.c.l.b16 %v687
    %v734 = vunpack.c.l.b16 %v688
    %v735 = vunpack.c.l.b16 %v689
    %v736 = vunpack.c.l.b16 %v690
    %v737 = vunpack.c.l.b16 %v691
    %v738 = vunpack.c.l.b16 %v706
    %v739 = vpack.c.b16 %v731, %v730
    %v740 = vpack.c.b16 %v733, %v732
    %v741 = vpack.c.b16 %v735, %v734
    %v742 = vpack.c.b16 %v737, %v736
    %v743 = vpack.c.b16 %v738, %v738
    %vm744 = vsmask.f32 7424
    %v746 = vshrl.u32 %v739, 16
    %v748 = vshll.u32 %v739, 16
    %v750 = vrot.slane %v748, 1
    %v751 = vor.u32 %v746, %v750
    %v753 = vshll.u32 %v740, 16
    %v755 = vrot.slane %v753, 1
    %v756 = vsel %vm744, %v751, %v755
    %v757 = vshrl.u32 %v740, 16
    %v759 = vor.u32 %v757, %v755
    %v761 = vshll.u32 %v741, 16
    %v763 = vrot.slane %v761, 1
    %v764 = vsel %vm744, %v759, %v763
    %v765 = vshrl.u32 %v741, 16
    %v767 = vor.u32 %v765, %v763
    %v769 = vshll.u32 %v742, 16
    %v771 = vrot.slane %v769, 1
    %v772 = vsel %vm744, %v767, %v771
    %v773 = vshrl.u32 %v742, 16
    %v775 = vor.u32 %v773, %v771
    %v777 = vshll.u32 %v743, 16
    %v779 = vrot.slane %v777, 1
    %v780 = vsel %vm744, %v775, %v779
    %v781 = vshrl.u32 %v743, 16
    %v783 = vor.u32 %v781, %v779
    %v797 = vunpack.c.l.b16 %v708
    %v798 = vunpack.c.h.b16 %v708
    %v799 = vunpack.c.l.b16 %v709
    %v800 = vunpack.c.h.b16 %v709
    %v801 = vunpack.c.l.b16 %v710
    %v802 = vunpack.c.h.b16 %v710
    %v803 = vunpack.c.l.b16 %v711
    %v804 = vunpack.c.h.b16 %v711
    %v805 = vunpack.c.l.b16 %v712
    %v806 = vunpack.c.h.b16 %v712
    %v807 = vunpack.c.l.b16 %v713
    %v808 = vunpack.c.h.b16 %v713
    %v809 = vunpack.c.l.b16 %v714
    %v810 = vunpack.c.h.b16 %v714
    %v811 = vunpack.c.l.b16 %v715
    %v812 = vunpack.c.h.b16 %v715
    %v813 = vunpack.c.l.b16 %v716
    %v814 = vunpack.c.h.b16 %v716
    %v815 = vunpack.c.l.b16 %v717
    %v816 = vunpack.c.h.b16 %v717
    %v817 = vunpack.c.l.b16 %v718
    %v818 = vunpack.c.h.b16 %v718
    %v819 = vunpack.c.l.b16 %v719
    %v820 = vunpack.c.h.b16 %v719
    %v821 = vunpack.c.l.b16 %v720
    %v822 = vunpack.c.h.b16 %v720
    %v823 = vpack.c.b16 %v799, %v797
    %v824 = vpack.c.b16 %v800, %v798
    %v825 = vpack.c.b16 %v803, %v801
    %v826 = vpack.c.b16 %v804, %v802
    %v827 = vpack.c.b16 %v807, %v805
    %v828 = vpack.c.b16 %v808, %v806
    %v829 = vpack.c.b16 %v811, %v809
    %v830 = vpack.c.b16 %v812, %v810
    %v831 = vpack.c.b16 %v815, %v813
    %v832 = vpack.c.b16 %v816, %v814
    %v833 = vpack.c.b16 %v819, %v817
    %v834 = vpack.c.b16 %v820, %v818
    %v835 = vpack.c.b16 %v821, %v821
    %v836 = vpack.c.b16 %v822, %v822
    %vm849 = vcmask 834560
    %v851 = vsel %vm849, %v756, 0
    %v854 = vsel %vm849, %v764, 0
    %v857 = vsel %vm849, %v772, 0
    %v860 = vsel %vm849, %v780, 0
    %v863 = vsel %vm849, %v783, 0
    %vm865 = vcmask 1042432
    %v867 = vsel %vm865, %v835, 0
    %v870 = vsel %vm865, %v836, 0
    %872 = vmatprep.subr.bf16.mxu0 0
    %873 = vmatpush1.bf16.msra.mxu0 0
    %874 = vmatprep.subr.bf16.mxu0 %v870
    %875 = vmatpush1.bf16.msra.mxu0 %v867
    %876 = vmatprep.subr.bf16.mxu0 %v834
    %877 = vmatpush1.bf16.msra.mxu0 %v833
    %878 = vmatprep.subr.bf16.mxu0 %v832
    %879 = vmatpush1.bf16.msra.mxu0 %v831
    %880 = vmatprep.subr.bf16.mxu0 %v830
    %881 = vmatpush1.bf16.msra.mxu0 %v829
    %882 = vmatprep.subr.bf16.mxu0 %v828
    %883 = vmatpush1.bf16.msra.mxu0 %v827
    %884 = vmatprep.subr.bf16.mxu0 %v826
    %885 = vmatpush1.bf16.msra.mxu0 %v825
    %886 = vmatprep.subr.bf16.mxu0 %v824
    %887 = vmatpush1.bf16.msra.mxu0 %v823
    %888 = vmatprep.subr.bf16.mxu0 0
    %889 = vmatpush2.bf16.msra.mxu0 0
    %890 = vmatprep.subr.bf16.mxu0 0
    %891 = vmatpush2.bf16.msra.mxu0 0
    %892 = vmatprep.subr.bf16.mxu0 0
    %893 = vmatpush2.bf16.msra.mxu0 0
    %894 = vmatprep.subr.bf16.mxu0 0
    %895 = vmatpush2.bf16.msra.mxu0 0
    %896 = vmatprep.subr.bf16.mxu0 0
    %897 = vmatpush2.bf16.msra.mxu0 0
    %898 = vmatprep.subr.bf16.mxu0 0
    %899 = vmatpush2.bf16.msra.mxu0 0
    %900 = vmatprep.subr.bf16.mxu0 0
    %901 = vmatpush2.bf16.msra.mxu0 0
    %902 = vmatprep.subr.bf16.mxu0 0
    %903 = vmatpush2.bf16.msra.mxu0 0
    %904 = vmatprep.mubr.bf16.mxu0 0
    %905 = vmatmul.mubr.bf16.gmra.mxu0 %v851
    %v906 = vpop.f32.mrf.mxu0
    %v907 = vadd.f32 0.0, %v906
    %v908 = vpop.f32.mrf.mxu0
    %v909 = vadd.f32 0.0, %v908
    %v910 = vpop.f32.mrf.mxu0
    %v911 = vadd.f32 0.0, %v910
    %v912 = vpop.f32.mrf.mxu0
    %v913 = vadd.f32 0.0, %v912
    %914 = vmatprep.mubr.bf16.mxu0 0
    %915 = vmatmul.mubr.bf16.gmra.mxu0 %v854
    %v916 = vpop.f32.mrf.mxu0
    %v917 = vadd.f32 0.0, %v916
    %v918 = vpop.f32.mrf.mxu0
    %v919 = vadd.f32 0.0, %v918
    %v920 = vpop.f32.mrf.mxu0
    %v921 = vadd.f32 0.0, %v920
    %v922 = vpop.f32.mrf.mxu0
    %v923 = vadd.f32 0.0, %v922
    %924 = vmatprep.mubr.bf16.mxu0 0
    %925 = vmatmul.mubr.bf16.gmra.mxu0 %v857
    %v926 = vpop.f32.mrf.mxu0
    %v927 = vadd.f32 0.0, %v926
    %v928 = vpop.f32.mrf.mxu0
    %v929 = vadd.f32 0.0, %v928
    %v930 = vpop.f32.mrf.mxu0
    %v931 = vadd.f32 0.0, %v930
    %v932 = vpop.f32.mrf.mxu0
    %v933 = vadd.f32 0.0, %v932
    %934 = vmatprep.mubr.bf16.mxu0 0
    %935 = vmatmul.mubr.bf16.gmra.mxu0 %v860
    %v936 = vpop.f32.mrf.mxu0
    %v937 = vadd.f32 0.0, %v936
    %v938 = vpop.f32.mrf.mxu0
    %v939 = vadd.f32 0.0, %v938
    %v940 = vpop.f32.mrf.mxu0
    %v941 = vadd.f32 0.0, %v940
    %v942 = vpop.f32.mrf.mxu0
    %v943 = vadd.f32 0.0, %v942
    %944 = vmatprep.mubr.bf16.mxu0 0
    %945 = vmatmul.mubr.bf16.gmra.mxu0 %v863
    %v946 = vpop.f32.mrf.mxu0
    %v947 = vadd.f32 0.0, %v946
    %v948 = vpop.f32.mrf.mxu0
    %v949 = vadd.f32 0.0, %v948
    %v950 = vpop.f32.mrf.mxu0
    %v951 = vpop.f32.mrf.mxu0
    %952 = vdwg.mxu0
    %v954 = vunpack.c.l.b16 %v692
    %v955 = vpack.c.b16 %v954, %v954
    %v969 = vunpack.c.l.b16 %v693
    %v970 = vunpack.c.h.b16 %v693
    %v971 = vunpack.c.l.b16 %v694
    %v972 = vunpack.c.h.b16 %v694
    %v973 = vunpack.c.l.b16 %v695
    %v974 = vunpack.c.h.b16 %v695
    %v975 = vunpack.c.l.b16 %v696
    %v976 = vunpack.c.h.b16 %v696
    %v977 = vunpack.c.l.b16 %v697
    %v978 = vunpack.c.h.b16 %v697
    %v979 = vunpack.c.l.b16 %v698
    %v980 = vunpack.c.h.b16 %v698
    %v981 = vunpack.c.l.b16 %v699
    %v982 = vunpack.c.h.b16 %v699
    %v983 = vunpack.c.l.b16 %v700
    %v984 = vunpack.c.h.b16 %v700
    %v985 = vunpack.c.l.b16 %v701
    %v986 = vunpack.c.h.b16 %v701
    %v987 = vunpack.c.l.b16 %v702
    %v988 = vunpack.c.h.b16 %v702
    %v989 = vunpack.c.l.b16 %v703
    %v990 = vunpack.c.h.b16 %v703
    %v991 = vunpack.c.l.b16 %v704
    %v992 = vunpack.c.h.b16 %v704
    %v993 = vunpack.c.l.b16 %v705
    %v994 = vunpack.c.h.b16 %v705
    %v995 = vpack.c.b16 %v971, %v969
    %v996 = vpack.c.b16 %v972, %v970
    %v997 = vpack.c.b16 %v975, %v973
    %v998 = vpack.c.b16 %v976, %v974
    %v999 = vpack.c.b16 %v979, %v977
    %v1000 = vpack.c.b16 %v980, %v978
    %v1001 = vpack.c.b16 %v983, %v981
    %v1002 = vpack.c.b16 %v984, %v982
    %v1003 = vpack.c.b16 %v987, %v985
    %v1004 = vpack.c.b16 %v988, %v986
    %v1005 = vpack.c.b16 %v991, %v989
    %v1006 = vpack.c.b16 %v992, %v990
    %v1007 = vpack.c.b16 %v993, %v993
    %v1008 = vpack.c.b16 %v994, %v994
    %v1021 = vsel %vm849, %v739, 0
    %v1023 = vsel %vm849, %v740, 0
    %v1025 = vsel %vm849, %v741, 0
    %v1027 = vsel %vm849, %v742, 0
    %v1030 = vsel %vm849, %v955, 0
    %v1033 = vsel %vm865, %v1007, 0
    %v1036 = vsel %vm865, %v1008, 0
    %1038 = vmatprep.subr.bf16.mxu0 0
    %1039 = vmatpush1.bf16.msra.mxu0 0
    %1040 = vmatprep.subr.bf16.mxu0 %v1036
    %1041 = vmatpush1.bf16.msra.mxu0 %v1033
    %1042 = vmatprep.subr.bf16.mxu0 %v1006
    %1043 = vmatpush1.bf16.msra.mxu0 %v1005
    %1044 = vmatprep.subr.bf16.mxu0 %v1004
    %1045 = vmatpush1.bf16.msra.mxu0 %v1003
    %1046 = vmatprep.subr.bf16.mxu0 %v1002
    %1047 = vmatpush1.bf16.msra.mxu0 %v1001
    %1048 = vmatprep.subr.bf16.mxu0 %v1000
    %1049 = vmatpush1.bf16.msra.mxu0 %v999
    %1050 = vmatprep.subr.bf16.mxu0 %v998
    %1051 = vmatpush1.bf16.msra.mxu0 %v997
    %1052 = vmatprep.subr.bf16.mxu0 %v996
    %1053 = vmatpush1.bf16.msra.mxu0 %v995
    %1054 = vmatprep.subr.bf16.mxu0 0
    %1055 = vmatpush2.bf16.msra.mxu0 0
    %1056 = vmatprep.subr.bf16.mxu0 0
    %1057 = vmatpush2.bf16.msra.mxu0 0
    %1058 = vmatprep.subr.bf16.mxu0 0
    %1059 = vmatpush2.bf16.msra.mxu0 0
    %1060 = vmatprep.subr.bf16.mxu0 0
    %1061 = vmatpush2.bf16.msra.mxu0 0
    %1062 = vmatprep.subr.bf16.mxu0 0
    %1063 = vmatpush2.bf16.msra.mxu0 0
    %1064 = vmatprep.subr.bf16.mxu0 0
    %1065 = vmatpush2.bf16.msra.mxu0 0
    %1066 = vmatprep.subr.bf16.mxu0 0
    %1067 = vmatpush2.bf16.msra.mxu0 0
    %1068 = vmatprep.subr.bf16.mxu0 0
    %1069 = vmatpush2.bf16.msra.mxu0 0
    %1070 = vmatprep.mubr.bf16.mxu0 0
    %1071 = vmatmul.mubr.bf16.gmra.mxu0 %v1021
    %v1072 = vpop.f32.mrf.mxu0
    %v1073 = vadd.f32 %v907, %v1072
    %v1074 = vpop.f32.mrf.mxu0
    %v1075 = vadd.f32 %v909, %v1074
    %v1076 = vpop.f32.mrf.mxu0
    %v1077 = vadd.f32 %v911, %v1076
    %v1078 = vpop.f32.mrf.mxu0
    %v1079 = vadd.f32 %v913, %v1078
    %1080 = vmatprep.mubr.bf16.mxu0 0
    %1081 = vmatmul.mubr.bf16.gmra.mxu0 %v1023
    %v1082 = vpop.f32.mrf.mxu0
    %v1083 = vadd.f32 %v917, %v1082
    %v1084 = vpop.f32.mrf.mxu0
    %v1085 = vadd.f32 %v919, %v1084
    %v1086 = vpop.f32.mrf.mxu0
    %v1087 = vadd.f32 %v921, %v1086
    %v1088 = vpop.f32.mrf.mxu0
    %v1089 = vadd.f32 %v923, %v1088
    %1090 = vmatprep.mubr.bf16.mxu0 0
    %1091 = vmatmul.mubr.bf16.gmra.mxu0 %v1025
    %v1092 = vpop.f32.mrf.mxu0
    %v1093 = vadd.f32 %v927, %v1092
    %v1094 = vpop.f32.mrf.mxu0
    %v1095 = vadd.f32 %v929, %v1094
    %v1096 = vpop.f32.mrf.mxu0
    %v1097 = vadd.f32 %v931, %v1096
    %v1098 = vpop.f32.mrf.mxu0
    %v1099 = vadd.f32 %v933, %v1098
    %1100 = vmatprep.mubr.bf16.mxu0 0
    %1101 = vmatmul.mubr.bf16.gmra.mxu0 %v1027
    %v1102 = vpop.f32.mrf.mxu0
    %v1103 = vadd.f32 %v937, %v1102
    %v1104 = vpop.f32.mrf.mxu0
    %v1105 = vadd.f32 %v939, %v1104
    %v1106 = vpop.f32.mrf.mxu0
    %v1107 = vadd.f32 %v941, %v1106
    %v1108 = vpop.f32.mrf.mxu0
    %v1109 = vadd.f32 %v943, %v1108
    %1110 = vmatprep.mubr.bf16.mxu0 0
    %1111 = vmatmul.mubr.bf16.gmra.mxu0 %v1030
    %v1112 = vpop.f32.mrf.mxu0
    %v1113 = vadd.f32 %v947, %v1112
    %v1114 = vpop.f32.mrf.mxu0
    %v1115 = vadd.f32 %v949, %v1114
    %v1116 = vpop.f32.mrf.mxu0
    %v1117 = vpop.f32.mrf.mxu0
    %1118 = vdwg.mxu0
    %v1119 = vld [vmem:[#allocation2] sm:$0xe]
    %s1120 = scalar_lea.vmem [#allocation10], 208
    %v1121 = vld [vmem:[%s1120] sm:$0xff]
    %v1122 = vld [vmem:[%s1120 + $0x8] sm:$0xff]
    %v1123 = vld [vmem:[%s1120 + $0x10] sm:$0xff]
    %v1124 = vld [vmem:[%s1120 + $0x18] sm:$0xff]
    %v1125 = vld [vmem:[%s1120 + $0x20] sm:$0xff]
    %v1126 = vld [vmem:[%s1120 + $0x28] sm:$0xff]
    %v1127 = vld [vmem:[%s1120 + $0x30] sm:$0xff]
    %v1128 = vld [vmem:[%s1120 + $0x38] sm:$0xff]
    %v1129 = vld [vmem:[%s1120 + $0x40] sm:$0xff]
    %v1130 = vld [vmem:[%s1120 + $0x48] sm:$0xff]
    %v1131 = vld [vmem:[%s1120 + $0x50] sm:$0xff]
    %v1132 = vld [vmem:[%s1120 + $0x58] sm:$0xff]
    %v1133 = vld [vmem:[%s1120 + $0x60] sm:$0x77]
    %v1135 = vunpack.c.l.b16 %v1119
    %v1136 = vpack.c.b16 %v731, %v1135
    %vm1137 = vcmask 1046528
    %v1138 = vrot.slane %v1136, 1
    %v1139 = vrot.slane %v740, 1
    %v1140 = vsel %vm1137, %v1138, %v1139
    %v1141 = vrot.slane %v741, 1
    %v1142 = vsel %vm1137, %v1139, %v1141
    %v1143 = vrot.slane %v742, 1
    %v1144 = vsel %vm1137, %v1141, %v1143
    %v1145 = vrot.slane %v743, 1
    %v1146 = vsel %vm1137, %v1143, %v1145
    %v1160 = vunpack.c.l.b16 %v1121
    %v1161 = vunpack.c.h.b16 %v1121
    %v1162 = vunpack.c.l.b16 %v1122
    %v1163 = vunpack.c.h.b16 %v1122
    %v1164 = vunpack.c.l.b16 %v1123
    %v1165 = vunpack.c.h.b16 %v1123
    %v1166 = vunpack.c.l.b16 %v1124
    %v1167 = vunpack.c.h.b16 %v1124
    %v1168 = vunpack.c.l.b16 %v1125
    %v1169 = vunpack.c.h.b16 %v1125
    %v1170 = vunpack.c.l.b16 %v1126
    %v1171 = vunpack.c.h.b16 %v1126
    %v1172 = vunpack.c.l.b16 %v1127
    %v1173 = vunpack.c.h.b16 %v1127
    %v1174 = vunpack.c.l.b16 %v1128
    %v1175 = vunpack.c.h.b16 %v1128
    %v1176 = vunpack.c.l.b16 %v1129
    %v1177 = vunpack.c.h.b16 %v1129
    %v1178 = vunpack.c.l.b16 %v1130
    %v1179 = vunpack.c.h.b16 %v1130
    %v1180 = vunpack.c.l.b16 %v1131
    %v1181 = vunpack.c.h.b16 %v1131
    %v1182 = vunpack.c.l.b16 %v1132
    %v1183 = vunpack.c.h.b16 %v1132
    %v1184 = vunpack.c.l.b16 %v1133
    %v1185 = vunpack.c.h.b16 %v1133
    %v1186 = vpack.c.b16 %v1162, %v1160
    %v1187 = vpack.c.b16 %v1163, %v1161
    %v1188 = vpack.c.b16 %v1166, %v1164
    %v1189 = vpack.c.b16 %v1167, %v1165
    %v1190 = vpack.c.b16 %v1170, %v1168
    %v1191 = vpack.c.b16 %v1171, %v1169
    %v1192 = vpack.c.b16 %v1174, %v1172
    %v1193 = vpack.c.b16 %v1175, %v1173
    %v1194 = vpack.c.b16 %v1178, %v1176
    %v1195 = vpack.c.b16 %v1179, %v1177
    %v1196 = vpack.c.b16 %v1182, %v1180
    %v1197 = vpack.c.b16 %v1183, %v1181
    %v1198 = vpack.c.b16 %v1184, %v1184
    %v1199 = vpack.c.b16 %v1185, %v1185
    %v1213 = vsel %vm849, %v1140, 0
    %v1216 = vsel %vm849, %v1142, 0
    %v1219 = vsel %vm849, %v1144, 0
    %v1222 = vsel %vm849, %v1146, 0
    %v1225 = vsel %vm849, %v1145, 0
    %v1228 = vsel %vm865, %v1198, 0
    %v1231 = vsel %vm865, %v1199, 0
    %1233 = vmatprep.subr.bf16.mxu0 0
    %1234 = vmatpush1.bf16.msra.mxu0 0
    %1235 = vmatprep.subr.bf16.mxu0 %v1231
    %1236 = vmatpush1.bf16.msra.mxu0 %v1228
    %1237 = vmatprep.subr.bf16.mxu0 %v1197
    %1238 = vmatpush1.bf16.msra.mxu0 %v1196
    %1239 = vmatprep.subr.bf16.mxu0 %v1195
    %1240 = vmatpush1.bf16.msra.mxu0 %v1194
    %1241 = vmatprep.subr.bf16.mxu0 %v1193
    %1242 = vmatpush1.bf16.msra.mxu0 %v1192
    %1243 = vmatprep.subr.bf16.mxu0 %v1191
    %1244 = vmatpush1.bf16.msra.mxu0 %v1190
    %1245 = vmatprep.subr.bf16.mxu0 %v1189
    %1246 = vmatpush1.bf16.msra.mxu0 %v1188
    %1247 = vmatprep.subr.bf16.mxu0 %v1187
    %1248 = vmatpush1.bf16.msra.mxu0 %v1186
    %1249 = vmatprep.subr.bf16.mxu0 0
    %1250 = vmatpush2.bf16.msra.mxu0 0
    %1251 = vmatprep.subr.bf16.mxu0 0
    %1252 = vmatpush2.bf16.msra.mxu0 0
    %1253 = vmatprep.subr.bf16.mxu0 0
    %1254 = vmatpush2.bf16.msra.mxu0 0
    %1255 = vmatprep.subr.bf16.mxu0 0
    %1256 = vmatpush2.bf16.msra.mxu0 0
    %1257 = vmatprep.subr.bf16.mxu0 0
    %1258 = vmatpush2.bf16.msra.mxu0 0
    %1259 = vmatprep.subr.bf16.mxu0 0
    %1260 = vmatpush2.bf16.msra.mxu0 0
    %1261 = vmatprep.subr.bf16.mxu0 0
    %1262 = vmatpush2.bf16.msra.mxu0 0
    %1263 = vmatprep.subr.bf16.mxu0 0
    %1264 = vmatpush2.bf16.msra.mxu0 0
    %1265 = vmatprep.mubr.bf16.mxu0 0
    %1266 = vmatmul.mubr.bf16.gmra.mxu0 %v1213
    %v1267 = vpop.f32.mrf.mxu0
    %v1268 = vadd.f32 0.0, %v1267
    %v1269 = vpop.f32.mrf.mxu0
    %v1270 = vadd.f32 0.0, %v1269
    %v1271 = vpop.f32.mrf.mxu0
    %v1272 = vadd.f32 0.0, %v1271
    %v1273 = vpop.f32.mrf.mxu0
    %v1274 = vadd.f32 0.0, %v1273
    %1275 = vmatprep.mubr.bf16.mxu0 0
    %1276 = vmatmul.mubr.bf16.gmra.mxu0 %v1216
    %v1277 = vpop.f32.mrf.mxu0
    %v1278 = vadd.f32 0.0, %v1277
    %v1279 = vpop.f32.mrf.mxu0
    %v1280 = vadd.f32 0.0, %v1279
    %v1281 = vpop.f32.mrf.mxu0
    %v1282 = vadd.f32 0.0, %v1281
    %v1283 = vpop.f32.mrf.mxu0
    %v1284 = vadd.f32 0.0, %v1283
    %1285 = vmatprep.mubr.bf16.mxu0 0
    %1286 = vmatmul.mubr.bf16.gmra.mxu0 %v1219
    %v1287 = vpop.f32.mrf.mxu0
    %v1288 = vadd.f32 0.0, %v1287
    %v1289 = vpop.f32.mrf.mxu0
    %v1290 = vadd.f32 0.0, %v1289
    %v1291 = vpop.f32.mrf.mxu0
    %v1292 = vadd.f32 0.0, %v1291
    %v1293 = vpop.f32.mrf.mxu0
    %v1294 = vadd.f32 0.0, %v1293
    %1295 = vmatprep.mubr.bf16.mxu0 0
    %1296 = vmatmul.mubr.bf16.gmra.mxu0 %v1222
    %v1297 = vpop.f32.mrf.mxu0
    %v1298 = vadd.f32 0.0, %v1297
    %v1299 = vpop.f32.mrf.mxu0
    %v1300 = vadd.f32 0.0, %v1299
    %v1301 = vpop.f32.mrf.mxu0
    %v1302 = vadd.f32 0.0, %v1301
    %v1303 = vpop.f32.mrf.mxu0
    %v1304 = vadd.f32 0.0, %v1303
    %1305 = vmatprep.mubr.bf16.mxu0 0
    %1306 = vmatmul.mubr.bf16.gmra.mxu0 %v1225
    %v1307 = vpop.f32.mrf.mxu0
    %v1308 = vadd.f32 0.0, %v1307
    %v1309 = vpop.f32.mrf.mxu0
    %v1310 = vadd.f32 0.0, %v1309
    %v1311 = vpop.f32.mrf.mxu0
    %v1312 = vpop.f32.mrf.mxu0
    %1313 = vdwg.mxu0
    %v1314 = vadd.f32 %v1073, %v1268
    %v1315 = vadd.f32 %v1075, %v1270
    %v1316 = vadd.f32 %v1077, %v1272
    %v1317 = vadd.f32 %v1079, %v1274
    %v1318 = vadd.f32 %v1083, %v1278
    %v1319 = vadd.f32 %v1085, %v1280
    %v1320 = vadd.f32 %v1087, %v1282
    %v1321 = vadd.f32 %v1089, %v1284
    %v1322 = vadd.f32 %v1093, %v1288
    %v1323 = vadd.f32 %v1095, %v1290
    %v1324 = vadd.f32 %v1097, %v1292
    %v1325 = vadd.f32 %v1099, %v1294
    %v1326 = vadd.f32 %v1103, %v1298
    %v1327 = vadd.f32 %v1105, %v1300
    %v1328 = vadd.f32 %v1107, %v1302
    %v1329 = vadd.f32 %v1109, %v1304
    %v1330 = vadd.f32 %v1113, %v1308
    %v1331 = vadd.f32 %v1115, %v1310
    %v1332 = vld [vmem:[#allocation13] sm:$0x3]
    %v1334 = vlaneseq
    %v1335 = vshrl.u32 %v1334, 7
    %v1336 = vsub.s32 0, %v1335
    %v1337 = vrot.slane %v1332, %v1336
    %v1338 = vlaneseq
    %v1339 = vshrl.u32 %v1338, 7
    %v1340 = vsub.s32 1, %v1339
    %v1341 = vrot.slane %v1332, %v1340
    %v1344 = vadd.f32 %v1314, %v1337
    %v1345 = vadd.f32 %v1315, %v1341
    %v1346 = vadd.f32 %v1316, %v1337
    %v1347 = vadd.f32 %v1317, %v1341
    %v1348 = vadd.f32 %v1318, %v1337
    %v1349 = vadd.f32 %v1319, %v1341
    %v1350 = vadd.f32 %v1320, %v1337
    %v1351 = vadd.f32 %v1321, %v1341
    %v1352 = vadd.f32 %v1322, %v1337
    %v1353 = vadd.f32 %v1323, %v1341
    %v1354 = vadd.f32 %v1324, %v1337
    %v1355 = vadd.f32 %v1325, %v1341
    %v1356 = vadd.f32 %v1326, %v1337
    %v1357 = vadd.f32 %v1327, %v1341
    %v1358 = vadd.f32 %v1328, %v1337
    %v1359 = vadd.f32 %v1329, %v1341
    %v1360 = vadd.f32 %v1330, %v1337
    %v1361 = vadd.f32 %v1331, %v1341
    %v1362 = vmax.f32 %v1344, 0.0
    %v1363 = vmax.f32 %v1345, 0.0
    %v1364 = vmax.f32 %v1346, 0.0
    %v1365 = vmax.f32 %v1347, 0.0
    %v1366 = vmax.f32 %v1348, 0.0
    %v1367 = vmax.f32 %v1349, 0.0
    %v1368 = vmax.f32 %v1350, 0.0
    %v1369 = vmax.f32 %v1351, 0.0
    %v1370 = vmax.f32 %v1352, 0.0
    %v1371 = vmax.f32 %v1353, 0.0
    %v1372 = vmax.f32 %v1354, 0.0
    %v1373 = vmax.f32 %v1355, 0.0
    %v1374 = vmax.f32 %v1356, 0.0
    %v1375 = vmax.f32 %v1357, 0.0
    %v1376 = vmax.f32 %v1358, 0.0
    %v1377 = vmax.f32 %v1359, 0.0
    %v1378 = vmax.f32 %v1360, 0.0
    %v1379 = vmax.f32 %v1361, 0.0
    %v1380 = vpack.c.bf16 %v1364, %v1362
    %v1381 = vpack.c.bf16 %v1365, %v1363
    %v1382 = vpack.c.bf16 %v1368, %v1366
    %v1383 = vpack.c.bf16 %v1369, %v1367
    %v1384 = vpack.c.bf16 %v1372, %v1370
    %v1385 = vpack.c.bf16 %v1373, %v1371
    %v1386 = vpack.c.bf16 %v1376, %v1374
    %v1387 = vpack.c.bf16 %v1377, %v1375
    %v1388 = vpack.c.bf16 %v1378, %v1378
    %v1389 = vpack.c.bf16 %v1379, %v1379
    %v1390 = vld [vmem:[#allocation15] sm:$0xf]
    %v1391 = vld [vmem:[#allocation15 + $0x4] sm:$0xf]
    %v1392 = vld [vmem:[#allocation15 + $0x8] sm:$0xf]
    %v1393 = vld [vmem:[#allocation15 + $0xc] sm:$0xf]
    %v1394 = vld [vmem:[#allocation15 + $0x10] sm:$0xf]
    %v1395 = vld [vmem:[#allocation15 + $0x14] sm:$0xf]
    %v1396 = vld [vmem:[#allocation15 + $0x18] sm:$0xf]
    %v1397 = vld [vmem:[#allocation15 + $0x1c] sm:$0xf]
    %v1398 = vld [vmem:[#allocation15 + $0x20] sm:$0xf]
    %v1399 = vld [vmem:[#allocation15 + $0x24] sm:$0xf]
    %v1400 = vld [vmem:[#allocation15 + $0x28] sm:$0xf]
    %v1401 = vld [vmem:[#allocation15 + $0x2c] sm:$0xf]
    %v1402 = vld [vmem:[#allocation15 + $0x30] sm:$0xf]
    %v1403 = vld [vmem:[#allocation15 + $0x34] sm:$0xf]
    %v1404 = vld [vmem:[#allocation15 + $0x38] sm:$0xf]
    %v1405 = vld [vmem:[#allocation15 + $0x3c] sm:$0xf]
    %v1406 = vld [vmem:[#allocation15 + $0x40] sm:$0xf]
    %v1407 = vld [vmem:[#allocation15 + $0x44] sm:$0xf]
    %v1408 = vld [vmem:[#allocation15 + $0x48] sm:$0xf]
    %v1409 = vld [vmem:[#allocation15 + $0x4c] sm:$0xf]
    %v1410 = vld [vmem:[#allocation15 + $0x50] sm:$0xf]
    %v1411 = vld [vmem:[#allocation15 + $0x54] sm:$0xf]
    %v1412 = vld [vmem:[#allocation15 + $0x58] sm:$0xf]
    %v1413 = vld [vmem:[#allocation15 + $0x5c] sm:$0xf]
    %v1414 = vld [vmem:[#allocation15 + $0x60] sm:$0xf]
    %v1415 = vld [vmem:[#allocation15 + $0x64] sm:$0xf]
    %v1416 = vld [vmem:[#allocation15 + $0x68] sm:$0xf]
    %v1417 = vld [vmem:[#allocation15 + $0x6c] sm:$0xf]
    %v1418 = vld [vmem:[#allocation15 + $0x70] sm:$0xf]
    %v1419 = vld [vmem:[#allocation15 + $0x74] sm:$0xf]
    %v1420 = vld [vmem:[#allocation15 + $0x78] sm:$0xf]
    %v1421 = vld [vmem:[#allocation15 + $0x7c] sm:$0xf]
    %v1454 = vunpack.c.l.b16 %v1390
    %v1455 = vunpack.c.l.b16 %v1391
    %v1456 = vunpack.c.l.b16 %v1392
    %v1457 = vunpack.c.l.b16 %v1393
    %v1458 = vunpack.c.l.b16 %v1394
    %v1459 = vunpack.c.l.b16 %v1395
    %v1460 = vunpack.c.l.b16 %v1396
    %v1461 = vunpack.c.l.b16 %v1397
    %v1462 = vunpack.c.l.b16 %v1398
    %v1463 = vunpack.c.l.b16 %v1399
    %v1464 = vunpack.c.l.b16 %v1400
    %v1465 = vunpack.c.l.b16 %v1401
    %v1466 = vunpack.c.l.b16 %v1402
    %v1467 = vunpack.c.l.b16 %v1403
    %v1468 = vunpack.c.l.b16 %v1404
    %v1469 = vunpack.c.l.b16 %v1405
    %v1470 = vunpack.c.l.b16 %v1406
    %v1471 = vunpack.c.l.b16 %v1407
    %v1472 = vunpack.c.l.b16 %v1408
    %v1473 = vunpack.c.l.b16 %v1409
    %v1474 = vunpack.c.l.b16 %v1410
    %v1475 = vunpack.c.l.b16 %v1411
    %v1476 = vunpack.c.l.b16 %v1412
    %v1477 = vunpack.c.l.b16 %v1413
    %v1478 = vunpack.c.l.b16 %v1414
    %v1479 = vunpack.c.l.b16 %v1415
    %v1480 = vunpack.c.l.b16 %v1416
    %v1481 = vunpack.c.l.b16 %v1417
    %v1482 = vunpack.c.l.b16 %v1418
    %v1483 = vunpack.c.l.b16 %v1419
    %v1484 = vunpack.c.l.b16 %v1420
    %v1485 = vunpack.c.l.b16 %v1421
    %v1486 = vpack.c.b16 %v1455, %v1454
    %v1487 = vpack.c.b16 %v1457, %v1456
    %v1488 = vpack.c.b16 %v1459, %v1458
    %v1489 = vpack.c.b16 %v1461, %v1460
    %v1490 = vpack.c.b16 %v1463, %v1462
    %v1491 = vpack.c.b16 %v1465, %v1464
    %v1492 = vpack.c.b16 %v1467, %v1466
    %v1493 = vpack.c.b16 %v1469, %v1468
    %v1494 = vpack.c.b16 %v1471, %v1470
    %v1495 = vpack.c.b16 %v1473, %v1472
    %v1496 = vpack.c.b16 %v1475, %v1474
    %v1497 = vpack.c.b16 %v1477, %v1476
    %v1498 = vpack.c.b16 %v1479, %v1478
    %v1499 = vpack.c.b16 %v1481, %v1480
    %v1500 = vpack.c.b16 %v1483, %v1482
    %v1501 = vpack.c.b16 %v1485, %v1484
    %1518 = vmatprep.subr.bf16.mxu0 0
    %1519 = vmatpush1.bf16.msra.mxu0 %v1493
    %1520 = vmatprep.subr.bf16.mxu0 0
    %1521 = vmatpush1.bf16.msra.mxu0 %v1492
    %1522 = vmatprep.subr.bf16.mxu0 0
    %1523 = vmatpush1.bf16.msra.mxu0 %v1491
    %1524 = vmatprep.subr.bf16.mxu0 0
    %1525 = vmatpush1.bf16.msra.mxu0 %v1490
    %1526 = vmatprep.subr.bf16.mxu0 0
    %1527 = vmatpush1.bf16.msra.mxu0 %v1489
    %1528 = vmatprep.subr.bf16.mxu0 0
    %1529 = vmatpush1.bf16.msra.mxu0 %v1488
    %1530 = vmatprep.subr.bf16.mxu0 0
    %1531 = vmatpush1.bf16.msra.mxu0 %v1487
    %1532 = vmatprep.subr.bf16.mxu0 0
    %1533 = vmatpush1.bf16.msra.mxu0 %v1486
    %1534 = vmatprep.subr.bf16.mxu0 0
    %1535 = vmatpush2.bf16.msra.mxu0 %v1501
    %1536 = vmatprep.subr.bf16.mxu0 0
    %1537 = vmatpush2.bf16.msra.mxu0 %v1500
    %1538 = vmatprep.subr.bf16.mxu0 0
    %1539 = vmatpush2.bf16.msra.mxu0 %v1499
    %1540 = vmatprep.subr.bf16.mxu0 0
    %1541 = vmatpush2.bf16.msra.mxu0 %v1498
    %1542 = vmatprep.subr.bf16.mxu0 0
    %1543 = vmatpush2.bf16.msra.mxu0 %v1497
    %1544 = vmatprep.subr.bf16.mxu0 0
    %1545 = vmatpush2.bf16.msra.mxu0 %v1496
    %1546 = vmatprep.subr.bf16.mxu0 0
    %1547 = vmatpush2.bf16.msra.mxu0 %v1495
    %1548 = vmatprep.subr.bf16.mxu0 0
    %1549 = vmatpush2.bf16.msra.mxu0 %v1494
    %1550 = vmatprep.mubr.bf16.mxu0 %v1381
    %1551 = vmatmul.mubr.bf16.gmra.mxu0 %v1380
    %v1552 = vpop.f32.mrf.mxu0
    %v1553 = vadd.f32 0.0, %v1552
    %v1554 = vpop.f32.mrf.mxu0
    %v1555 = vpop.f32.mrf.mxu0
    %v1556 = vadd.f32 0.0, %v1555
    %v1557 = vpop.f32.mrf.mxu0
    %1558 = vmatprep.mubr.bf16.mxu0 %v1383
    %1559 = vmatmul.mubr.bf16.gmra.mxu0 %v1382
    %v1560 = vpop.f32.mrf.mxu0
    %v1561 = vadd.f32 0.0, %v1560
    %v1562 = vpop.f32.mrf.mxu0
    %v1563 = vpop.f32.mrf.mxu0
    %v1564 = vadd.f32 0.0, %v1563
    %v1565 = vpop.f32.mrf.mxu0
    %1566 = vmatprep.mubr.bf16.mxu0 %v1385
    %1567 = vmatmul.mubr.bf16.gmra.mxu0 %v1384
    %v1568 = vpop.f32.mrf.mxu0
    %v1569 = vadd.f32 0.0, %v1568
    %v1570 = vpop.f32.mrf.mxu0
    %v1571 = vpop.f32.mrf.mxu0
    %v1572 = vadd.f32 0.0, %v1571
    %v1573 = vpop.f32.mrf.mxu0
    %1574 = vmatprep.mubr.bf16.mxu0 %v1387
    %1575 = vmatmul.mubr.bf16.gmra.mxu0 %v1386
    %v1576 = vpop.f32.mrf.mxu0
    %v1577 = vadd.f32 0.0, %v1576
    %v1578 = vpop.f32.mrf.mxu0
    %v1579 = vpop.f32.mrf.mxu0
    %v1580 = vadd.f32 0.0, %v1579
    %v1581 = vpop.f32.mrf.mxu0
    %1582 = vmatprep.mubr.bf16.mxu0 %v1389
    %1583 = vmatmul.mubr.bf16.gmra.mxu0 %v1388
    %v1584 = vpop.f32.mrf.mxu0
    %v1585 = vadd.f32 0.0, %v1584
    %v1586 = vpop.f32.mrf.mxu0
    %v1587 = vpop.f32.mrf.mxu0
    %v1588 = vpop.f32.mrf.mxu0
    %1589 = vdwg.mxu0
    %s1590 = scalar_lea.vmem [#allocation15], 128
    %v1591 = vld [vmem:[%s1590] sm:$0xf]
    %v1592 = vld [vmem:[%s1590 + $0x4] sm:$0xf]
    %v1593 = vld [vmem:[%s1590 + $0x8] sm:$0xf]
    %v1594 = vld [vmem:[%s1590 + $0xc] sm:$0xf]
    %v1595 = vld [vmem:[%s1590 + $0x10] sm:$0xf]
    %v1596 = vld [vmem:[%s1590 + $0x14] sm:$0xf]
    %v1597 = vld [vmem:[%s1590 + $0x18] sm:$0xf]
    %v1598 = vld [vmem:[%s1590 + $0x1c] sm:$0xf]
    %v1599 = vld [vmem:[%s1590 + $0x20] sm:$0xf]
    %v1600 = vld [vmem:[%s1590 + $0x24] sm:$0xf]
    %v1601 = vld [vmem:[%s1590 + $0x28] sm:$0xf]
    %v1602 = vld [vmem:[%s1590 + $0x2c] sm:$0xf]
    %v1603 = vld [vmem:[%s1590 + $0x30] sm:$0xf]
    %v1604 = vld [vmem:[%s1590 + $0x34] sm:$0xf]
    %v1605 = vld [vmem:[%s1590 + $0x38] sm:$0xf]
    %v1606 = vld [vmem:[%s1590 + $0x3c] sm:$0xf]
    %v1607 = vld [vmem:[%s1590 + $0x40] sm:$0xf]
    %v1608 = vld [vmem:[%s1590 + $0x44] sm:$0xf]
    %v1609 = vld [vmem:[%s1590 + $0x48] sm:$0xf]
    %v1610 = vld [vmem:[%s1590 + $0x4c] sm:$0xf]
    %v1611 = vld [vmem:[%s1590 + $0x50] sm:$0xf]
    %v1612 = vld [vmem:[%s1590 + $0x54] sm:$0xf]
    %v1613 = vld [vmem:[%s1590 + $0x58] sm:$0xf]
    %v1614 = vld [vmem:[%s1590 + $0x5c] sm:$0xf]
    %v1615 = vld [vmem:[%s1590 + $0x60] sm:$0xf]
    %v1616 = vld [vmem:[%s1590 + $0x64] sm:$0xf]
    %v1617 = vld [vmem:[%s1590 + $0x68] sm:$0xf]
    %v1618 = vld [vmem:[%s1590 + $0x6c] sm:$0xf]
    %v1619 = vld [vmem:[%s1590 + $0x70] sm:$0xf]
    %v1620 = vld [vmem:[%s1590 + $0x74] sm:$0xf]
    %v1621 = vld [vmem:[%s1590 + $0x78] sm:$0xf]
    %v1622 = vld [vmem:[%s1590 + $0x7c] sm:$0xf]
    %v1655 = vunpack.c.l.b16 %v1591
    %v1656 = vunpack.c.l.b16 %v1592
    %v1657 = vunpack.c.l.b16 %v1593
    %v1658 = vunpack.c.l.b16 %v1594
    %v1659 = vunpack.c.l.b16 %v1595
    %v1660 = vunpack.c.l.b16 %v1596
    %v1661 = vunpack.c.l.b16 %v1597
    %v1662 = vunpack.c.l.b16 %v1598
    %v1663 = vunpack.c.l.b16 %v1599
    %v1664 = vunpack.c.l.b16 %v1600
    %v1665 = vunpack.c.l.b16 %v1601
    %v1666 = vunpack.c.l.b16 %v1602
    %v1667 = vunpack.c.l.b16 %v1603
    %v1668 = vunpack.c.l.b16 %v1604
    %v1669 = vunpack.c.l.b16 %v1605
    %v1670 = vunpack.c.l.b16 %v1606
    %v1671 = vunpack.c.l.b16 %v1607
    %v1672 = vunpack.c.l.b16 %v1608
    %v1673 = vunpack.c.l.b16 %v1609
    %v1674 = vunpack.c.l.b16 %v1610
    %v1675 = vunpack.c.l.b16 %v1611
    %v1676 = vunpack.c.l.b16 %v1612
    %v1677 = vunpack.c.l.b16 %v1613
    %v1678 = vunpack.c.l.b16 %v1614
    %v1679 = vunpack.c.l.b16 %v1615
    %v1680 = vunpack.c.l.b16 %v1616
    %v1681 = vunpack.c.l.b16 %v1617
    %v1682 = vunpack.c.l.b16 %v1618
    %v1683 = vunpack.c.l.b16 %v1619
    %v1684 = vunpack.c.l.b16 %v1620
    %v1685 = vunpack.c.l.b16 %v1621
    %v1686 = vunpack.c.l.b16 %v1622
    %v1687 = vpack.c.b16 %v1656, %v1655
    %v1688 = vpack.c.b16 %v1658, %v1657
    %v1689 = vpack.c.b16 %v1660, %v1659
    %v1690 = vpack.c.b16 %v1662, %v1661
    %v1691 = vpack.c.b16 %v1664, %v1663
    %v1692 = vpack.c.b16 %v1666, %v1665
    %v1693 = vpack.c.b16 %v1668, %v1667
    %v1694 = vpack.c.b16 %v1670, %v1669
    %v1695 = vpack.c.b16 %v1672, %v1671
    %v1696 = vpack.c.b16 %v1674, %v1673
    %v1697 = vpack.c.b16 %v1676, %v1675
    %v1698 = vpack.c.b16 %v1678, %v1677
    %v1699 = vpack.c.b16 %v1680, %v1679
    %v1700 = vpack.c.b16 %v1682, %v1681
    %v1701 = vpack.c.b16 %v1684, %v1683
    %v1702 = vpack.c.b16 %v1686, %v1685
    %1719 = vmatprep.subr.bf16.mxu0 0
    %1720 = vmatpush1.bf16.msra.mxu0 %v1694
    %1721 = vmatprep.subr.bf16.mxu0 0
    %1722 = vmatpush1.bf16.msra.mxu0 %v1693
    %1723 = vmatprep.subr.bf16.mxu0 0
    %1724 = vmatpush1.bf16.msra.mxu0 %v1692
    %1725 = vmatprep.subr.bf16.mxu0 0
    %1726 = vmatpush1.bf16.msra.mxu0 %v1691
    %1727 = vmatprep.subr.bf16.mxu0 0
    %1728 = vmatpush1.bf16.msra.mxu0 %v1690
    %1729 = vmatprep.subr.bf16.mxu0 0
    %1730 = vmatpush1.bf16.msra.mxu0 %v1689
    %1731 = vmatprep.subr.bf16.mxu0 0
    %1732 = vmatpush1.bf16.msra.mxu0 %v1688
    %1733 = vmatprep.subr.bf16.mxu0 0
    %1734 = vmatpush1.bf16.msra.mxu0 %v1687
    %1735 = vmatprep.subr.bf16.mxu0 0
    %1736 = vmatpush2.bf16.msra.mxu0 %v1702
    %1737 = vmatprep.subr.bf16.mxu0 0
    %1738 = vmatpush2.bf16.msra.mxu0 %v1701
    %1739 = vmatprep.subr.bf16.mxu0 0
    %1740 = vmatpush2.bf16.msra.mxu0 %v1700
    %1741 = vmatprep.subr.bf16.mxu0 0
    %1742 = vmatpush2.bf16.msra.mxu0 %v1699
    %1743 = vmatprep.subr.bf16.mxu0 0
    %1744 = vmatpush2.bf16.msra.mxu0 %v1698
    %1745 = vmatprep.subr.bf16.mxu0 0
    %1746 = vmatpush2.bf16.msra.mxu0 %v1697
    %1747 = vmatprep.subr.bf16.mxu0 0
    %1748 = vmatpush2.bf16.msra.mxu0 %v1696
    %1749 = vmatprep.subr.bf16.mxu0 0
    %1750 = vmatpush2.bf16.msra.mxu0 %v1695
    %1751 = vmatprep.mubr.bf16.mxu0 %v1381
    %1752 = vmatmul.mubr.bf16.gmra.mxu0 %v1380
    %v1753 = vpop.f32.mrf.mxu0
    %v1754 = vadd.f32 0.0, %v1753
    %v1755 = vpop.f32.mrf.mxu0
    %v1756 = vpop.f32.mrf.mxu0
    %v1757 = vadd.f32 0.0, %v1756
    %v1758 = vpop.f32.mrf.mxu0
    %1759 = vmatprep.mubr.bf16.mxu0 %v1383
    %1760 = vmatmul.mubr.bf16.gmra.mxu0 %v1382
    %v1761 = vpop.f32.mrf.mxu0
    %v1762 = vadd.f32 0.0, %v1761
    %v1763 = vpop.f32.mrf.mxu0
    %v1764 = vpop.f32.mrf.mxu0
    %v1765 = vadd.f32 0.0, %v1764
    %v1766 = vpop.f32.mrf.mxu0
    %1767 = vmatprep.mubr.bf16.mxu0 %v1385
    %1768 = vmatmul.mubr.bf16.gmra.mxu0 %v1384
    %v1769 = vpop.f32.mrf.mxu0
    %v1770 = vadd.f32 0.0, %v1769
    %v1771 = vpop.f32.mrf.mxu0
    %v1772 = vpop.f32.mrf.mxu0
    %v1773 = vadd.f32 0.0, %v1772
    %v1774 = vpop.f32.mrf.mxu0
    %1775 = vmatprep.mubr.bf16.mxu0 %v1387
    %1776 = vmatmul.mubr.bf16.gmra.mxu0 %v1386
    %v1777 = vpop.f32.mrf.mxu0
    %v1778 = vadd.f32 0.0, %v1777
    %v1779 = vpop.f32.mrf.mxu0
    %v1780 = vpop.f32.mrf.mxu0
    %v1781 = vadd.f32 0.0, %v1780
    %v1782 = vpop.f32.mrf.mxu0
    %1783 = vmatprep.mubr.bf16.mxu0 %v1389
    %1784 = vmatmul.mubr.bf16.gmra.mxu0 %v1388
    %v1785 = vpop.f32.mrf.mxu0
    %v1786 = vadd.f32 0.0, %v1785
    %v1787 = vpop.f32.mrf.mxu0
    %v1788 = vpop.f32.mrf.mxu0
    %v1789 = vpop.f32.mrf.mxu0
    %1790 = vdwg.mxu0
    %v1791 = vmax.f32 %v1553, %v1754
    %v1792 = vmax.f32 %v1556, %v1757
    %v1793 = vmax.f32 %v1561, %v1762
    %v1794 = vmax.f32 %v1564, %v1765
    %v1795 = vmax.f32 %v1569, %v1770
    %v1796 = vmax.f32 %v1572, %v1773
    %v1797 = vmax.f32 %v1577, %v1778
    %v1798 = vmax.f32 %v1580, %v1781
    %v1799 = vmax.f32 %v1585, %v1786
    %v1800 = vpack.c.bf16 %v1792, %v1791
    %v1801 = vpack.c.bf16 %v1794, %v1793
    %v1802 = vpack.c.bf16 %v1796, %v1795
    %v1803 = vpack.c.bf16 %v1798, %v1797
    %v1804 = vpack.c.bf16 %v1799, %v1799
    %v1805 = vld [vmem:[#allocation16] sm:$0xf]
    %v1806 = vld [vmem:[#allocation16 + $0x4] sm:$0xf]
    %v1807 = vld [vmem:[#allocation16 + $0x8] sm:$0xf]
    %v1808 = vld [vmem:[#allocation16 + $0xc] sm:$0xf]
    %v1813 = vunpack.c.l.b16 %v1805
    %v1814 = vunpack.c.l.b16 %v1806
    %v1815 = vunpack.c.l.b16 %v1807
    %v1816 = vunpack.c.l.b16 %v1808
    %v1817 = vpack.c.b16 %v1814, %v1813
    %v1818 = vpack.c.b16 %v1816, %v1815
    %vm1819 = vcmask 539648
    %v1821 = vsel %vm1819, %v1817, 0
    %v1824 = vsel %vm1819, %v1818, 0
    %vm1826 = vcmask 1040384
    %v1828 = vsel %vm1826, %v1804, 0
    %1830 = vmatprep.subr.bf16.mxu0 0
    %1831 = vmatpush1.bf16.msra.mxu0 0
    %1832 = vmatprep.subr.bf16.mxu0 0
    %1833 = vmatpush1.bf16.msra.mxu0 0
    %1834 = vmatprep.subr.bf16.mxu0 0
    %1835 = vmatpush1.bf16.msra.mxu0 0
    %1836 = vmatprep.subr.bf16.mxu0 0
    %1837 = vmatpush1.bf16.msra.mxu0 %v1828
    %1838 = vmatprep.subr.bf16.mxu0 0
    %1839 = vmatpush1.bf16.msra.mxu0 %v1803
    %1840 = vmatprep.subr.bf16.mxu0 0
    %1841 = vmatpush1.bf16.msra.mxu0 %v1802
    %1842 = vmatprep.subr.bf16.mxu0 0
    %1843 = vmatpush1.bf16.msra.mxu0 %v1801
    %1844 = vmatprep.subr.bf16.mxu0 0
    %1845 = vmatpush1.bf16.msra.mxu0 %v1800
    %1846 = vmatprep.subr.bf16.mxu0 0
    %1847 = vmatpush2.bf16.msra.mxu0 0
    %1848 = vmatprep.subr.bf16.mxu0 0
    %1849 = vmatpush2.bf16.msra.mxu0 0
    %1850 = vmatprep.subr.bf16.mxu0 0
    %1851 = vmatpush2.bf16.msra.mxu0 0
    %1852 = vmatprep.subr.bf16.mxu0 0
    %1853 = vmatpush2.bf16.msra.mxu0 0
    %1854 = vmatprep.subr.bf16.mxu0 0
    %1855 = vmatpush2.bf16.msra.mxu0 0
    %1856 = vmatprep.subr.bf16.mxu0 0
    %1857 = vmatpush2.bf16.msra.mxu0 0
    %1858 = vmatprep.subr.bf16.mxu0 0
    %1859 = vmatpush2.bf16.msra.mxu0 0
    %1860 = vmatprep.subr.bf16.mxu0 0
    %1861 = vmatpush2.bf16.msra.mxu0 0
    %1862 = vmatprep.mubr.bf16.mxu0 0
    %1863 = vmatmul.mubr.bf16.gmra.mxu0 %v1821
    %v1864 = vpop.f32.mrf.mxu0
    %v1865 = vadd.f32 0.0, %v1864
    %v1866 = vpop.f32.mrf.mxu0
    %v1867 = vpop.f32.mrf.mxu0
    %v1868 = vadd.f32 0.0, %v1867
    %v1869 = vpop.f32.mrf.mxu0
    %1870 = vmatprep.mubr.bf16.mxu0 0
    %1871 = vmatmul.mubr.bf16.gmra.mxu0 %v1824
    %v1872 = vpop.f32.mrf.mxu0
    %v1873 = vadd.f32 0.0, %v1872
    %v1874 = vpop.f32.mrf.mxu0
    %v1875 = vpop.f32.mrf.mxu0
    %v1876 = vadd.f32 0.0, %v1875
    %v1877 = vpop.f32.mrf.mxu0
    %1878 = vdwg.mxu0
    %s1879 = scalar_lea.vmem [#allocation16], 16
    %v1880 = vld [vmem:[%s1879] sm:$0xf]
    %v1881 = vld [vmem:[%s1879 + $0x4] sm:$0xf]
    %v1882 = vld [vmem:[%s1879 + $0x8] sm:$0xf]
    %v1883 = vld [vmem:[%s1879 + $0xc] sm:$0xf]
    %v1888 = vunpack.c.l.b16 %v1880
    %v1889 = vunpack.c.l.b16 %v1881
    %v1890 = vunpack.c.l.b16 %v1882
    %v1891 = vunpack.c.l.b16 %v1883
    %v1892 = vpack.c.b16 %v1889, %v1888
    %v1893 = vpack.c.b16 %v1891, %v1890
    %v1895 = vsel %vm1819, %v1892, 0
    %v1898 = vsel %vm1819, %v1893, 0
    %1900 = vmatprep.subr.bf16.mxu0 0
    %1901 = vmatpush1.bf16.msra.mxu0 0
    %1902 = vmatprep.subr.bf16.mxu0 0
    %1903 = vmatpush1.bf16.msra.mxu0 0
    %1904 = vmatprep.subr.bf16.mxu0 0
    %1905 = vmatpush1.bf16.msra.mxu0 0
    %1906 = vmatprep.subr.bf16.mxu0 0
    %1907 = vmatpush1.bf16.msra.mxu0 %v1828
    %1908 = vmatprep.subr.bf16.mxu0 0
    %1909 = vmatpush1.bf16.msra.mxu0 %v1803
    %1910 = vmatprep.subr.bf16.mxu0 0
    %1911 = vmatpush1.bf16.msra.mxu0 %v1802
    %1912 = vmatprep.subr.bf16.mxu0 0
    %1913 = vmatpush1.bf16.msra.mxu0 %v1801
    %1914 = vmatprep.subr.bf16.mxu0 0
    %1915 = vmatpush1.bf16.msra.mxu0 %v1800
    %1916 = vmatprep.subr.bf16.mxu0 0
    %1917 = vmatpush2.bf16.msra.mxu0 0
    %1918 = vmatprep.subr.bf16.mxu0 0
    %1919 = vmatpush2.bf16.msra.mxu0 0
    %1920 = vmatprep.subr.bf16.mxu0 0
    %1921 = vmatpush2.bf16.msra.mxu0 0
    %1922 = vmatprep.subr.bf16.mxu0 0
    %1923 = vmatpush2.bf16.msra.mxu0 0
    %1924 = vmatprep.subr.bf16.mxu0 0
    %1925 = vmatpush2.bf16.msra.mxu0 0
    %1926 = vmatprep.subr.bf16.mxu0 0
    %1927 = vmatpush2.bf16.msra.mxu0 0
    %1928 = vmatprep.subr.bf16.mxu0 0
    %1929 = vmatpush2.bf16.msra.mxu0 0
    %1930 = vmatprep.subr.bf16.mxu0 0
    %1931 = vmatpush2.bf16.msra.mxu0 0
    %1932 = vmatprep.mubr.bf16.mxu0 0
    %1933 = vmatmul.mubr.bf16.gmra.mxu0 %v1895
    %v1934 = vpop.f32.mrf.mxu0
    %v1935 = vadd.f32 0.0, %v1934
    %v1936 = vpop.f32.mrf.mxu0
    %v1937 = vpop.f32.mrf.mxu0
    %v1938 = vadd.f32 0.0, %v1937
    %v1939 = vpop.f32.mrf.mxu0
    %1940 = vmatprep.mubr.bf16.mxu0 0
    %1941 = vmatmul.mubr.bf16.gmra.mxu0 %v1898
    %v1942 = vpop.f32.mrf.mxu0
    %v1943 = vadd.f32 0.0, %v1942
    %v1944 = vpop.f32.mrf.mxu0
    %v1945 = vpop.f32.mrf.mxu0
    %v1946 = vadd.f32 0.0, %v1945
    %v1947 = vpop.f32.mrf.mxu0
    %1948 = vdwg.mxu0
    %v1949 = vmax.f32 %v1865, %v1935
    %v1950 = vmax.f32 %v1868, %v1938
    %v1951 = vmax.f32 %v1873, %v1943
    %v1952 = vmax.f32 %v1876, %v1946
    %vm1953 = vcmask 1043456
    %vm1954 = vcmask 130052
    %vm1955 = vmor %vm1954, %vm1953
    %1956 = vst.msk [vmem:[#allocation3] sm:$0xff] %vm1955, 0
    %1957 = vst.msk [vmem:[#allocation3 + $0x8] sm:$0xff] %vm1955, 0
    %1958 = vst.msk [vmem:[#allocation3 + $0x10] sm:$0xff] %vm1955, 0
    %1959 = vst.msk [vmem:[#allocation3 + $0x18] sm:$0xff] %vm1955, 0
    %vm1960 = vcmask 1041408
    %vm1961 = vcmask 128004
    %vm1962 = vmor %vm1961, %vm1960
    %1963 = vst.msk [vmem:[#allocation3 + $0x20] sm:$0x33] %vm1962, 0
    %v1964 = vpack.c.bf16 %v1950, %v1949
    %v1966 = vunpack.c.l.b16 %v1964
    %v1967 = vunpack.c.h.b16 %v1964
    %v1968 = vpack.c.b16 %v1966, %v1966
    %v1969 = vpack.c.b16 %v1967, %v1967
    %v1971 = vshrl.u32 %v1968, 16
    %v1973 = vrot.slane %v1971, 7
    %v1974 = vshll.u32 %v1968, 16
    %v1976 = vor.u32 %v1973, %v1974
    %v1977 = vrot.slane %v1973, 4
    %v1979 = vshrl.u32 %v1969, 16
    %v1981 = vrot.slane %v1979, 7
    %v1982 = vshll.u32 %v1969, 16
    %v1984 = vor.u32 %v1981, %v1982
    %v1985 = vsel %vm530, %v1977, %v1984
    %v1986 = vrot.slane %v1981, 4
    %1987 = vrot.lane.b32.xlu0 %v1976, 8
    %v1988 = vpop.permute.xlu0 %1987
    %1989 = vrot.lane.b32.xlu0 %v1985, 8
    %v1990 = vpop.permute.xlu0 %1989
    %1991 = vrot.lane.b32.xlu0 %v1986, 8
    %v1992 = vpop.permute.xlu0 %1991
    %v1993 = vrot.slane %v1988, 4
    %v1994 = vrot.slane %v1990, 4
    %v1995 = vrot.slane %v1992, 4
    %vm1996 = vcmask 64512
    %v1997 = vsel %vm1996, %v1993, %v1988
    %v1998 = vsel %vm1996, %v1994, %v1990
    %v1999 = vsel %vm1996, %v1995, %v1992
    %vm2003 = vcmask 1043520
    %vm2004 = vmand %vm2003, %vm582
    %vm2005 = vcmask 64516
    %vm2006 = vsmask.f32 7954
    %vm2007 = vmand %vm2005, %vm2006
    %vm2008 = vmor %vm2007, %vm2004
    %v2009 = vld [vmem:[#allocation3] sm:$0xff]
    %v2010 = vsel %vm2008, %v1997, %v2009
    %2011 = vst [vmem:[#allocation3] sm:$0xff] %v2010
    %vm2012 = vcmask 1043520
    %vm2013 = vcmask 64516
    %vm2014 = vmor %vm2013, %vm2012
    %2015 = vst.msk [vmem:[#allocation3 + $0x8] sm:$0xff] %vm2014, %v1998
    %vm2016 = vcmask 1040448
    %vm2017 = vmand %vm2016, %vm528
    %vm2018 = vcmask 61444
    %vm2019 = vsmask.f32 4352
    %vm2020 = vmand %vm2018, %vm2019
    %vm2021 = vmor %vm2020, %vm2017
    %v2022 = vld [vmem:[#allocation3 + $0x10] sm:$0x11]
    %v2023 = vsel %vm2021, %v1999, %v2022
    %2024 = vst [vmem:[#allocation3 + $0x10] sm:$0x11] %v2023
    %v2025 = vpack.c.bf16 %v1952, %v1951
    %v2027 = vunpack.c.l.b16 %v2025
    %v2028 = vunpack.c.h.b16 %v2025
    %v2029 = vpack.c.b16 %v2027, %v2027
    %v2030 = vpack.c.b16 %v2028, %v2028
    %v2032 = vshrl.u32 %v2029, 16
    %v2034 = vrot.slane %v2032, 6
    %v2035 = vshll.u32 %v2029, 16
    %v2037 = vrot.slane %v2035, 7
    %v2038 = vor.u32 %v2034, %v2037
    %v2039 = vrot.slane %v2038, 4
    %v2041 = vshrl.u32 %v2030, 16
    %v2043 = vrot.slane %v2041, 6
    %v2044 = vshll.u32 %v2030, 16
    %v2046 = vrot.slane %v2044, 7
    %v2047 = vor.u32 %v2043, %v2046
    %v2048 = vsel %vm615, %v2039, %v2047
    %v2049 = vrot.slane %v2047, 4
    %2050 = vrot.lane.b32.xlu0 %v2038, 8
    %v2051 = vpop.permute.xlu0 %2050
    %2052 = vrot.lane.b32.xlu0 %v2048, 8
    %v2053 = vpop.permute.xlu0 %2052
    %2054 = vrot.lane.b32.xlu0 %v2049, 8
    %v2055 = vpop.permute.xlu0 %2054
    %v2056 = vrot.slane %v2051, 4
    %v2057 = vrot.slane %v2053, 4
    %v2058 = vrot.slane %v2055, 4
    %v2059 = vsel %vm1996, %v2056, %v2051
    %v2060 = vsel %vm1996, %v2057, %v2053
    %v2061 = vsel %vm1996, %v2058, %v2055
    %vm2065 = vcmask 1043521
    %vm2066 = vmand %vm2065, %vm671
    %vm2067 = vcmask 64517
    %vm2068 = vsmask.f32 7958
    %vm2069 = vmand %vm2067, %vm2068
    %vm2070 = vmor %vm2069, %vm2066
    %v2071 = vld [vmem:[#allocation3 + $0x10] sm:$0xee]
    %v2072 = vsel %vm2070, %v2059, %v2071
    %2073 = vst [vmem:[#allocation3 + $0x10] sm:$0xee] %v2072
    %2074 = vst.msk [vmem:[#allocation3 + $0x18] sm:$0xff] %vm2014, %v2060
    %vm2075 = vcmask 1041472
    %vm2076 = vmand %vm2075, %vm613
    %vm2077 = vcmask 62468
    %vm2078 = vsmask.f32 5376
    %vm2079 = vmand %vm2077, %vm2078
    %vm2080 = vmor %vm2079, %vm2076
    %v2081 = vld [vmem:[#allocation3 + $0x20] sm:$0x33]
    %v2082 = vsel %vm2080, %v2061, %v2081
    %2083 = vst [vmem:[#allocation3 + $0x20] sm:$0x33] %v2082
    %v2084 = vld [vmem:[#allocation3] sm:$0xff]
    %v2085 = vld [vmem:[#allocation3 + $0x8] sm:$0xff]
    %v2086 = vld [vmem:[#allocation3 + $0x10] sm:$0xff]
    %v2087 = vld [vmem:[#allocation3 + $0x18] sm:$0xff]
    %v2088 = vld [vmem:[#allocation3 + $0x20] sm:$0x11]
    %v2089 = vld [vmem:[#allocation18] sm:$0xff]
    %v2090 = vld [vmem:[#allocation18 + $0x8] sm:$0xff]
    %v2091 = vld [vmem:[#allocation18 + $0x10] sm:$0xff]
    %v2092 = vld [vmem:[#allocation18 + $0x18] sm:$0xff]
    %v2093 = vld [vmem:[#allocation18 + $0x20] sm:$0xff]
    %v2094 = vld [vmem:[#allocation18 + $0x28] sm:$0xff]
    %v2095 = vld [vmem:[#allocation18 + $0x30] sm:$0xff]
    %v2096 = vld [vmem:[#allocation18 + $0x38] sm:$0xff]
    %v2097 = vld [vmem:[#allocation18 + $0x40] sm:$0xff]
    %v2098 = vld [vmem:[#allocation18 + $0x48] sm:$0xff]
    %v2099 = vld [vmem:[#allocation18 + $0x50] sm:$0xff]
    %v2100 = vld [vmem:[#allocation18 + $0x58] sm:$0xff]
    %v2101 = vld [vmem:[#allocation18 + $0x60] sm:$0xff]
    %v2102 = vld [vmem:[#allocation18 + $0x68] sm:$0xff]
    %v2103 = vld [vmem:[#allocation18 + $0x70] sm:$0xff]
    %v2104 = vld [vmem:[#allocation18 + $0x78] sm:$0xff]
    %v2105 = vld [vmem:[#allocation18 + $0x80] sm:$0xff]
    %v2106 = vld [vmem:[#allocation18 + $0x88] sm:$0xff]
    %v2107 = vld [vmem:[#allocation3 + $0x20] sm:$0x33]
    %s2108 = scalar_lea.vmem [#allocation18], 144
    %v2109 = vld [vmem:[%s2108] sm:$0xff]
    %v2110 = vld [vmem:[%s2108 + $0x8] sm:$0xff]
    %v2111 = vld [vmem:[%s2108 + $0x10] sm:$0xff]
    %v2112 = vld [vmem:[%s2108 + $0x18] sm:$0xff]
    %v2113 = vld [vmem:[%s2108 + $0x20] sm:$0xff]
    %v2114 = vld [vmem:[%s2108 + $0x28] sm:$0xff]
    %v2115 = vld [vmem:[%s2108 + $0x30] sm:$0xff]
    %v2116 = vld [vmem:[%s2108 + $0x38] sm:$0xff]
    %v2117 = vld [vmem:[%s2108 + $0x40] sm:$0xff]
    %v2118 = vld [vmem:[%s2108 + $0x48] sm:$0xff]
    %v2119 = vld [vmem:[%s2108 + $0x50] sm:$0xff]
    %v2120 = vld [vmem:[%s2108 + $0x58] sm:$0xff]
    %v2121 = vld [vmem:[%s2108 + $0x60] sm:$0xff]
    %v2122 = vld [vmem:[%s2108 + $0x68] sm:$0xff]
    %v2123 = vld [vmem:[%s2108 + $0x70] sm:$0xff]
    %v2124 = vld [vmem:[%s2108 + $0x78] sm:$0xff]
    %v2125 = vld [vmem:[%s2108 + $0x80] sm:$0xff]
    %v2126 = vld [vmem:[%s2108 + $0x88] sm:$0xff]
    %v2132 = vunpack.c.l.b16 %v2084
    %v2133 = vunpack.c.h.b16 %v2084
    %v2134 = vunpack.c.l.b16 %v2085
    %v2135 = vunpack.c.h.b16 %v2085
    %v2136 = vunpack.c.l.b16 %v2086
    %v2137 = vunpack.c.h.b16 %v2086
    %v2138 = vunpack.c.l.b16 %v2087
    %v2139 = vunpack.c.h.b16 %v2087
    %v2140 = vunpack.c.l.b16 %v2107
    %v2141 = vunpack.c.h.b16 %v2107
    %v2142 = vpack.c.b16 %v2134, %v2132
    %v2143 = vpack.c.b16 %v2135, %v2133
    %v2144 = vpack.c.b16 %v2138, %v2136
    %v2145 = vpack.c.b16 %v2139, %v2137
    %v2146 = vpack.c.b16 %v2140, %v2140
    %v2147 = vpack.c.b16 %v2141, %v2141
    %v2149 = vshrl.u32 %v2142, 16
    %v2151 = vshll.u32 %v2142, 16
    %v2153 = vrot.slane %v2151, 1
    %v2154 = vor.u32 %v2149, %v2153
    %v2156 = vshll.u32 %v2144, 16
    %v2158 = vrot.slane %v2156, 1
    %v2159 = vsel %vm744, %v2154, %v2158
    %v2161 = vshrl.u32 %v2143, 16
    %v2163 = vshll.u32 %v2143, 16
    %v2165 = vrot.slane %v2163, 1
    %v2166 = vor.u32 %v2161, %v2165
    %v2168 = vshll.u32 %v2145, 16
    %v2170 = vrot.slane %v2168, 1
    %v2171 = vsel %vm744, %v2166, %v2170
    %v2172 = vshrl.u32 %v2144, 16
    %v2174 = vor.u32 %v2172, %v2158
    %v2176 = vshll.u32 %v2146, 16
    %v2178 = vrot.slane %v2176, 1
    %v2179 = vsel %vm744, %v2174, %v2178
    %v2180 = vshrl.u32 %v2145, 16
    %v2182 = vor.u32 %v2180, %v2170
    %v2184 = vshll.u32 %v2147, 16
    %v2186 = vrot.slane %v2184, 1
    %v2187 = vsel %vm744, %v2182, %v2186
    %v2188 = vshrl.u32 %v2146, 16
    %v2190 = vor.u32 %v2188, %v2178
    %v2191 = vshrl.u32 %v2147, 16
    %v2193 = vor.u32 %v2191, %v2186
    %v2215 = vunpack.c.l.b16 %v2109
    %v2216 = vunpack.c.h.b16 %v2109
    %v2217 = vunpack.c.l.b16 %v2110
    %v2218 = vunpack.c.h.b16 %v2110
    %v2219 = vunpack.c.l.b16 %v2111
    %v2220 = vunpack.c.h.b16 %v2111
    %v2221 = vunpack.c.l.b16 %v2112
    %v2222 = vunpack.c.h.b16 %v2112
    %v2223 = vunpack.c.l.b16 %v2113
    %v2224 = vunpack.c.h.b16 %v2113
    %v2225 = vunpack.c.l.b16 %v2114
    %v2226 = vunpack.c.h.b16 %v2114
    %v2227 = vunpack.c.l.b16 %v2115
    %v2228 = vunpack.c.h.b16 %v2115
    %v2229 = vunpack.c.l.b16 %v2116
    %v2230 = vunpack.c.h.b16 %v2116
    %v2231 = vunpack.c.l.b16 %v2117
    %v2232 = vunpack.c.h.b16 %v2117
    %v2233 = vunpack.c.l.b16 %v2118
    %v2234 = vunpack.c.h.b16 %v2118
    %v2235 = vunpack.c.l.b16 %v2119
    %v2236 = vunpack.c.h.b16 %v2119
    %v2237 = vunpack.c.l.b16 %v2120
    %v2238 = vunpack.c.h.b16 %v2120
    %v2239 = vunpack.c.l.b16 %v2121
    %v2240 = vunpack.c.h.b16 %v2121
    %v2241 = vunpack.c.l.b16 %v2122
    %v2242 = vunpack.c.h.b16 %v2122
    %v2243 = vunpack.c.l.b16 %v2123
    %v2244 = vunpack.c.h.b16 %v2123
    %v2245 = vunpack.c.l.b16 %v2124
    %v2246 = vunpack.c.h.b16 %v2124
    %v2247 = vunpack.c.l.b16 %v2125
    %v2248 = vunpack.c.h.b16 %v2125
    %v2249 = vunpack.c.l.b16 %v2126
    %v2250 = vunpack.c.h.b16 %v2126
    %v2251 = vpack.c.b16 %v2217, %v2215
    %v2252 = vpack.c.b16 %v2218, %v2216
    %v2253 = vpack.c.b16 %v2221, %v2219
    %v2254 = vpack.c.b16 %v2222, %v2220
    %v2255 = vpack.c.b16 %v2225, %v2223
    %v2256 = vpack.c.b16 %v2226, %v2224
    %v2257 = vpack.c.b16 %v2229, %v2227
    %v2258 = vpack.c.b16 %v2230, %v2228
    %v2259 = vpack.c.b16 %v2233, %v2231
    %v2260 = vpack.c.b16 %v2234, %v2232
    %v2261 = vpack.c.b16 %v2237, %v2235
    %v2262 = vpack.c.b16 %v2238, %v2236
    %v2263 = vpack.c.b16 %v2241, %v2239
    %v2264 = vpack.c.b16 %v2242, %v2240
    %v2265 = vpack.c.b16 %v2245, %v2243
    %v2266 = vpack.c.b16 %v2246, %v2244
    %v2267 = vpack.c.b16 %v2249, %v2247
    %v2268 = vpack.c.b16 %v2250, %v2248
    %vm2287 = vcmask 130048
    %v2289 = vsel %vm2287, %v2171, 0
    %v2292 = vsel %vm2287, %v2187, 0
    %v2295 = vsel %vm2287, %v2193, 0
    %2297 = vmatprep.subr.bf16.mxu0 %v2266
    %2298 = vmatpush1.bf16.msra.mxu0 %v2265
    %2299 = vmatprep.subr.bf16.mxu0 %v2264
    %2300 = vmatpush1.bf16.msra.mxu0 %v2263
    %2301 = vmatprep.subr.bf16.mxu0 %v2262
    %2302 = vmatpush1.bf16.msra.mxu0 %v2261
    %2303 = vmatprep.subr.bf16.mxu0 %v2260
    %2304 = vmatpush1.bf16.msra.mxu0 %v2259
    %2305 = vmatprep.subr.bf16.mxu0 %v2258
    %2306 = vmatpush1.bf16.msra.mxu0 %v2257
    %2307 = vmatprep.subr.bf16.mxu0 %v2256
    %2308 = vmatpush1.bf16.msra.mxu0 %v2255
    %2309 = vmatprep.subr.bf16.mxu0 %v2254
    %2310 = vmatpush1.bf16.msra.mxu0 %v2253
    %2311 = vmatprep.subr.bf16.mxu0 %v2252
    %2312 = vmatpush1.bf16.msra.mxu0 %v2251
    %2313 = vmatprep.subr.bf16.mxu0 0
    %2314 = vmatpush2.bf16.msra.mxu0 0
    %2315 = vmatprep.subr.bf16.mxu0 0
    %2316 = vmatpush2.bf16.msra.mxu0 0
    %2317 = vmatprep.subr.bf16.mxu0 0
    %2318 = vmatpush2.bf16.msra.mxu0 0
    %2319 = vmatprep.subr.bf16.mxu0 0
    %2320 = vmatpush2.bf16.msra.mxu0 0
    %2321 = vmatprep.subr.bf16.mxu0 0
    %2322 = vmatpush2.bf16.msra.mxu0 0
    %2323 = vmatprep.subr.bf16.mxu0 0
    %2324 = vmatpush2.bf16.msra.mxu0 0
    %2325 = vmatprep.subr.bf16.mxu0 0
    %2326 = vmatpush2.bf16.msra.mxu0 0
    %2327 = vmatprep.subr.bf16.mxu0 %v2268
    %2328 = vmatpush2.bf16.msra.mxu0 %v2267
    %2329 = vmatprep.mubr.bf16.mxu0 %v2289
    %2330 = vmatmul.mubr.bf16.gmra.mxu0 %v2159
    %v2331 = vpop.f32.mrf.mxu0
    %v2332 = vadd.f32 0.0, %v2331
    %v2333 = vpop.f32.mrf.mxu0
    %v2334 = vadd.f32 0.0, %v2333
    %v2335 = vpop.f32.mrf.mxu0
    %v2336 = vadd.f32 0.0, %v2335
    %v2337 = vpop.f32.mrf.mxu0
    %v2338 = vadd.f32 0.0, %v2337
    %2339 = vmatprep.mubr.bf16.mxu0 %v2292
    %2340 = vmatmul.mubr.bf16.gmra.mxu0 %v2179
    %v2341 = vpop.f32.mrf.mxu0
    %v2342 = vadd.f32 0.0, %v2341
    %v2343 = vpop.f32.mrf.mxu0
    %v2344 = vadd.f32 0.0, %v2343
    %v2345 = vpop.f32.mrf.mxu0
    %v2346 = vadd.f32 0.0, %v2345
    %v2347 = vpop.f32.mrf.mxu0
    %v2348 = vadd.f32 0.0, %v2347
    %2349 = vmatprep.mubr.bf16.mxu0 %v2295
    %2350 = vmatmul.mubr.bf16.gmra.mxu0 %v2190
    %v2351 = vpop.f32.mrf.mxu0
    %v2352 = vadd.f32 0.0, %v2351
    %v2353 = vpop.f32.mrf.mxu0
    %v2354 = vadd.f32 0.0, %v2353
    %v2355 = vpop.f32.mrf.mxu0
    %v2356 = vpop.f32.mrf.mxu0
    %2357 = vdwg.mxu0
    %v2359 = vunpack.c.l.b16 %v2088
    %v2360 = vunpack.c.h.b16 %v2088
    %v2361 = vpack.c.b16 %v2359, %v2359
    %v2362 = vpack.c.b16 %v2360, %v2360
    %v2384 = vunpack.c.l.b16 %v2089
    %v2385 = vunpack.c.h.b16 %v2089
    %v2386 = vunpack.c.l.b16 %v2090
    %v2387 = vunpack.c.h.b16 %v2090
    %v2388 = vunpack.c.l.b16 %v2091
    %v2389 = vunpack.c.h.b16 %v2091
    %v2390 = vunpack.c.l.b16 %v2092
    %v2391 = vunpack.c.h.b16 %v2092
    %v2392 = vunpack.c.l.b16 %v2093
    %v2393 = vunpack.c.h.b16 %v2093
    %v2394 = vunpack.c.l.b16 %v2094
    %v2395 = vunpack.c.h.b16 %v2094
    %v2396 = vunpack.c.l.b16 %v2095
    %v2397 = vunpack.c.h.b16 %v2095
    %v2398 = vunpack.c.l.b16 %v2096
    %v2399 = vunpack.c.h.b16 %v2096
    %v2400 = vunpack.c.l.b16 %v2097
    %v2401 = vunpack.c.h.b16 %v2097
    %v2402 = vunpack.c.l.b16 %v2098
    %v2403 = vunpack.c.h.b16 %v2098
    %v2404 = vunpack.c.l.b16 %v2099
    %v2405 = vunpack.c.h.b16 %v2099
    %v2406 = vunpack.c.l.b16 %v2100
    %v2407 = vunpack.c.h.b16 %v2100
    %v2408 = vunpack.c.l.b16 %v2101
    %v2409 = vunpack.c.h.b16 %v2101
    %v2410 = vunpack.c.l.b16 %v2102
    %v2411 = vunpack.c.h.b16 %v2102
    %v2412 = vunpack.c.l.b16 %v2103
    %v2413 = vunpack.c.h.b16 %v2103
    %v2414 = vunpack.c.l.b16 %v2104
    %v2415 = vunpack.c.h.b16 %v2104
    %v2416 = vunpack.c.l.b16 %v2105
    %v2417 = vunpack.c.h.b16 %v2105
    %v2418 = vunpack.c.l.b16 %v2106
    %v2419 = vunpack.c.h.b16 %v2106
    %v2420 = vpack.c.b16 %v2386, %v2384
    %v2421 = vpack.c.b16 %v2387, %v2385
    %v2422 = vpack.c.b16 %v2390, %v2388
    %v2423 = vpack.c.b16 %v2391, %v2389
    %v2424 = vpack.c.b16 %v2394, %v2392
    %v2425 = vpack.c.b16 %v2395, %v2393
    %v2426 = vpack.c.b16 %v2398, %v2396
    %v2427 = vpack.c.b16 %v2399, %v2397
    %v2428 = vpack.c.b16 %v2402, %v2400
    %v2429 = vpack.c.b16 %v2403, %v2401
    %v2430 = vpack.c.b16 %v2406, %v2404
    %v2431 = vpack.c.b16 %v2407, %v2405
    %v2432 = vpack.c.b16 %v2410, %v2408
    %v2433 = vpack.c.b16 %v2411, %v2409
    %v2434 = vpack.c.b16 %v2414, %v2412
    %v2435 = vpack.c.b16 %v2415, %v2413
    %v2436 = vpack.c.b16 %v2418, %v2416
    %v2437 = vpack.c.b16 %v2419, %v2417
    %v2456 = vsel %vm2287, %v2143, 0
    %v2458 = vsel %vm2287, %v2145, 0
    %v2461 = vsel %vm2287, %v2362, 0
    %2463 = vmatprep.subr.bf16.mxu0 %v2435
    %2464 = vmatpush1.bf16.msra.mxu0 %v2434
    %2465 = vmatprep.subr.bf16.mxu0 %v2433
    %2466 = vmatpush1.bf16.msra.mxu0 %v2432
    %2467 = vmatprep.subr.bf16.mxu0 %v2431
    %2468 = vmatpush1.bf16.msra.mxu0 %v2430
    %2469 = vmatprep.subr.bf16.mxu0 %v2429
    %2470 = vmatpush1.bf16.msra.mxu0 %v2428
    %2471 = vmatprep.subr.bf16.mxu0 %v2427
    %2472 = vmatpush1.bf16.msra.mxu0 %v2426
    %2473 = vmatprep.subr.bf16.mxu0 %v2425
    %2474 = vmatpush1.bf16.msra.mxu0 %v2424
    %2475 = vmatprep.subr.bf16.mxu0 %v2423
    %2476 = vmatpush1.bf16.msra.mxu0 %v2422
    %2477 = vmatprep.subr.bf16.mxu0 %v2421
    %2478 = vmatpush1.bf16.msra.mxu0 %v2420
    %2479 = vmatprep.subr.bf16.mxu0 0
    %2480 = vmatpush2.bf16.msra.mxu0 0
    %2481 = vmatprep.subr.bf16.mxu0 0
    %2482 = vmatpush2.bf16.msra.mxu0 0
    %2483 = vmatprep.subr.bf16.mxu0 0
    %2484 = vmatpush2.bf16.msra.mxu0 0
    %2485 = vmatprep.subr.bf16.mxu0 0
    %2486 = vmatpush2.bf16.msra.mxu0 0
    %2487 = vmatprep.subr.bf16.mxu0 0
    %2488 = vmatpush2.bf16.msra.mxu0 0
    %2489 = vmatprep.subr.bf16.mxu0 0
    %2490 = vmatpush2.bf16.msra.mxu0 0
    %2491 = vmatprep.subr.bf16.mxu0 0
    %2492 = vmatpush2.bf16.msra.mxu0 0
    %2493 = vmatprep.subr.bf16.mxu0 %v2437
    %2494 = vmatpush2.bf16.msra.mxu0 %v2436
    %2495 = vmatprep.mubr.bf16.mxu0 %v2456
    %2496 = vmatmul.mubr.bf16.gmra.mxu0 %v2142
    %v2497 = vpop.f32.mrf.mxu0
    %v2498 = vadd.f32 %v2332, %v2497
    %v2499 = vpop.f32.mrf.mxu0
    %v2500 = vadd.f32 %v2334, %v2499
    %v2501 = vpop.f32.mrf.mxu0
    %v2502 = vadd.f32 %v2336, %v2501
    %v2503 = vpop.f32.mrf.mxu0
    %v2504 = vadd.f32 %v2338, %v2503
    %2505 = vmatprep.mubr.bf16.mxu0 %v2458
    %2506 = vmatmul.mubr.bf16.gmra.mxu0 %v2144
    %v2507 = vpop.f32.mrf.mxu0
    %v2508 = vadd.f32 %v2342, %v2507
    %v2509 = vpop.f32.mrf.mxu0
    %v2510 = vadd.f32 %v2344, %v2509
    %v2511 = vpop.f32.mrf.mxu0
    %v2512 = vadd.f32 %v2346, %v2511
    %v2513 = vpop.f32.mrf.mxu0
    %v2514 = vadd.f32 %v2348, %v2513
    %2515 = vmatprep.mubr.bf16.mxu0 %v2461
    %2516 = vmatmul.mubr.bf16.gmra.mxu0 %v2361
    %v2517 = vpop.f32.mrf.mxu0
    %v2518 = vadd.f32 %v2352, %v2517
    %v2519 = vpop.f32.mrf.mxu0
    %v2520 = vadd.f32 %v2354, %v2519
    %v2521 = vpop.f32.mrf.mxu0
    %v2522 = vpop.f32.mrf.mxu0
    %2523 = vdwg.mxu0
    %v2524 = vld [vmem:[#allocation3] sm:$0xee]
    %s2525 = scalar_lea.vmem [#allocation18], 288
    %v2526 = vld [vmem:[%s2525] sm:$0xff]
    %v2527 = vld [vmem:[%s2525 + $0x8] sm:$0xff]
    %v2528 = vld [vmem:[%s2525 + $0x10] sm:$0xff]
    %v2529 = vld [vmem:[%s2525 + $0x18] sm:$0xff]
    %v2530 = vld [vmem:[%s2525 + $0x20] sm:$0xff]
    %v2531 = vld [vmem:[%s2525 + $0x28] sm:$0xff]
    %v2532 = vld [vmem:[%s2525 + $0x30] sm:$0xff]
    %v2533 = vld [vmem:[%s2525 + $0x38] sm:$0xff]
    %v2534 = vld [vmem:[%s2525 + $0x40] sm:$0xff]
    %v2535 = vld [vmem:[%s2525 + $0x48] sm:$0xff]
    %v2536 = vld [vmem:[%s2525 + $0x50] sm:$0xff]
    %v2537 = vld [vmem:[%s2525 + $0x58] sm:$0xff]
    %v2538 = vld [vmem:[%s2525 + $0x60] sm:$0xff]
    %v2539 = vld [vmem:[%s2525 + $0x68] sm:$0xff]
    %v2540 = vld [vmem:[%s2525 + $0x70] sm:$0xff]
    %v2541 = vld [vmem:[%s2525 + $0x78] sm:$0xff]
    %v2542 = vld [vmem:[%s2525 + $0x80] sm:$0xff]
    %v2543 = vld [vmem:[%s2525 + $0x88] sm:$0xff]
    %v2545 = vunpack.c.l.b16 %v2524
    %v2546 = vunpack.c.h.b16 %v2524
    %v2547 = vpack.c.b16 %v2134, %v2545
    %v2548 = vpack.c.b16 %v2135, %v2546
    %v2549 = vrot.slane %v2547, 1
    %v2550 = vrot.slane %v2144, 1
    %v2551 = vsel %vm1137, %v2549, %v2550
    %v2552 = vrot.slane %v2548, 1
    %v2553 = vrot.slane %v2145, 1
    %v2554 = vsel %vm1137, %v2552, %v2553
    %v2555 = vrot.slane %v2146, 1
    %v2556 = vsel %vm1137, %v2550, %v2555
    %v2557 = vrot.slane %v2147, 1
    %v2558 = vsel %vm1137, %v2553, %v2557
    %v2580 = vunpack.c.l.b16 %v2526
    %v2581 = vunpack.c.h.b16 %v2526
    %v2582 = vunpack.c.l.b16 %v2527
    %v2583 = vunpack.c.h.b16 %v2527
    %v2584 = vunpack.c.l.b16 %v2528
    %v2585 = vunpack.c.h.b16 %v2528
    %v2586 = vunpack.c.l.b16 %v2529
    %v2587 = vunpack.c.h.b16 %v2529
    %v2588 = vunpack.c.l.b16 %v2530
    %v2589 = vunpack.c.h.b16 %v2530
    %v2590 = vunpack.c.l.b16 %v2531
    %v2591 = vunpack.c.h.b16 %v2531
    %v2592 = vunpack.c.l.b16 %v2532
    %v2593 = vunpack.c.h.b16 %v2532
    %v2594 = vunpack.c.l.b16 %v2533
    %v2595 = vunpack.c.h.b16 %v2533
    %v2596 = vunpack.c.l.b16 %v2534
    %v2597 = vunpack.c.h.b16 %v2534
    %v2598 = vunpack.c.l.b16 %v2535
    %v2599 = vunpack.c.h.b16 %v2535
    %v2600 = vunpack.c.l.b16 %v2536
    %v2601 = vunpack.c.h.b16 %v2536
    %v2602 = vunpack.c.l.b16 %v2537
    %v2603 = vunpack.c.h.b16 %v2537
    %v2604 = vunpack.c.l.b16 %v2538
    %v2605 = vunpack.c.h.b16 %v2538
    %v2606 = vunpack.c.l.b16 %v2539
    %v2607 = vunpack.c.h.b16 %v2539
    %v2608 = vunpack.c.l.b16 %v2540
    %v2609 = vunpack.c.h.b16 %v2540
    %v2610 = vunpack.c.l.b16 %v2541
    %v2611 = vunpack.c.h.b16 %v2541
    %v2612 = vunpack.c.l.b16 %v2542
    %v2613 = vunpack.c.h.b16 %v2542
    %v2614 = vunpack.c.l.b16 %v2543
    %v2615 = vunpack.c.h.b16 %v2543
    %v2616 = vpack.c.b16 %v2582, %v2580
    %v2617 = vpack.c.b16 %v2583, %v2581
    %v2618 = vpack.c.b16 %v2586, %v2584
    %v2619 = vpack.c.b16 %v2587, %v2585
    %v2620 = vpack.c.b16 %v2590, %v2588
    %v2621 = vpack.c.b16 %v2591, %v2589
    %v2622 = vpack.c.b16 %v2594, %v2592
    %v2623 = vpack.c.b16 %v2595, %v2593
    %v2624 = vpack.c.b16 %v2598, %v2596
    %v2625 = vpack.c.b16 %v2599, %v2597
    %v2626 = vpack.c.b16 %v2602, %v2600
    %v2627 = vpack.c.b16 %v2603, %v2601
    %v2628 = vpack.c.b16 %v2606, %v2604
    %v2629 = vpack.c.b16 %v2607, %v2605
    %v2630 = vpack.c.b16 %v2610, %v2608
    %v2631 = vpack.c.b16 %v2611, %v2609
    %v2632 = vpack.c.b16 %v2614, %v2612
    %v2633 = vpack.c.b16 %v2615, %v2613
    %v2653 = vsel %vm2287, %v2554, 0
    %v2656 = vsel %vm2287, %v2558, 0
    %v2659 = vsel %vm2287, %v2557, 0
    %2661 = vmatprep.subr.bf16.mxu0 %v2631
    %2662 = vmatpush1.bf16.msra.mxu0 %v2630
    %2663 = vmatprep.subr.bf16.mxu0 %v2629
    %2664 = vmatpush1.bf16.msra.mxu0 %v2628
    %2665 = vmatprep.subr.bf16.mxu0 %v2627
    %2666 = vmatpush1.bf16.msra.mxu0 %v2626
    %2667 = vmatprep.subr.bf16.mxu0 %v2625
    %2668 = vmatpush1.bf16.msra.mxu0 %v2624
    %2669 = vmatprep.subr.bf16.mxu0 %v2623
    %2670 = vmatpush1.bf16.msra.mxu0 %v2622
    %2671 = vmatprep.subr.bf16.mxu0 %v2621
    %2672 = vmatpush1.bf16.msra.mxu0 %v2620
    %2673 = vmatprep.subr.bf16.mxu0 %v2619
    %2674 = vmatpush1.bf16.msra.mxu0 %v2618
    %2675 = vmatprep.subr.bf16.mxu0 %v2617
    %2676 = vmatpush1.bf16.msra.mxu0 %v2616
    %2677 = vmatprep.subr.bf16.mxu0 0
    %2678 = vmatpush2.bf16.msra.mxu0 0
    %2679 = vmatprep.subr.bf16.mxu0 0
    %2680 = vmatpush2.bf16.msra.mxu0 0
    %2681 = vmatprep.subr.bf16.mxu0 0
    %2682 = vmatpush2.bf16.msra.mxu0 0
    %2683 = vmatprep.subr.bf16.mxu0 0
    %2684 = vmatpush2.bf16.msra.mxu0 0
    %2685 = vmatprep.subr.bf16.mxu0 0
    %2686 = vmatpush2.bf16.msra.mxu0 0
    %2687 = vmatprep.subr.bf16.mxu0 0
    %2688 = vmatpush2.bf16.msra.mxu0 0
    %2689 = vmatprep.subr.bf16.mxu0 0
    %2690 = vmatpush2.bf16.msra.mxu0 0
    %2691 = vmatprep.subr.bf16.mxu0 %v2633
    %2692 = vmatpush2.bf16.msra.mxu0 %v2632
    %2693 = vmatprep.mubr.bf16.mxu0 %v2653
    %2694 = vmatmul.mubr.bf16.gmra.mxu0 %v2551
    %v2695 = vpop.f32.mrf.mxu0
    %v2696 = vadd.f32 0.0, %v2695
    %v2697 = vpop.f32.mrf.mxu0
    %v2698 = vadd.f32 0.0, %v2697
    %v2699 = vpop.f32.mrf.mxu0
    %v2700 = vadd.f32 0.0, %v2699
    %v2701 = vpop.f32.mrf.mxu0
    %v2702 = vadd.f32 0.0, %v2701
    %2703 = vmatprep.mubr.bf16.mxu0 %v2656
    %2704 = vmatmul.mubr.bf16.gmra.mxu0 %v2556
    %v2705 = vpop.f32.mrf.mxu0
    %v2706 = vadd.f32 0.0, %v2705
    %v2707 = vpop.f32.mrf.mxu0
    %v2708 = vadd.f32 0.0, %v2707
    %v2709 = vpop.f32.mrf.mxu0
    %v2710 = vadd.f32 0.0, %v2709
    %v2711 = vpop.f32.mrf.mxu0
    %v2712 = vadd.f32 0.0, %v2711
    %2713 = vmatprep.mubr.bf16.mxu0 %v2659
    %2714 = vmatmul.mubr.bf16.gmra.mxu0 %v2555
    %v2715 = vpop.f32.mrf.mxu0
    %v2716 = vadd.f32 0.0, %v2715
    %v2717 = vpop.f32.mrf.mxu0
    %v2718 = vadd.f32 0.0, %v2717
    %v2719 = vpop.f32.mrf.mxu0
    %v2720 = vpop.f32.mrf.mxu0
    %2721 = vdwg.mxu0
    %v2722 = vadd.f32 %v2498, %v2696
    %v2723 = vadd.f32 %v2500, %v2698
    %v2724 = vadd.f32 %v2502, %v2700
    %v2725 = vadd.f32 %v2504, %v2702
    %v2726 = vadd.f32 %v2508, %v2706
    %v2727 = vadd.f32 %v2510, %v2708
    %v2728 = vadd.f32 %v2512, %v2710
    %v2729 = vadd.f32 %v2514, %v2712
    %v2730 = vadd.f32 %v2518, %v2716
    %v2731 = vadd.f32 %v2520, %v2718
    %v2732 = vld [vmem:[#allocation19] sm:$0x3]
    %v2734 = vlaneseq
    %v2735 = vshrl.u32 %v2734, 7
    %v2736 = vsub.s32 0, %v2735
    %v2737 = vrot.slane %v2732, %v2736
    %v2738 = vlaneseq
    %v2739 = vshrl.u32 %v2738, 7
    %v2740 = vsub.s32 1, %v2739
    %v2741 = vrot.slane %v2732, %v2740
    %v2744 = vadd.f32 %v2722, %v2737
    %v2745 = vadd.f32 %v2723, %v2741
    %v2746 = vadd.f32 %v2724, %v2737
    %v2747 = vadd.f32 %v2725, %v2741
    %v2748 = vadd.f32 %v2726, %v2737
    %v2749 = vadd.f32 %v2727, %v2741
    %v2750 = vadd.f32 %v2728, %v2737
    %v2751 = vadd.f32 %v2729, %v2741
    %v2752 = vadd.f32 %v2730, %v2737
    %v2753 = vadd.f32 %v2731, %v2741
    %v2754 = vmax.f32 %v2744, 0.0
    %v2755 = vmax.f32 %v2745, 0.0
    %v2756 = vmax.f32 %v2746, 0.0
    %v2757 = vmax.f32 %v2747, 0.0
    %v2758 = vmax.f32 %v2748, 0.0
    %v2759 = vmax.f32 %v2749, 0.0
    %v2760 = vmax.f32 %v2750, 0.0
    %v2761 = vmax.f32 %v2751, 0.0
    %v2762 = vmax.f32 %v2752, 0.0
    %v2763 = vmax.f32 %v2753, 0.0
    %v2764 = vpack.c.bf16 %v2756, %v2754
    %v2765 = vpack.c.bf16 %v2757, %v2755
    %v2766 = vpack.c.bf16 %v2760, %v2758
    %v2767 = vpack.c.bf16 %v2761, %v2759
    %v2768 = vpack.c.bf16 %v2762, %v2762
    %v2769 = vpack.c.bf16 %v2763, %v2763
    %v2770 = vld [vmem:[#allocation21] sm:$0xf]
    %v2771 = vld [vmem:[#allocation21 + $0x4] sm:$0xf]
    %v2772 = vld [vmem:[#allocation21 + $0x8] sm:$0xf]
    %v2773 = vld [vmem:[#allocation21 + $0xc] sm:$0xf]
    %v2774 = vld [vmem:[#allocation21 + $0x10] sm:$0xf]
    %v2775 = vld [vmem:[#allocation21 + $0x14] sm:$0xf]
    %v2776 = vld [vmem:[#allocation21 + $0x18] sm:$0xf]
    %v2777 = vld [vmem:[#allocation21 + $0x1c] sm:$0xf]
    %v2778 = vld [vmem:[#allocation21 + $0x20] sm:$0xf]
    %v2779 = vld [vmem:[#allocation21 + $0x24] sm:$0xf]
    %v2780 = vld [vmem:[#allocation21 + $0x28] sm:$0xf]
    %v2781 = vld [vmem:[#allocation21 + $0x2c] sm:$0xf]
    %v2782 = vld [vmem:[#allocation21 + $0x30] sm:$0xf]
    %v2783 = vld [vmem:[#allocation21 + $0x34] sm:$0xf]
    %v2784 = vld [vmem:[#allocation21 + $0x38] sm:$0xf]
    %v2785 = vld [vmem:[#allocation21 + $0x3c] sm:$0xf]
    %v2786 = vld [vmem:[#allocation21 + $0x40] sm:$0xf]
    %v2787 = vld [vmem:[#allocation21 + $0x44] sm:$0xf]
    %v2788 = vld [vmem:[#allocation21 + $0x48] sm:$0xf]
    %v2789 = vld [vmem:[#allocation21 + $0x4c] sm:$0xf]
    %v2790 = vld [vmem:[#allocation21 + $0x50] sm:$0xf]
    %v2791 = vld [vmem:[#allocation21 + $0x54] sm:$0xf]
    %v2792 = vld [vmem:[#allocation21 + $0x58] sm:$0xf]
    %v2793 = vld [vmem:[#allocation21 + $0x5c] sm:$0xf]
    %v2794 = vld [vmem:[#allocation21 + $0x60] sm:$0xf]
    %v2795 = vld [vmem:[#allocation21 + $0x64] sm:$0xf]
    %v2796 = vld [vmem:[#allocation21 + $0x68] sm:$0xf]
    %v2797 = vld [vmem:[#allocation21 + $0x6c] sm:$0xf]
    %v2798 = vld [vmem:[#allocation21 + $0x70] sm:$0xf]
    %v2799 = vld [vmem:[#allocation21 + $0x74] sm:$0xf]
    %v2800 = vld [vmem:[#allocation21 + $0x78] sm:$0xf]
    %v2801 = vld [vmem:[#allocation21 + $0x7c] sm:$0xf]
    %v2834 = vunpack.c.l.b16 %v2770
    %v2835 = vunpack.c.l.b16 %v2771
    %v2836 = vunpack.c.l.b16 %v2772
    %v2837 = vunpack.c.l.b16 %v2773
    %v2838 = vunpack.c.l.b16 %v2774
    %v2839 = vunpack.c.l.b16 %v2775
    %v2840 = vunpack.c.l.b16 %v2776
    %v2841 = vunpack.c.l.b16 %v2777
    %v2842 = vunpack.c.l.b16 %v2778
    %v2843 = vunpack.c.l.b16 %v2779
    %v2844 = vunpack.c.l.b16 %v2780
    %v2845 = vunpack.c.l.b16 %v2781
    %v2846 = vunpack.c.l.b16 %v2782
    %v2847 = vunpack.c.l.b16 %v2783
    %v2848 = vunpack.c.l.b16 %v2784
    %v2849 = vunpack.c.l.b16 %v2785
    %v2850 = vunpack.c.l.b16 %v2786
    %v2851 = vunpack.c.l.b16 %v2787
    %v2852 = vunpack.c.l.b16 %v2788
    %v2853 = vunpack.c.l.b16 %v2789
    %v2854 = vunpack.c.l.b16 %v2790
    %v2855 = vunpack.c.l.b16 %v2791
    %v2856 = vunpack.c.l.b16 %v2792
    %v2857 = vunpack.c.l.b16 %v2793
    %v2858 = vunpack.c.l.b16 %v2794
    %v2859 = vunpack.c.l.b16 %v2795
    %v2860 = vunpack.c.l.b16 %v2796
    %v2861 = vunpack.c.l.b16 %v2797
    %v2862 = vunpack.c.l.b16 %v2798
    %v2863 = vunpack.c.l.b16 %v2799
    %v2864 = vunpack.c.l.b16 %v2800
    %v2865 = vunpack.c.l.b16 %v2801
    %v2866 = vpack.c.b16 %v2835, %v2834
    %v2867 = vpack.c.b16 %v2837, %v2836
    %v2868 = vpack.c.b16 %v2839, %v2838
    %v2869 = vpack.c.b16 %v2841, %v2840
    %v2870 = vpack.c.b16 %v2843, %v2842
    %v2871 = vpack.c.b16 %v2845, %v2844
    %v2872 = vpack.c.b16 %v2847, %v2846
    %v2873 = vpack.c.b16 %v2849, %v2848
    %v2874 = vpack.c.b16 %v2851, %v2850
    %v2875 = vpack.c.b16 %v2853, %v2852
    %v2876 = vpack.c.b16 %v2855, %v2854
    %v2877 = vpack.c.b16 %v2857, %v2856
    %v2878 = vpack.c.b16 %v2859, %v2858
    %v2879 = vpack.c.b16 %v2861, %v2860
    %v2880 = vpack.c.b16 %v2863, %v2862
    %v2881 = vpack.c.b16 %v2865, %v2864
    %2898 = vmatprep.subr.bf16.mxu0 0
    %2899 = vmatpush1.bf16.msra.mxu0 %v2873
    %2900 = vmatprep.subr.bf16.mxu0 0
    %2901 = vmatpush1.bf16.msra.mxu0 %v2872
    %2902 = vmatprep.subr.bf16.mxu0 0
    %2903 = vmatpush1.bf16.msra.mxu0 %v2871
    %2904 = vmatprep.subr.bf16.mxu0 0
    %2905 = vmatpush1.bf16.msra.mxu0 %v2870
    %2906 = vmatprep.subr.bf16.mxu0 0
    %2907 = vmatpush1.bf16.msra.mxu0 %v2869
    %2908 = vmatprep.subr.bf16.mxu0 0
    %2909 = vmatpush1.bf16.msra.mxu0 %v2868
    %2910 = vmatprep.subr.bf16.mxu0 0
    %2911 = vmatpush1.bf16.msra.mxu0 %v2867
    %2912 = vmatprep.subr.bf16.mxu0 0
    %2913 = vmatpush1.bf16.msra.mxu0 %v2866
    %2914 = vmatprep.subr.bf16.mxu0 0
    %2915 = vmatpush2.bf16.msra.mxu0 %v2881
    %2916 = vmatprep.subr.bf16.mxu0 0
    %2917 = vmatpush2.bf16.msra.mxu0 %v2880
    %2918 = vmatprep.subr.bf16.mxu0 0
    %2919 = vmatpush2.bf16.msra.mxu0 %v2879
    %2920 = vmatprep.subr.bf16.mxu0 0
    %2921 = vmatpush2.bf16.msra.mxu0 %v2878
    %2922 = vmatprep.subr.bf16.mxu0 0
    %2923 = vmatpush2.bf16.msra.mxu0 %v2877
    %2924 = vmatprep.subr.bf16.mxu0 0
    %2925 = vmatpush2.bf16.msra.mxu0 %v2876
    %2926 = vmatprep.subr.bf16.mxu0 0
    %2927 = vmatpush2.bf16.msra.mxu0 %v2875
    %2928 = vmatprep.subr.bf16.mxu0 0
    %2929 = vmatpush2.bf16.msra.mxu0 %v2874
    %2930 = vmatprep.mubr.bf16.mxu0 %v2765
    %2931 = vmatmul.mubr.bf16.gmra.mxu0 %v2764
    %v2932 = vpop.f32.mrf.mxu0
    %v2933 = vadd.f32 0.0, %v2932
    %v2934 = vpop.f32.mrf.mxu0
    %v2935 = vpop.f32.mrf.mxu0
    %v2936 = vadd.f32 0.0, %v2935
    %v2937 = vpop.f32.mrf.mxu0
    %2938 = vmatprep.mubr.bf16.mxu0 %v2767
    %2939 = vmatmul.mubr.bf16.gmra.mxu0 %v2766
    %v2940 = vpop.f32.mrf.mxu0
    %v2941 = vadd.f32 0.0, %v2940
    %v2942 = vpop.f32.mrf.mxu0
    %v2943 = vpop.f32.mrf.mxu0
    %v2944 = vadd.f32 0.0, %v2943
    %v2945 = vpop.f32.mrf.mxu0
    %2946 = vmatprep.mubr.bf16.mxu0 %v2769
    %2947 = vmatmul.mubr.bf16.gmra.mxu0 %v2768
    %v2948 = vpop.f32.mrf.mxu0
    %v2949 = vadd.f32 0.0, %v2948
    %v2950 = vpop.f32.mrf.mxu0
    %v2951 = vpop.f32.mrf.mxu0
    %v2952 = vpop.f32.mrf.mxu0
    %2953 = vdwg.mxu0
    %s2954 = scalar_lea.vmem [#allocation21], 128
    %v2955 = vld [vmem:[%s2954] sm:$0xf]
    %v2956 = vld [vmem:[%s2954 + $0x4] sm:$0xf]
    %v2957 = vld [vmem:[%s2954 + $0x8] sm:$0xf]
    %v2958 = vld [vmem:[%s2954 + $0xc] sm:$0xf]
    %v2959 = vld [vmem:[%s2954 + $0x10] sm:$0xf]
    %v2960 = vld [vmem:[%s2954 + $0x14] sm:$0xf]
    %v2961 = vld [vmem:[%s2954 + $0x18] sm:$0xf]
    %v2962 = vld [vmem:[%s2954 + $0x1c] sm:$0xf]
    %v2963 = vld [vmem:[%s2954 + $0x20] sm:$0xf]
    %v2964 = vld [vmem:[%s2954 + $0x24] sm:$0xf]
    %v2965 = vld [vmem:[%s2954 + $0x28] sm:$0xf]
    %v2966 = vld [vmem:[%s2954 + $0x2c] sm:$0xf]
    %v2967 = vld [vmem:[%s2954 + $0x30] sm:$0xf]
    %v2968 = vld [vmem:[%s2954 + $0x34] sm:$0xf]
    %v2969 = vld [vmem:[%s2954 + $0x38] sm:$0xf]
    %v2970 = vld [vmem:[%s2954 + $0x3c] sm:$0xf]
    %v2971 = vld [vmem:[%s2954 + $0x40] sm:$0xf]
    %v2972 = vld [vmem:[%s2954 + $0x44] sm:$0xf]
    %v2973 = vld [vmem:[%s2954 + $0x48] sm:$0xf]
    %v2974 = vld [vmem:[%s2954 + $0x4c] sm:$0xf]
    %v2975 = vld [vmem:[%s2954 + $0x50] sm:$0xf]
    %v2976 = vld [vmem:[%s2954 + $0x54] sm:$0xf]
    %v2977 = vld [vmem:[%s2954 + $0x58] sm:$0xf]
    %v2978 = vld [vmem:[%s2954 + $0x5c] sm:$0xf]
    %v2979 = vld [vmem:[%s2954 + $0x60] sm:$0xf]
    %v2980 = vld [vmem:[%s2954 + $0x64] sm:$0xf]
    %v2981 = vld [vmem:[%s2954 + $0x68] sm:$0xf]
    %v2982 = vld [vmem:[%s2954 + $0x6c] sm:$0xf]
    %v2983 = vld [vmem:[%s2954 + $0x70] sm:$0xf]
    %v2984 = vld [vmem:[%s2954 + $0x74] sm:$0xf]
    %v2985 = vld [vmem:[%s2954 + $0x78] sm:$0xf]
    %v2986 = vld [vmem:[%s2954 + $0x7c] sm:$0xf]
    %v3019 = vunpack.c.l.b16 %v2955
    %v3020 = vunpack.c.l.b16 %v2956
    %v3021 = vunpack.c.l.b16 %v2957
    %v3022 = vunpack.c.l.b16 %v2958
    %v3023 = vunpack.c.l.b16 %v2959
    %v3024 = vunpack.c.l.b16 %v2960
    %v3025 = vunpack.c.l.b16 %v2961
    %v3026 = vunpack.c.l.b16 %v2962
    %v3027 = vunpack.c.l.b16 %v2963
    %v3028 = vunpack.c.l.b16 %v2964
    %v3029 = vunpack.c.l.b16 %v2965
    %v3030 = vunpack.c.l.b16 %v2966
    %v3031 = vunpack.c.l.b16 %v2967
    %v3032 = vunpack.c.l.b16 %v2968
    %v3033 = vunpack.c.l.b16 %v2969
    %v3034 = vunpack.c.l.b16 %v2970
    %v3035 = vunpack.c.l.b16 %v2971
    %v3036 = vunpack.c.l.b16 %v2972
    %v3037 = vunpack.c.l.b16 %v2973
    %v3038 = vunpack.c.l.b16 %v2974
    %v3039 = vunpack.c.l.b16 %v2975
    %v3040 = vunpack.c.l.b16 %v2976
    %v3041 = vunpack.c.l.b16 %v2977
    %v3042 = vunpack.c.l.b16 %v2978
    %v3043 = vunpack.c.l.b16 %v2979
    %v3044 = vunpack.c.l.b16 %v2980
    %v3045 = vunpack.c.l.b16 %v2981
    %v3046 = vunpack.c.l.b16 %v2982
    %v3047 = vunpack.c.l.b16 %v2983
    %v3048 = vunpack.c.l.b16 %v2984
    %v3049 = vunpack.c.l.b16 %v2985
    %v3050 = vunpack.c.l.b16 %v2986
    %v3051 = vpack.c.b16 %v3020, %v3019
    %v3052 = vpack.c.b16 %v3022, %v3021
    %v3053 = vpack.c.b16 %v3024, %v3023
    %v3054 = vpack.c.b16 %v3026, %v3025
    %v3055 = vpack.c.b16 %v3028, %v3027
    %v3056 = vpack.c.b16 %v3030, %v3029
    %v3057 = vpack.c.b16 %v3032, %v3031
    %v3058 = vpack.c.b16 %v3034, %v3033
    %v3059 = vpack.c.b16 %v3036, %v3035
    %v3060 = vpack.c.b16 %v3038, %v3037
    %v3061 = vpack.c.b16 %v3040, %v3039
    %v3062 = vpack.c.b16 %v3042, %v3041
    %v3063 = vpack.c.b16 %v3044, %v3043
    %v3064 = vpack.c.b16 %v3046, %v3045
    %v3065 = vpack.c.b16 %v3048, %v3047
    %v3066 = vpack.c.b16 %v3050, %v3049
    %3083 = vmatprep.subr.bf16.mxu0 0
    %3084 = vmatpush1.bf16.msra.mxu0 %v3058
    %3085 = vmatprep.subr.bf16.mxu0 0
    %3086 = vmatpush1.bf16.msra.mxu0 %v3057
    %3087 = vmatprep.subr.bf16.mxu0 0
    %3088 = vmatpush1.bf16.msra.mxu0 %v3056
    %3089 = vmatprep.subr.bf16.mxu0 0
    %3090 = vmatpush1.bf16.msra.mxu0 %v3055
    %3091 = vmatprep.subr.bf16.mxu0 0
    %3092 = vmatpush1.bf16.msra.mxu0 %v3054
    %3093 = vmatprep.subr.bf16.mxu0 0
    %3094 = vmatpush1.bf16.msra.mxu0 %v3053
    %3095 = vmatprep.subr.bf16.mxu0 0
    %3096 = vmatpush1.bf16.msra.mxu0 %v3052
    %3097 = vmatprep.subr.bf16.mxu0 0
    %3098 = vmatpush1.bf16.msra.mxu0 %v3051
    %3099 = vmatprep.subr.bf16.mxu0 0
    %3100 = vmatpush2.bf16.msra.mxu0 %v3066
    %3101 = vmatprep.subr.bf16.mxu0 0
    %3102 = vmatpush2.bf16.msra.mxu0 %v3065
    %3103 = vmatprep.subr.bf16.mxu0 0
    %3104 = vmatpush2.bf16.msra.mxu0 %v3064
    %3105 = vmatprep.subr.bf16.mxu0 0
    %3106 = vmatpush2.bf16.msra.mxu0 %v3063
    %3107 = vmatprep.subr.bf16.mxu0 0
    %3108 = vmatpush2.bf16.msra.mxu0 %v3062
    %3109 = vmatprep.subr.bf16.mxu0 0
    %3110 = vmatpush2.bf16.msra.mxu0 %v3061
    %3111 = vmatprep.subr.bf16.mxu0 0
    %3112 = vmatpush2.bf16.msra.mxu0 %v3060
    %3113 = vmatprep.subr.bf16.mxu0 0
    %3114 = vmatpush2.bf16.msra.mxu0 %v3059
    %3115 = vmatprep.mubr.bf16.mxu0 %v2765
    %3116 = vmatmul.mubr.bf16.gmra.mxu0 %v2764
    %v3117 = vpop.f32.mrf.mxu0
    %v3118 = vadd.f32 0.0, %v3117
    %v3119 = vpop.f32.mrf.mxu0
    %v3120 = vpop.f32.mrf.mxu0
    %v3121 = vadd.f32 0.0, %v3120
    %v3122 = vpop.f32.mrf.mxu0
    %3123 = vmatprep.mubr.bf16.mxu0 %v2767
    %3124 = vmatmul.mubr.bf16.gmra.mxu0 %v2766
    %v3125 = vpop.f32.mrf.mxu0
    %v3126 = vadd.f32 0.0, %v3125
    %v3127 = vpop.f32.mrf.mxu0
    %v3128 = vpop.f32.mrf.mxu0
    %v3129 = vadd.f32 0.0, %v3128
    %v3130 = vpop.f32.mrf.mxu0
    %3131 = vmatprep.mubr.bf16.mxu0 %v2769
    %3132 = vmatmul.mubr.bf16.gmra.mxu0 %v2768
    %v3133 = vpop.f32.mrf.mxu0
    %v3134 = vadd.f32 0.0, %v3133
    %v3135 = vpop.f32.mrf.mxu0
    %v3136 = vpop.f32.mrf.mxu0
    %v3137 = vpop.f32.mrf.mxu0
    %3138 = vdwg.mxu0
    %v3139 = vmax.f32 %v2933, %v3118
    %v3140 = vmax.f32 %v2936, %v3121
    %v3141 = vmax.f32 %v2941, %v3126
    %v3142 = vmax.f32 %v2944, %v3129
    %v3143 = vmax.f32 %v2949, %v3134
    %v3144 = vpack.c.bf16 %v3140, %v3139
    %v3145 = vpack.c.bf16 %v3142, %v3141
    %v3146 = vpack.c.bf16 %v3143, %v3143
    %v3147 = vld [vmem:[%s17] sm:$0xf]
    %v3148 = vld [vmem:[%s17 + $0x4] sm:$0xf]
    %v3151 = vunpack.c.l.b16 %v3147
    %v3152 = vunpack.c.l.b16 %v3148
    %v3153 = vpack.c.b16 %v3152, %v3151
    %vm3154 = vcmask 277504
    %v3156 = vsel %vm3154, %v3153, 0
    %v3159 = vsel %vm1826, %v3146, 0
    %3161 = vmatprep.subr.bf16.mxu0 0
    %3162 = vmatpush1.bf16.msra.mxu0 0
    %3163 = vmatprep.subr.bf16.mxu0 0
    %3164 = vmatpush1.bf16.msra.mxu0 0
    %3165 = vmatprep.subr.bf16.mxu0 0
    %3166 = vmatpush1.bf16.msra.mxu0 0
    %3167 = vmatprep.subr.bf16.mxu0 0
    %3168 = vmatpush1.bf16.msra.mxu0 0
    %3169 = vmatprep.subr.bf16.mxu0 0
    %3170 = vmatpush1.bf16.msra.mxu0 0
    %3171 = vmatprep.subr.bf16.mxu0 0
    %3172 = vmatpush1.bf16.msra.mxu0 %v3159
    %3173 = vmatprep.subr.bf16.mxu0 0
    %3174 = vmatpush1.bf16.msra.mxu0 %v3145
    %3175 = vmatprep.subr.bf16.mxu0 0
    %3176 = vmatpush1.bf16.msra.mxu0 %v3144
    %3177 = vmatprep.subr.bf16.mxu0 0
    %3178 = vmatpush2.bf16.msra.mxu0 0
    %3179 = vmatprep.subr.bf16.mxu0 0
    %3180 = vmatpush2.bf16.msra.mxu0 0
    %3181 = vmatprep.subr.bf16.mxu0 0
    %3182 = vmatpush2.bf16.msra.mxu0 0
    %3183 = vmatprep.subr.bf16.mxu0 0
    %3184 = vmatpush2.bf16.msra.mxu0 0
    %3185 = vmatprep.subr.bf16.mxu0 0
    %3186 = vmatpush2.bf16.msra.mxu0 0
    %3187 = vmatprep.subr.bf16.mxu0 0
    %3188 = vmatpush2.bf16.msra.mxu0 0
    %3189 = vmatprep.subr.bf16.mxu0 0
    %3190 = vmatpush2.bf16.msra.mxu0 0
    %3191 = vmatprep.subr.bf16.mxu0 0
    %3192 = vmatpush2.bf16.msra.mxu0 0
    %3193 = vmatprep.mubr.bf16.mxu0 0
    %3194 = vmatmul.mubr.bf16.gmra.mxu0 %v3156
    %v3195 = vpop.f32.mrf.mxu0
    %v3196 = vadd.f32 0.0, %v3195
    %v3197 = vpop.f32.mrf.mxu0
    %v3198 = vpop.f32.mrf.mxu0
    %v3199 = vadd.f32 0.0, %v3198
    %v3200 = vpop.f32.mrf.mxu0
    %3201 = vdwg.mxu0
    %s3202 = scalar_lea.vmem %s17, 8
    %v3203 = vld [vmem:[%s3202] sm:$0xf]
    %v3204 = vld [vmem:[%s3202 + $0x4] sm:$0xf]
    %v3207 = vunpack.c.l.b16 %v3203
    %v3208 = vunpack.c.l.b16 %v3204
    %v3209 = vpack.c.b16 %v3208, %v3207
    %v3211 = vsel %vm3154, %v3209, 0
    %3213 = vmatprep.subr.bf16.mxu0 0
    %3214 = vmatpush1.bf16.msra.mxu0 0
    %3215 = vmatprep.subr.bf16.mxu0 0
    %3216 = vmatpush1.bf16.msra.mxu0 0
    %3217 = vmatprep.subr.bf16.mxu0 0
    %3218 = vmatpush1.bf16.msra.mxu0 0
    %3219 = vmatprep.subr.bf16.mxu0 0
    %3220 = vmatpush1.bf16.msra.mxu0 0
    %3221 = vmatprep.subr.bf16.mxu0 0
    %3222 = vmatpush1.bf16.msra.mxu0 0
    %3223 = vmatprep.subr.bf16.mxu0 0
    %3224 = vmatpush1.bf16.msra.mxu0 %v3159
    %3225 = vmatprep.subr.bf16.mxu0 0
    %3226 = vmatpush1.bf16.msra.mxu0 %v3145
    %3227 = vmatprep.subr.bf16.mxu0 0
    %3228 = vmatpush1.bf16.msra.mxu0 %v3144
    %3229 = vmatprep.subr.bf16.mxu0 0
    %3230 = vmatpush2.bf16.msra.mxu0 0
    %3231 = vmatprep.subr.bf16.mxu0 0
    %3232 = vmatpush2.bf16.msra.mxu0 0
    %3233 = vmatprep.subr.bf16.mxu0 0
    %3234 = vmatpush2.bf16.msra.mxu0 0
    %3235 = vmatprep.subr.bf16.mxu0 0
    %3236 = vmatpush2.bf16.msra.mxu0 0
    %3237 = vmatprep.subr.bf16.mxu0 0
    %3238 = vmatpush2.bf16.msra.mxu0 0
    %3239 = vmatprep.subr.bf16.mxu0 0
    %3240 = vmatpush2.bf16.msra.mxu0 0
    %3241 = vmatprep.subr.bf16.mxu0 0
    %3242 = vmatpush2.bf16.msra.mxu0 0
    %3243 = vmatprep.subr.bf16.mxu0 0
    %3244 = vmatpush2.bf16.msra.mxu0 0
    %3245 = vmatprep.mubr.bf16.mxu0 0
    %3246 = vmatmul.mubr.bf16.gmra.mxu0 %v3211
    %v3247 = vpop.f32.mrf.mxu0
    %v3248 = vadd.f32 0.0, %v3247
    %v3249 = vpop.f32.mrf.mxu0
    %v3250 = vpop.f32.mrf.mxu0
    %v3251 = vadd.f32 0.0, %v3250
    %v3252 = vpop.f32.mrf.mxu0
    %3253 = vdwg.mxu0
    %v3254 = vmax.f32 %v3196, %v3248
    %v3255 = vmax.f32 %v3199, %v3251
    %vm3256 = vcmask 261124
    %vm3257 = vmor %vm3256, %vm1953
    %3258 = vst.msk [vmem:[#allocation4] sm:$0xff] %vm3257, 0
    %3259 = vst.msk [vmem:[#allocation4 + $0x8] sm:$0xff] %vm3257, 0
    %vm3260 = vcmask 259076
    %vm3261 = vmor %vm3260, %vm1960
    %3262 = vst.msk [vmem:[#allocation4 + $0x10] sm:$0x33] %vm3261, 0
    %v3263 = vpack.c.bf16 %v3254, %v3254
    %v3265 = vunpack.c.l.b16 %v3263
    %v3266 = vpack.c.b16 %v3265, %v3265
    %v3268 = vshrl.u32 %v3266, 16
    %v3270 = vrot.slane %v3268, 7
    %v3271 = vshll.u32 %v3266, 16
    %v3273 = vor.u32 %v3270, %v3271
    %v3274 = vrot.slane %v3270, 4
    %3275 = vrot.lane.b32.xlu0 %v3273, 16
    %v3276 = vpop.permute.xlu0 %3275
    %3277 = vrot.lane.b32.xlu0 %v3274, 16
    %v3278 = vpop.permute.xlu0 %3277
    %v3279 = vrot.slane %v3276, 4
    %v3280 = vrot.slane %v3278, 4
    %vm3281 = vcmask 130048
    %v3282 = vsel %vm3281, %v3279, %v3276
    %v3283 = vsel %vm3281, %v3280, %v3278
    %vm3286 = vcmask 1043584
    %vm3287 = vmand %vm3286, %vm582
    %vm3288 = vcmask 130052
    %vm3289 = vmand %vm3288, %vm2006
    %vm3290 = vmor %vm3289, %vm3287
    %v3291 = vld [vmem:[#allocation4] sm:$0xff]
    %v3292 = vsel %vm3290, %v3282, %v3291
    %3293 = vst [vmem:[#allocation4] sm:$0xff] %v3292
    %vm3294 = vcmask 1040512
    %vm3295 = vmand %vm3294, %vm528
    %vm3296 = vcmask 126980
    %vm3297 = vmand %vm3296, %vm2019
    %vm3298 = vmor %vm3297, %vm3295
    %v3299 = vld [vmem:[#allocation4 + $0x8] sm:$0x11]
    %v3300 = vsel %vm3298, %v3283, %v3299
    %3301 = vst [vmem:[#allocation4 + $0x8] sm:$0x11] %v3300
    %v3302 = vpack.c.bf16 %v3255, %v3255
    %v3304 = vunpack.c.l.b16 %v3302
    %v3305 = vpack.c.b16 %v3304, %v3304
    %v3307 = vshrl.u32 %v3305, 16
    %v3309 = vrot.slane %v3307, 6
    %v3310 = vshll.u32 %v3305, 16
    %v3312 = vrot.slane %v3310, 7
    %v3313 = vor.u32 %v3309, %v3312
    %v3314 = vrot.slane %v3313, 4
    %3315 = vrot.lane.b32.xlu0 %v3313, 16
    %v3316 = vpop.permute.xlu0 %3315
    %3317 = vrot.lane.b32.xlu0 %v3314, 16
    %v3318 = vpop.permute.xlu0 %3317
    %v3319 = vrot.slane %v3316, 4
    %v3320 = vrot.slane %v3318, 4
    %v3321 = vsel %vm3281, %v3319, %v3316
    %v3322 = vsel %vm3281, %v3320, %v3318
    %vm3325 = vcmask 1043585
    %vm3326 = vmand %vm3325, %vm671
    %vm3327 = vcmask 130053
    %vm3328 = vmand %vm3327, %vm2068
    %vm3329 = vmor %vm3328, %vm3326
    %v3330 = vld [vmem:[#allocation4 + $0x8] sm:$0xee]
    %v3331 = vsel %vm3329, %v3321, %v3330
    %3332 = vst [vmem:[#allocation4 + $0x8] sm:$0xee] %v3331
    %vm3333 = vcmask 1041536
    %vm3334 = vmand %vm3333, %vm613
    %vm3335 = vcmask 128004
    %vm3336 = vmand %vm3335, %vm2078
    %vm3337 = vmor %vm3336, %vm3334
    %v3338 = vld [vmem:[#allocation4 + $0x10] sm:$0x33]
    %v3339 = vsel %vm3337, %v3322, %v3338
    %3340 = vst [vmem:[#allocation4 + $0x10] sm:$0x33] %v3339
    %v3341 = vld [vmem:[#allocation4] sm:$0xff]
    %v3342 = vld [vmem:[#allocation4 + $0x8] sm:$0xff]
    %v3343 = vld [vmem:[#allocation4 + $0x10] sm:$0x11]
    %v3344 = vld [vmem:[#allocation22] sm:$0xff]
    %v3345 = vld [vmem:[#allocation22 + $0x8] sm:$0xff]
    %v3346 = vld [vmem:[#allocation22 + $0x10] sm:$0xff]
    %v3347 = vld [vmem:[#allocation22 + $0x18] sm:$0xff]
    %v3348 = vld [vmem:[#allocation22 + $0x20] sm:$0xff]
    %v3349 = vld [vmem:[#allocation22 + $0x28] sm:$0xff]
    %v3350 = vld [vmem:[#allocation22 + $0x30] sm:$0xff]
    %v3351 = vld [vmem:[#allocation22 + $0x38] sm:$0xff]
    %v3352 = vld [vmem:[#allocation22 + $0x40] sm:$0xff]
    %v3353 = vld [vmem:[#allocation22 + $0x48] sm:$0xff]
    %v3354 = vld [vmem:[#allocation22 + $0x50] sm:$0xff]
    %v3355 = vld [vmem:[#allocation22 + $0x58] sm:$0xff]
    %v3356 = vld [vmem:[#allocation22 + $0x60] sm:$0xff]
    %v3357 = vld [vmem:[#allocation22 + $0x68] sm:$0xff]
    %v3358 = vld [vmem:[#allocation22 + $0x70] sm:$0xff]
    %v3359 = vld [vmem:[#allocation22 + $0x78] sm:$0xff]
    %v3360 = vld [vmem:[#allocation22 + $0x80] sm:$0xff]
    %v3361 = vld [vmem:[#allocation22 + $0x88] sm:$0xff]
    %v3362 = vld [vmem:[#allocation22 + $0x90] sm:$0xff]
    %v3363 = vld [vmem:[#allocation22 + $0x98] sm:$0xff]
    %v3364 = vld [vmem:[#allocation4 + $0x10] sm:$0x33]
    %s3365 = scalar_lea.vmem [#allocation22], 160
    %v3366 = vld [vmem:[%s3365] sm:$0xff]
    %v3367 = vld [vmem:[%s3365 + $0x8] sm:$0xff]
    %v3368 = vld [vmem:[%s3365 + $0x10] sm:$0xff]
    %v3369 = vld [vmem:[%s3365 + $0x18] sm:$0xff]
    %v3370 = vld [vmem:[%s3365 + $0x20] sm:$0xff]
    %v3371 = vld [vmem:[%s3365 + $0x28] sm:$0xff]
    %v3372 = vld [vmem:[%s3365 + $0x30] sm:$0xff]
    %v3373 = vld [vmem:[%s3365 + $0x38] sm:$0xff]
    %v3374 = vld [vmem:[%s3365 + $0x40] sm:$0xff]
    %v3375 = vld [vmem:[%s3365 + $0x48] sm:$0xff]
    %v3376 = vld [vmem:[%s3365 + $0x50] sm:$0xff]
    %v3377 = vld [vmem:[%s3365 + $0x58] sm:$0xff]
    %v3378 = vld [vmem:[%s3365 + $0x60] sm:$0xff]
    %v3379 = vld [vmem:[%s3365 + $0x68] sm:$0xff]
    %v3380 = vld [vmem:[%s3365 + $0x70] sm:$0xff]
    %v3381 = vld [vmem:[%s3365 + $0x78] sm:$0xff]
    %v3382 = vld [vmem:[%s3365 + $0x80] sm:$0xff]
    %v3383 = vld [vmem:[%s3365 + $0x88] sm:$0xff]
    %v3384 = vld [vmem:[%s3365 + $0x90] sm:$0xff]
    %v3385 = vld [vmem:[%s3365 + $0x98] sm:$0xff]
    %v3389 = vunpack.c.l.b16 %v3341
    %v3390 = vunpack.c.h.b16 %v3341
    %v3391 = vunpack.c.l.b16 %v3342
    %v3392 = vunpack.c.h.b16 %v3342
    %v3393 = vunpack.c.l.b16 %v3364
    %v3394 = vunpack.c.h.b16 %v3364
    %v3395 = vpack.c.b16 %v3391, %v3389
    %v3396 = vpack.c.b16 %v3392, %v3390
    %v3397 = vpack.c.b16 %v3393, %v3393
    %v3398 = vpack.c.b16 %v3394, %v3394
    %v3400 = vshrl.u32 %v3395, 16
    %v3402 = vshll.u32 %v3395, 16
    %v3404 = vrot.slane %v3402, 1
    %v3405 = vor.u32 %v3400, %v3404
    %v3407 = vshll.u32 %v3397, 16
    %v3409 = vrot.slane %v3407, 1
    %v3410 = vsel %vm744, %v3405, %v3409
    %v3412 = vshrl.u32 %v3396, 16
    %v3414 = vshll.u32 %v3396, 16
    %v3416 = vrot.slane %v3414, 1
    %v3417 = vor.u32 %v3412, %v3416
    %v3419 = vshll.u32 %v3398, 16
    %v3421 = vrot.slane %v3419, 1
    %v3422 = vsel %vm744, %v3417, %v3421
    %v3423 = vshrl.u32 %v3397, 16
    %v3425 = vor.u32 %v3423, %v3409
    %v3426 = vshrl.u32 %v3398, 16
    %v3428 = vor.u32 %v3426, %v3421
    %v3451 = vunpack.c.l.b16 %v3366
    %v3452 = vunpack.c.h.b16 %v3366
    %v3453 = vunpack.c.l.b16 %v3367
    %v3454 = vunpack.c.h.b16 %v3367
    %v3455 = vunpack.c.l.b16 %v3368
    %v3456 = vunpack.c.h.b16 %v3368
    %v3457 = vunpack.c.l.b16 %v3369
    %v3458 = vunpack.c.h.b16 %v3369
    %v3459 = vunpack.c.l.b16 %v3370
    %v3460 = vunpack.c.h.b16 %v3370
    %v3461 = vunpack.c.l.b16 %v3371
    %v3462 = vunpack.c.h.b16 %v3371
    %v3463 = vunpack.c.l.b16 %v3372
    %v3464 = vunpack.c.h.b16 %v3372
    %v3465 = vunpack.c.l.b16 %v3373
    %v3466 = vunpack.c.h.b16 %v3373
    %v3467 = vunpack.c.l.b16 %v3374
    %v3468 = vunpack.c.h.b16 %v3374
    %v3469 = vunpack.c.l.b16 %v3375
    %v3470 = vunpack.c.h.b16 %v3375
    %v3471 = vunpack.c.l.b16 %v3376
    %v3472 = vunpack.c.h.b16 %v3376
    %v3473 = vunpack.c.l.b16 %v3377
    %v3474 = vunpack.c.h.b16 %v3377
    %v3475 = vunpack.c.l.b16 %v3378
    %v3476 = vunpack.c.h.b16 %v3378
    %v3477 = vunpack.c.l.b16 %v3379
    %v3478 = vunpack.c.h.b16 %v3379
    %v3479 = vunpack.c.l.b16 %v3380
    %v3480 = vunpack.c.h.b16 %v3380
    %v3481 = vunpack.c.l.b16 %v3381
    %v3482 = vunpack.c.h.b16 %v3381
    %v3483 = vunpack.c.l.b16 %v3382
    %v3484 = vunpack.c.h.b16 %v3382
    %v3485 = vunpack.c.l.b16 %v3383
    %v3486 = vunpack.c.h.b16 %v3383
    %v3487 = vunpack.c.l.b16 %v3384
    %v3488 = vunpack.c.h.b16 %v3384
    %v3489 = vunpack.c.l.b16 %v3385
    %v3490 = vunpack.c.h.b16 %v3385
    %v3491 = vpack.c.b16 %v3453, %v3451
    %v3492 = vpack.c.b16 %v3454, %v3452
    %v3493 = vpack.c.b16 %v3457, %v3455
    %v3494 = vpack.c.b16 %v3458, %v3456
    %v3495 = vpack.c.b16 %v3461, %v3459
    %v3496 = vpack.c.b16 %v3462, %v3460
    %v3497 = vpack.c.b16 %v3465, %v3463
    %v3498 = vpack.c.b16 %v3466, %v3464
    %v3499 = vpack.c.b16 %v3469, %v3467
    %v3500 = vpack.c.b16 %v3470, %v3468
    %v3501 = vpack.c.b16 %v3473, %v3471
    %v3502 = vpack.c.b16 %v3474, %v3472
    %v3503 = vpack.c.b16 %v3477, %v3475
    %v3504 = vpack.c.b16 %v3478, %v3476
    %v3505 = vpack.c.b16 %v3481, %v3479
    %v3506 = vpack.c.b16 %v3482, %v3480
    %v3507 = vpack.c.b16 %v3485, %v3483
    %v3508 = vpack.c.b16 %v3486, %v3484
    %v3509 = vpack.c.b16 %v3489, %v3487
    %v3510 = vpack.c.b16 %v3490, %v3488
    %vm3531 = vcmask 261120
    %v3533 = vsel %vm3531, %v3422, 0
    %v3536 = vsel %vm3531, %v3428, 0
    %3538 = vmatprep.subr.bf16.mxu0 %v3506
    %3539 = vmatpush1.bf16.msra.mxu0 %v3505
    %3540 = vmatprep.subr.bf16.mxu0 %v3504
    %3541 = vmatpush1.bf16.msra.mxu0 %v3503
    %3542 = vmatprep.subr.bf16.mxu0 %v3502
    %3543 = vmatpush1.bf16.msra.mxu0 %v3501
    %3544 = vmatprep.subr.bf16.mxu0 %v3500
    %3545 = vmatpush1.bf16.msra.mxu0 %v3499
    %3546 = vmatprep.subr.bf16.mxu0 %v3498
    %3547 = vmatpush1.bf16.msra.mxu0 %v3497
    %3548 = vmatprep.subr.bf16.mxu0 %v3496
    %3549 = vmatpush1.bf16.msra.mxu0 %v3495
    %3550 = vmatprep.subr.bf16.mxu0 %v3494
    %3551 = vmatpush1.bf16.msra.mxu0 %v3493
    %3552 = vmatprep.subr.bf16.mxu0 %v3492
    %3553 = vmatpush1.bf16.msra.mxu0 %v3491
    %3554 = vmatprep.subr.bf16.mxu0 0
    %3555 = vmatpush2.bf16.msra.mxu0 0
    %3556 = vmatprep.subr.bf16.mxu0 0
    %3557 = vmatpush2.bf16.msra.mxu0 0
    %3558 = vmatprep.subr.bf16.mxu0 0
    %3559 = vmatpush2.bf16.msra.mxu0 0
    %3560 = vmatprep.subr.bf16.mxu0 0
    %3561 = vmatpush2.bf16.msra.mxu0 0
    %3562 = vmatprep.subr.bf16.mxu0 0
    %3563 = vmatpush2.bf16.msra.mxu0 0
    %3564 = vmatprep.subr.bf16.mxu0 0
    %3565 = vmatpush2.bf16.msra.mxu0 0
    %3566 = vmatprep.subr.bf16.mxu0 %v3510
    %3567 = vmatpush2.bf16.msra.mxu0 %v3509
    %3568 = vmatprep.subr.bf16.mxu0 %v3508
    %3569 = vmatpush2.bf16.msra.mxu0 %v3507
    %3570 = vmatprep.mubr.bf16.mxu0 %v3533
    %3571 = vmatmul.mubr.bf16.gmra.mxu0 %v3410
    %v3572 = vpop.f32.mrf.mxu0
    %v3573 = vadd.f32 0.0, %v3572
    %v3574 = vpop.f32.mrf.mxu0
    %v3575 = vadd.f32 0.0, %v3574
    %v3576 = vpop.f32.mrf.mxu0
    %v3577 = vadd.f32 0.0, %v3576
    %v3578 = vpop.f32.mrf.mxu0
    %v3579 = vadd.f32 0.0, %v3578
    %3580 = vmatprep.mubr.bf16.mxu0 %v3536
    %3581 = vmatmul.mubr.bf16.gmra.mxu0 %v3425
    %v3582 = vpop.f32.mrf.mxu0
    %v3583 = vadd.f32 0.0, %v3582
    %v3584 = vpop.f32.mrf.mxu0
    %v3585 = vadd.f32 0.0, %v3584
    %v3586 = vpop.f32.mrf.mxu0
    %v3587 = vpop.f32.mrf.mxu0
    %3588 = vdwg.mxu0
    %v3590 = vunpack.c.l.b16 %v3343
    %v3591 = vunpack.c.h.b16 %v3343
    %v3592 = vpack.c.b16 %v3590, %v3590
    %v3593 = vpack.c.b16 %v3591, %v3591
    %v3616 = vunpack.c.l.b16 %v3344
    %v3617 = vunpack.c.h.b16 %v3344
    %v3618 = vunpack.c.l.b16 %v3345
    %v3619 = vunpack.c.h.b16 %v3345
    %v3620 = vunpack.c.l.b16 %v3346
    %v3621 = vunpack.c.h.b16 %v3346
    %v3622 = vunpack.c.l.b16 %v3347
    %v3623 = vunpack.c.h.b16 %v3347
    %v3624 = vunpack.c.l.b16 %v3348
    %v3625 = vunpack.c.h.b16 %v3348
    %v3626 = vunpack.c.l.b16 %v3349
    %v3627 = vunpack.c.h.b16 %v3349
    %v3628 = vunpack.c.l.b16 %v3350
    %v3629 = vunpack.c.h.b16 %v3350
    %v3630 = vunpack.c.l.b16 %v3351
    %v3631 = vunpack.c.h.b16 %v3351
    %v3632 = vunpack.c.l.b16 %v3352
    %v3633 = vunpack.c.h.b16 %v3352
    %v3634 = vunpack.c.l.b16 %v3353
    %v3635 = vunpack.c.h.b16 %v3353
    %v3636 = vunpack.c.l.b16 %v3354
    %v3637 = vunpack.c.h.b16 %v3354
    %v3638 = vunpack.c.l.b16 %v3355
    %v3639 = vunpack.c.h.b16 %v3355
    %v3640 = vunpack.c.l.b16 %v3356
    %v3641 = vunpack.c.h.b16 %v3356
    %v3642 = vunpack.c.l.b16 %v3357
    %v3643 = vunpack.c.h.b16 %v3357
    %v3644 = vunpack.c.l.b16 %v3358
    %v3645 = vunpack.c.h.b16 %v3358
    %v3646 = vunpack.c.l.b16 %v3359
    %v3647 = vunpack.c.h.b16 %v3359
    %v3648 = vunpack.c.l.b16 %v3360
    %v3649 = vunpack.c.h.b16 %v3360
    %v3650 = vunpack.c.l.b16 %v3361
    %v3651 = vunpack.c.h.b16 %v3361
    %v3652 = vunpack.c.l.b16 %v3362
    %v3653 = vunpack.c.h.b16 %v3362
    %v3654 = vunpack.c.l.b16 %v3363
    %v3655 = vunpack.c.h.b16 %v3363
    %v3656 = vpack.c.b16 %v3618, %v3616
    %v3657 = vpack.c.b16 %v3619, %v3617
    %v3658 = vpack.c.b16 %v3622, %v3620
    %v3659 = vpack.c.b16 %v3623, %v3621
    %v3660 = vpack.c.b16 %v3626, %v3624
    %v3661 = vpack.c.b16 %v3627, %v3625
    %v3662 = vpack.c.b16 %v3630, %v3628
    %v3663 = vpack.c.b16 %v3631, %v3629
    %v3664 = vpack.c.b16 %v3634, %v3632
    %v3665 = vpack.c.b16 %v3635, %v3633
    %v3666 = vpack.c.b16 %v3638, %v3636
    %v3667 = vpack.c.b16 %v3639, %v3637
    %v3668 = vpack.c.b16 %v3642, %v3640
    %v3669 = vpack.c.b16 %v3643, %v3641
    %v3670 = vpack.c.b16 %v3646, %v3644
    %v3671 = vpack.c.b16 %v3647, %v3645
    %v3672 = vpack.c.b16 %v3650, %v3648
    %v3673 = vpack.c.b16 %v3651, %v3649
    %v3674 = vpack.c.b16 %v3654, %v3652
    %v3675 = vpack.c.b16 %v3655, %v3653
    %v3696 = vsel %vm3531, %v3396, 0
    %v3699 = vsel %vm3531, %v3593, 0
    %3701 = vmatprep.subr.bf16.mxu0 %v3671
    %3702 = vmatpush1.bf16.msra.mxu0 %v3670
    %3703 = vmatprep.subr.bf16.mxu0 %v3669
    %3704 = vmatpush1.bf16.msra.mxu0 %v3668
    %3705 = vmatprep.subr.bf16.mxu0 %v3667
    %3706 = vmatpush1.bf16.msra.mxu0 %v3666
    %3707 = vmatprep.subr.bf16.mxu0 %v3665
    %3708 = vmatpush1.bf16.msra.mxu0 %v3664
    %3709 = vmatprep.subr.bf16.mxu0 %v3663
    %3710 = vmatpush1.bf16.msra.mxu0 %v3662
    %3711 = vmatprep.subr.bf16.mxu0 %v3661
    %3712 = vmatpush1.bf16.msra.mxu0 %v3660
    %3713 = vmatprep.subr.bf16.mxu0 %v3659
    %3714 = vmatpush1.bf16.msra.mxu0 %v3658
    %3715 = vmatprep.subr.bf16.mxu0 %v3657
    %3716 = vmatpush1.bf16.msra.mxu0 %v3656
    %3717 = vmatprep.subr.bf16.mxu0 0
    %3718 = vmatpush2.bf16.msra.mxu0 0
    %3719 = vmatprep.subr.bf16.mxu0 0
    %3720 = vmatpush2.bf16.msra.mxu0 0
    %3721 = vmatprep.subr.bf16.mxu0 0
    %3722 = vmatpush2.bf16.msra.mxu0 0
    %3723 = vmatprep.subr.bf16.mxu0 0
    %3724 = vmatpush2.bf16.msra.mxu0 0
    %3725 = vmatprep.subr.bf16.mxu0 0
    %3726 = vmatpush2.bf16.msra.mxu0 0
    %3727 = vmatprep.subr.bf16.mxu0 0
    %3728 = vmatpush2.bf16.msra.mxu0 0
    %3729 = vmatprep.subr.bf16.mxu0 %v3675
    %3730 = vmatpush2.bf16.msra.mxu0 %v3674
    %3731 = vmatprep.subr.bf16.mxu0 %v3673
    %3732 = vmatpush2.bf16.msra.mxu0 %v3672
    %3733 = vmatprep.mubr.bf16.mxu0 %v3696
    %3734 = vmatmul.mubr.bf16.gmra.mxu0 %v3395
    %v3735 = vpop.f32.mrf.mxu0
    %v3736 = vadd.f32 %v3573, %v3735
    %v3737 = vpop.f32.mrf.mxu0
    %v3738 = vadd.f32 %v3575, %v3737
    %v3739 = vpop.f32.mrf.mxu0
    %v3740 = vadd.f32 %v3577, %v3739
    %v3741 = vpop.f32.mrf.mxu0
    %v3742 = vadd.f32 %v3579, %v3741
    %3743 = vmatprep.mubr.bf16.mxu0 %v3699
    %3744 = vmatmul.mubr.bf16.gmra.mxu0 %v3592
    %v3745 = vpop.f32.mrf.mxu0
    %v3746 = vadd.f32 %v3583, %v3745
    %v3747 = vpop.f32.mrf.mxu0
    %v3748 = vadd.f32 %v3585, %v3747
    %v3749 = vpop.f32.mrf.mxu0
    %v3750 = vpop.f32.mrf.mxu0
    %3751 = vdwg.mxu0
    %v3752 = vld [vmem:[#allocation4] sm:$0xee]
    %s3753 = scalar_lea.vmem [#allocation22], 320
    %v3754 = vld [vmem:[%s3753] sm:$0xff]
    %v3755 = vld [vmem:[%s3753 + $0x8] sm:$0xff]
    %v3756 = vld [vmem:[%s3753 + $0x10] sm:$0xff]
    %v3757 = vld [vmem:[%s3753 + $0x18] sm:$0xff]
    %v3758 = vld [vmem:[%s3753 + $0x20] sm:$0xff]
    %v3759 = vld [vmem:[%s3753 + $0x28] sm:$0xff]
    %v3760 = vld [vmem:[%s3753 + $0x30] sm:$0xff]
    %v3761 = vld [vmem:[%s3753 + $0x38] sm:$0xff]
    %v3762 = vld [vmem:[%s3753 + $0x40] sm:$0xff]
    %v3763 = vld [vmem:[%s3753 + $0x48] sm:$0xff]
    %v3764 = vld [vmem:[%s3753 + $0x50] sm:$0xff]
    %v3765 = vld [vmem:[%s3753 + $0x58] sm:$0xff]
    %v3766 = vld [vmem:[%s3753 + $0x60] sm:$0xff]
    %v3767 = vld [vmem:[%s3753 + $0x68] sm:$0xff]
    %v3768 = vld [vmem:[%s3753 + $0x70] sm:$0xff]
    %v3769 = vld [vmem:[%s3753 + $0x78] sm:$0xff]
    %v3770 = vld [vmem:[%s3753 + $0x80] sm:$0xff]
    %v3771 = vld [vmem:[%s3753 + $0x88] sm:$0xff]
    %v3772 = vld [vmem:[%s3753 + $0x90] sm:$0xff]
    %v3773 = vld [vmem:[%s3753 + $0x98] sm:$0xff]
    %v3775 = vunpack.c.l.b16 %v3752
    %v3776 = vunpack.c.h.b16 %v3752
    %v3777 = vpack.c.b16 %v3391, %v3775
    %v3778 = vpack.c.b16 %v3392, %v3776
    %v3779 = vrot.slane %v3777, 1
    %v3780 = vrot.slane %v3397, 1
    %v3781 = vsel %vm1137, %v3779, %v3780
    %v3782 = vrot.slane %v3778, 1
    %v3783 = vrot.slane %v3398, 1
    %v3784 = vsel %vm1137, %v3782, %v3783
    %v3807 = vunpack.c.l.b16 %v3754
    %v3808 = vunpack.c.h.b16 %v3754
    %v3809 = vunpack.c.l.b16 %v3755
    %v3810 = vunpack.c.h.b16 %v3755
    %v3811 = vunpack.c.l.b16 %v3756
    %v3812 = vunpack.c.h.b16 %v3756
    %v3813 = vunpack.c.l.b16 %v3757
    %v3814 = vunpack.c.h.b16 %v3757
    %v3815 = vunpack.c.l.b16 %v3758
    %v3816 = vunpack.c.h.b16 %v3758
    %v3817 = vunpack.c.l.b16 %v3759
    %v3818 = vunpack.c.h.b16 %v3759
    %v3819 = vunpack.c.l.b16 %v3760
    %v3820 = vunpack.c.h.b16 %v3760
    %v3821 = vunpack.c.l.b16 %v3761
    %v3822 = vunpack.c.h.b16 %v3761
    %v3823 = vunpack.c.l.b16 %v3762
    %v3824 = vunpack.c.h.b16 %v3762
    %v3825 = vunpack.c.l.b16 %v3763
    %v3826 = vunpack.c.h.b16 %v3763
    %v3827 = vunpack.c.l.b16 %v3764
    %v3828 = vunpack.c.h.b16 %v3764
    %v3829 = vunpack.c.l.b16 %v3765
    %v3830 = vunpack.c.h.b16 %v3765
    %v3831 = vunpack.c.l.b16 %v3766
    %v3832 = vunpack.c.h.b16 %v3766
    %v3833 = vunpack.c.l.b16 %v3767
    %v3834 = vunpack.c.h.b16 %v3767
    %v3835 = vunpack.c.l.b16 %v3768
    %v3836 = vunpack.c.h.b16 %v3768
    %v3837 = vunpack.c.l.b16 %v3769
    %v3838 = vunpack.c.h.b16 %v3769
    %v3839 = vunpack.c.l.b16 %v3770
    %v3840 = vunpack.c.h.b16 %v3770
    %v3841 = vunpack.c.l.b16 %v3771
    %v3842 = vunpack.c.h.b16 %v3771
    %v3843 = vunpack.c.l.b16 %v3772
    %v3844 = vunpack.c.h.b16 %v3772
    %v3845 = vunpack.c.l.b16 %v3773
    %v3846 = vunpack.c.h.b16 %v3773
    %v3847 = vpack.c.b16 %v3809, %v3807
    %v3848 = vpack.c.b16 %v3810, %v3808
    %v3849 = vpack.c.b16 %v3813, %v3811
    %v3850 = vpack.c.b16 %v3814, %v3812
    %v3851 = vpack.c.b16 %v3817, %v3815
    %v3852 = vpack.c.b16 %v3818, %v3816
    %v3853 = vpack.c.b16 %v3821, %v3819
    %v3854 = vpack.c.b16 %v3822, %v3820
    %v3855 = vpack.c.b16 %v3825, %v3823
    %v3856 = vpack.c.b16 %v3826, %v3824
    %v3857 = vpack.c.b16 %v3829, %v3827
    %v3858 = vpack.c.b16 %v3830, %v3828
    %v3859 = vpack.c.b16 %v3833, %v3831
    %v3860 = vpack.c.b16 %v3834, %v3832
    %v3861 = vpack.c.b16 %v3837, %v3835
    %v3862 = vpack.c.b16 %v3838, %v3836
    %v3863 = vpack.c.b16 %v3841, %v3839
    %v3864 = vpack.c.b16 %v3842, %v3840
    %v3865 = vpack.c.b16 %v3845, %v3843
    %v3866 = vpack.c.b16 %v3846, %v3844
    %v3888 = vsel %vm3531, %v3784, 0
    %v3891 = vsel %vm3531, %v3783, 0
    %3893 = vmatprep.subr.bf16.mxu0 %v3862
    %3894 = vmatpush1.bf16.msra.mxu0 %v3861
    %3895 = vmatprep.subr.bf16.mxu0 %v3860
    %3896 = vmatpush1.bf16.msra.mxu0 %v3859
    %3897 = vmatprep.subr.bf16.mxu0 %v3858
    %3898 = vmatpush1.bf16.msra.mxu0 %v3857
    %3899 = vmatprep.subr.bf16.mxu0 %v3856
    %3900 = vmatpush1.bf16.msra.mxu0 %v3855
    %3901 = vmatprep.subr.bf16.mxu0 %v3854
    %3902 = vmatpush1.bf16.msra.mxu0 %v3853
    %3903 = vmatprep.subr.bf16.mxu0 %v3852
    %3904 = vmatpush1.bf16.msra.mxu0 %v3851
    %3905 = vmatprep.subr.bf16.mxu0 %v3850
    %3906 = vmatpush1.bf16.msra.mxu0 %v3849
    %3907 = vmatprep.subr.bf16.mxu0 %v3848
    %3908 = vmatpush1.bf16.msra.mxu0 %v3847
    %3909 = vmatprep.subr.bf16.mxu0 0
    %3910 = vmatpush2.bf16.msra.mxu0 0
    %3911 = vmatprep.subr.bf16.mxu0 0
    %3912 = vmatpush2.bf16.msra.mxu0 0
    %3913 = vmatprep.subr.bf16.mxu0 0
    %3914 = vmatpush2.bf16.msra.mxu0 0
    %3915 = vmatprep.subr.bf16.mxu0 0
    %3916 = vmatpush2.bf16.msra.mxu0 0
    %3917 = vmatprep.subr.bf16.mxu0 0
    %3918 = vmatpush2.bf16.msra.mxu0 0
    %3919 = vmatprep.subr.bf16.mxu0 0
    %3920 = vmatpush2.bf16.msra.mxu0 0
    %3921 = vmatprep.subr.bf16.mxu0 %v3866
    %3922 = vmatpush2.bf16.msra.mxu0 %v3865
    %3923 = vmatprep.subr.bf16.mxu0 %v3864
    %3924 = vmatpush2.bf16.msra.mxu0 %v3863
    %3925 = vmatprep.mubr.bf16.mxu0 %v3888
    %3926 = vmatmul.mubr.bf16.gmra.mxu0 %v3781
    %v3927 = vpop.f32.mrf.mxu0
    %v3928 = vadd.f32 0.0, %v3927
    %v3929 = vpop.f32.mrf.mxu0
    %v3930 = vadd.f32 0.0, %v3929
    %v3931 = vpop.f32.mrf.mxu0
    %v3932 = vadd.f32 0.0, %v3931
    %v3933 = vpop.f32.mrf.mxu0
    %v3934 = vadd.f32 0.0, %v3933
    %3935 = vmatprep.mubr.bf16.mxu0 %v3891
    %3936 = vmatmul.mubr.bf16.gmra.mxu0 %v3780
    %v3937 = vpop.f32.mrf.mxu0
    %v3938 = vadd.f32 0.0, %v3937
    %v3939 = vpop.f32.mrf.mxu0
    %v3940 = vadd.f32 0.0, %v3939
    %v3941 = vpop.f32.mrf.mxu0
    %v3942 = vpop.f32.mrf.mxu0
    %3943 = vdwg.mxu0
    %v3944 = vadd.f32 %v3736, %v3928
    %v3945 = vadd.f32 %v3738, %v3930
    %v3946 = vadd.f32 %v3740, %v3932
    %v3947 = vadd.f32 %v3742, %v3934
    %v3948 = vadd.f32 %v3746, %v3938
    %v3949 = vadd.f32 %v3748, %v3940
    %v3950 = vld [vmem:[#allocation24] sm:$0x3]
    %v3952 = vlaneseq
    %v3953 = vshrl.u32 %v3952, 7
    %v3954 = vsub.s32 0, %v3953
    %v3955 = vrot.slane %v3950, %v3954
    %v3956 = vlaneseq
    %v3957 = vshrl.u32 %v3956, 7
    %v3958 = vsub.s32 1, %v3957
    %v3959 = vrot.slane %v3950, %v3958
    %v3962 = vadd.f32 %v3944, %v3955
    %v3963 = vadd.f32 %v3945, %v3959
    %v3964 = vadd.f32 %v3946, %v3955
    %v3965 = vadd.f32 %v3947, %v3959
    %v3966 = vadd.f32 %v3948, %v3955
    %v3967 = vadd.f32 %v3949, %v3959
    %v3968 = vmax.f32 %v3962, 0.0
    %v3969 = vmax.f32 %v3963, 0.0
    %v3970 = vmax.f32 %v3964, 0.0
    %v3971 = vmax.f32 %v3965, 0.0
    %v3972 = vmax.f32 %v3966, 0.0
    %v3973 = vmax.f32 %v3967, 0.0
    %3974 = vst [vmem:[#allocation5] sm:$0xff] 0
    %vm3975 = vcmask 519168
    %3976 = vst.msk [vmem:[#allocation5 + $0x8] sm:$0xf] %vm3975, 0
    %3977 = vst [vmem:[#allocation5 + $0xc] sm:$0xff] 0
    %3978 = vst.msk [vmem:[#allocation5 + $0x14] sm:$0xf] %vm3975, 0
    %3979 = vst [vmem:[#allocation5 + $0x18] sm:$0x33] 0
    %vm3980 = vcmask 517120
    %3981 = vst.msk [vmem:[#allocation5 + $0x20] sm:$0x3] %vm3980, 0
    %v3982 = vpack.c.bf16 %v3968, %v3968
    %v3983 = vpack.c.bf16 %v3969, %v3969
    %v3986 = vunpack.c.l.b16 %v3982
    %v3987 = vunpack.c.l.b16 %v3983
    %v3988 = vpack.c.b16 %v3987, %v3986
    %v3990 = vshrl.u32 %v3988, 16
    %v3992 = vrot.slane %v3990, 7
    %v3993 = vshll.u32 %v3988, 16
    %v3995 = vor.u32 %v3992, %v3993
    %v3996 = vrot.slane %v3992, 4
    %3997 = vrot.lane.b32.xlu0 %v3995, 32
    %v3998 = vpop.permute.xlu0 %3997
    %3999 = vrot.lane.b32.xlu0 %v3996, 32
    %v4000 = vpop.permute.xlu0 %3999
    %v4001 = vrot.slane %v3998, 4
    %v4002 = vrot.slane %v4000, 4
    %vm4003 = vcmask 261120
    %v4004 = vsel %vm4003, %v4001, %v3998
    %v4005 = vsel %vm4003, %v4002, %v4000
    %vm4010 = vcmask 1043712
    %vm4011 = vmand %vm4010, %vm582
    %vm4012 = vcmask 1047556
    %vm4013 = vmand %vm4012, %vm2006
    %vm4014 = vmor %vm4013, %vm4011
    %v4015 = vld [vmem:[#allocation5] sm:$0xff]
    %v4016 = vsel %vm4014, %v4004, %v4015
    %4017 = vst [vmem:[#allocation5] sm:$0xff] %v4016
    %vm4018 = vcmask 257024
    %vm4019 = vmand %vm4018, %vm582
    %v4020 = vld [vmem:[#allocation5 + $0x8] sm:$0xf]
    %v4021 = vsel %vm4019, %v4001, %v4020
    %4022 = vst [vmem:[#allocation5 + $0x8] sm:$0xf] %v4021
    %vm4023 = vcmask 1040640
    %vm4024 = vmand %vm4023, %vm528
    %vm4025 = vcmask 1044484
    %vm4026 = vmand %vm4025, %vm2019
    %vm4027 = vmor %vm4026, %vm4024
    %v4028 = vld [vmem:[#allocation5 + $0xc] sm:$0x11]
    %v4029 = vsel %vm4027, %v4005, %v4028
    %4030 = vst [vmem:[#allocation5 + $0xc] sm:$0x11] %v4029
    %vm4031 = vcmask 253952
    %vm4032 = vmand %vm4031, %vm528
    %v4033 = vld [vmem:[#allocation5 + $0x14] sm:$0x1]
    %v4034 = vsel %vm4032, %v4002, %v4033
    %4035 = vst [vmem:[#allocation5 + $0x14] sm:$0x1] %v4034
    %v4036 = vpack.c.bf16 %v3972, %v3970
    %v4037 = vpack.c.bf16 %v3973, %v3971
    %v4040 = vunpack.c.l.b16 %v4036
    %v4041 = vunpack.c.l.b16 %v4037
    %v4042 = vunpack.c.h.b16 %v4036
    %v4043 = vunpack.c.h.b16 %v4037
    %v4044 = vpack.c.b16 %v4041, %v4040
    %v4045 = vpack.c.b16 %v4043, %v4042
    %v4047 = vshrl.u32 %v4044, 16
    %v4049 = vrot.slane %v4047, 7
    %v4050 = vshll.u32 %v4044, 16
    %v4052 = vor.u32 %v4049, %v4050
    %v4053 = vrot.slane %v4049, 4
    %v4055 = vshrl.u32 %v4045, 16
    %v4057 = vrot.slane %v4055, 7
    %v4058 = vshll.u32 %v4045, 16
    %v4060 = vor.u32 %v4057, %v4058
    %v4061 = vsel %vm530, %v4053, %v4060
    %4062 = vrot.lane.b32.xlu0 %v4052, 32
    %v4063 = vpop.permute.xlu0 %4062
    %4064 = vrot.lane.b32.xlu0 %v4061, 32
    %v4065 = vpop.permute.xlu0 %4064
    %v4066 = vrot.slane %v4063, 4
    %v4067 = vrot.slane %v4065, 4
    %v4068 = vsel %vm4003, %v4066, %v4063
    %v4069 = vsel %vm4003, %v4067, %v4065
    %vm4074 = vcmask 1043713
    %vm4075 = vmand %vm4074, %vm671
    %vm4076 = vcmask 1047557
    %vm4077 = vmand %vm4076, %vm2068
    %vm4078 = vmor %vm4077, %vm4075
    %v4079 = vld [vmem:[#allocation5 + $0xc] sm:$0xee]
    %v4080 = vsel %vm4078, %v4068, %v4079
    %4081 = vst [vmem:[#allocation5 + $0xc] sm:$0xee] %v4080
    %vm4082 = vcmask 257025
    %vm4083 = vmand %vm4082, %vm671
    %v4084 = vld [vmem:[#allocation5 + $0x14] sm:$0xe]
    %v4085 = vsel %vm4083, %v4066, %v4084
    %4086 = vst [vmem:[#allocation5 + $0x14] sm:$0xe] %v4085
    %vm4087 = vcmask 1041664
    %vm4088 = vmand %vm4087, %vm613
    %vm4089 = vcmask 1045508
    %vm4090 = vmand %vm4089, %vm2078
    %vm4091 = vmor %vm4090, %vm4088
    %v4092 = vld [vmem:[#allocation5 + $0x18] sm:$0x33]
    %v4093 = vsel %vm4091, %v4069, %v4092
    %4094 = vst [vmem:[#allocation5 + $0x18] sm:$0x33] %v4093
    %vm4095 = vcmask 254976
    %vm4096 = vmand %vm4095, %vm613
    %v4097 = vld [vmem:[#allocation5 + $0x20] sm:$0x3]
    %v4098 = vsel %vm4096, %v4067, %v4097
    %4099 = vst [vmem:[#allocation5 + $0x20] sm:$0x3] %v4098
    %v4100 = vld [vmem:[#allocation5] sm:$0xff]
    %v4101 = vld [vmem:[#allocation5 + $0x8] sm:$0xf]
    %v4102 = vld [vmem:[#allocation5 + $0xc] sm:$0xff]
    %v4103 = vld [vmem:[#allocation5 + $0x14] sm:$0xf]
    %v4104 = vld [vmem:[#allocation5 + $0x18] sm:$0x11]
    %v4105 = vld [vmem:[#allocation5 + $0x20] sm:$0x1]
    %v4106 = vld [vmem:[%s23] sm:$0xff]
    %v4107 = vld [vmem:[%s23 + $0x8] sm:$0xff]
    %v4108 = vld [vmem:[%s23 + $0x10] sm:$0xff]
    %v4109 = vld [vmem:[%s23 + $0x18] sm:$0xff]
    %v4110 = vld [vmem:[%s23 + $0x20] sm:$0xff]
    %v4111 = vld [vmem:[%s23 + $0x28] sm:$0xff]
    %v4112 = vld [vmem:[%s23 + $0x30] sm:$0xff]
    %v4113 = vld [vmem:[%s23 + $0x38] sm:$0xff]
    %v4114 = vld [vmem:[%s23 + $0x40] sm:$0xff]
    %v4115 = vld [vmem:[%s23 + $0x48] sm:$0xff]
    %v4116 = vld [vmem:[%s23 + $0x50] sm:$0xff]
    %v4117 = vld [vmem:[%s23 + $0x58] sm:$0xff]
    %v4118 = vld [vmem:[%s23 + $0x60] sm:$0xff]
    %v4119 = vld [vmem:[%s23 + $0x68] sm:$0xff]
    %v4120 = vld [vmem:[%s23 + $0x70] sm:$0xff]
    %v4121 = vld [vmem:[%s23 + $0x78] sm:$0xff]
    %v4122 = vld [vmem:[%s23 + $0x80] sm:$0xff]
    %v4123 = vld [vmem:[%s23 + $0x88] sm:$0xff]
    %v4124 = vld [vmem:[%s23 + $0x90] sm:$0xff]
    %v4125 = vld [vmem:[%s23 + $0x98] sm:$0xff]
    %v4126 = vld [vmem:[%s23 + $0xa0] sm:$0xff]
    %v4127 = vld [vmem:[%s23 + $0xa8] sm:$0xff]
    %v4128 = vld [vmem:[%s23 + $0xb0] sm:$0xff]
    %v4129 = vld [vmem:[%s23 + $0xb8] sm:$0xff]
    %v4130 = vld [vmem:[%s23 + $0xc0] sm:$0xff]
    %v4131 = vld [vmem:[%s23 + $0xc8] sm:$0xff]
    %v4132 = vld [vmem:[%s23 + $0xd0] sm:$0xff]
    %v4133 = vld [vmem:[%s23 + $0xd8] sm:$0xff]
    %v4134 = vld [vmem:[%s23 + $0xe0] sm:$0xff]
    %v4135 = vld [vmem:[%s23 + $0xe8] sm:$0xff]
    %v4136 = vld [vmem:[%s23 + $0xf0] sm:$0xff]
    %v4137 = vld [vmem:[%s23 + $0xf8] sm:$0xff]
    %v4138 = vld [vmem:[%s23 + $0x100] sm:$0xff]
    %v4139 = vld [vmem:[%s23 + $0x108] sm:$0xff]
    %v4140 = vld [vmem:[%s23 + $0x110] sm:$0xff]
    %v4141 = vld [vmem:[%s23 + $0x118] sm:$0xff]
    %v4142 = vld [vmem:[%s23 + $0x120] sm:$0xff]
    %v4143 = vld [vmem:[%s23 + $0x128] sm:$0xff]
    %v4144 = vld [vmem:[%s23 + $0x130] sm:$0xff]
    %v4145 = vld [vmem:[%s23 + $0x138] sm:$0xff]
    %v4146 = vld [vmem:[#allocation5 + $0x18] sm:$0x33]
    %v4147 = vld [vmem:[#allocation5 + $0x20] sm:$0x3]
    %s4148 = scalar_lea.vmem %s23, 320
    %v4149 = vld [vmem:[%s4148] sm:$0xff]
    %v4150 = vld [vmem:[%s4148 + $0x8] sm:$0xff]
    %v4151 = vld [vmem:[%s4148 + $0x10] sm:$0xff]
    %v4152 = vld [vmem:[%s4148 + $0x18] sm:$0xff]
    %v4153 = vld [vmem:[%s4148 + $0x20] sm:$0xff]
    %v4154 = vld [vmem:[%s4148 + $0x28] sm:$0xff]
    %v4155 = vld [vmem:[%s4148 + $0x30] sm:$0xff]
    %v4156 = vld [vmem:[%s4148 + $0x38] sm:$0xff]
    %v4157 = vld [vmem:[%s4148 + $0x40] sm:$0xff]
    %v4158 = vld [vmem:[%s4148 + $0x48] sm:$0xff]
    %v4159 = vld [vmem:[%s4148 + $0x50] sm:$0xff]
    %v4160 = vld [vmem:[%s4148 + $0x58] sm:$0xff]
    %v4161 = vld [vmem:[%s4148 + $0x60] sm:$0xff]
    %v4162 = vld [vmem:[%s4148 + $0x68] sm:$0xff]
    %v4163 = vld [vmem:[%s4148 + $0x70] sm:$0xff]
    %v4164 = vld [vmem:[%s4148 + $0x78] sm:$0xff]
    %v4165 = vld [vmem:[%s4148 + $0x80] sm:$0xff]
    %v4166 = vld [vmem:[%s4148 + $0x88] sm:$0xff]
    %v4167 = vld [vmem:[%s4148 + $0x90] sm:$0xff]
    %v4168 = vld [vmem:[%s4148 + $0x98] sm:$0xff]
    %v4169 = vld [vmem:[%s4148 + $0xa0] sm:$0xff]
    %v4170 = vld [vmem:[%s4148 + $0xa8] sm:$0xff]
    %v4171 = vld [vmem:[%s4148 + $0xb0] sm:$0xff]
    %v4172 = vld [vmem:[%s4148 + $0xb8] sm:$0xff]
    %v4173 = vld [vmem:[%s4148 + $0xc0] sm:$0xff]
    %v4174 = vld [vmem:[%s4148 + $0xc8] sm:$0xff]
    %v4175 = vld [vmem:[%s4148 + $0xd0] sm:$0xff]
    %v4176 = vld [vmem:[%s4148 + $0xd8] sm:$0xff]
    %v4177 = vld [vmem:[%s4148 + $0xe0] sm:$0xff]
    %v4178 = vld [vmem:[%s4148 + $0xe8] sm:$0xff]
    %v4179 = vld [vmem:[%s4148 + $0xf0] sm:$0xff]
    %v4180 = vld [vmem:[%s4148 + $0xf8] sm:$0xff]
    %v4181 = vld [vmem:[%s4148 + $0x100] sm:$0xff]
    %v4182 = vld [vmem:[%s4148 + $0x108] sm:$0xff]
    %v4183 = vld [vmem:[%s4148 + $0x110] sm:$0xff]
    %v4184 = vld [vmem:[%s4148 + $0x118] sm:$0xff]
    %v4185 = vld [vmem:[%s4148 + $0x120] sm:$0xff]
    %v4186 = vld [vmem:[%s4148 + $0x128] sm:$0xff]
    %v4187 = vld [vmem:[%s4148 + $0x130] sm:$0xff]
    %v4188 = vld [vmem:[%s4148 + $0x138] sm:$0xff]
    %v4195 = vunpack.c.l.b16 %v4100
    %v4196 = vunpack.c.h.b16 %v4100
    %v4197 = vunpack.c.l.b16 %v4101
    %v4198 = vunpack.c.l.b16 %v4102
    %v4199 = vunpack.c.h.b16 %v4102
    %v4200 = vunpack.c.l.b16 %v4103
    %v4201 = vunpack.c.l.b16 %v4146
    %v4202 = vunpack.c.h.b16 %v4146
    %v4203 = vunpack.c.l.b16 %v4147
    %v4204 = vpack.c.b16 %v4198, %v4195
    %v4205 = vpack.c.b16 %v4199, %v4196
    %v4206 = vpack.c.b16 %v4200, %v4197
    %v4207 = vpack.c.b16 %v4201, %v4201
    %v4208 = vpack.c.b16 %v4202, %v4202
    %v4209 = vpack.c.b16 %v4203, %v4203
    %v4211 = vshrl.u32 %v4204, 16
    %v4213 = vshll.u32 %v4204, 16
    %v4215 = vrot.slane %v4213, 1
    %v4216 = vor.u32 %v4211, %v4215
    %v4218 = vshll.u32 %v4207, 16
    %v4220 = vrot.slane %v4218, 1
    %v4221 = vsel %vm744, %v4216, %v4220
    %v4223 = vshrl.u32 %v4205, 16
    %v4225 = vshll.u32 %v4205, 16
    %v4227 = vrot.slane %v4225, 1
    %v4228 = vor.u32 %v4223, %v4227
    %v4230 = vshll.u32 %v4208, 16
    %v4232 = vrot.slane %v4230, 1
    %v4233 = vsel %vm744, %v4228, %v4232
    %v4235 = vshrl.u32 %v4206, 16
    %v4237 = vshll.u32 %v4206, 16
    %v4239 = vrot.slane %v4237, 1
    %v4240 = vor.u32 %v4235, %v4239
    %v4242 = vshll.u32 %v4209, 16
    %v4244 = vrot.slane %v4242, 1
    %v4245 = vsel %vm744, %v4240, %v4244
    %v4246 = vshrl.u32 %v4207, 16
    %v4248 = vor.u32 %v4246, %v4220
    %v4249 = vshrl.u32 %v4208, 16
    %v4251 = vor.u32 %v4249, %v4232
    %v4252 = vshrl.u32 %v4209, 16
    %v4254 = vor.u32 %v4252, %v4244
    %v4299 = vunpack.c.l.b16 %v4149
    %v4300 = vunpack.c.h.b16 %v4149
    %v4301 = vunpack.c.l.b16 %v4150
    %v4302 = vunpack.c.h.b16 %v4150
    %v4303 = vunpack.c.l.b16 %v4151
    %v4304 = vunpack.c.h.b16 %v4151
    %v4305 = vunpack.c.l.b16 %v4152
    %v4306 = vunpack.c.h.b16 %v4152
    %v4307 = vunpack.c.l.b16 %v4153
    %v4308 = vunpack.c.h.b16 %v4153
    %v4309 = vunpack.c.l.b16 %v4154
    %v4310 = vunpack.c.h.b16 %v4154
    %v4311 = vunpack.c.l.b16 %v4155
    %v4312 = vunpack.c.h.b16 %v4155
    %v4313 = vunpack.c.l.b16 %v4156
    %v4314 = vunpack.c.h.b16 %v4156
    %v4315 = vunpack.c.l.b16 %v4157
    %v4316 = vunpack.c.h.b16 %v4157
    %v4317 = vunpack.c.l.b16 %v4158
    %v4318 = vunpack.c.h.b16 %v4158
    %v4319 = vunpack.c.l.b16 %v4159
    %v4320 = vunpack.c.h.b16 %v4159
    %v4321 = vunpack.c.l.b16 %v4160
    %v4322 = vunpack.c.h.b16 %v4160
    %v4323 = vunpack.c.l.b16 %v4161
    %v4324 = vunpack.c.h.b16 %v4161
    %v4325 = vunpack.c.l.b16 %v4162
    %v4326 = vunpack.c.h.b16 %v4162
    %v4327 = vunpack.c.l.b16 %v4163
    %v4328 = vunpack.c.h.b16 %v4163
    %v4329 = vunpack.c.l.b16 %v4164
    %v4330 = vunpack.c.h.b16 %v4164
    %v4331 = vunpack.c.l.b16 %v4165
    %v4332 = vunpack.c.h.b16 %v4165
    %v4333 = vunpack.c.l.b16 %v4166
    %v4334 = vunpack.c.h.b16 %v4166
    %v4335 = vunpack.c.l.b16 %v4167
    %v4336 = vunpack.c.h.b16 %v4167
    %v4337 = vunpack.c.l.b16 %v4168
    %v4338 = vunpack.c.h.b16 %v4168
    %v4339 = vunpack.c.l.b16 %v4169
    %v4340 = vunpack.c.h.b16 %v4169
    %v4341 = vunpack.c.l.b16 %v4170
    %v4342 = vunpack.c.h.b16 %v4170
    %v4343 = vunpack.c.l.b16 %v4171
    %v4344 = vunpack.c.h.b16 %v4171
    %v4345 = vunpack.c.l.b16 %v4172
    %v4346 = vunpack.c.h.b16 %v4172
    %v4347 = vunpack.c.l.b16 %v4173
    %v4348 = vunpack.c.h.b16 %v4173
    %v4349 = vunpack.c.l.b16 %v4174
    %v4350 = vunpack.c.h.b16 %v4174
    %v4351 = vunpack.c.l.b16 %v4175
    %v4352 = vunpack.c.h.b16 %v4175
    %v4353 = vunpack.c.l.b16 %v4176
    %v4354 = vunpack.c.h.b16 %v4176
    %v4355 = vunpack.c.l.b16 %v4177
    %v4356 = vunpack.c.h.b16 %v4177
    %v4357 = vunpack.c.l.b16 %v4178
    %v4358 = vunpack.c.h.b16 %v4178
    %v4359 = vunpack.c.l.b16 %v4179
    %v4360 = vunpack.c.h.b16 %v4179
    %v4361 = vunpack.c.l.b16 %v4180
    %v4362 = vunpack.c.h.b16 %v4180
    %v4363 = vunpack.c.l.b16 %v4181
    %v4364 = vunpack.c.h.b16 %v4181
    %v4365 = vunpack.c.l.b16 %v4182
    %v4366 = vunpack.c.h.b16 %v4182
    %v4367 = vunpack.c.l.b16 %v4183
    %v4368 = vunpack.c.h.b16 %v4183
    %v4369 = vunpack.c.l.b16 %v4184
    %v4370 = vunpack.c.h.b16 %v4184
    %v4371 = vunpack.c.l.b16 %v4185
    %v4372 = vunpack.c.h.b16 %v4185
    %v4373 = vunpack.c.l.b16 %v4186
    %v4374 = vunpack.c.h.b16 %v4186
    %v4375 = vunpack.c.l.b16 %v4187
    %v4376 = vunpack.c.h.b16 %v4187
    %v4377 = vunpack.c.l.b16 %v4188
    %v4378 = vunpack.c.h.b16 %v4188
    %v4379 = vpack.c.b16 %v4301, %v4299
    %v4380 = vpack.c.b16 %v4302, %v4300
    %v4381 = vpack.c.b16 %v4305, %v4303
    %v4382 = vpack.c.b16 %v4306, %v4304
    %v4383 = vpack.c.b16 %v4309, %v4307
    %v4384 = vpack.c.b16 %v4310, %v4308
    %v4385 = vpack.c.b16 %v4313, %v4311
    %v4386 = vpack.c.b16 %v4314, %v4312
    %v4387 = vpack.c.b16 %v4317, %v4315
    %v4388 = vpack.c.b16 %v4318, %v4316
    %v4389 = vpack.c.b16 %v4321, %v4319
    %v4390 = vpack.c.b16 %v4322, %v4320
    %v4391 = vpack.c.b16 %v4325, %v4323
    %v4392 = vpack.c.b16 %v4326, %v4324
    %v4393 = vpack.c.b16 %v4329, %v4327
    %v4394 = vpack.c.b16 %v4330, %v4328
    %v4395 = vpack.c.b16 %v4333, %v4331
    %v4396 = vpack.c.b16 %v4334, %v4332
    %v4397 = vpack.c.b16 %v4337, %v4335
    %v4398 = vpack.c.b16 %v4338, %v4336
    %v4399 = vpack.c.b16 %v4341, %v4339
    %v4400 = vpack.c.b16 %v4342, %v4340
    %v4401 = vpack.c.b16 %v4345, %v4343
    %v4402 = vpack.c.b16 %v4346, %v4344
    %v4403 = vpack.c.b16 %v4349, %v4347
    %v4404 = vpack.c.b16 %v4350, %v4348
    %v4405 = vpack.c.b16 %v4353, %v4351
    %v4406 = vpack.c.b16 %v4354, %v4352
    %v4407 = vpack.c.b16 %v4357, %v4355
    %v4408 = vpack.c.b16 %v4358, %v4356
    %v4409 = vpack.c.b16 %v4361, %v4359
    %v4410 = vpack.c.b16 %v4362, %v4360
    %v4411 = vpack.c.b16 %v4365, %v4363
    %v4412 = vpack.c.b16 %v4366, %v4364
    %v4413 = vpack.c.b16 %v4369, %v4367
    %v4414 = vpack.c.b16 %v4370, %v4368
    %v4415 = vpack.c.b16 %v4373, %v4371
    %v4416 = vpack.c.b16 %v4374, %v4372
    %v4417 = vpack.c.b16 %v4377, %v4375
    %v4418 = vpack.c.b16 %v4378, %v4376
    %vm4459 = vcmask 523264
    %v4461 = vsel %vm4459, %v4245, 0
    %v4464 = vsel %vm4459, %v4254, 0
    %4466 = vmatprep.subr.bf16.mxu0 %v4394
    %4467 = vmatpush1.bf16.msra.mxu0 %v4393
    %4468 = vmatprep.subr.bf16.mxu0 %v4392
    %4469 = vmatpush1.bf16.msra.mxu0 %v4391
    %4470 = vmatprep.subr.bf16.mxu0 %v4390
    %4471 = vmatpush1.bf16.msra.mxu0 %v4389
    %4472 = vmatprep.subr.bf16.mxu0 %v4388
    %4473 = vmatpush1.bf16.msra.mxu0 %v4387
    %4474 = vmatprep.subr.bf16.mxu0 %v4386
    %4475 = vmatpush1.bf16.msra.mxu0 %v4385
    %4476 = vmatprep.subr.bf16.mxu0 %v4384
    %4477 = vmatpush1.bf16.msra.mxu0 %v4383
    %4478 = vmatprep.subr.bf16.mxu0 %v4382
    %4479 = vmatpush1.bf16.msra.mxu0 %v4381
    %4480 = vmatprep.subr.bf16.mxu0 %v4380
    %4481 = vmatpush1.bf16.msra.mxu0 %v4379
    %4482 = vmatprep.subr.bf16.mxu0 %v4410
    %4483 = vmatpush2.bf16.msra.mxu0 %v4409
    %4484 = vmatprep.subr.bf16.mxu0 %v4408
    %4485 = vmatpush2.bf16.msra.mxu0 %v4407
    %4486 = vmatprep.subr.bf16.mxu0 %v4406
    %4487 = vmatpush2.bf16.msra.mxu0 %v4405
    %4488 = vmatprep.subr.bf16.mxu0 %v4404
    %4489 = vmatpush2.bf16.msra.mxu0 %v4403
    %4490 = vmatprep.subr.bf16.mxu0 %v4402
    %4491 = vmatpush2.bf16.msra.mxu0 %v4401
    %4492 = vmatprep.subr.bf16.mxu0 %v4400
    %4493 = vmatpush2.bf16.msra.mxu0 %v4399
    %4494 = vmatprep.subr.bf16.mxu0 %v4398
    %4495 = vmatpush2.bf16.msra.mxu0 %v4397
    %4496 = vmatprep.subr.bf16.mxu0 %v4396
    %4497 = vmatpush2.bf16.msra.mxu0 %v4395
    %4498 = vmatprep.mubr.bf16.mxu0 %v4233
    %4499 = vmatmul.mubr.bf16.gmra.mxu0 %v4221
    %v4500 = vpop.f32.mrf.mxu0
    %v4501 = vadd.f32 0.0, %v4500
    %v4502 = vpop.f32.mrf.mxu0
    %v4503 = vadd.f32 0.0, %v4502
    %v4504 = vpop.f32.mrf.mxu0
    %v4505 = vadd.f32 0.0, %v4504
    %v4506 = vpop.f32.mrf.mxu0
    %v4507 = vadd.f32 0.0, %v4506
    %4508 = vmatprep.mubr.bf16.mxu0 %v4251
    %4509 = vmatmul.mubr.bf16.gmra.mxu0 %v4248
    %v4510 = vpop.f32.mrf.mxu0
    %v4511 = vadd.f32 0.0, %v4510
    %v4512 = vpop.f32.mrf.mxu0
    %v4513 = vadd.f32 0.0, %v4512
    %v4514 = vpop.f32.mrf.mxu0
    %v4515 = vpop.f32.mrf.mxu0
    %4516 = vdwg.mxu0
    %4517 = vmatprep.subr.bf16.mxu0 0
    %4518 = vmatpush1.bf16.msra.mxu0 0
    %4519 = vmatprep.subr.bf16.mxu0 0
    %4520 = vmatpush1.bf16.msra.mxu0 0
    %4521 = vmatprep.subr.bf16.mxu0 0
    %4522 = vmatpush1.bf16.msra.mxu0 0
    %4523 = vmatprep.subr.bf16.mxu0 0
    %4524 = vmatpush1.bf16.msra.mxu0 0
    %4525 = vmatprep.subr.bf16.mxu0 %v4418
    %4526 = vmatpush1.bf16.msra.mxu0 %v4417
    %4527 = vmatprep.subr.bf16.mxu0 %v4416
    %4528 = vmatpush1.bf16.msra.mxu0 %v4415
    %4529 = vmatprep.subr.bf16.mxu0 %v4414
    %4530 = vmatpush1.bf16.msra.mxu0 %v4413
    %4531 = vmatprep.subr.bf16.mxu0 %v4412
    %4532 = vmatpush1.bf16.msra.mxu0 %v4411
    %4533 = vmatprep.subr.bf16.mxu0 0
    %4534 = vmatpush2.bf16.msra.mxu0 0
    %4535 = vmatprep.subr.bf16.mxu0 0
    %4536 = vmatpush2.bf16.msra.mxu0 0
    %4537 = vmatprep.subr.bf16.mxu0 0
    %4538 = vmatpush2.bf16.msra.mxu0 0
    %4539 = vmatprep.subr.bf16.mxu0 0
    %4540 = vmatpush2.bf16.msra.mxu0 0
    %4541 = vmatprep.subr.bf16.mxu0 0
    %4542 = vmatpush2.bf16.msra.mxu0 0
    %4543 = vmatprep.subr.bf16.mxu0 0
    %4544 = vmatpush2.bf16.msra.mxu0 0
    %4545 = vmatprep.subr.bf16.mxu0 0
    %4546 = vmatpush2.bf16.msra.mxu0 0
    %4547 = vmatprep.subr.bf16.mxu0 0
    %4548 = vmatpush2.bf16.msra.mxu0 0
    %4549 = vmatprep.mubr.bf16.mxu0 0
    %4550 = vmatmul.mubr.bf16.gmra.mxu0 %v4461
    %v4551 = vpop.f32.mrf.mxu0
    %v4552 = vadd.f32 %v4501, %v4551
    %v4553 = vpop.f32.mrf.mxu0
    %v4554 = vadd.f32 %v4503, %v4553
    %v4555 = vpop.f32.mrf.mxu0
    %v4556 = vadd.f32 %v4505, %v4555
    %v4557 = vpop.f32.mrf.mxu0
    %v4558 = vadd.f32 %v4507, %v4557
    %4559 = vmatprep.mubr.bf16.mxu0 0
    %4560 = vmatmul.mubr.bf16.gmra.mxu0 %v4464
    %v4561 = vpop.f32.mrf.mxu0
    %v4562 = vadd.f32 %v4511, %v4561
    %v4563 = vpop.f32.mrf.mxu0
    %v4564 = vadd.f32 %v4513, %v4563
    %v4565 = vpop.f32.mrf.mxu0
    %v4566 = vpop.f32.mrf.mxu0
    %4567 = vdwg.mxu0
    %v4570 = vunpack.c.l.b16 %v4104
    %v4571 = vunpack.c.h.b16 %v4104
    %v4572 = vunpack.c.l.b16 %v4105
    %v4573 = vpack.c.b16 %v4570, %v4570
    %v4574 = vpack.c.b16 %v4571, %v4571
    %v4575 = vpack.c.b16 %v4572, %v4572
    %v4620 = vunpack.c.l.b16 %v4106
    %v4621 = vunpack.c.h.b16 %v4106
    %v4622 = vunpack.c.l.b16 %v4107
    %v4623 = vunpack.c.h.b16 %v4107
    %v4624 = vunpack.c.l.b16 %v4108
    %v4625 = vunpack.c.h.b16 %v4108
    %v4626 = vunpack.c.l.b16 %v4109
    %v4627 = vunpack.c.h.b16 %v4109
    %v4628 = vunpack.c.l.b16 %v4110
    %v4629 = vunpack.c.h.b16 %v4110
    %v4630 = vunpack.c.l.b16 %v4111
    %v4631 = vunpack.c.h.b16 %v4111
    %v4632 = vunpack.c.l.b16 %v4112
    %v4633 = vunpack.c.h.b16 %v4112
    %v4634 = vunpack.c.l.b16 %v4113
    %v4635 = vunpack.c.h.b16 %v4113
    %v4636 = vunpack.c.l.b16 %v4114
    %v4637 = vunpack.c.h.b16 %v4114
    %v4638 = vunpack.c.l.b16 %v4115
    %v4639 = vunpack.c.h.b16 %v4115
    %v4640 = vunpack.c.l.b16 %v4116
    %v4641 = vunpack.c.h.b16 %v4116
    %v4642 = vunpack.c.l.b16 %v4117
    %v4643 = vunpack.c.h.b16 %v4117
    %v4644 = vunpack.c.l.b16 %v4118
    %v4645 = vunpack.c.h.b16 %v4118
    %v4646 = vunpack.c.l.b16 %v4119
    %v4647 = vunpack.c.h.b16 %v4119
    %v4648 = vunpack.c.l.b16 %v4120
    %v4649 = vunpack.c.h.b16 %v4120
    %v4650 = vunpack.c.l.b16 %v4121
    %v4651 = vunpack.c.h.b16 %v4121
    %v4652 = vunpack.c.l.b16 %v4122
    %v4653 = vunpack.c.h.b16 %v4122
    %v4654 = vunpack.c.l.b16 %v4123
    %v4655 = vunpack.c.h.b16 %v4123
    %v4656 = vunpack.c.l.b16 %v4124
    %v4657 = vunpack.c.h.b16 %v4124
    %v4658 = vunpack.c.l.b16 %v4125
    %v4659 = vunpack.c.h.b16 %v4125
    %v4660 = vunpack.c.l.b16 %v4126
    %v4661 = vunpack.c.h.b16 %v4126
    %v4662 = vunpack.c.l.b16 %v4127
    %v4663 = vunpack.c.h.b16 %v4127
    %v4664 = vunpack.c.l.b16 %v4128
    %v4665 = vunpack.c.h.b16 %v4128
    %v4666 = vunpack.c.l.b16 %v4129
    %v4667 = vunpack.c.h.b16 %v4129
    %v4668 = vunpack.c.l.b16 %v4130
    %v4669 = vunpack.c.h.b16 %v4130
    %v4670 = vunpack.c.l.b16 %v4131
    %v4671 = vunpack.c.h.b16 %v4131
    %v4672 = vunpack.c.l.b16 %v4132
    %v4673 = vunpack.c.h.b16 %v4132
    %v4674 = vunpack.c.l.b16 %v4133
    %v4675 = vunpack.c.h.b16 %v4133
    %v4676 = vunpack.c.l.b16 %v4134
    %v4677 = vunpack.c.h.b16 %v4134
    %v4678 = vunpack.c.l.b16 %v4135
    %v4679 = vunpack.c.h.b16 %v4135
    %v4680 = vunpack.c.l.b16 %v4136
    %v4681 = vunpack.c.h.b16 %v4136
    %v4682 = vunpack.c.l.b16 %v4137
    %v4683 = vunpack.c.h.b16 %v4137
    %v4684 = vunpack.c.l.b16 %v4138
    %v4685 = vunpack.c.h.b16 %v4138
    %v4686 = vunpack.c.l.b16 %v4139
    %v4687 = vunpack.c.h.b16 %v4139
    %v4688 = vunpack.c.l.b16 %v4140
    %v4689 = vunpack.c.h.b16 %v4140
    %v4690 = vunpack.c.l.b16 %v4141
    %v4691 = vunpack.c.h.b16 %v4141
    %v4692 = vunpack.c.l.b16 %v4142
    %v4693 = vunpack.c.h.b16 %v4142
    %v4694 = vunpack.c.l.b16 %v4143
    %v4695 = vunpack.c.h.b16 %v4143
    %v4696 = vunpack.c.l.b16 %v4144
    %v4697 = vunpack.c.h.b16 %v4144
    %v4698 = vunpack.c.l.b16 %v4145
    %v4699 = vunpack.c.h.b16 %v4145
    %v4700 = vpack.c.b16 %v4622, %v4620
    %v4701 = vpack.c.b16 %v4623, %v4621
    %v4702 = vpack.c.b16 %v4626, %v4624
    %v4703 = vpack.c.b16 %v4627, %v4625
    %v4704 = vpack.c.b16 %v4630, %v4628
    %v4705 = vpack.c.b16 %v4631, %v4629
    %v4706 = vpack.c.b16 %v4634, %v4632
    %v4707 = vpack.c.b16 %v4635, %v4633
    %v4708 = vpack.c.b16 %v4638, %v4636
    %v4709 = vpack.c.b16 %v4639, %v4637
    %v4710 = vpack.c.b16 %v4642, %v4640
    %v4711 = vpack.c.b16 %v4643, %v4641
    %v4712 = vpack.c.b16 %v4646, %v4644
    %v4713 = vpack.c.b16 %v4647, %v4645
    %v4714 = vpack.c.b16 %v4650, %v4648
    %v4715 = vpack.c.b16 %v4651, %v4649
    %v4716 = vpack.c.b16 %v4654, %v4652
    %v4717 = vpack.c.b16 %v4655, %v4653
    %v4718 = vpack.c.b16 %v4658, %v4656
    %v4719 = vpack.c.b16 %v4659, %v4657
    %v4720 = vpack.c.b16 %v4662, %v4660
    %v4721 = vpack.c.b16 %v4663, %v4661
    %v4722 = vpack.c.b16 %v4666, %v4664
    %v4723 = vpack.c.b16 %v4667, %v4665
    %v4724 = vpack.c.b16 %v4670, %v4668
    %v4725 = vpack.c.b16 %v4671, %v4669
    %v4726 = vpack.c.b16 %v4674, %v4672
    %v4727 = vpack.c.b16 %v4675, %v4673
    %v4728 = vpack.c.b16 %v4678, %v4676
    %v4729 = vpack.c.b16 %v4679, %v4677
    %v4730 = vpack.c.b16 %v4682, %v4680
    %v4731 = vpack.c.b16 %v4683, %v4681
    %v4732 = vpack.c.b16 %v4686, %v4684
    %v4733 = vpack.c.b16 %v4687, %v4685
    %v4734 = vpack.c.b16 %v4690, %v4688
    %v4735 = vpack.c.b16 %v4691, %v4689
    %v4736 = vpack.c.b16 %v4694, %v4692
    %v4737 = vpack.c.b16 %v4695, %v4693
    %v4738 = vpack.c.b16 %v4698, %v4696
    %v4739 = vpack.c.b16 %v4699, %v4697
    %v4780 = vsel %vm4459, %v4206, 0
    %v4783 = vsel %vm4459, %v4575, 0
    %4785 = vmatprep.subr.bf16.mxu0 %v4715
    %4786 = vmatpush1.bf16.msra.mxu0 %v4714
    %4787 = vmatprep.subr.bf16.mxu0 %v4713
    %4788 = vmatpush1.bf16.msra.mxu0 %v4712
    %4789 = vmatprep.subr.bf16.mxu0 %v4711
    %4790 = vmatpush1.bf16.msra.mxu0 %v4710
    %4791 = vmatprep.subr.bf16.mxu0 %v4709
    %4792 = vmatpush1.bf16.msra.mxu0 %v4708
    %4793 = vmatprep.subr.bf16.mxu0 %v4707
    %4794 = vmatpush1.bf16.msra.mxu0 %v4706
    %4795 = vmatprep.subr.bf16.mxu0 %v4705
    %4796 = vmatpush1.bf16.msra.mxu0 %v4704
    %4797 = vmatprep.subr.bf16.mxu0 %v4703
    %4798 = vmatpush1.bf16.msra.mxu0 %v4702
    %4799 = vmatprep.subr.bf16.mxu0 %v4701
    %4800 = vmatpush1.bf16.msra.mxu0 %v4700
    %4801 = vmatprep.subr.bf16.mxu0 %v4731
    %4802 = vmatpush2.bf16.msra.mxu0 %v4730
    %4803 = vmatprep.subr.bf16.mxu0 %v4729
    %4804 = vmatpush2.bf16.msra.mxu0 %v4728
    %4805 = vmatprep.subr.bf16.mxu0 %v4727
    %4806 = vmatpush2.bf16.msra.mxu0 %v4726
    %4807 = vmatprep.subr.bf16.mxu0 %v4725
    %4808 = vmatpush2.bf16.msra.mxu0 %v4724
    %4809 = vmatprep.subr.bf16.mxu0 %v4723
    %4810 = vmatpush2.bf16.msra.mxu0 %v4722
    %4811 = vmatprep.subr.bf16.mxu0 %v4721
    %4812 = vmatpush2.bf16.msra.mxu0 %v4720
    %4813 = vmatprep.subr.bf16.mxu0 %v4719
    %4814 = vmatpush2.bf16.msra.mxu0 %v4718
    %4815 = vmatprep.subr.bf16.mxu0 %v4717
    %4816 = vmatpush2.bf16.msra.mxu0 %v4716
    %4817 = vmatprep.mubr.bf16.mxu0 %v4205
    %4818 = vmatmul.mubr.bf16.gmra.mxu0 %v4204
    %v4819 = vpop.f32.mrf.mxu0
    %v4820 = vadd.f32 %v4552, %v4819
    %v4821 = vpop.f32.mrf.mxu0
    %v4822 = vadd.f32 %v4554, %v4821
    %v4823 = vpop.f32.mrf.mxu0
    %v4824 = vadd.f32 %v4556, %v4823
    %v4825 = vpop.f32.mrf.mxu0
    %v4826 = vadd.f32 %v4558, %v4825
    %4827 = vmatprep.mubr.bf16.mxu0 %v4574
    %4828 = vmatmul.mubr.bf16.gmra.mxu0 %v4573
    %v4829 = vpop.f32.mrf.mxu0
    %v4830 = vadd.f32 %v4562, %v4829
    %v4831 = vpop.f32.mrf.mxu0
    %v4832 = vadd.f32 %v4564, %v4831
    %v4833 = vpop.f32.mrf.mxu0
    %v4834 = vpop.f32.mrf.mxu0
    %4835 = vdwg.mxu0
    %4836 = vmatprep.subr.bf16.mxu0 0
    %4837 = vmatpush1.bf16.msra.mxu0 0
    %4838 = vmatprep.subr.bf16.mxu0 0
    %4839 = vmatpush1.bf16.msra.mxu0 0
    %4840 = vmatprep.subr.bf16.mxu0 0
    %4841 = vmatpush1.bf16.msra.mxu0 0
    %4842 = vmatprep.subr.bf16.mxu0 0
    %4843 = vmatpush1.bf16.msra.mxu0 0
    %4844 = vmatprep.subr.bf16.mxu0 %v4739
    %4845 = vmatpush1.bf16.msra.mxu0 %v4738
    %4846 = vmatprep.subr.bf16.mxu0 %v4737
    %4847 = vmatpush1.bf16.msra.mxu0 %v4736
    %4848 = vmatprep.subr.bf16.mxu0 %v4735
    %4849 = vmatpush1.bf16.msra.mxu0 %v4734
    %4850 = vmatprep.subr.bf16.mxu0 %v4733
    %4851 = vmatpush1.bf16.msra.mxu0 %v4732
    %4852 = vmatprep.subr.bf16.mxu0 0
    %4853 = vmatpush2.bf16.msra.mxu0 0
    %4854 = vmatprep.subr.bf16.mxu0 0
    %4855 = vmatpush2.bf16.msra.mxu0 0
    %4856 = vmatprep.subr.bf16.mxu0 0
    %4857 = vmatpush2.bf16.msra.mxu0 0
    %4858 = vmatprep.subr.bf16.mxu0 0
    %4859 = vmatpush2.bf16.msra.mxu0 0
    %4860 = vmatprep.subr.bf16.mxu0 0
    %4861 = vmatpush2.bf16.msra.mxu0 0
    %4862 = vmatprep.subr.bf16.mxu0 0
    %4863 = vmatpush2.bf16.msra.mxu0 0
    %4864 = vmatprep.subr.bf16.mxu0 0
    %4865 = vmatpush2.bf16.msra.mxu0 0
    %4866 = vmatprep.subr.bf16.mxu0 0
    %4867 = vmatpush2.bf16.msra.mxu0 0
    %4868 = vmatprep.mubr.bf16.mxu0 0
    %4869 = vmatmul.mubr.bf16.gmra.mxu0 %v4780
    %v4870 = vpop.f32.mrf.mxu0
    %v4871 = vadd.f32 %v4820, %v4870
    %v4872 = vpop.f32.mrf.mxu0
    %v4873 = vadd.f32 %v4822, %v4872
    %v4874 = vpop.f32.mrf.mxu0
    %v4875 = vadd.f32 %v4824, %v4874
    %v4876 = vpop.f32.mrf.mxu0
    %v4877 = vadd.f32 %v4826, %v4876
    %4878 = vmatprep.mubr.bf16.mxu0 0
    %4879 = vmatmul.mubr.bf16.gmra.mxu0 %v4783
    %v4880 = vpop.f32.mrf.mxu0
    %v4881 = vadd.f32 %v4830, %v4880
    %v4882 = vpop.f32.mrf.mxu0
    %v4883 = vadd.f32 %v4832, %v4882
    %v4884 = vpop.f32.mrf.mxu0
    %v4885 = vpop.f32.mrf.mxu0
    %4886 = vdwg.mxu0
    %v4887 = vld [vmem:[#allocation5] sm:$0xee]
    %v4888 = vld [vmem:[#allocation5 + $0x8] sm:$0xe]
    %s4889 = scalar_lea.vmem %s23, 640
    %v4890 = vld [vmem:[%s4889] sm:$0xff]
    %v4891 = vld [vmem:[%s4889 + $0x8] sm:$0xff]
    %v4892 = vld [vmem:[%s4889 + $0x10] sm:$0xff]
    %v4893 = vld [vmem:[%s4889 + $0x18] sm:$0xff]
    %v4894 = vld [vmem:[%s4889 + $0x20] sm:$0xff]
    %v4895 = vld [vmem:[%s4889 + $0x28] sm:$0xff]
    %v4896 = vld [vmem:[%s4889 + $0x30] sm:$0xff]
    %v4897 = vld [vmem:[%s4889 + $0x38] sm:$0xff]
    %v4898 = vld [vmem:[%s4889 + $0x40] sm:$0xff]
    %v4899 = vld [vmem:[%s4889 + $0x48] sm:$0xff]
    %v4900 = vld [vmem:[%s4889 + $0x50] sm:$0xff]
    %v4901 = vld [vmem:[%s4889 + $0x58] sm:$0xff]
    %v4902 = vld [vmem:[%s4889 + $0x60] sm:$0xff]
    %v4903 = vld [vmem:[%s4889 + $0x68] sm:$0xff]
    %v4904 = vld [vmem:[%s4889 + $0x70] sm:$0xff]
    %v4905 = vld [vmem:[%s4889 + $0x78] sm:$0xff]
    %v4906 = vld [vmem:[%s4889 + $0x80] sm:$0xff]
    %v4907 = vld [vmem:[%s4889 + $0x88] sm:$0xff]
    %v4908 = vld [vmem:[%s4889 + $0x90] sm:$0xff]
    %v4909 = vld [vmem:[%s4889 + $0x98] sm:$0xff]
    %v4910 = vld [vmem:[%s4889 + $0xa0] sm:$0xff]
    %v4911 = vld [vmem:[%s4889 + $0xa8] sm:$0xff]
    %v4912 = vld [vmem:[%s4889 + $0xb0] sm:$0xff]
    %v4913 = vld [vmem:[%s4889 + $0xb8] sm:$0xff]
    %v4914 = vld [vmem:[%s4889 + $0xc0] sm:$0xff]
    %v4915 = vld [vmem:[%s4889 + $0xc8] sm:$0xff]
    %v4916 = vld [vmem:[%s4889 + $0xd0] sm:$0xff]
    %v4917 = vld [vmem:[%s4889 + $0xd8] sm:$0xff]
    %v4918 = vld [vmem:[%s4889 + $0xe0] sm:$0xff]
    %v4919 = vld [vmem:[%s4889 + $0xe8] sm:$0xff]
    %v4920 = vld [vmem:[%s4889 + $0xf0] sm:$0xff]
    %v4921 = vld [vmem:[%s4889 + $0xf8] sm:$0xff]
    %v4922 = vld [vmem:[%s4889 + $0x100] sm:$0xff]
    %v4923 = vld [vmem:[%s4889 + $0x108] sm:$0xff]
    %v4924 = vld [vmem:[%s4889 + $0x110] sm:$0xff]
    %v4925 = vld [vmem:[%s4889 + $0x118] sm:$0xff]
    %v4926 = vld [vmem:[%s4889 + $0x120] sm:$0xff]
    %v4927 = vld [vmem:[%s4889 + $0x128] sm:$0xff]
    %v4928 = vld [vmem:[%s4889 + $0x130] sm:$0xff]
    %v4929 = vld [vmem:[%s4889 + $0x138] sm:$0xff]
    %v4932 = vunpack.c.l.b16 %v4887
    %v4933 = vunpack.c.h.b16 %v4887
    %v4934 = vunpack.c.l.b16 %v4888
    %v4935 = vpack.c.b16 %v4198, %v4932
    %v4936 = vpack.c.b16 %v4199, %v4933
    %v4937 = vpack.c.b16 %v4200, %v4934
    %v4938 = vrot.slane %v4935, 1
    %v4939 = vrot.slane %v4207, 1
    %v4940 = vsel %vm1137, %v4938, %v4939
    %v4941 = vrot.slane %v4936, 1
    %v4942 = vrot.slane %v4208, 1
    %v4943 = vsel %vm1137, %v4941, %v4942
    %v4944 = vrot.slane %v4937, 1
    %v4945 = vrot.slane %v4209, 1
    %v4946 = vsel %vm1137, %v4944, %v4945
    %v4991 = vunpack.c.l.b16 %v4890
    %v4992 = vunpack.c.h.b16 %v4890
    %v4993 = vunpack.c.l.b16 %v4891
    %v4994 = vunpack.c.h.b16 %v4891
    %v4995 = vunpack.c.l.b16 %v4892
    %v4996 = vunpack.c.h.b16 %v4892
    %v4997 = vunpack.c.l.b16 %v4893
    %v4998 = vunpack.c.h.b16 %v4893
    %v4999 = vunpack.c.l.b16 %v4894
    %v5000 = vunpack.c.h.b16 %v4894
    %v5001 = vunpack.c.l.b16 %v4895
    %v5002 = vunpack.c.h.b16 %v4895
    %v5003 = vunpack.c.l.b16 %v4896
    %v5004 = vunpack.c.h.b16 %v4896
    %v5005 = vunpack.c.l.b16 %v4897
    %v5006 = vunpack.c.h.b16 %v4897
    %v5007 = vunpack.c.l.b16 %v4898
    %v5008 = vunpack.c.h.b16 %v4898
    %v5009 = vunpack.c.l.b16 %v4899
    %v5010 = vunpack.c.h.b16 %v4899
    %v5011 = vunpack.c.l.b16 %v4900
    %v5012 = vunpack.c.h.b16 %v4900
    %v5013 = vunpack.c.l.b16 %v4901
    %v5014 = vunpack.c.h.b16 %v4901
    %v5015 = vunpack.c.l.b16 %v4902
    %v5016 = vunpack.c.h.b16 %v4902
    %v5017 = vunpack.c.l.b16 %v4903
    %v5018 = vunpack.c.h.b16 %v4903
    %v5019 = vunpack.c.l.b16 %v4904
    %v5020 = vunpack.c.h.b16 %v4904
    %v5021 = vunpack.c.l.b16 %v4905
    %v5022 = vunpack.c.h.b16 %v4905
    %v5023 = vunpack.c.l.b16 %v4906
    %v5024 = vunpack.c.h.b16 %v4906
    %v5025 = vunpack.c.l.b16 %v4907
    %v5026 = vunpack.c.h.b16 %v4907
    %v5027 = vunpack.c.l.b16 %v4908
    %v5028 = vunpack.c.h.b16 %v4908
    %v5029 = vunpack.c.l.b16 %v4909
    %v5030 = vunpack.c.h.b16 %v4909
    %v5031 = vunpack.c.l.b16 %v4910
    %v5032 = vunpack.c.h.b16 %v4910
    %v5033 = vunpack.c.l.b16 %v4911
    %v5034 = vunpack.c.h.b16 %v4911
    %v5035 = vunpack.c.l.b16 %v4912
    %v5036 = vunpack.c.h.b16 %v4912
    %v5037 = vunpack.c.l.b16 %v4913
    %v5038 = vunpack.c.h.b16 %v4913
    %v5039 = vunpack.c.l.b16 %v4914
    %v5040 = vunpack.c.h.b16 %v4914
    %v5041 = vunpack.c.l.b16 %v4915
    %v5042 = vunpack.c.h.b16 %v4915
    %v5043 = vunpack.c.l.b16 %v4916
    %v5044 = vunpack.c.h.b16 %v4916
    %v5045 = vunpack.c.l.b16 %v4917
    %v5046 = vunpack.c.h.b16 %v4917
    %v5047 = vunpack.c.l.b16 %v4918
    %v5048 = vunpack.c.h.b16 %v4918
    %v5049 = vunpack.c.l.b16 %v4919
    %v5050 = vunpack.c.h.b16 %v4919
    %v5051 = vunpack.c.l.b16 %v4920
    %v5052 = vunpack.c.h.b16 %v4920
    %v5053 = vunpack.c.l.b16 %v4921
    %v5054 = vunpack.c.h.b16 %v4921
    %v5055 = vunpack.c.l.b16 %v4922
    %v5056 = vunpack.c.h.b16 %v4922
    %v5057 = vunpack.c.l.b16 %v4923
    %v5058 = vunpack.c.h.b16 %v4923
    %v5059 = vunpack.c.l.b16 %v4924
    %v5060 = vunpack.c.h.b16 %v4924
    %v5061 = vunpack.c.l.b16 %v4925
    %v5062 = vunpack.c.h.b16 %v4925
    %v5063 = vunpack.c.l.b16 %v4926
    %v5064 = vunpack.c.h.b16 %v4926
    %v5065 = vunpack.c.l.b16 %v4927
    %v5066 = vunpack.c.h.b16 %v4927
    %v5067 = vunpack.c.l.b16 %v4928
    %v5068 = vunpack.c.h.b16 %v4928
    %v5069 = vunpack.c.l.b16 %v4929
    %v5070 = vunpack.c.h.b16 %v4929
    %v5071 = vpack.c.b16 %v4993, %v4991
    %v5072 = vpack.c.b16 %v4994, %v4992
    %v5073 = vpack.c.b16 %v4997, %v4995
    %v5074 = vpack.c.b16 %v4998, %v4996
    %v5075 = vpack.c.b16 %v5001, %v4999
    %v5076 = vpack.c.b16 %v5002, %v5000
    %v5077 = vpack.c.b16 %v5005, %v5003
    %v5078 = vpack.c.b16 %v5006, %v5004
    %v5079 = vpack.c.b16 %v5009, %v5007
    %v5080 = vpack.c.b16 %v5010, %v5008
    %v5081 = vpack.c.b16 %v5013, %v5011
    %v5082 = vpack.c.b16 %v5014, %v5012
    %v5083 = vpack.c.b16 %v5017, %v5015
    %v5084 = vpack.c.b16 %v5018, %v5016
    %v5085 = vpack.c.b16 %v5021, %v5019
    %v5086 = vpack.c.b16 %v5022, %v5020
    %v5087 = vpack.c.b16 %v5025, %v5023
    %v5088 = vpack.c.b16 %v5026, %v5024
    %v5089 = vpack.c.b16 %v5029, %v5027
    %v5090 = vpack.c.b16 %v5030, %v5028
    %v5091 = vpack.c.b16 %v5033, %v5031
    %v5092 = vpack.c.b16 %v5034, %v5032
    %v5093 = vpack.c.b16 %v5037, %v5035
    %v5094 = vpack.c.b16 %v5038, %v5036
    %v5095 = vpack.c.b16 %v5041, %v5039
    %v5096 = vpack.c.b16 %v5042, %v5040
    %v5097 = vpack.c.b16 %v5045, %v5043
    %v5098 = vpack.c.b16 %v5046, %v5044
    %v5099 = vpack.c.b16 %v5049, %v5047
    %v5100 = vpack.c.b16 %v5050, %v5048
    %v5101 = vpack.c.b16 %v5053, %v5051
    %v5102 = vpack.c.b16 %v5054, %v5052
    %v5103 = vpack.c.b16 %v5057, %v5055
    %v5104 = vpack.c.b16 %v5058, %v5056
    %v5105 = vpack.c.b16 %v5061, %v5059
    %v5106 = vpack.c.b16 %v5062, %v5060
    %v5107 = vpack.c.b16 %v5065, %v5063
    %v5108 = vpack.c.b16 %v5066, %v5064
    %v5109 = vpack.c.b16 %v5069, %v5067
    %v5110 = vpack.c.b16 %v5070, %v5068
    %v5152 = vsel %vm4459, %v4946, 0
    %v5155 = vsel %vm4459, %v4945, 0
    %5157 = vmatprep.subr.bf16.mxu0 %v5086
    %5158 = vmatpush1.bf16.msra.mxu0 %v5085
    %5159 = vmatprep.subr.bf16.mxu0 %v5084
    %5160 = vmatpush1.bf16.msra.mxu0 %v5083
    %5161 = vmatprep.subr.bf16.mxu0 %v5082
    %5162 = vmatpush1.bf16.msra.mxu0 %v5081
    %5163 = vmatprep.subr.bf16.mxu0 %v5080
    %5164 = vmatpush1.bf16.msra.mxu0 %v5079
    %5165 = vmatprep.subr.bf16.mxu0 %v5078
    %5166 = vmatpush1.bf16.msra.mxu0 %v5077
    %5167 = vmatprep.subr.bf16.mxu0 %v5076
    %5168 = vmatpush1.bf16.msra.mxu0 %v5075
    %5169 = vmatprep.subr.bf16.mxu0 %v5074
    %5170 = vmatpush1.bf16.msra.mxu0 %v5073
    %5171 = vmatprep.subr.bf16.mxu0 %v5072
    %5172 = vmatpush1.bf16.msra.mxu0 %v5071
    %5173 = vmatprep.subr.bf16.mxu0 %v5102
    %5174 = vmatpush2.bf16.msra.mxu0 %v5101
    %5175 = vmatprep.subr.bf16.mxu0 %v5100
    %5176 = vmatpush2.bf16.msra.mxu0 %v5099
    %5177 = vmatprep.subr.bf16.mxu0 %v5098
    %5178 = vmatpush2.bf16.msra.mxu0 %v5097
    %5179 = vmatprep.subr.bf16.mxu0 %v5096
    %5180 = vmatpush2.bf16.msra.mxu0 %v5095
    %5181 = vmatprep.subr.bf16.mxu0 %v5094
    %5182 = vmatpush2.bf16.msra.mxu0 %v5093
    %5183 = vmatprep.subr.bf16.mxu0 %v5092
    %5184 = vmatpush2.bf16.msra.mxu0 %v5091
    %5185 = vmatprep.subr.bf16.mxu0 %v5090
    %5186 = vmatpush2.bf16.msra.mxu0 %v5089
    %5187 = vmatprep.subr.bf16.mxu0 %v5088
    %5188 = vmatpush2.bf16.msra.mxu0 %v5087
    %5189 = vmatprep.mubr.bf16.mxu0 %v4943
    %5190 = vmatmul.mubr.bf16.gmra.mxu0 %v4940
    %v5191 = vpop.f32.mrf.mxu0
    %v5192 = vadd.f32 0.0, %v5191
    %v5193 = vpop.f32.mrf.mxu0
    %v5194 = vadd.f32 0.0, %v5193
    %v5195 = vpop.f32.mrf.mxu0
    %v5196 = vadd.f32 0.0, %v5195
    %v5197 = vpop.f32.mrf.mxu0
    %v5198 = vadd.f32 0.0, %v5197
    %5199 = vmatprep.mubr.bf16.mxu0 %v4942
    %5200 = vmatmul.mubr.bf16.gmra.mxu0 %v4939
    %v5201 = vpop.f32.mrf.mxu0
    %v5202 = vadd.f32 0.0, %v5201
    %v5203 = vpop.f32.mrf.mxu0
    %v5204 = vadd.f32 0.0, %v5203
    %v5205 = vpop.f32.mrf.mxu0
    %v5206 = vpop.f32.mrf.mxu0
    %5207 = vdwg.mxu0
    %5208 = vmatprep.subr.bf16.mxu0 0
    %5209 = vmatpush1.bf16.msra.mxu0 0
    %5210 = vmatprep.subr.bf16.mxu0 0
    %5211 = vmatpush1.bf16.msra.mxu0 0
    %5212 = vmatprep.subr.bf16.mxu0 0
    %5213 = vmatpush1.bf16.msra.mxu0 0
    %5214 = vmatprep.subr.bf16.mxu0 0
    %5215 = vmatpush1.bf16.msra.mxu0 0
    %5216 = vmatprep.subr.bf16.mxu0 %v5110
    %5217 = vmatpush1.bf16.msra.mxu0 %v5109
    %5218 = vmatprep.subr.bf16.mxu0 %v5108
    %5219 = vmatpush1.bf16.msra.mxu0 %v5107
    %5220 = vmatprep.subr.bf16.mxu0 %v5106
    %5221 = vmatpush1.bf16.msra.mxu0 %v5105
    %5222 = vmatprep.subr.bf16.mxu0 %v5104
    %5223 = vmatpush1.bf16.msra.mxu0 %v5103
    %5224 = vmatprep.subr.bf16.mxu0 0
    %5225 = vmatpush2.bf16.msra.mxu0 0
    %5226 = vmatprep.subr.bf16.mxu0 0
    %5227 = vmatpush2.bf16.msra.mxu0 0
    %5228 = vmatprep.subr.bf16.mxu0 0
    %5229 = vmatpush2.bf16.msra.mxu0 0
    %5230 = vmatprep.subr.bf16.mxu0 0
    %5231 = vmatpush2.bf16.msra.mxu0 0
    %5232 = vmatprep.subr.bf16.mxu0 0
    %5233 = vmatpush2.bf16.msra.mxu0 0
    %5234 = vmatprep.subr.bf16.mxu0 0
    %5235 = vmatpush2.bf16.msra.mxu0 0
    %5236 = vmatprep.subr.bf16.mxu0 0
    %5237 = vmatpush2.bf16.msra.mxu0 0
    %5238 = vmatprep.subr.bf16.mxu0 0
    %5239 = vmatpush2.bf16.msra.mxu0 0
    %5240 = vmatprep.mubr.bf16.mxu0 0
    %5241 = vmatmul.mubr.bf16.gmra.mxu0 %v5152
    %v5242 = vpop.f32.mrf.mxu0
    %v5243 = vadd.f32 %v5192, %v5242
    %v5244 = vpop.f32.mrf.mxu0
    %v5245 = vadd.f32 %v5194, %v5244
    %v5246 = vpop.f32.mrf.mxu0
    %v5247 = vadd.f32 %v5196, %v5246
    %v5248 = vpop.f32.mrf.mxu0
    %v5249 = vadd.f32 %v5198, %v5248
    %5250 = vmatprep.mubr.bf16.mxu0 0
    %5251 = vmatmul.mubr.bf16.gmra.mxu0 %v5155
    %v5252 = vpop.f32.mrf.mxu0
    %v5253 = vadd.f32 %v5202, %v5252
    %v5254 = vpop.f32.mrf.mxu0
    %v5255 = vadd.f32 %v5204, %v5254
    %v5256 = vpop.f32.mrf.mxu0
    %v5257 = vpop.f32.mrf.mxu0
    %5258 = vdwg.mxu0
    %v5259 = vadd.f32 %v4871, %v5243
    %v5260 = vadd.f32 %v4873, %v5245
    %v5261 = vadd.f32 %v4875, %v5247
    %v5262 = vadd.f32 %v4877, %v5249
    %v5263 = vadd.f32 %v4881, %v5253
    %v5264 = vadd.f32 %v4883, %v5255
    %v5265 = vld [vmem:[#allocation25] sm:$0x3]
    %v5267 = vlaneseq
    %v5268 = vshrl.u32 %v5267, 7
    %v5269 = vsub.s32 0, %v5268
    %v5270 = vrot.slane %v5265, %v5269
    %v5271 = vlaneseq
    %v5272 = vshrl.u32 %v5271, 7
    %v5273 = vsub.s32 1, %v5272
    %v5274 = vrot.slane %v5265, %v5273
    %v5277 = vadd.f32 %v5259, %v5270
    %v5278 = vadd.f32 %v5260, %v5274
    %v5279 = vadd.f32 %v5261, %v5270
    %v5280 = vadd.f32 %v5262, %v5274
    %v5281 = vadd.f32 %v5263, %v5270
    %v5282 = vadd.f32 %v5264, %v5274
    %v5283 = vmax.f32 %v5277, 0.0
    %v5284 = vmax.f32 %v5278, 0.0
    %v5285 = vmax.f32 %v5279, 0.0
    %v5286 = vmax.f32 %v5280, 0.0
    %v5287 = vmax.f32 %v5281, 0.0
    %v5288 = vmax.f32 %v5282, 0.0
    %v5289 = vpack.c.bf16 %v5285, %v5283
    %v5290 = vpack.c.bf16 %v5286, %v5284
    %v5291 = vpack.c.bf16 %v5287, %v5287
    %v5292 = vpack.c.bf16 %v5288, %v5288
    %v5293 = vld [vmem:[#allocation27] sm:$0xf]
    %v5294 = vld [vmem:[#allocation27 + $0x4] sm:$0xf]
    %v5295 = vld [vmem:[#allocation27 + $0x8] sm:$0xf]
    %v5296 = vld [vmem:[#allocation27 + $0xc] sm:$0xf]
    %v5297 = vld [vmem:[#allocation27 + $0x10] sm:$0xf]
    %v5298 = vld [vmem:[#allocation27 + $0x14] sm:$0xf]
    %v5299 = vld [vmem:[#allocation27 + $0x18] sm:$0xf]
    %v5300 = vld [vmem:[#allocation27 + $0x1c] sm:$0xf]
    %v5301 = vld [vmem:[#allocation27 + $0x20] sm:$0xf]
    %v5302 = vld [vmem:[#allocation27 + $0x24] sm:$0xf]
    %v5303 = vld [vmem:[#allocation27 + $0x28] sm:$0xf]
    %v5304 = vld [vmem:[#allocation27 + $0x2c] sm:$0xf]
    %v5305 = vld [vmem:[#allocation27 + $0x30] sm:$0xf]
    %v5306 = vld [vmem:[#allocation27 + $0x34] sm:$0xf]
    %v5307 = vld [vmem:[#allocation27 + $0x38] sm:$0xf]
    %v5308 = vld [vmem:[#allocation27 + $0x3c] sm:$0xf]
    %v5309 = vld [vmem:[#allocation27 + $0x40] sm:$0xf]
    %v5310 = vld [vmem:[#allocation27 + $0x44] sm:$0xf]
    %v5311 = vld [vmem:[#allocation27 + $0x48] sm:$0xf]
    %v5312 = vld [vmem:[#allocation27 + $0x4c] sm:$0xf]
    %v5313 = vld [vmem:[#allocation27 + $0x50] sm:$0xf]
    %v5314 = vld [vmem:[#allocation27 + $0x54] sm:$0xf]
    %v5315 = vld [vmem:[#allocation27 + $0x58] sm:$0xf]
    %v5316 = vld [vmem:[#allocation27 + $0x5c] sm:$0xf]
    %v5317 = vld [vmem:[#allocation27 + $0x60] sm:$0xf]
    %v5318 = vld [vmem:[#allocation27 + $0x64] sm:$0xf]
    %v5319 = vld [vmem:[#allocation27 + $0x68] sm:$0xf]
    %v5320 = vld [vmem:[#allocation27 + $0x6c] sm:$0xf]
    %v5321 = vld [vmem:[#allocation27 + $0x70] sm:$0xf]
    %v5322 = vld [vmem:[#allocation27 + $0x74] sm:$0xf]
    %v5323 = vld [vmem:[#allocation27 + $0x78] sm:$0xf]
    %v5324 = vld [vmem:[#allocation27 + $0x7c] sm:$0xf]
    %v5357 = vunpack.c.l.b16 %v5293
    %v5358 = vunpack.c.l.b16 %v5294
    %v5359 = vunpack.c.l.b16 %v5295
    %v5360 = vunpack.c.l.b16 %v5296
    %v5361 = vunpack.c.l.b16 %v5297
    %v5362 = vunpack.c.l.b16 %v5298
    %v5363 = vunpack.c.l.b16 %v5299
    %v5364 = vunpack.c.l.b16 %v5300
    %v5365 = vunpack.c.l.b16 %v5301
    %v5366 = vunpack.c.l.b16 %v5302
    %v5367 = vunpack.c.l.b16 %v5303
    %v5368 = vunpack.c.l.b16 %v5304
    %v5369 = vunpack.c.l.b16 %v5305
    %v5370 = vunpack.c.l.b16 %v5306
    %v5371 = vunpack.c.l.b16 %v5307
    %v5372 = vunpack.c.l.b16 %v5308
    %v5373 = vunpack.c.l.b16 %v5309
    %v5374 = vunpack.c.l.b16 %v5310
    %v5375 = vunpack.c.l.b16 %v5311
    %v5376 = vunpack.c.l.b16 %v5312
    %v5377 = vunpack.c.l.b16 %v5313
    %v5378 = vunpack.c.l.b16 %v5314
    %v5379 = vunpack.c.l.b16 %v5315
    %v5380 = vunpack.c.l.b16 %v5316
    %v5381 = vunpack.c.l.b16 %v5317
    %v5382 = vunpack.c.l.b16 %v5318
    %v5383 = vunpack.c.l.b16 %v5319
    %v5384 = vunpack.c.l.b16 %v5320
    %v5385 = vunpack.c.l.b16 %v5321
    %v5386 = vunpack.c.l.b16 %v5322
    %v5387 = vunpack.c.l.b16 %v5323
    %v5388 = vunpack.c.l.b16 %v5324
    %v5389 = vpack.c.b16 %v5358, %v5357
    %v5390 = vpack.c.b16 %v5360, %v5359
    %v5391 = vpack.c.b16 %v5362, %v5361
    %v5392 = vpack.c.b16 %v5364, %v5363
    %v5393 = vpack.c.b16 %v5366, %v5365
    %v5394 = vpack.c.b16 %v5368, %v5367
    %v5395 = vpack.c.b16 %v5370, %v5369
    %v5396 = vpack.c.b16 %v5372, %v5371
    %v5397 = vpack.c.b16 %v5374, %v5373
    %v5398 = vpack.c.b16 %v5376, %v5375
    %v5399 = vpack.c.b16 %v5378, %v5377
    %v5400 = vpack.c.b16 %v5380, %v5379
    %v5401 = vpack.c.b16 %v5382, %v5381
    %v5402 = vpack.c.b16 %v5384, %v5383
    %v5403 = vpack.c.b16 %v5386, %v5385
    %v5404 = vpack.c.b16 %v5388, %v5387
    %5421 = vmatprep.subr.bf16.mxu0 0
    %5422 = vmatpush1.bf16.msra.mxu0 %v5396
    %5423 = vmatprep.subr.bf16.mxu0 0
    %5424 = vmatpush1.bf16.msra.mxu0 %v5395
    %5425 = vmatprep.subr.bf16.mxu0 0
    %5426 = vmatpush1.bf16.msra.mxu0 %v5394
    %5427 = vmatprep.subr.bf16.mxu0 0
    %5428 = vmatpush1.bf16.msra.mxu0 %v5393
    %5429 = vmatprep.subr.bf16.mxu0 0
    %5430 = vmatpush1.bf16.msra.mxu0 %v5392
    %5431 = vmatprep.subr.bf16.mxu0 0
    %5432 = vmatpush1.bf16.msra.mxu0 %v5391
    %5433 = vmatprep.subr.bf16.mxu0 0
    %5434 = vmatpush1.bf16.msra.mxu0 %v5390
    %5435 = vmatprep.subr.bf16.mxu0 0
    %5436 = vmatpush1.bf16.msra.mxu0 %v5389
    %5437 = vmatprep.subr.bf16.mxu0 0
    %5438 = vmatpush2.bf16.msra.mxu0 %v5404
    %5439 = vmatprep.subr.bf16.mxu0 0
    %5440 = vmatpush2.bf16.msra.mxu0 %v5403
    %5441 = vmatprep.subr.bf16.mxu0 0
    %5442 = vmatpush2.bf16.msra.mxu0 %v5402
    %5443 = vmatprep.subr.bf16.mxu0 0
    %5444 = vmatpush2.bf16.msra.mxu0 %v5401
    %5445 = vmatprep.subr.bf16.mxu0 0
    %5446 = vmatpush2.bf16.msra.mxu0 %v5400
    %5447 = vmatprep.subr.bf16.mxu0 0
    %5448 = vmatpush2.bf16.msra.mxu0 %v5399
    %5449 = vmatprep.subr.bf16.mxu0 0
    %5450 = vmatpush2.bf16.msra.mxu0 %v5398
    %5451 = vmatprep.subr.bf16.mxu0 0
    %5452 = vmatpush2.bf16.msra.mxu0 %v5397
    %5453 = vmatprep.mubr.bf16.mxu0 %v5290
    %5454 = vmatmul.mubr.bf16.gmra.mxu0 %v5289
    %v5455 = vpop.f32.mrf.mxu0
    %v5456 = vadd.f32 0.0, %v5455
    %v5457 = vpop.f32.mrf.mxu0
    %v5458 = vpop.f32.mrf.mxu0
    %v5459 = vadd.f32 0.0, %v5458
    %v5460 = vpop.f32.mrf.mxu0
    %5461 = vmatprep.mubr.bf16.mxu0 %v5292
    %5462 = vmatmul.mubr.bf16.gmra.mxu0 %v5291
    %v5463 = vpop.f32.mrf.mxu0
    %v5464 = vadd.f32 0.0, %v5463
    %v5465 = vpop.f32.mrf.mxu0
    %v5466 = vpop.f32.mrf.mxu0
    %v5467 = vpop.f32.mrf.mxu0
    %5468 = vdwg.mxu0
    %s5469 = scalar_lea.vmem [#allocation27], 128
    %v5470 = vld [vmem:[%s5469] sm:$0xf]
    %v5471 = vld [vmem:[%s5469 + $0x4] sm:$0xf]
    %v5472 = vld [vmem:[%s5469 + $0x8] sm:$0xf]
    %v5473 = vld [vmem:[%s5469 + $0xc] sm:$0xf]
    %v5474 = vld [vmem:[%s5469 + $0x10] sm:$0xf]
    %v5475 = vld [vmem:[%s5469 + $0x14] sm:$0xf]
    %v5476 = vld [vmem:[%s5469 + $0x18] sm:$0xf]
    %v5477 = vld [vmem:[%s5469 + $0x1c] sm:$0xf]
    %v5478 = vld [vmem:[%s5469 + $0x20] sm:$0xf]
    %v5479 = vld [vmem:[%s5469 + $0x24] sm:$0xf]
    %v5480 = vld [vmem:[%s5469 + $0x28] sm:$0xf]
    %v5481 = vld [vmem:[%s5469 + $0x2c] sm:$0xf]
    %v5482 = vld [vmem:[%s5469 + $0x30] sm:$0xf]
    %v5483 = vld [vmem:[%s5469 + $0x34] sm:$0xf]
    %v5484 = vld [vmem:[%s5469 + $0x38] sm:$0xf]
    %v5485 = vld [vmem:[%s5469 + $0x3c] sm:$0xf]
    %v5486 = vld [vmem:[%s5469 + $0x40] sm:$0xf]
    %v5487 = vld [vmem:[%s5469 + $0x44] sm:$0xf]
    %v5488 = vld [vmem:[%s5469 + $0x48] sm:$0xf]
    %v5489 = vld [vmem:[%s5469 + $0x4c] sm:$0xf]
    %v5490 = vld [vmem:[%s5469 + $0x50] sm:$0xf]
    %v5491 = vld [vmem:[%s5469 + $0x54] sm:$0xf]
    %v5492 = vld [vmem:[%s5469 + $0x58] sm:$0xf]
    %v5493 = vld [vmem:[%s5469 + $0x5c] sm:$0xf]
    %v5494 = vld [vmem:[%s5469 + $0x60] sm:$0xf]
    %v5495 = vld [vmem:[%s5469 + $0x64] sm:$0xf]
    %v5496 = vld [vmem:[%s5469 + $0x68] sm:$0xf]
    %v5497 = vld [vmem:[%s5469 + $0x6c] sm:$0xf]
    %v5498 = vld [vmem:[%s5469 + $0x70] sm:$0xf]
    %v5499 = vld [vmem:[%s5469 + $0x74] sm:$0xf]
    %v5500 = vld [vmem:[%s5469 + $0x78] sm:$0xf]
    %v5501 = vld [vmem:[%s5469 + $0x7c] sm:$0xf]
    %v5534 = vunpack.c.l.b16 %v5470
    %v5535 = vunpack.c.l.b16 %v5471
    %v5536 = vunpack.c.l.b16 %v5472
    %v5537 = vunpack.c.l.b16 %v5473
    %v5538 = vunpack.c.l.b16 %v5474
    %v5539 = vunpack.c.l.b16 %v5475
    %v5540 = vunpack.c.l.b16 %v5476
    %v5541 = vunpack.c.l.b16 %v5477
    %v5542 = vunpack.c.l.b16 %v5478
    %v5543 = vunpack.c.l.b16 %v5479
    %v5544 = vunpack.c.l.b16 %v5480
    %v5545 = vunpack.c.l.b16 %v5481
    %v5546 = vunpack.c.l.b16 %v5482
    %v5547 = vunpack.c.l.b16 %v5483
    %v5548 = vunpack.c.l.b16 %v5484
    %v5549 = vunpack.c.l.b16 %v5485
    %v5550 = vunpack.c.l.b16 %v5486
    %v5551 = vunpack.c.l.b16 %v5487
    %v5552 = vunpack.c.l.b16 %v5488
    %v5553 = vunpack.c.l.b16 %v5489
    %v5554 = vunpack.c.l.b16 %v5490
    %v5555 = vunpack.c.l.b16 %v5491
    %v5556 = vunpack.c.l.b16 %v5492
    %v5557 = vunpack.c.l.b16 %v5493
    %v5558 = vunpack.c.l.b16 %v5494
    %v5559 = vunpack.c.l.b16 %v5495
    %v5560 = vunpack.c.l.b16 %v5496
    %v5561 = vunpack.c.l.b16 %v5497
    %v5562 = vunpack.c.l.b16 %v5498
    %v5563 = vunpack.c.l.b16 %v5499
    %v5564 = vunpack.c.l.b16 %v5500
    %v5565 = vunpack.c.l.b16 %v5501
    %v5566 = vpack.c.b16 %v5535, %v5534
    %v5567 = vpack.c.b16 %v5537, %v5536
    %v5568 = vpack.c.b16 %v5539, %v5538
    %v5569 = vpack.c.b16 %v5541, %v5540
    %v5570 = vpack.c.b16 %v5543, %v5542
    %v5571 = vpack.c.b16 %v5545, %v5544
    %v5572 = vpack.c.b16 %v5547, %v5546
    %v5573 = vpack.c.b16 %v5549, %v5548
    %v5574 = vpack.c.b16 %v5551, %v5550
    %v5575 = vpack.c.b16 %v5553, %v5552
    %v5576 = vpack.c.b16 %v5555, %v5554
    %v5577 = vpack.c.b16 %v5557, %v5556
    %v5578 = vpack.c.b16 %v5559, %v5558
    %v5579 = vpack.c.b16 %v5561, %v5560
    %v5580 = vpack.c.b16 %v5563, %v5562
    %v5581 = vpack.c.b16 %v5565, %v5564
    %5598 = vmatprep.subr.bf16.mxu0 0
    %5599 = vmatpush1.bf16.msra.mxu0 %v5573
    %5600 = vmatprep.subr.bf16.mxu0 0
    %5601 = vmatpush1.bf16.msra.mxu0 %v5572
    %5602 = vmatprep.subr.bf16.mxu0 0
    %5603 = vmatpush1.bf16.msra.mxu0 %v5571
    %5604 = vmatprep.subr.bf16.mxu0 0
    %5605 = vmatpush1.bf16.msra.mxu0 %v5570
    %5606 = vmatprep.subr.bf16.mxu0 0
    %5607 = vmatpush1.bf16.msra.mxu0 %v5569
    %5608 = vmatprep.subr.bf16.mxu0 0
    %5609 = vmatpush1.bf16.msra.mxu0 %v5568
    %5610 = vmatprep.subr.bf16.mxu0 0
    %5611 = vmatpush1.bf16.msra.mxu0 %v5567
    %5612 = vmatprep.subr.bf16.mxu0 0
    %5613 = vmatpush1.bf16.msra.mxu0 %v5566
    %5614 = vmatprep.subr.bf16.mxu0 0
    %5615 = vmatpush2.bf16.msra.mxu0 %v5581
    %5616 = vmatprep.subr.bf16.mxu0 0
    %5617 = vmatpush2.bf16.msra.mxu0 %v5580
    %5618 = vmatprep.subr.bf16.mxu0 0
    %5619 = vmatpush2.bf16.msra.mxu0 %v5579
    %5620 = vmatprep.subr.bf16.mxu0 0
    %5621 = vmatpush2.bf16.msra.mxu0 %v5578
    %5622 = vmatprep.subr.bf16.mxu0 0
    %5623 = vmatpush2.bf16.msra.mxu0 %v5577
    %5624 = vmatprep.subr.bf16.mxu0 0
    %5625 = vmatpush2.bf16.msra.mxu0 %v5576
    %5626 = vmatprep.subr.bf16.mxu0 0
    %5627 = vmatpush2.bf16.msra.mxu0 %v5575
    %5628 = vmatprep.subr.bf16.mxu0 0
    %5629 = vmatpush2.bf16.msra.mxu0 %v5574
    %5630 = vmatprep.mubr.bf16.mxu0 %v5290
    %5631 = vmatmul.mubr.bf16.gmra.mxu0 %v5289
    %v5632 = vpop.f32.mrf.mxu0
    %v5633 = vadd.f32 0.0, %v5632
    %v5634 = vpop.f32.mrf.mxu0
    %v5635 = vpop.f32.mrf.mxu0
    %v5636 = vadd.f32 0.0, %v5635
    %v5637 = vpop.f32.mrf.mxu0
    %5638 = vmatprep.mubr.bf16.mxu0 %v5292
    %5639 = vmatmul.mubr.bf16.gmra.mxu0 %v5291
    %v5640 = vpop.f32.mrf.mxu0
    %v5641 = vadd.f32 0.0, %v5640
    %v5642 = vpop.f32.mrf.mxu0
    %v5643 = vpop.f32.mrf.mxu0
    %v5644 = vpop.f32.mrf.mxu0
    %5645 = vdwg.mxu0
    %v5646 = vmax.f32 %v5456, %v5633
    %v5647 = vmax.f32 %v5459, %v5636
    %v5648 = vmax.f32 %v5464, %v5641
    %v5649 = vpack.c.bf16 %v5647, %v5646
    %v5650 = vpack.c.bf16 %v5648, %v5648
    %v5651 = vld [vmem:[%s29] sm:$0xf]
    %vm5652 = vcmask 146432
    %v5654 = vsel %vm5652, %v5651, 0
    %v5657 = vsel %vm1826, %v5650, 0
    %5659 = vmatprep.subr.bf16.mxu0 0
    %5660 = vmatpush1.bf16.msra.mxu0 0
    %5661 = vmatprep.subr.bf16.mxu0 0
    %5662 = vmatpush1.bf16.msra.mxu0 0
    %5663 = vmatprep.subr.bf16.mxu0 0
    %5664 = vmatpush1.bf16.msra.mxu0 0
    %5665 = vmatprep.subr.bf16.mxu0 0
    %5666 = vmatpush1.bf16.msra.mxu0 0
    %5667 = vmatprep.subr.bf16.mxu0 0
    %5668 = vmatpush1.bf16.msra.mxu0 0
    %5669 = vmatprep.subr.bf16.mxu0 0
    %5670 = vmatpush1.bf16.msra.mxu0 0
    %5671 = vmatprep.subr.bf16.mxu0 0
    %5672 = vmatpush1.bf16.msra.mxu0 %v5657
    %5673 = vmatprep.subr.bf16.mxu0 0
    %5674 = vmatpush1.bf16.msra.mxu0 %v5649
    %5675 = vmatprep.subr.bf16.mxu0 0
    %5676 = vmatpush2.bf16.msra.mxu0 0
    %5677 = vmatprep.subr.bf16.mxu0 0
    %5678 = vmatpush2.bf16.msra.mxu0 0
    %5679 = vmatprep.subr.bf16.mxu0 0
    %5680 = vmatpush2.bf16.msra.mxu0 0
    %5681 = vmatprep.subr.bf16.mxu0 0
    %5682 = vmatpush2.bf16.msra.mxu0 0
    %5683 = vmatprep.subr.bf16.mxu0 0
    %5684 = vmatpush2.bf16.msra.mxu0 0
    %5685 = vmatprep.subr.bf16.mxu0 0
    %5686 = vmatpush2.bf16.msra.mxu0 0
    %5687 = vmatprep.subr.bf16.mxu0 0
    %5688 = vmatpush2.bf16.msra.mxu0 0
    %5689 = vmatprep.subr.bf16.mxu0 0
    %5690 = vmatpush2.bf16.msra.mxu0 0
    %5691 = vmatprep.mubr.bf16.mxu0 0
    %5692 = vmatmul.mubr.bf16.gmra.mxu0 %v5654
    %v5693 = vpop.f32.mrf.mxu0
    %v5694 = vadd.f32 0.0, %v5693
    %v5695 = vpop.f32.mrf.mxu0
    %v5696 = vpop.f32.mrf.mxu0
    %v5697 = vpop.f32.mrf.mxu0
    %5698 = vdwg.mxu0
    %s5699 = scalar_lea.vmem %s29, 4
    %v5700 = vld [vmem:[%s5699] sm:$0xf]
    %v5702 = vsel %vm5652, %v5700, 0
    %5704 = vmatprep.subr.bf16.mxu0 0
    %5705 = vmatpush1.bf16.msra.mxu0 0
    %5706 = vmatprep.subr.bf16.mxu0 0
    %5707 = vmatpush1.bf16.msra.mxu0 0
    %5708 = vmatprep.subr.bf16.mxu0 0
    %5709 = vmatpush1.bf16.msra.mxu0 0
    %5710 = vmatprep.subr.bf16.mxu0 0
    %5711 = vmatpush1.bf16.msra.mxu0 0
    %5712 = vmatprep.subr.bf16.mxu0 0
    %5713 = vmatpush1.bf16.msra.mxu0 0
    %5714 = vmatprep.subr.bf16.mxu0 0
    %5715 = vmatpush1.bf16.msra.mxu0 0
    %5716 = vmatprep.subr.bf16.mxu0 0
    %5717 = vmatpush1.bf16.msra.mxu0 %v5657
    %5718 = vmatprep.subr.bf16.mxu0 0
    %5719 = vmatpush1.bf16.msra.mxu0 %v5649
    %5720 = vmatprep.subr.bf16.mxu0 0
    %5721 = vmatpush2.bf16.msra.mxu0 0
    %5722 = vmatprep.subr.bf16.mxu0 0
    %5723 = vmatpush2.bf16.msra.mxu0 0
    %5724 = vmatprep.subr.bf16.mxu0 0
    %5725 = vmatpush2.bf16.msra.mxu0 0
    %5726 = vmatprep.subr.bf16.mxu0 0
    %5727 = vmatpush2.bf16.msra.mxu0 0
    %5728 = vmatprep.subr.bf16.mxu0 0
    %5729 = vmatpush2.bf16.msra.mxu0 0
    %5730 = vmatprep.subr.bf16.mxu0 0
    %5731 = vmatpush2.bf16.msra.mxu0 0
    %5732 = vmatprep.subr.bf16.mxu0 0
    %5733 = vmatpush2.bf16.msra.mxu0 0
    %5734 = vmatprep.subr.bf16.mxu0 0
    %5735 = vmatpush2.bf16.msra.mxu0 0
    %5736 = vmatprep.mubr.bf16.mxu0 0
    %5737 = vmatmul.mubr.bf16.gmra.mxu0 %v5702
    %v5738 = vpop.f32.mrf.mxu0
    %v5739 = vadd.f32 0.0, %v5738
    %v5740 = vpop.f32.mrf.mxu0
    %v5741 = vpop.f32.mrf.mxu0
    %v5742 = vpop.f32.mrf.mxu0
    %5743 = vdwg.mxu0
    %v5744 = vmax.f32 %v5694, %v5739
    %vm5745 = vcmask 523268
    %vm5746 = vmor %vm5745, %vm1953
    %5747 = vst.msk [vmem:[#allocation6] sm:$0xff] %vm5746, 0
    %vm5748 = vcmask 521220
    %vm5749 = vmor %vm5748, %vm1960
    %5750 = vst.msk [vmem:[#allocation6 + $0x8] sm:$0x33] %vm5749, 0
    %v5751 = vpack.c.bf16 %v5744, %v5744
    %v5753 = vunpack.c.l.b16 %v5751
    %v5754 = vpack.c.b16 %v5753, %v5753
    %v5756 = vshrl.u32 %v5754, 16
    %v5758 = vrot.slane %v5756, 7
    %v5759 = vshll.u32 %v5754, 16
    %v5761 = vor.u32 %v5758, %v5759
    %5762 = vrot.lane.b32.xlu0 %v5761, 32
    %v5763 = vpop.permute.xlu0 %5762
    %v5764 = vrot.slane %v5763, 4
    %v5765 = vsel %vm4003, %v5764, %v5763
    %vm5767 = vcmask 1042688
    %vm5768 = vsmask.f32 2306
    %vm5769 = vmand %vm5767, %vm5768
    %vm5770 = vcmask 260100
    %vm5771 = vsmask.f32 6418
    %vm5772 = vmand %vm5770, %vm5771
    %vm5773 = vmor %vm5772, %vm5769
    %v5774 = vld [vmem:[#allocation6] sm:$0x77]
    %v5775 = vsel %vm5773, %v5765, %v5774
    %5776 = vst [vmem:[#allocation6] sm:$0x77] %v5775
    %v5777 = vrot.slane %v5759, 7
    %v5778 = vrot.slane %v5756, 6
    %v5779 = vor.u32 %v5778, %v5777
    %v5780 = vrot.slane %v5779, 4
    %5781 = vrot.lane.b32.xlu0 %v5777, 32
    %v5782 = vpop.permute.xlu0 %5781
    %5783 = vrot.lane.b32.xlu0 %v5780, 32
    %v5784 = vpop.permute.xlu0 %5783
    %v5785 = vrot.slane %v5782, 4
    %v5786 = vrot.slane %v5784, 4
    %v5787 = vsel %vm4003, %v5785, %v5782
    %v5788 = vsel %vm4003, %v5786, %v5784
    %vm5791 = vcmask 1043715
    %vm5792 = vsmask.f32 7950
    %vm5793 = vmand %vm5791, %vm5792
    %vm5794 = vcmask 261127
    %vm5795 = vsmask.f32 7966
    %vm5796 = vmand %vm5794, %vm5795
    %vm5797 = vmor %vm5796, %vm5793
    %v5798 = vld [vmem:[#allocation6] sm:$0x88]
    %v5799 = vsel %vm5797, %v5787, %v5798
    %5800 = vst [vmem:[#allocation6] sm:$0x88] %v5799
    %vm5801 = vcmask 259076
    %vm5802 = vmand %vm5801, %vm2078
    %vm5803 = vmor %vm5802, %vm4088
    %v5804 = vld [vmem:[#allocation6 + $0x8] sm:$0x33]
    %v5805 = vsel %vm5803, %v5788, %v5804
    %5806 = vst [vmem:[#allocation6 + $0x8] sm:$0x33] %v5805
    %v5807 = vld [vmem:[#allocation6] sm:$0xff]
    %v5808 = vld [vmem:[#allocation6 + $0x8] sm:$0x11]
    %v5809 = vld [vmem:[#allocation28] sm:$0xff]
    %v5810 = vld [vmem:[#allocation28 + $0x8] sm:$0xff]
    %v5811 = vld [vmem:[#allocation28 + $0x10] sm:$0xff]
    %v5812 = vld [vmem:[#allocation28 + $0x18] sm:$0xff]
    %v5813 = vld [vmem:[#allocation28 + $0x20] sm:$0xff]
    %v5814 = vld [vmem:[#allocation28 + $0x28] sm:$0xff]
    %v5815 = vld [vmem:[#allocation28 + $0x30] sm:$0xff]
    %v5816 = vld [vmem:[#allocation28 + $0x38] sm:$0xff]
    %v5817 = vld [vmem:[#allocation28 + $0x40] sm:$0xff]
    %v5818 = vld [vmem:[#allocation28 + $0x48] sm:$0xff]
    %v5819 = vld [vmem:[#allocation28 + $0x50] sm:$0xff]
    %v5820 = vld [vmem:[#allocation28 + $0x58] sm:$0xff]
    %v5821 = vld [vmem:[#allocation28 + $0x60] sm:$0xff]
    %v5822 = vld [vmem:[#allocation28 + $0x68] sm:$0xff]
    %v5823 = vld [vmem:[#allocation28 + $0x70] sm:$0xff]
    %v5824 = vld [vmem:[#allocation28 + $0x78] sm:$0xff]
    %v5825 = vld [vmem:[#allocation28 + $0x80] sm:$0xff]
    %v5826 = vld [vmem:[#allocation28 + $0x88] sm:$0xff]
    %v5827 = vld [vmem:[#allocation28 + $0x90] sm:$0xff]
    %v5828 = vld [vmem:[#allocation28 + $0x98] sm:$0xff]
    %v5829 = vld [vmem:[#allocation28 + $0xa0] sm:$0xff]
    %v5830 = vld [vmem:[#allocation28 + $0xa8] sm:$0xff]
    %v5831 = vld [vmem:[#allocation28 + $0xb0] sm:$0xff]
    %v5832 = vld [vmem:[#allocation28 + $0xb8] sm:$0xff]
    %v5833 = vld [vmem:[#allocation6 + $0x8] sm:$0x33]
    %s5834 = scalar_lea.vmem [#allocation28], 192
    %v5835 = vld [vmem:[%s5834] sm:$0xff]
    %v5836 = vld [vmem:[%s5834 + $0x8] sm:$0xff]
    %v5837 = vld [vmem:[%s5834 + $0x10] sm:$0xff]
    %v5838 = vld [vmem:[%s5834 + $0x18] sm:$0xff]
    %v5839 = vld [vmem:[%s5834 + $0x20] sm:$0xff]
    %v5840 = vld [vmem:[%s5834 + $0x28] sm:$0xff]
    %v5841 = vld [vmem:[%s5834 + $0x30] sm:$0xff]
    %v5842 = vld [vmem:[%s5834 + $0x38] sm:$0xff]
    %v5843 = vld [vmem:[%s5834 + $0x40] sm:$0xff]
    %v5844 = vld [vmem:[%s5834 + $0x48] sm:$0xff]
    %v5845 = vld [vmem:[%s5834 + $0x50] sm:$0xff]
    %v5846 = vld [vmem:[%s5834 + $0x58] sm:$0xff]
    %v5847 = vld [vmem:[%s5834 + $0x60] sm:$0xff]
    %v5848 = vld [vmem:[%s5834 + $0x68] sm:$0xff]
    %v5849 = vld [vmem:[%s5834 + $0x70] sm:$0xff]
    %v5850 = vld [vmem:[%s5834 + $0x78] sm:$0xff]
    %v5851 = vld [vmem:[%s5834 + $0x80] sm:$0xff]
    %v5852 = vld [vmem:[%s5834 + $0x88] sm:$0xff]
    %v5853 = vld [vmem:[%s5834 + $0x90] sm:$0xff]
    %v5854 = vld [vmem:[%s5834 + $0x98] sm:$0xff]
    %v5855 = vld [vmem:[%s5834 + $0xa0] sm:$0xff]
    %v5856 = vld [vmem:[%s5834 + $0xa8] sm:$0xff]
    %v5857 = vld [vmem:[%s5834 + $0xb0] sm:$0xff]
    %v5858 = vld [vmem:[%s5834 + $0xb8] sm:$0xff]
    %v5861 = vunpack.c.l.b16 %v5807
    %v5862 = vunpack.c.h.b16 %v5807
    %v5863 = vunpack.c.l.b16 %v5833
    %v5864 = vunpack.c.h.b16 %v5833
    %v5865 = vpack.c.b16 %v5863, %v5861
    %v5866 = vpack.c.b16 %v5864, %v5862
    %v5868 = vshrl.u32 %v5865, 16
    %v5870 = vshll.u32 %v5865, 16
    %v5872 = vrot.slane %v5870, 1
    %v5873 = vor.u32 %v5868, %v5872
    %v5875 = vshrl.u32 %v5866, 16
    %v5877 = vshll.u32 %v5866, 16
    %v5879 = vrot.slane %v5877, 1
    %v5880 = vor.u32 %v5875, %v5879
    %v5906 = vunpack.c.l.b16 %v5835
    %v5907 = vunpack.c.h.b16 %v5835
    %v5908 = vunpack.c.l.b16 %v5836
    %v5909 = vunpack.c.h.b16 %v5836
    %v5910 = vunpack.c.l.b16 %v5837
    %v5911 = vunpack.c.h.b16 %v5837
    %v5912 = vunpack.c.l.b16 %v5838
    %v5913 = vunpack.c.h.b16 %v5838
    %v5914 = vunpack.c.l.b16 %v5839
    %v5915 = vunpack.c.h.b16 %v5839
    %v5916 = vunpack.c.l.b16 %v5840
    %v5917 = vunpack.c.h.b16 %v5840
    %v5918 = vunpack.c.l.b16 %v5841
    %v5919 = vunpack.c.h.b16 %v5841
    %v5920 = vunpack.c.l.b16 %v5842
    %v5921 = vunpack.c.h.b16 %v5842
    %v5922 = vunpack.c.l.b16 %v5843
    %v5923 = vunpack.c.h.b16 %v5843
    %v5924 = vunpack.c.l.b16 %v5844
    %v5925 = vunpack.c.h.b16 %v5844
    %v5926 = vunpack.c.l.b16 %v5845
    %v5927 = vunpack.c.h.b16 %v5845
    %v5928 = vunpack.c.l.b16 %v5846
    %v5929 = vunpack.c.h.b16 %v5846
    %v5930 = vunpack.c.l.b16 %v5847
    %v5931 = vunpack.c.h.b16 %v5847
    %v5932 = vunpack.c.l.b16 %v5848
    %v5933 = vunpack.c.h.b16 %v5848
    %v5934 = vunpack.c.l.b16 %v5849
    %v5935 = vunpack.c.h.b16 %v5849
    %v5936 = vunpack.c.l.b16 %v5850
    %v5937 = vunpack.c.h.b16 %v5850
    %v5938 = vunpack.c.l.b16 %v5851
    %v5939 = vunpack.c.h.b16 %v5851
    %v5940 = vunpack.c.l.b16 %v5852
    %v5941 = vunpack.c.h.b16 %v5852
    %v5942 = vunpack.c.l.b16 %v5853
    %v5943 = vunpack.c.h.b16 %v5853
    %v5944 = vunpack.c.l.b16 %v5854
    %v5945 = vunpack.c.h.b16 %v5854
    %v5946 = vunpack.c.l.b16 %v5855
    %v5947 = vunpack.c.h.b16 %v5855
    %v5948 = vunpack.c.l.b16 %v5856
    %v5949 = vunpack.c.h.b16 %v5856
    %v5950 = vunpack.c.l.b16 %v5857
    %v5951 = vunpack.c.h.b16 %v5857
    %v5952 = vunpack.c.l.b16 %v5858
    %v5953 = vunpack.c.h.b16 %v5858
    %v5954 = vpack.c.b16 %v5908, %v5906
    %v5955 = vpack.c.b16 %v5909, %v5907
    %v5956 = vpack.c.b16 %v5912, %v5910
    %v5957 = vpack.c.b16 %v5913, %v5911
    %v5958 = vpack.c.b16 %v5916, %v5914
    %v5959 = vpack.c.b16 %v5917, %v5915
    %v5960 = vpack.c.b16 %v5920, %v5918
    %v5961 = vpack.c.b16 %v5921, %v5919
    %v5962 = vpack.c.b16 %v5924, %v5922
    %v5963 = vpack.c.b16 %v5925, %v5923
    %v5964 = vpack.c.b16 %v5928, %v5926
    %v5965 = vpack.c.b16 %v5929, %v5927
    %v5966 = vpack.c.b16 %v5932, %v5930
    %v5967 = vpack.c.b16 %v5933, %v5931
    %v5968 = vpack.c.b16 %v5936, %v5934
    %v5969 = vpack.c.b16 %v5937, %v5935
    %v5970 = vpack.c.b16 %v5940, %v5938
    %v5971 = vpack.c.b16 %v5941, %v5939
    %v5972 = vpack.c.b16 %v5944, %v5942
    %v5973 = vpack.c.b16 %v5945, %v5943
    %v5974 = vpack.c.b16 %v5948, %v5946
    %v5975 = vpack.c.b16 %v5949, %v5947
    %v5976 = vpack.c.b16 %v5952, %v5950
    %v5977 = vpack.c.b16 %v5953, %v5951
    %v6003 = vsel %vm4459, %v5880, 0
    %6005 = vmatprep.subr.bf16.mxu0 %v5969
    %6006 = vmatpush1.bf16.msra.mxu0 %v5968
    %6007 = vmatprep.subr.bf16.mxu0 %v5967
    %6008 = vmatpush1.bf16.msra.mxu0 %v5966
    %6009 = vmatprep.subr.bf16.mxu0 %v5965
    %6010 = vmatpush1.bf16.msra.mxu0 %v5964
    %6011 = vmatprep.subr.bf16.mxu0 %v5963
    %6012 = vmatpush1.bf16.msra.mxu0 %v5962
    %6013 = vmatprep.subr.bf16.mxu0 %v5961
    %6014 = vmatpush1.bf16.msra.mxu0 %v5960
    %6015 = vmatprep.subr.bf16.mxu0 %v5959
    %6016 = vmatpush1.bf16.msra.mxu0 %v5958
    %6017 = vmatprep.subr.bf16.mxu0 %v5957
    %6018 = vmatpush1.bf16.msra.mxu0 %v5956
    %6019 = vmatprep.subr.bf16.mxu0 %v5955
    %6020 = vmatpush1.bf16.msra.mxu0 %v5954
    %6021 = vmatprep.subr.bf16.mxu0 0
    %6022 = vmatpush2.bf16.msra.mxu0 0
    %6023 = vmatprep.subr.bf16.mxu0 0
    %6024 = vmatpush2.bf16.msra.mxu0 0
    %6025 = vmatprep.subr.bf16.mxu0 0
    %6026 = vmatpush2.bf16.msra.mxu0 0
    %6027 = vmatprep.subr.bf16.mxu0 0
    %6028 = vmatpush2.bf16.msra.mxu0 0
    %6029 = vmatprep.subr.bf16.mxu0 %v5977
    %6030 = vmatpush2.bf16.msra.mxu0 %v5976
    %6031 = vmatprep.subr.bf16.mxu0 %v5975
    %6032 = vmatpush2.bf16.msra.mxu0 %v5974
    %6033 = vmatprep.subr.bf16.mxu0 %v5973
    %6034 = vmatpush2.bf16.msra.mxu0 %v5972
    %6035 = vmatprep.subr.bf16.mxu0 %v5971
    %6036 = vmatpush2.bf16.msra.mxu0 %v5970
    %6037 = vmatprep.mubr.bf16.mxu0 %v6003
    %6038 = vmatmul.mubr.bf16.gmra.mxu0 %v5873
    %v6039 = vpop.f32.mrf.mxu0
    %v6040 = vadd.f32 0.0, %v6039
    %v6041 = vpop.f32.mrf.mxu0
    %v6042 = vadd.f32 0.0, %v6041
    %v6043 = vpop.f32.mrf.mxu0
    %v6044 = vadd.f32 0.0, %v6043
    %v6045 = vpop.f32.mrf.mxu0
    %v6046 = vadd.f32 0.0, %v6045
    %6047 = vdwg.mxu0
    %v6049 = vunpack.c.l.b16 %v5808
    %v6050 = vunpack.c.h.b16 %v5808
    %v6051 = vpack.c.b16 %v6049, %v5861
    %v6052 = vpack.c.b16 %v6050, %v5862
    %v6078 = vunpack.c.l.b16 %v5809
    %v6079 = vunpack.c.h.b16 %v5809
    %v6080 = vunpack.c.l.b16 %v5810
    %v6081 = vunpack.c.h.b16 %v5810
    %v6082 = vunpack.c.l.b16 %v5811
    %v6083 = vunpack.c.h.b16 %v5811
    %v6084 = vunpack.c.l.b16 %v5812
    %v6085 = vunpack.c.h.b16 %v5812
    %v6086 = vunpack.c.l.b16 %v5813
    %v6087 = vunpack.c.h.b16 %v5813
    %v6088 = vunpack.c.l.b16 %v5814
    %v6089 = vunpack.c.h.b16 %v5814
    %v6090 = vunpack.c.l.b16 %v5815
    %v6091 = vunpack.c.h.b16 %v5815
    %v6092 = vunpack.c.l.b16 %v5816
    %v6093 = vunpack.c.h.b16 %v5816
    %v6094 = vunpack.c.l.b16 %v5817
    %v6095 = vunpack.c.h.b16 %v5817
    %v6096 = vunpack.c.l.b16 %v5818
    %v6097 = vunpack.c.h.b16 %v5818
    %v6098 = vunpack.c.l.b16 %v5819
    %v6099 = vunpack.c.h.b16 %v5819
    %v6100 = vunpack.c.l.b16 %v5820
    %v6101 = vunpack.c.h.b16 %v5820
    %v6102 = vunpack.c.l.b16 %v5821
    %v6103 = vunpack.c.h.b16 %v5821
    %v6104 = vunpack.c.l.b16 %v5822
    %v6105 = vunpack.c.h.b16 %v5822
    %v6106 = vunpack.c.l.b16 %v5823
    %v6107 = vunpack.c.h.b16 %v5823
    %v6108 = vunpack.c.l.b16 %v5824
    %v6109 = vunpack.c.h.b16 %v5824
    %v6110 = vunpack.c.l.b16 %v5825
    %v6111 = vunpack.c.h.b16 %v5825
    %v6112 = vunpack.c.l.b16 %v5826
    %v6113 = vunpack.c.h.b16 %v5826
    %v6114 = vunpack.c.l.b16 %v5827
    %v6115 = vunpack.c.h.b16 %v5827
    %v6116 = vunpack.c.l.b16 %v5828
    %v6117 = vunpack.c.h.b16 %v5828
    %v6118 = vunpack.c.l.b16 %v5829
    %v6119 = vunpack.c.h.b16 %v5829
    %v6120 = vunpack.c.l.b16 %v5830
    %v6121 = vunpack.c.h.b16 %v5830
    %v6122 = vunpack.c.l.b16 %v5831
    %v6123 = vunpack.c.h.b16 %v5831
    %v6124 = vunpack.c.l.b16 %v5832
    %v6125 = vunpack.c.h.b16 %v5832
    %v6126 = vpack.c.b16 %v6080, %v6078
    %v6127 = vpack.c.b16 %v6081, %v6079
    %v6128 = vpack.c.b16 %v6084, %v6082
    %v6129 = vpack.c.b16 %v6085, %v6083
    %v6130 = vpack.c.b16 %v6088, %v6086
    %v6131 = vpack.c.b16 %v6089, %v6087
    %v6132 = vpack.c.b16 %v6092, %v6090
    %v6133 = vpack.c.b16 %v6093, %v6091
    %v6134 = vpack.c.b16 %v6096, %v6094
    %v6135 = vpack.c.b16 %v6097, %v6095
    %v6136 = vpack.c.b16 %v6100, %v6098
    %v6137 = vpack.c.b16 %v6101, %v6099
    %v6138 = vpack.c.b16 %v6104, %v6102
    %v6139 = vpack.c.b16 %v6105, %v6103
    %v6140 = vpack.c.b16 %v6108, %v6106
    %v6141 = vpack.c.b16 %v6109, %v6107
    %v6142 = vpack.c.b16 %v6112, %v6110
    %v6143 = vpack.c.b16 %v6113, %v6111
    %v6144 = vpack.c.b16 %v6116, %v6114
    %v6145 = vpack.c.b16 %v6117, %v6115
    %v6146 = vpack.c.b16 %v6120, %v6118
    %v6147 = vpack.c.b16 %v6121, %v6119
    %v6148 = vpack.c.b16 %v6124, %v6122
    %v6149 = vpack.c.b16 %v6125, %v6123
    %v6175 = vsel %vm4459, %v6052, 0
    %6177 = vmatprep.subr.bf16.mxu0 %v6141
    %6178 = vmatpush1.bf16.msra.mxu0 %v6140
    %6179 = vmatprep.subr.bf16.mxu0 %v6139
    %6180 = vmatpush1.bf16.msra.mxu0 %v6138
    %6181 = vmatprep.subr.bf16.mxu0 %v6137
    %6182 = vmatpush1.bf16.msra.mxu0 %v6136
    %6183 = vmatprep.subr.bf16.mxu0 %v6135
    %6184 = vmatpush1.bf16.msra.mxu0 %v6134
    %6185 = vmatprep.subr.bf16.mxu0 %v6133
    %6186 = vmatpush1.bf16.msra.mxu0 %v6132
    %6187 = vmatprep.subr.bf16.mxu0 %v6131
    %6188 = vmatpush1.bf16.msra.mxu0 %v6130
    %6189 = vmatprep.subr.bf16.mxu0 %v6129
    %6190 = vmatpush1.bf16.msra.mxu0 %v6128
    %6191 = vmatprep.subr.bf16.mxu0 %v6127
    %6192 = vmatpush1.bf16.msra.mxu0 %v6126
    %6193 = vmatprep.subr.bf16.mxu0 0
    %6194 = vmatpush2.bf16.msra.mxu0 0
    %6195 = vmatprep.subr.bf16.mxu0 0
    %6196 = vmatpush2.bf16.msra.mxu0 0
    %6197 = vmatprep.subr.bf16.mxu0 0
    %6198 = vmatpush2.bf16.msra.mxu0 0
    %6199 = vmatprep.subr.bf16.mxu0 0
    %6200 = vmatpush2.bf16.msra.mxu0 0
    %6201 = vmatprep.subr.bf16.mxu0 %v6149
    %6202 = vmatpush2.bf16.msra.mxu0 %v6148
    %6203 = vmatprep.subr.bf16.mxu0 %v6147
    %6204 = vmatpush2.bf16.msra.mxu0 %v6146
    %6205 = vmatprep.subr.bf16.mxu0 %v6145
    %6206 = vmatpush2.bf16.msra.mxu0 %v6144
    %6207 = vmatprep.subr.bf16.mxu0 %v6143
    %6208 = vmatpush2.bf16.msra.mxu0 %v6142
    %6209 = vmatprep.mubr.bf16.mxu0 %v6175
    %6210 = vmatmul.mubr.bf16.gmra.mxu0 %v6051
    %v6211 = vpop.f32.mrf.mxu0
    %v6212 = vadd.f32 %v6040, %v6211
    %v6213 = vpop.f32.mrf.mxu0
    %v6214 = vadd.f32 %v6042, %v6213
    %v6215 = vpop.f32.mrf.mxu0
    %v6216 = vadd.f32 %v6044, %v6215
    %v6217 = vpop.f32.mrf.mxu0
    %v6218 = vadd.f32 %v6046, %v6217
    %6219 = vdwg.mxu0
    %v6220 = vld [vmem:[#allocation6] sm:$0xee]
    %s6221 = scalar_lea.vmem [#allocation28], 384
    %v6222 = vld [vmem:[%s6221] sm:$0xff]
    %v6223 = vld [vmem:[%s6221 + $0x8] sm:$0xff]
    %v6224 = vld [vmem:[%s6221 + $0x10] sm:$0xff]
    %v6225 = vld [vmem:[%s6221 + $0x18] sm:$0xff]
    %v6226 = vld [vmem:[%s6221 + $0x20] sm:$0xff]
    %v6227 = vld [vmem:[%s6221 + $0x28] sm:$0xff]
    %v6228 = vld [vmem:[%s6221 + $0x30] sm:$0xff]
    %v6229 = vld [vmem:[%s6221 + $0x38] sm:$0xff]
    %v6230 = vld [vmem:[%s6221 + $0x40] sm:$0xff]
    %v6231 = vld [vmem:[%s6221 + $0x48] sm:$0xff]
    %v6232 = vld [vmem:[%s6221 + $0x50] sm:$0xff]
    %v6233 = vld [vmem:[%s6221 + $0x58] sm:$0xff]
    %v6234 = vld [vmem:[%s6221 + $0x60] sm:$0xff]
    %v6235 = vld [vmem:[%s6221 + $0x68] sm:$0xff]
    %v6236 = vld [vmem:[%s6221 + $0x70] sm:$0xff]
    %v6237 = vld [vmem:[%s6221 + $0x78] sm:$0xff]
    %v6238 = vld [vmem:[%s6221 + $0x80] sm:$0xff]
    %v6239 = vld [vmem:[%s6221 + $0x88] sm:$0xff]
    %v6240 = vld [vmem:[%s6221 + $0x90] sm:$0xff]
    %v6241 = vld [vmem:[%s6221 + $0x98] sm:$0xff]
    %v6242 = vld [vmem:[%s6221 + $0xa0] sm:$0xff]
    %v6243 = vld [vmem:[%s6221 + $0xa8] sm:$0xff]
    %v6244 = vld [vmem:[%s6221 + $0xb0] sm:$0xff]
    %v6245 = vld [vmem:[%s6221 + $0xb8] sm:$0xff]
    %v6247 = vunpack.c.l.b16 %v6220
    %v6248 = vunpack.c.h.b16 %v6220
    %v6249 = vpack.c.b16 %v5863, %v6247
    %v6250 = vpack.c.b16 %v5864, %v6248
    %v6251 = vrot.slane %v6249, 1
    %v6252 = vrot.slane %v6250, 1
    %v6278 = vunpack.c.l.b16 %v6222
    %v6279 = vunpack.c.h.b16 %v6222
    %v6280 = vunpack.c.l.b16 %v6223
    %v6281 = vunpack.c.h.b16 %v6223
    %v6282 = vunpack.c.l.b16 %v6224
    %v6283 = vunpack.c.h.b16 %v6224
    %v6284 = vunpack.c.l.b16 %v6225
    %v6285 = vunpack.c.h.b16 %v6225
    %v6286 = vunpack.c.l.b16 %v6226
    %v6287 = vunpack.c.h.b16 %v6226
    %v6288 = vunpack.c.l.b16 %v6227
    %v6289 = vunpack.c.h.b16 %v6227
    %v6290 = vunpack.c.l.b16 %v6228
    %v6291 = vunpack.c.h.b16 %v6228
    %v6292 = vunpack.c.l.b16 %v6229
    %v6293 = vunpack.c.h.b16 %v6229
    %v6294 = vunpack.c.l.b16 %v6230
    %v6295 = vunpack.c.h.b16 %v6230
    %v6296 = vunpack.c.l.b16 %v6231
    %v6297 = vunpack.c.h.b16 %v6231
    %v6298 = vunpack.c.l.b16 %v6232
    %v6299 = vunpack.c.h.b16 %v6232
    %v6300 = vunpack.c.l.b16 %v6233
    %v6301 = vunpack.c.h.b16 %v6233
    %v6302 = vunpack.c.l.b16 %v6234
    %v6303 = vunpack.c.h.b16 %v6234
    %v6304 = vunpack.c.l.b16 %v6235
    %v6305 = vunpack.c.h.b16 %v6235
    %v6306 = vunpack.c.l.b16 %v6236
    %v6307 = vunpack.c.h.b16 %v6236
    %v6308 = vunpack.c.l.b16 %v6237
    %v6309 = vunpack.c.h.b16 %v6237
    %v6310 = vunpack.c.l.b16 %v6238
    %v6311 = vunpack.c.h.b16 %v6238
    %v6312 = vunpack.c.l.b16 %v6239
    %v6313 = vunpack.c.h.b16 %v6239
    %v6314 = vunpack.c.l.b16 %v6240
    %v6315 = vunpack.c.h.b16 %v6240
    %v6316 = vunpack.c.l.b16 %v6241
    %v6317 = vunpack.c.h.b16 %v6241
    %v6318 = vunpack.c.l.b16 %v6242
    %v6319 = vunpack.c.h.b16 %v6242
    %v6320 = vunpack.c.l.b16 %v6243
    %v6321 = vunpack.c.h.b16 %v6243
    %v6322 = vunpack.c.l.b16 %v6244
    %v6323 = vunpack.c.h.b16 %v6244
    %v6324 = vunpack.c.l.b16 %v6245
    %v6325 = vunpack.c.h.b16 %v6245
    %v6326 = vpack.c.b16 %v6280, %v6278
    %v6327 = vpack.c.b16 %v6281, %v6279
    %v6328 = vpack.c.b16 %v6284, %v6282
    %v6329 = vpack.c.b16 %v6285, %v6283
    %v6330 = vpack.c.b16 %v6288, %v6286
    %v6331 = vpack.c.b16 %v6289, %v6287
    %v6332 = vpack.c.b16 %v6292, %v6290
    %v6333 = vpack.c.b16 %v6293, %v6291
    %v6334 = vpack.c.b16 %v6296, %v6294
    %v6335 = vpack.c.b16 %v6297, %v6295
    %v6336 = vpack.c.b16 %v6300, %v6298
    %v6337 = vpack.c.b16 %v6301, %v6299
    %v6338 = vpack.c.b16 %v6304, %v6302
    %v6339 = vpack.c.b16 %v6305, %v6303
    %v6340 = vpack.c.b16 %v6308, %v6306
    %v6341 = vpack.c.b16 %v6309, %v6307
    %v6342 = vpack.c.b16 %v6312, %v6310
    %v6343 = vpack.c.b16 %v6313, %v6311
    %v6344 = vpack.c.b16 %v6316, %v6314
    %v6345 = vpack.c.b16 %v6317, %v6315
    %v6346 = vpack.c.b16 %v6320, %v6318
    %v6347 = vpack.c.b16 %v6321, %v6319
    %v6348 = vpack.c.b16 %v6324, %v6322
    %v6349 = vpack.c.b16 %v6325, %v6323
    %v6375 = vsel %vm4459, %v6252, 0
    %6377 = vmatprep.subr.bf16.mxu0 %v6341
    %6378 = vmatpush1.bf16.msra.mxu0 %v6340
    %6379 = vmatprep.subr.bf16.mxu0 %v6339
    %6380 = vmatpush1.bf16.msra.mxu0 %v6338
    %6381 = vmatprep.subr.bf16.mxu0 %v6337
    %6382 = vmatpush1.bf16.msra.mxu0 %v6336
    %6383 = vmatprep.subr.bf16.mxu0 %v6335
    %6384 = vmatpush1.bf16.msra.mxu0 %v6334
    %6385 = vmatprep.subr.bf16.mxu0 %v6333
    %6386 = vmatpush1.bf16.msra.mxu0 %v6332
    %6387 = vmatprep.subr.bf16.mxu0 %v6331
    %6388 = vmatpush1.bf16.msra.mxu0 %v6330
    %6389 = vmatprep.subr.bf16.mxu0 %v6329
    %6390 = vmatpush1.bf16.msra.mxu0 %v6328
    %6391 = vmatprep.subr.bf16.mxu0 %v6327
    %6392 = vmatpush1.bf16.msra.mxu0 %v6326
    %6393 = vmatprep.subr.bf16.mxu0 0
    %6394 = vmatpush2.bf16.msra.mxu0 0
    %6395 = vmatprep.subr.bf16.mxu0 0
    %6396 = vmatpush2.bf16.msra.mxu0 0
    %6397 = vmatprep.subr.bf16.mxu0 0
    %6398 = vmatpush2.bf16.msra.mxu0 0
    %6399 = vmatprep.subr.bf16.mxu0 0
    %6400 = vmatpush2.bf16.msra.mxu0 0
    %6401 = vmatprep.subr.bf16.mxu0 %v6349
    %6402 = vmatpush2.bf16.msra.mxu0 %v6348
    %6403 = vmatprep.subr.bf16.mxu0 %v6347
    %6404 = vmatpush2.bf16.msra.mxu0 %v6346
    %6405 = vmatprep.subr.bf16.mxu0 %v6345
    %6406 = vmatpush2.bf16.msra.mxu0 %v6344
    %6407 = vmatprep.subr.bf16.mxu0 %v6343
    %6408 = vmatpush2.bf16.msra.mxu0 %v6342
    %6409 = vmatprep.mubr.bf16.mxu0 %v6375
    %6410 = vmatmul.mubr.bf16.gmra.mxu0 %v6251
    %v6411 = vpop.f32.mrf.mxu0
    %v6412 = vadd.f32 0.0, %v6411
    %v6413 = vpop.f32.mrf.mxu0
    %v6414 = vadd.f32 0.0, %v6413
    %v6415 = vpop.f32.mrf.mxu0
    %v6416 = vadd.f32 0.0, %v6415
    %v6417 = vpop.f32.mrf.mxu0
    %v6418 = vadd.f32 0.0, %v6417
    %6419 = vdwg.mxu0
    %v6420 = vadd.f32 %v6212, %v6412
    %v6421 = vadd.f32 %v6214, %v6414
    %v6422 = vadd.f32 %v6216, %v6416
    %v6423 = vadd.f32 %v6218, %v6418
    %v6424 = vld [vmem:[#allocation30] sm:$0x3]
    %v6426 = vlaneseq
    %v6427 = vshrl.u32 %v6426, 7
    %v6428 = vsub.s32 0, %v6427
    %v6429 = vrot.slane %v6424, %v6428
    %v6430 = vlaneseq
    %v6431 = vshrl.u32 %v6430, 7
    %v6432 = vsub.s32 1, %v6431
    %v6433 = vrot.slane %v6424, %v6432
    %v6436 = vadd.f32 %v6420, %v6429
    %v6437 = vadd.f32 %v6421, %v6433
    %v6438 = vadd.f32 %v6422, %v6429
    %v6439 = vadd.f32 %v6423, %v6433
    %v6440 = vmax.f32 %v6436, 0.0
    %v6441 = vmax.f32 %v6437, 0.0
    %v6442 = vmax.f32 %v6438, 0.0
    %v6443 = vmax.f32 %v6439, 0.0
    %6444 = vst [vmem:[#allocation7] sm:$0xff] 0
    %6445 = vst [vmem:[#allocation7 + $0x8] sm:$0xf] 0
    %6446 = vst [vmem:[#allocation7 + $0xc] sm:$0x33] 0
    %6447 = vst [vmem:[#allocation7 + $0x14] sm:$0x3] 0
    %v6448 = vpack.c.bf16 %v6440, %v6440
    %v6449 = vpack.c.bf16 %v6441, %v6441
    %v6452 = vunpack.c.l.b16 %v6448
    %v6453 = vunpack.c.l.b16 %v6449
    %v6454 = vpack.c.b16 %v6453, %v6452
    %v6456 = vshrl.u32 %v6454, 16
    %v6458 = vrot.slane %v6456, 7
    %v6459 = vshll.u32 %v6454, 16
    %v6461 = vor.u32 %v6458, %v6459
    %6462 = vrot.lane.b32.xlu0 %v6461, 64
    %v6463 = vpop.permute.xlu0 %6462
    %v6464 = vrot.slane %v6463, 4
    %vm6465 = vcmask 523264
    %v6466 = vsel %vm6465, %v6464, %v6463
    %vm6469 = vcmask 1042944
    %vm6470 = vmand %vm6469, %vm5768
    %vm6471 = vcmask 1046532
    %vm6472 = vmand %vm6471, %vm5771
    %vm6473 = vmor %vm6472, %vm6470
    %v6474 = vld [vmem:[#allocation7] sm:$0x77]
    %v6475 = vsel %vm6473, %v6466, %v6474
    %6476 = vst [vmem:[#allocation7] sm:$0x77] %v6475
    %vm6477 = vcmask 518144
    %vm6478 = vmand %vm6477, %vm5768
    %v6479 = vld [vmem:[#allocation7 + $0x8] sm:$0x7]
    %v6480 = vsel %vm6478, %v6464, %v6479
    %6481 = vst [vmem:[#allocation7 + $0x8] sm:$0x7] %v6480
    %v6482 = vpack.c.bf16 %v6442, %v6440
    %v6483 = vpack.c.bf16 %v6443, %v6441
    %v6486 = vunpack.c.l.b16 %v6482
    %v6487 = vunpack.c.l.b16 %v6483
    %v6488 = vunpack.c.h.b16 %v6482
    %v6489 = vunpack.c.h.b16 %v6483
    %v6490 = vpack.c.b16 %v6487, %v6486
    %v6491 = vpack.c.b16 %v6489, %v6488
    %v6493 = vshll.u32 %v6490, 16
    %v6495 = vshrl.u32 %v6490, 16
    %v6497 = vrot.slane %v6495, 7
    %v6498 = vrot.slane %v6497, 4
    %v6500 = vshrl.u32 %v6491, 16
    %v6502 = vrot.slane %v6500, 7
    %v6503 = vshll.u32 %v6491, 16
    %v6505 = vor.u32 %v6502, %v6503
    %v6506 = vsel %vm530, %v6498, %v6505
    %6507 = vrot.lane.b32.xlu0 %v6493, 64
    %v6508 = vpop.permute.xlu0 %6507
    %6509 = vrot.lane.b32.xlu0 %v6506, 64
    %v6510 = vpop.permute.xlu0 %6509
    %v6511 = vrot.slane %v6508, 4
    %v6512 = vrot.slane %v6510, 4
    %v6513 = vsel %vm6465, %v6511, %v6508
    %v6514 = vsel %vm6465, %v6512, %v6510
    %vm6519 = vcmask 1043971
    %vm6520 = vmand %vm6519, %vm5792
    %vm6521 = vcmask 1047559
    %vm6522 = vmand %vm6521, %vm5795
    %vm6523 = vmor %vm6522, %vm6520
    %v6524 = vld [vmem:[#allocation7] sm:$0x88]
    %v6525 = vsel %vm6523, %v6513, %v6524
    %6526 = vst [vmem:[#allocation7] sm:$0x88] %v6525
    %vm6527 = vcmask 519171
    %vm6528 = vmand %vm6527, %vm5792
    %v6529 = vld [vmem:[#allocation7 + $0x8] sm:$0x8]
    %v6530 = vsel %vm6528, %v6511, %v6529
    %6531 = vst [vmem:[#allocation7 + $0x8] sm:$0x8] %v6530
    %vm6532 = vcmask 1041920
    %vm6533 = vmand %vm6532, %vm613
    %vm6534 = vmor %vm4090, %vm6533
    %v6535 = vld [vmem:[#allocation7 + $0xc] sm:$0x33]
    %v6536 = vsel %vm6534, %v6514, %v6535
    %6537 = vst [vmem:[#allocation7 + $0xc] sm:$0x33] %v6536
    %vm6538 = vcmask 517120
    %vm6539 = vmand %vm6538, %vm613
    %v6540 = vld [vmem:[#allocation7 + $0x14] sm:$0x3]
    %v6541 = vsel %vm6539, %v6512, %v6540
    %6542 = vst [vmem:[#allocation7 + $0x14] sm:$0x3] %v6541
    %v6543 = vld [vmem:[#allocation7] sm:$0xff]
    %v6544 = vld [vmem:[#allocation7 + $0x8] sm:$0xf]
    %v6545 = vld [vmem:[#allocation7 + $0xc] sm:$0x11]
    %v6546 = vld [vmem:[#allocation7 + $0x14] sm:$0x1]
    %v6547 = vld [vmem:[#allocation31] sm:$0xff]
    %v6548 = vld [vmem:[#allocation31 + $0x8] sm:$0xff]
    %v6549 = vld [vmem:[#allocation31 + $0x10] sm:$0xff]
    %v6550 = vld [vmem:[#allocation31 + $0x18] sm:$0xff]
    %v6551 = vld [vmem:[#allocation31 + $0x20] sm:$0xff]
    %v6552 = vld [vmem:[#allocation31 + $0x28] sm:$0xff]
    %v6553 = vld [vmem:[#allocation31 + $0x30] sm:$0xff]
    %v6554 = vld [vmem:[#allocation31 + $0x38] sm:$0xff]
    %v6555 = vld [vmem:[#allocation31 + $0x40] sm:$0xff]
    %v6556 = vld [vmem:[#allocation31 + $0x48] sm:$0xff]
    %v6557 = vld [vmem:[#allocation31 + $0x50] sm:$0xff]
    %v6558 = vld [vmem:[#allocation31 + $0x58] sm:$0xff]
    %v6559 = vld [vmem:[#allocation31 + $0x60] sm:$0xff]
    %v6560 = vld [vmem:[#allocation31 + $0x68] sm:$0xff]
    %v6561 = vld [vmem:[#allocation31 + $0x70] sm:$0xff]
    %v6562 = vld [vmem:[#allocation31 + $0x78] sm:$0xff]
    %v6563 = vld [vmem:[#allocation31 + $0x80] sm:$0xff]
    %v6564 = vld [vmem:[#allocation31 + $0x88] sm:$0xff]
    %v6565 = vld [vmem:[#allocation31 + $0x90] sm:$0xff]
    %v6566 = vld [vmem:[#allocation31 + $0x98] sm:$0xff]
    %v6567 = vld [vmem:[#allocation31 + $0xa0] sm:$0xff]
    %v6568 = vld [vmem:[#allocation31 + $0xa8] sm:$0xff]
    %v6569 = vld [vmem:[#allocation31 + $0xb0] sm:$0xff]
    %v6570 = vld [vmem:[#allocation31 + $0xb8] sm:$0xff]
    %v6571 = vld [vmem:[#allocation31 + $0xc0] sm:$0xff]
    %v6572 = vld [vmem:[#allocation31 + $0xc8] sm:$0xff]
    %v6573 = vld [vmem:[#allocation31 + $0xd0] sm:$0xff]
    %v6574 = vld [vmem:[#allocation31 + $0xd8] sm:$0xff]
    %v6575 = vld [vmem:[#allocation31 + $0xe0] sm:$0xff]
    %v6576 = vld [vmem:[#allocation31 + $0xe8] sm:$0xff]
    %v6577 = vld [vmem:[#allocation31 + $0xf0] sm:$0xff]
    %v6578 = vld [vmem:[#allocation31 + $0xf8] sm:$0xff]
    %v6579 = vld [vmem:[#allocation31 + $0x100] sm:$0xff]
    %v6580 = vld [vmem:[#allocation31 + $0x108] sm:$0xff]
    %v6581 = vld [vmem:[#allocation31 + $0x110] sm:$0xff]
    %v6582 = vld [vmem:[#allocation31 + $0x118] sm:$0xff]
    %v6583 = vld [vmem:[#allocation31 + $0x120] sm:$0xff]
    %v6584 = vld [vmem:[#allocation31 + $0x128] sm:$0xff]
    %v6585 = vld [vmem:[#allocation31 + $0x130] sm:$0xff]
    %v6586 = vld [vmem:[#allocation31 + $0x138] sm:$0xff]
    %v6587 = vld [vmem:[#allocation31 + $0x140] sm:$0xff]
    %v6588 = vld [vmem:[#allocation31 + $0x148] sm:$0xff]
    %v6589 = vld [vmem:[#allocation31 + $0x150] sm:$0xff]
    %v6590 = vld [vmem:[#allocation31 + $0x158] sm:$0xff]
    %v6591 = vld [vmem:[#allocation31 + $0x160] sm:$0xff]
    %v6592 = vld [vmem:[#allocation31 + $0x168] sm:$0xff]
    %v6593 = vld [vmem:[#allocation31 + $0x170] sm:$0xff]
    %v6594 = vld [vmem:[#allocation31 + $0x178] sm:$0xff]
    %v6595 = vld [vmem:[#allocation7 + $0xc] sm:$0x33]
    %v6596 = vld [vmem:[#allocation7 + $0x14] sm:$0x3]
    %s6597 = scalar_lea.vmem [#allocation31], 384
    %v6598 = vld [vmem:[%s6597] sm:$0xff]
    %v6599 = vld [vmem:[%s6597 + $0x8] sm:$0xff]
    %v6600 = vld [vmem:[%s6597 + $0x10] sm:$0xff]
    %v6601 = vld [vmem:[%s6597 + $0x18] sm:$0xff]
    %v6602 = vld [vmem:[%s6597 + $0x20] sm:$0xff]
    %v6603 = vld [vmem:[%s6597 + $0x28] sm:$0xff]
    %v6604 = vld [vmem:[%s6597 + $0x30] sm:$0xff]
    %v6605 = vld [vmem:[%s6597 + $0x38] sm:$0xff]
    %v6606 = vld [vmem:[%s6597 + $0x40] sm:$0xff]
    %v6607 = vld [vmem:[%s6597 + $0x48] sm:$0xff]
    %v6608 = vld [vmem:[%s6597 + $0x50] sm:$0xff]
    %v6609 = vld [vmem:[%s6597 + $0x58] sm:$0xff]
    %v6610 = vld [vmem:[%s6597 + $0x60] sm:$0xff]
    %v6611 = vld [vmem:[%s6597 + $0x68] sm:$0xff]
    %v6612 = vld [vmem:[%s6597 + $0x70] sm:$0xff]
    %v6613 = vld [vmem:[%s6597 + $0x78] sm:$0xff]
    %v6614 = vld [vmem:[%s6597 + $0x80] sm:$0xff]
    %v6615 = vld [vmem:[%s6597 + $0x88] sm:$0xff]
    %v6616 = vld [vmem:[%s6597 + $0x90] sm:$0xff]
    %v6617 = vld [vmem:[%s6597 + $0x98] sm:$0xff]
    %v6618 = vld [vmem:[%s6597 + $0xa0] sm:$0xff]
    %v6619 = vld [vmem:[%s6597 + $0xa8] sm:$0xff]
    %v6620 = vld [vmem:[%s6597 + $0xb0] sm:$0xff]
    %v6621 = vld [vmem:[%s6597 + $0xb8] sm:$0xff]
    %v6622 = vld [vmem:[%s6597 + $0xc0] sm:$0xff]
    %v6623 = vld [vmem:[%s6597 + $0xc8] sm:$0xff]
    %v6624 = vld [vmem:[%s6597 + $0xd0] sm:$0xff]
    %v6625 = vld [vmem:[%s6597 + $0xd8] sm:$0xff]
    %v6626 = vld [vmem:[%s6597 + $0xe0] sm:$0xff]
    %v6627 = vld [vmem:[%s6597 + $0xe8] sm:$0xff]
    %v6628 = vld [vmem:[%s6597 + $0xf0] sm:$0xff]
    %v6629 = vld [vmem:[%s6597 + $0xf8] sm:$0xff]
    %v6630 = vld [vmem:[%s6597 + $0x100] sm:$0xff]
    %v6631 = vld [vmem:[%s6597 + $0x108] sm:$0xff]
    %v6632 = vld [vmem:[%s6597 + $0x110] sm:$0xff]
    %v6633 = vld [vmem:[%s6597 + $0x118] sm:$0xff]
    %v6634 = vld [vmem:[%s6597 + $0x120] sm:$0xff]
    %v6635 = vld [vmem:[%s6597 + $0x128] sm:$0xff]
    %v6636 = vld [vmem:[%s6597 + $0x130] sm:$0xff]
    %v6637 = vld [vmem:[%s6597 + $0x138] sm:$0xff]
    %v6638 = vld [vmem:[%s6597 + $0x140] sm:$0xff]
    %v6639 = vld [vmem:[%s6597 + $0x148] sm:$0xff]
    %v6640 = vld [vmem:[%s6597 + $0x150] sm:$0xff]
    %v6641 = vld [vmem:[%s6597 + $0x158] sm:$0xff]
    %v6642 = vld [vmem:[%s6597 + $0x160] sm:$0xff]
    %v6643 = vld [vmem:[%s6597 + $0x168] sm:$0xff]
    %v6644 = vld [vmem:[%s6597 + $0x170] sm:$0xff]
    %v6645 = vld [vmem:[%s6597 + $0x178] sm:$0xff]
    %v6650 = vunpack.c.l.b16 %v6543
    %v6651 = vunpack.c.h.b16 %v6543
    %v6652 = vunpack.c.l.b16 %v6544
    %v6653 = vunpack.c.l.b16 %v6595
    %v6654 = vunpack.c.h.b16 %v6595
    %v6655 = vunpack.c.l.b16 %v6596
    %v6656 = vpack.c.b16 %v6653, %v6650
    %v6657 = vpack.c.b16 %v6654, %v6651
    %v6658 = vpack.c.b16 %v6655, %v6652
    %v6660 = vshrl.u32 %v6656, 16
    %v6662 = vshll.u32 %v6656, 16
    %v6664 = vrot.slane %v6662, 1
    %v6665 = vor.u32 %v6660, %v6664
    %v6667 = vshrl.u32 %v6657, 16
    %v6669 = vshll.u32 %v6657, 16
    %v6671 = vrot.slane %v6669, 1
    %v6672 = vor.u32 %v6667, %v6671
    %v6674 = vshrl.u32 %v6658, 16
    %v6676 = vshll.u32 %v6658, 16
    %v6678 = vrot.slane %v6676, 1
    %v6679 = vor.u32 %v6674, %v6678
    %v6731 = vunpack.c.l.b16 %v6598
    %v6732 = vunpack.c.h.b16 %v6598
    %v6733 = vunpack.c.l.b16 %v6599
    %v6734 = vunpack.c.h.b16 %v6599
    %v6735 = vunpack.c.l.b16 %v6600
    %v6736 = vunpack.c.h.b16 %v6600
    %v6737 = vunpack.c.l.b16 %v6601
    %v6738 = vunpack.c.h.b16 %v6601
    %v6739 = vunpack.c.l.b16 %v6602
    %v6740 = vunpack.c.h.b16 %v6602
    %v6741 = vunpack.c.l.b16 %v6603
    %v6742 = vunpack.c.h.b16 %v6603
    %v6743 = vunpack.c.l.b16 %v6604
    %v6744 = vunpack.c.h.b16 %v6604
    %v6745 = vunpack.c.l.b16 %v6605
    %v6746 = vunpack.c.h.b16 %v6605
    %v6747 = vunpack.c.l.b16 %v6606
    %v6748 = vunpack.c.h.b16 %v6606
    %v6749 = vunpack.c.l.b16 %v6607
    %v6750 = vunpack.c.h.b16 %v6607
    %v6751 = vunpack.c.l.b16 %v6608
    %v6752 = vunpack.c.h.b16 %v6608
    %v6753 = vunpack.c.l.b16 %v6609
    %v6754 = vunpack.c.h.b16 %v6609
    %v6755 = vunpack.c.l.b16 %v6610
    %v6756 = vunpack.c.h.b16 %v6610
    %v6757 = vunpack.c.l.b16 %v6611
    %v6758 = vunpack.c.h.b16 %v6611
    %v6759 = vunpack.c.l.b16 %v6612
    %v6760 = vunpack.c.h.b16 %v6612
    %v6761 = vunpack.c.l.b16 %v6613
    %v6762 = vunpack.c.h.b16 %v6613
    %v6763 = vunpack.c.l.b16 %v6614
    %v6764 = vunpack.c.h.b16 %v6614
    %v6765 = vunpack.c.l.b16 %v6615
    %v6766 = vunpack.c.h.b16 %v6615
    %v6767 = vunpack.c.l.b16 %v6616
    %v6768 = vunpack.c.h.b16 %v6616
    %v6769 = vunpack.c.l.b16 %v6617
    %v6770 = vunpack.c.h.b16 %v6617
    %v6771 = vunpack.c.l.b16 %v6618
    %v6772 = vunpack.c.h.b16 %v6618
    %v6773 = vunpack.c.l.b16 %v6619
    %v6774 = vunpack.c.h.b16 %v6619
    %v6775 = vunpack.c.l.b16 %v6620
    %v6776 = vunpack.c.h.b16 %v6620
    %v6777 = vunpack.c.l.b16 %v6621
    %v6778 = vunpack.c.h.b16 %v6621
    %v6779 = vunpack.c.l.b16 %v6622
    %v6780 = vunpack.c.h.b16 %v6622
    %v6781 = vunpack.c.l.b16 %v6623
    %v6782 = vunpack.c.h.b16 %v6623
    %v6783 = vunpack.c.l.b16 %v6624
    %v6784 = vunpack.c.h.b16 %v6624
    %v6785 = vunpack.c.l.b16 %v6625
    %v6786 = vunpack.c.h.b16 %v6625
    %v6787 = vunpack.c.l.b16 %v6626
    %v6788 = vunpack.c.h.b16 %v6626
    %v6789 = vunpack.c.l.b16 %v6627
    %v6790 = vunpack.c.h.b16 %v6627
    %v6791 = vunpack.c.l.b16 %v6628
    %v6792 = vunpack.c.h.b16 %v6628
    %v6793 = vunpack.c.l.b16 %v6629
    %v6794 = vunpack.c.h.b16 %v6629
    %v6795 = vunpack.c.l.b16 %v6630
    %v6796 = vunpack.c.h.b16 %v6630
    %v6797 = vunpack.c.l.b16 %v6631
    %v6798 = vunpack.c.h.b16 %v6631
    %v6799 = vunpack.c.l.b16 %v6632
    %v6800 = vunpack.c.h.b16 %v6632
    %v6801 = vunpack.c.l.b16 %v6633
    %v6802 = vunpack.c.h.b16 %v6633
    %v6803 = vunpack.c.l.b16 %v6634
    %v6804 = vunpack.c.h.b16 %v6634
    %v6805 = vunpack.c.l.b16 %v6635
    %v6806 = vunpack.c.h.b16 %v6635
    %v6807 = vunpack.c.l.b16 %v6636
    %v6808 = vunpack.c.h.b16 %v6636
    %v6809 = vunpack.c.l.b16 %v6637
    %v6810 = vunpack.c.h.b16 %v6637
    %v6811 = vunpack.c.l.b16 %v6638
    %v6812 = vunpack.c.h.b16 %v6638
    %v6813 = vunpack.c.l.b16 %v6639
    %v6814 = vunpack.c.h.b16 %v6639
    %v6815 = vunpack.c.l.b16 %v6640
    %v6816 = vunpack.c.h.b16 %v6640
    %v6817 = vunpack.c.l.b16 %v6641
    %v6818 = vunpack.c.h.b16 %v6641
    %v6819 = vunpack.c.l.b16 %v6642
    %v6820 = vunpack.c.h.b16 %v6642
    %v6821 = vunpack.c.l.b16 %v6643
    %v6822 = vunpack.c.h.b16 %v6643
    %v6823 = vunpack.c.l.b16 %v6644
    %v6824 = vunpack.c.h.b16 %v6644
    %v6825 = vunpack.c.l.b16 %v6645
    %v6826 = vunpack.c.h.b16 %v6645
    %v6827 = vpack.c.b16 %v6733, %v6731
    %v6828 = vpack.c.b16 %v6734, %v6732
    %v6829 = vpack.c.b16 %v6737, %v6735
    %v6830 = vpack.c.b16 %v6738, %v6736
    %v6831 = vpack.c.b16 %v6741, %v6739
    %v6832 = vpack.c.b16 %v6742, %v6740
    %v6833 = vpack.c.b16 %v6745, %v6743
    %v6834 = vpack.c.b16 %v6746, %v6744
    %v6835 = vpack.c.b16 %v6749, %v6747
    %v6836 = vpack.c.b16 %v6750, %v6748
    %v6837 = vpack.c.b16 %v6753, %v6751
    %v6838 = vpack.c.b16 %v6754, %v6752
    %v6839 = vpack.c.b16 %v6757, %v6755
    %v6840 = vpack.c.b16 %v6758, %v6756
    %v6841 = vpack.c.b16 %v6761, %v6759
    %v6842 = vpack.c.b16 %v6762, %v6760
    %v6843 = vpack.c.b16 %v6765, %v6763
    %v6844 = vpack.c.b16 %v6766, %v6764
    %v6845 = vpack.c.b16 %v6769, %v6767
    %v6846 = vpack.c.b16 %v6770, %v6768
    %v6847 = vpack.c.b16 %v6773, %v6771
    %v6848 = vpack.c.b16 %v6774, %v6772
    %v6849 = vpack.c.b16 %v6777, %v6775
    %v6850 = vpack.c.b16 %v6778, %v6776
    %v6851 = vpack.c.b16 %v6781, %v6779
    %v6852 = vpack.c.b16 %v6782, %v6780
    %v6853 = vpack.c.b16 %v6785, %v6783
    %v6854 = vpack.c.b16 %v6786, %v6784
    %v6855 = vpack.c.b16 %v6789, %v6787
    %v6856 = vpack.c.b16 %v6790, %v6788
    %v6857 = vpack.c.b16 %v6793, %v6791
    %v6858 = vpack.c.b16 %v6794, %v6792
    %v6859 = vpack.c.b16 %v6797, %v6795
    %v6860 = vpack.c.b16 %v6798, %v6796
    %v6861 = vpack.c.b16 %v6801, %v6799
    %v6862 = vpack.c.b16 %v6802, %v6800
    %v6863 = vpack.c.b16 %v6805, %v6803
    %v6864 = vpack.c.b16 %v6806, %v6804
    %v6865 = vpack.c.b16 %v6809, %v6807
    %v6866 = vpack.c.b16 %v6810, %v6808
    %v6867 = vpack.c.b16 %v6813, %v6811
    %v6868 = vpack.c.b16 %v6814, %v6812
    %v6869 = vpack.c.b16 %v6817, %v6815
    %v6870 = vpack.c.b16 %v6818, %v6816
    %v6871 = vpack.c.b16 %v6821, %v6819
    %v6872 = vpack.c.b16 %v6822, %v6820
    %v6873 = vpack.c.b16 %v6825, %v6823
    %v6874 = vpack.c.b16 %v6826, %v6824
    %6923 = vmatprep.subr.bf16.mxu0 %v6842
    %6924 = vmatpush1.bf16.msra.mxu0 %v6841
    %6925 = vmatprep.subr.bf16.mxu0 %v6840
    %6926 = vmatpush1.bf16.msra.mxu0 %v6839
    %6927 = vmatprep.subr.bf16.mxu0 %v6838
    %6928 = vmatpush1.bf16.msra.mxu0 %v6837
    %6929 = vmatprep.subr.bf16.mxu0 %v6836
    %6930 = vmatpush1.bf16.msra.mxu0 %v6835
    %6931 = vmatprep.subr.bf16.mxu0 %v6834
    %6932 = vmatpush1.bf16.msra.mxu0 %v6833
    %6933 = vmatprep.subr.bf16.mxu0 %v6832
    %6934 = vmatpush1.bf16.msra.mxu0 %v6831
    %6935 = vmatprep.subr.bf16.mxu0 %v6830
    %6936 = vmatpush1.bf16.msra.mxu0 %v6829
    %6937 = vmatprep.subr.bf16.mxu0 %v6828
    %6938 = vmatpush1.bf16.msra.mxu0 %v6827
    %6939 = vmatprep.subr.bf16.mxu0 %v6858
    %6940 = vmatpush2.bf16.msra.mxu0 %v6857
    %6941 = vmatprep.subr.bf16.mxu0 %v6856
    %6942 = vmatpush2.bf16.msra.mxu0 %v6855
    %6943 = vmatprep.subr.bf16.mxu0 %v6854
    %6944 = vmatpush2.bf16.msra.mxu0 %v6853
    %6945 = vmatprep.subr.bf16.mxu0 %v6852
    %6946 = vmatpush2.bf16.msra.mxu0 %v6851
    %6947 = vmatprep.subr.bf16.mxu0 %v6850
    %6948 = vmatpush2.bf16.msra.mxu0 %v6849
    %6949 = vmatprep.subr.bf16.mxu0 %v6848
    %6950 = vmatpush2.bf16.msra.mxu0 %v6847
    %6951 = vmatprep.subr.bf16.mxu0 %v6846
    %6952 = vmatpush2.bf16.msra.mxu0 %v6845
    %6953 = vmatprep.subr.bf16.mxu0 %v6844
    %6954 = vmatpush2.bf16.msra.mxu0 %v6843
    %6955 = vmatprep.mubr.bf16.mxu0 %v6672
    %6956 = vmatmul.mubr.bf16.gmra.mxu0 %v6665
    %v6957 = vpop.f32.mrf.mxu0
    %v6958 = vadd.f32 0.0, %v6957
    %v6959 = vpop.f32.mrf.mxu0
    %v6960 = vadd.f32 0.0, %v6959
    %v6961 = vpop.f32.mrf.mxu0
    %v6962 = vadd.f32 0.0, %v6961
    %v6963 = vpop.f32.mrf.mxu0
    %v6964 = vadd.f32 0.0, %v6963
    %6965 = vdwg.mxu0
    %6966 = vmatprep.subr.bf16.mxu0 %v6874
    %6967 = vmatpush1.bf16.msra.mxu0 %v6873
    %6968 = vmatprep.subr.bf16.mxu0 %v6872
    %6969 = vmatpush1.bf16.msra.mxu0 %v6871
    %6970 = vmatprep.subr.bf16.mxu0 %v6870
    %6971 = vmatpush1.bf16.msra.mxu0 %v6869
    %6972 = vmatprep.subr.bf16.mxu0 %v6868
    %6973 = vmatpush1.bf16.msra.mxu0 %v6867
    %6974 = vmatprep.subr.bf16.mxu0 %v6866
    %6975 = vmatpush1.bf16.msra.mxu0 %v6865
    %6976 = vmatprep.subr.bf16.mxu0 %v6864
    %6977 = vmatpush1.bf16.msra.mxu0 %v6863
    %6978 = vmatprep.subr.bf16.mxu0 %v6862
    %6979 = vmatpush1.bf16.msra.mxu0 %v6861
    %6980 = vmatprep.subr.bf16.mxu0 %v6860
    %6981 = vmatpush1.bf16.msra.mxu0 %v6859
    %6982 = vmatprep.subr.bf16.mxu0 0
    %6983 = vmatpush2.bf16.msra.mxu0 0
    %6984 = vmatprep.subr.bf16.mxu0 0
    %6985 = vmatpush2.bf16.msra.mxu0 0
    %6986 = vmatprep.subr.bf16.mxu0 0
    %6987 = vmatpush2.bf16.msra.mxu0 0
    %6988 = vmatprep.subr.bf16.mxu0 0
    %6989 = vmatpush2.bf16.msra.mxu0 0
    %6990 = vmatprep.subr.bf16.mxu0 0
    %6991 = vmatpush2.bf16.msra.mxu0 0
    %6992 = vmatprep.subr.bf16.mxu0 0
    %6993 = vmatpush2.bf16.msra.mxu0 0
    %6994 = vmatprep.subr.bf16.mxu0 0
    %6995 = vmatpush2.bf16.msra.mxu0 0
    %6996 = vmatprep.subr.bf16.mxu0 0
    %6997 = vmatpush2.bf16.msra.mxu0 0
    %6998 = vmatprep.mubr.bf16.mxu0 0
    %6999 = vmatmul.mubr.bf16.gmra.mxu0 %v6679
    %v7000 = vpop.f32.mrf.mxu0
    %v7001 = vadd.f32 %v6958, %v7000
    %v7002 = vpop.f32.mrf.mxu0
    %v7003 = vadd.f32 %v6960, %v7002
    %v7004 = vpop.f32.mrf.mxu0
    %v7005 = vadd.f32 %v6962, %v7004
    %v7006 = vpop.f32.mrf.mxu0
    %v7007 = vadd.f32 %v6964, %v7006
    %7008 = vdwg.mxu0
    %v7011 = vunpack.c.l.b16 %v6545
    %v7012 = vunpack.c.h.b16 %v6545
    %v7013 = vunpack.c.l.b16 %v6546
    %v7014 = vpack.c.b16 %v7011, %v6650
    %v7015 = vpack.c.b16 %v7012, %v6651
    %v7016 = vpack.c.b16 %v7013, %v6652
    %v7068 = vunpack.c.l.b16 %v6547
    %v7069 = vunpack.c.h.b16 %v6547
    %v7070 = vunpack.c.l.b16 %v6548
    %v7071 = vunpack.c.h.b16 %v6548
    %v7072 = vunpack.c.l.b16 %v6549
    %v7073 = vunpack.c.h.b16 %v6549
    %v7074 = vunpack.c.l.b16 %v6550
    %v7075 = vunpack.c.h.b16 %v6550
    %v7076 = vunpack.c.l.b16 %v6551
    %v7077 = vunpack.c.h.b16 %v6551
    %v7078 = vunpack.c.l.b16 %v6552
    %v7079 = vunpack.c.h.b16 %v6552
    %v7080 = vunpack.c.l.b16 %v6553
    %v7081 = vunpack.c.h.b16 %v6553
    %v7082 = vunpack.c.l.b16 %v6554
    %v7083 = vunpack.c.h.b16 %v6554
    %v7084 = vunpack.c.l.b16 %v6555
    %v7085 = vunpack.c.h.b16 %v6555
    %v7086 = vunpack.c.l.b16 %v6556
    %v7087 = vunpack.c.h.b16 %v6556
    %v7088 = vunpack.c.l.b16 %v6557
    %v7089 = vunpack.c.h.b16 %v6557
    %v7090 = vunpack.c.l.b16 %v6558
    %v7091 = vunpack.c.h.b16 %v6558
    %v7092 = vunpack.c.l.b16 %v6559
    %v7093 = vunpack.c.h.b16 %v6559
    %v7094 = vunpack.c.l.b16 %v6560
    %v7095 = vunpack.c.h.b16 %v6560
    %v7096 = vunpack.c.l.b16 %v6561
    %v7097 = vunpack.c.h.b16 %v6561
    %v7098 = vunpack.c.l.b16 %v6562
    %v7099 = vunpack.c.h.b16 %v6562
    %v7100 = vunpack.c.l.b16 %v6563
    %v7101 = vunpack.c.h.b16 %v6563
    %v7102 = vunpack.c.l.b16 %v6564
    %v7103 = vunpack.c.h.b16 %v6564
    %v7104 = vunpack.c.l.b16 %v6565
    %v7105 = vunpack.c.h.b16 %v6565
    %v7106 = vunpack.c.l.b16 %v6566
    %v7107 = vunpack.c.h.b16 %v6566
    %v7108 = vunpack.c.l.b16 %v6567
    %v7109 = vunpack.c.h.b16 %v6567
    %v7110 = vunpack.c.l.b16 %v6568
    %v7111 = vunpack.c.h.b16 %v6568
    %v7112 = vunpack.c.l.b16 %v6569
    %v7113 = vunpack.c.h.b16 %v6569
    %v7114 = vunpack.c.l.b16 %v6570
    %v7115 = vunpack.c.h.b16 %v6570
    %v7116 = vunpack.c.l.b16 %v6571
    %v7117 = vunpack.c.h.b16 %v6571
    %v7118 = vunpack.c.l.b16 %v6572
    %v7119 = vunpack.c.h.b16 %v6572
    %v7120 = vunpack.c.l.b16 %v6573
    %v7121 = vunpack.c.h.b16 %v6573
    %v7122 = vunpack.c.l.b16 %v6574
    %v7123 = vunpack.c.h.b16 %v6574
    %v7124 = vunpack.c.l.b16 %v6575
    %v7125 = vunpack.c.h.b16 %v6575
    %v7126 = vunpack.c.l.b16 %v6576
    %v7127 = vunpack.c.h.b16 %v6576
    %v7128 = vunpack.c.l.b16 %v6577
    %v7129 = vunpack.c.h.b16 %v6577
    %v7130 = vunpack.c.l.b16 %v6578
    %v7131 = vunpack.c.h.b16 %v6578
    %v7132 = vunpack.c.l.b16 %v6579
    %v7133 = vunpack.c.h.b16 %v6579
    %v7134 = vunpack.c.l.b16 %v6580
    %v7135 = vunpack.c.h.b16 %v6580
    %v7136 = vunpack.c.l.b16 %v6581
    %v7137 = vunpack.c.h.b16 %v6581
    %v7138 = vunpack.c.l.b16 %v6582
    %v7139 = vunpack.c.h.b16 %v6582
    %v7140 = vunpack.c.l.b16 %v6583
    %v7141 = vunpack.c.h.b16 %v6583
    %v7142 = vunpack.c.l.b16 %v6584
    %v7143 = vunpack.c.h.b16 %v6584
    %v7144 = vunpack.c.l.b16 %v6585
    %v7145 = vunpack.c.h.b16 %v6585
    %v7146 = vunpack.c.l.b16 %v6586
    %v7147 = vunpack.c.h.b16 %v6586
    %v7148 = vunpack.c.l.b16 %v6587
    %v7149 = vunpack.c.h.b16 %v6587
    %v7150 = vunpack.c.l.b16 %v6588
    %v7151 = vunpack.c.h.b16 %v6588
    %v7152 = vunpack.c.l.b16 %v6589
    %v7153 = vunpack.c.h.b16 %v6589
    %v7154 = vunpack.c.l.b16 %v6590
    %v7155 = vunpack.c.h.b16 %v6590
    %v7156 = vunpack.c.l.b16 %v6591
    %v7157 = vunpack.c.h.b16 %v6591
    %v7158 = vunpack.c.l.b16 %v6592
    %v7159 = vunpack.c.h.b16 %v6592
    %v7160 = vunpack.c.l.b16 %v6593
    %v7161 = vunpack.c.h.b16 %v6593
    %v7162 = vunpack.c.l.b16 %v6594
    %v7163 = vunpack.c.h.b16 %v6594
    %v7164 = vpack.c.b16 %v7070, %v7068
    %v7165 = vpack.c.b16 %v7071, %v7069
    %v7166 = vpack.c.b16 %v7074, %v7072
    %v7167 = vpack.c.b16 %v7075, %v7073
    %v7168 = vpack.c.b16 %v7078, %v7076
    %v7169 = vpack.c.b16 %v7079, %v7077
    %v7170 = vpack.c.b16 %v7082, %v7080
    %v7171 = vpack.c.b16 %v7083, %v7081
    %v7172 = vpack.c.b16 %v7086, %v7084
    %v7173 = vpack.c.b16 %v7087, %v7085
    %v7174 = vpack.c.b16 %v7090, %v7088
    %v7175 = vpack.c.b16 %v7091, %v7089
    %v7176 = vpack.c.b16 %v7094, %v7092
    %v7177 = vpack.c.b16 %v7095, %v7093
    %v7178 = vpack.c.b16 %v7098, %v7096
    %v7179 = vpack.c.b16 %v7099, %v7097
    %v7180 = vpack.c.b16 %v7102, %v7100
    %v7181 = vpack.c.b16 %v7103, %v7101
    %v7182 = vpack.c.b16 %v7106, %v7104
    %v7183 = vpack.c.b16 %v7107, %v7105
    %v7184 = vpack.c.b16 %v7110, %v7108
    %v7185 = vpack.c.b16 %v7111, %v7109
    %v7186 = vpack.c.b16 %v7114, %v7112
    %v7187 = vpack.c.b16 %v7115, %v7113
    %v7188 = vpack.c.b16 %v7118, %v7116
    %v7189 = vpack.c.b16 %v7119, %v7117
    %v7190 = vpack.c.b16 %v7122, %v7120
    %v7191 = vpack.c.b16 %v7123, %v7121
    %v7192 = vpack.c.b16 %v7126, %v7124
    %v7193 = vpack.c.b16 %v7127, %v7125
    %v7194 = vpack.c.b16 %v7130, %v7128
    %v7195 = vpack.c.b16 %v7131, %v7129
    %v7196 = vpack.c.b16 %v7134, %v7132
    %v7197 = vpack.c.b16 %v7135, %v7133
    %v7198 = vpack.c.b16 %v7138, %v7136
    %v7199 = vpack.c.b16 %v7139, %v7137
    %v7200 = vpack.c.b16 %v7142, %v7140
    %v7201 = vpack.c.b16 %v7143, %v7141
    %v7202 = vpack.c.b16 %v7146, %v7144
    %v7203 = vpack.c.b16 %v7147, %v7145
    %v7204 = vpack.c.b16 %v7150, %v7148
    %v7205 = vpack.c.b16 %v7151, %v7149
    %v7206 = vpack.c.b16 %v7154, %v7152
    %v7207 = vpack.c.b16 %v7155, %v7153
    %v7208 = vpack.c.b16 %v7158, %v7156
    %v7209 = vpack.c.b16 %v7159, %v7157
    %v7210 = vpack.c.b16 %v7162, %v7160
    %v7211 = vpack.c.b16 %v7163, %v7161
    %7260 = vmatprep.subr.bf16.mxu0 %v7179
    %7261 = vmatpush1.bf16.msra.mxu0 %v7178
    %7262 = vmatprep.subr.bf16.mxu0 %v7177
    %7263 = vmatpush1.bf16.msra.mxu0 %v7176
    %7264 = vmatprep.subr.bf16.mxu0 %v7175
    %7265 = vmatpush1.bf16.msra.mxu0 %v7174
    %7266 = vmatprep.subr.bf16.mxu0 %v7173
    %7267 = vmatpush1.bf16.msra.mxu0 %v7172
    %7268 = vmatprep.subr.bf16.mxu0 %v7171
    %7269 = vmatpush1.bf16.msra.mxu0 %v7170
    %7270 = vmatprep.subr.bf16.mxu0 %v7169
    %7271 = vmatpush1.bf16.msra.mxu0 %v7168
    %7272 = vmatprep.subr.bf16.mxu0 %v7167
    %7273 = vmatpush1.bf16.msra.mxu0 %v7166
    %7274 = vmatprep.subr.bf16.mxu0 %v7165
    %7275 = vmatpush1.bf16.msra.mxu0 %v7164
    %7276 = vmatprep.subr.bf16.mxu0 %v7195
    %7277 = vmatpush2.bf16.msra.mxu0 %v7194
    %7278 = vmatprep.subr.bf16.mxu0 %v7193
    %7279 = vmatpush2.bf16.msra.mxu0 %v7192
    %7280 = vmatprep.subr.bf16.mxu0 %v7191
    %7281 = vmatpush2.bf16.msra.mxu0 %v7190
    %7282 = vmatprep.subr.bf16.mxu0 %v7189
    %7283 = vmatpush2.bf16.msra.mxu0 %v7188
    %7284 = vmatprep.subr.bf16.mxu0 %v7187
    %7285 = vmatpush2.bf16.msra.mxu0 %v7186
    %7286 = vmatprep.subr.bf16.mxu0 %v7185
    %7287 = vmatpush2.bf16.msra.mxu0 %v7184
    %7288 = vmatprep.subr.bf16.mxu0 %v7183
    %7289 = vmatpush2.bf16.msra.mxu0 %v7182
    %7290 = vmatprep.subr.bf16.mxu0 %v7181
    %7291 = vmatpush2.bf16.msra.mxu0 %v7180
    %7292 = vmatprep.mubr.bf16.mxu0 %v7015
    %7293 = vmatmul.mubr.bf16.gmra.mxu0 %v7014
    %v7294 = vpop.f32.mrf.mxu0
    %v7295 = vadd.f32 %v7001, %v7294
    %v7296 = vpop.f32.mrf.mxu0
    %v7297 = vadd.f32 %v7003, %v7296
    %v7298 = vpop.f32.mrf.mxu0
    %v7299 = vadd.f32 %v7005, %v7298
    %v7300 = vpop.f32.mrf.mxu0
    %v7301 = vadd.f32 %v7007, %v7300
    %7302 = vdwg.mxu0
    %7303 = vmatprep.subr.bf16.mxu0 %v7211
    %7304 = vmatpush1.bf16.msra.mxu0 %v7210
    %7305 = vmatprep.subr.bf16.mxu0 %v7209
    %7306 = vmatpush1.bf16.msra.mxu0 %v7208
    %7307 = vmatprep.subr.bf16.mxu0 %v7207
    %7308 = vmatpush1.bf16.msra.mxu0 %v7206
    %7309 = vmatprep.subr.bf16.mxu0 %v7205
    %7310 = vmatpush1.bf16.msra.mxu0 %v7204
    %7311 = vmatprep.subr.bf16.mxu0 %v7203
    %7312 = vmatpush1.bf16.msra.mxu0 %v7202
    %7313 = vmatprep.subr.bf16.mxu0 %v7201
    %7314 = vmatpush1.bf16.msra.mxu0 %v7200
    %7315 = vmatprep.subr.bf16.mxu0 %v7199
    %7316 = vmatpush1.bf16.msra.mxu0 %v7198
    %7317 = vmatprep.subr.bf16.mxu0 %v7197
    %7318 = vmatpush1.bf16.msra.mxu0 %v7196
    %7319 = vmatprep.subr.bf16.mxu0 0
    %7320 = vmatpush2.bf16.msra.mxu0 0
    %7321 = vmatprep.subr.bf16.mxu0 0
    %7322 = vmatpush2.bf16.msra.mxu0 0
    %7323 = vmatprep.subr.bf16.mxu0 0
    %7324 = vmatpush2.bf16.msra.mxu0 0
    %7325 = vmatprep.subr.bf16.mxu0 0
    %7326 = vmatpush2.bf16.msra.mxu0 0
    %7327 = vmatprep.subr.bf16.mxu0 0
    %7328 = vmatpush2.bf16.msra.mxu0 0
    %7329 = vmatprep.subr.bf16.mxu0 0
    %7330 = vmatpush2.bf16.msra.mxu0 0
    %7331 = vmatprep.subr.bf16.mxu0 0
    %7332 = vmatpush2.bf16.msra.mxu0 0
    %7333 = vmatprep.subr.bf16.mxu0 0
    %7334 = vmatpush2.bf16.msra.mxu0 0
    %7335 = vmatprep.mubr.bf16.mxu0 0
    %7336 = vmatmul.mubr.bf16.gmra.mxu0 %v7016
    %v7337 = vpop.f32.mrf.mxu0
    %v7338 = vadd.f32 %v7295, %v7337
    %v7339 = vpop.f32.mrf.mxu0
    %v7340 = vadd.f32 %v7297, %v7339
    %v7341 = vpop.f32.mrf.mxu0
    %v7342 = vadd.f32 %v7299, %v7341
    %v7343 = vpop.f32.mrf.mxu0
    %v7344 = vadd.f32 %v7301, %v7343
    %7345 = vdwg.mxu0
    %v7346 = vld [vmem:[#allocation7] sm:$0xee]
    %v7347 = vld [vmem:[#allocation7 + $0x8] sm:$0xe]
    %s7348 = scalar_lea.vmem [#allocation31], 768
    %v7349 = vld [vmem:[%s7348] sm:$0xff]
    %v7350 = vld [vmem:[%s7348 + $0x8] sm:$0xff]
    %v7351 = vld [vmem:[%s7348 + $0x10] sm:$0xff]
    %v7352 = vld [vmem:[%s7348 + $0x18] sm:$0xff]
    %v7353 = vld [vmem:[%s7348 + $0x20] sm:$0xff]
    %v7354 = vld [vmem:[%s7348 + $0x28] sm:$0xff]
    %v7355 = vld [vmem:[%s7348 + $0x30] sm:$0xff]
    %v7356 = vld [vmem:[%s7348 + $0x38] sm:$0xff]
    %v7357 = vld [vmem:[%s7348 + $0x40] sm:$0xff]
    %v7358 = vld [vmem:[%s7348 + $0x48] sm:$0xff]
    %v7359 = vld [vmem:[%s7348 + $0x50] sm:$0xff]
    %v7360 = vld [vmem:[%s7348 + $0x58] sm:$0xff]
    %v7361 = vld [vmem:[%s7348 + $0x60] sm:$0xff]
    %v7362 = vld [vmem:[%s7348 + $0x68] sm:$0xff]
    %v7363 = vld [vmem:[%s7348 + $0x70] sm:$0xff]
    %v7364 = vld [vmem:[%s7348 + $0x78] sm:$0xff]
    %v7365 = vld [vmem:[%s7348 + $0x80] sm:$0xff]
    %v7366 = vld [vmem:[%s7348 + $0x88] sm:$0xff]
    %v7367 = vld [vmem:[%s7348 + $0x90] sm:$0xff]
    %v7368 = vld [vmem:[%s7348 + $0x98] sm:$0xff]
    %v7369 = vld [vmem:[%s7348 + $0xa0] sm:$0xff]
    %v7370 = vld [vmem:[%s7348 + $0xa8] sm:$0xff]
    %v7371 = vld [vmem:[%s7348 + $0xb0] sm:$0xff]
    %v7372 = vld [vmem:[%s7348 + $0xb8] sm:$0xff]
    %v7373 = vld [vmem:[%s7348 + $0xc0] sm:$0xff]
    %v7374 = vld [vmem:[%s7348 + $0xc8] sm:$0xff]
    %v7375 = vld [vmem:[%s7348 + $0xd0] sm:$0xff]
    %v7376 = vld [vmem:[%s7348 + $0xd8] sm:$0xff]
    %v7377 = vld [vmem:[%s7348 + $0xe0] sm:$0xff]
    %v7378 = vld [vmem:[%s7348 + $0xe8] sm:$0xff]
    %v7379 = vld [vmem:[%s7348 + $0xf0] sm:$0xff]
    %v7380 = vld [vmem:[%s7348 + $0xf8] sm:$0xff]
    %v7381 = vld [vmem:[%s7348 + $0x100] sm:$0xff]
    %v7382 = vld [vmem:[%s7348 + $0x108] sm:$0xff]
    %v7383 = vld [vmem:[%s7348 + $0x110] sm:$0xff]
    %v7384 = vld [vmem:[%s7348 + $0x118] sm:$0xff]
    %v7385 = vld [vmem:[%s7348 + $0x120] sm:$0xff]
    %v7386 = vld [vmem:[%s7348 + $0x128] sm:$0xff]
    %v7387 = vld [vmem:[%s7348 + $0x130] sm:$0xff]
    %v7388 = vld [vmem:[%s7348 + $0x138] sm:$0xff]
    %v7389 = vld [vmem:[%s7348 + $0x140] sm:$0xff]
    %v7390 = vld [vmem:[%s7348 + $0x148] sm:$0xff]
    %v7391 = vld [vmem:[%s7348 + $0x150] sm:$0xff]
    %v7392 = vld [vmem:[%s7348 + $0x158] sm:$0xff]
    %v7393 = vld [vmem:[%s7348 + $0x160] sm:$0xff]
    %v7394 = vld [vmem:[%s7348 + $0x168] sm:$0xff]
    %v7395 = vld [vmem:[%s7348 + $0x170] sm:$0xff]
    %v7396 = vld [vmem:[%s7348 + $0x178] sm:$0xff]
    %v7399 = vunpack.c.l.b16 %v7346
    %v7400 = vunpack.c.h.b16 %v7346
    %v7401 = vunpack.c.l.b16 %v7347
    %v7402 = vpack.c.b16 %v6653, %v7399
    %v7403 = vpack.c.b16 %v6654, %v7400
    %v7404 = vpack.c.b16 %v6655, %v7401
    %v7405 = vrot.slane %v7402, 1
    %v7406 = vrot.slane %v7403, 1
    %v7407 = vrot.slane %v7404, 1
    %v7459 = vunpack.c.l.b16 %v7349
    %v7460 = vunpack.c.h.b16 %v7349
    %v7461 = vunpack.c.l.b16 %v7350
    %v7462 = vunpack.c.h.b16 %v7350
    %v7463 = vunpack.c.l.b16 %v7351
    %v7464 = vunpack.c.h.b16 %v7351
    %v7465 = vunpack.c.l.b16 %v7352
    %v7466 = vunpack.c.h.b16 %v7352
    %v7467 = vunpack.c.l.b16 %v7353
    %v7468 = vunpack.c.h.b16 %v7353
    %v7469 = vunpack.c.l.b16 %v7354
    %v7470 = vunpack.c.h.b16 %v7354
    %v7471 = vunpack.c.l.b16 %v7355
    %v7472 = vunpack.c.h.b16 %v7355
    %v7473 = vunpack.c.l.b16 %v7356
    %v7474 = vunpack.c.h.b16 %v7356
    %v7475 = vunpack.c.l.b16 %v7357
    %v7476 = vunpack.c.h.b16 %v7357
    %v7477 = vunpack.c.l.b16 %v7358
    %v7478 = vunpack.c.h.b16 %v7358
    %v7479 = vunpack.c.l.b16 %v7359
    %v7480 = vunpack.c.h.b16 %v7359
    %v7481 = vunpack.c.l.b16 %v7360
    %v7482 = vunpack.c.h.b16 %v7360
    %v7483 = vunpack.c.l.b16 %v7361
    %v7484 = vunpack.c.h.b16 %v7361
    %v7485 = vunpack.c.l.b16 %v7362
    %v7486 = vunpack.c.h.b16 %v7362
    %v7487 = vunpack.c.l.b16 %v7363
    %v7488 = vunpack.c.h.b16 %v7363
    %v7489 = vunpack.c.l.b16 %v7364
    %v7490 = vunpack.c.h.b16 %v7364
    %v7491 = vunpack.c.l.b16 %v7365
    %v7492 = vunpack.c.h.b16 %v7365
    %v7493 = vunpack.c.l.b16 %v7366
    %v7494 = vunpack.c.h.b16 %v7366
    %v7495 = vunpack.c.l.b16 %v7367
    %v7496 = vunpack.c.h.b16 %v7367
    %v7497 = vunpack.c.l.b16 %v7368
    %v7498 = vunpack.c.h.b16 %v7368
    %v7499 = vunpack.c.l.b16 %v7369
    %v7500 = vunpack.c.h.b16 %v7369
    %v7501 = vunpack.c.l.b16 %v7370
    %v7502 = vunpack.c.h.b16 %v7370
    %v7503 = vunpack.c.l.b16 %v7371
    %v7504 = vunpack.c.h.b16 %v7371
    %v7505 = vunpack.c.l.b16 %v7372
    %v7506 = vunpack.c.h.b16 %v7372
    %v7507 = vunpack.c.l.b16 %v7373
    %v7508 = vunpack.c.h.b16 %v7373
    %v7509 = vunpack.c.l.b16 %v7374
    %v7510 = vunpack.c.h.b16 %v7374
    %v7511 = vunpack.c.l.b16 %v7375
    %v7512 = vunpack.c.h.b16 %v7375
    %v7513 = vunpack.c.l.b16 %v7376
    %v7514 = vunpack.c.h.b16 %v7376
    %v7515 = vunpack.c.l.b16 %v7377
    %v7516 = vunpack.c.h.b16 %v7377
    %v7517 = vunpack.c.l.b16 %v7378
    %v7518 = vunpack.c.h.b16 %v7378
    %v7519 = vunpack.c.l.b16 %v7379
    %v7520 = vunpack.c.h.b16 %v7379
    %v7521 = vunpack.c.l.b16 %v7380
    %v7522 = vunpack.c.h.b16 %v7380
    %v7523 = vunpack.c.l.b16 %v7381
    %v7524 = vunpack.c.h.b16 %v7381
    %v7525 = vunpack.c.l.b16 %v7382
    %v7526 = vunpack.c.h.b16 %v7382
    %v7527 = vunpack.c.l.b16 %v7383
    %v7528 = vunpack.c.h.b16 %v7383
    %v7529 = vunpack.c.l.b16 %v7384
    %v7530 = vunpack.c.h.b16 %v7384
    %v7531 = vunpack.c.l.b16 %v7385
    %v7532 = vunpack.c.h.b16 %v7385
    %v7533 = vunpack.c.l.b16 %v7386
    %v7534 = vunpack.c.h.b16 %v7386
    %v7535 = vunpack.c.l.b16 %v7387
    %v7536 = vunpack.c.h.b16 %v7387
    %v7537 = vunpack.c.l.b16 %v7388
    %v7538 = vunpack.c.h.b16 %v7388
    %v7539 = vunpack.c.l.b16 %v7389
    %v7540 = vunpack.c.h.b16 %v7389
    %v7541 = vunpack.c.l.b16 %v7390
    %v7542 = vunpack.c.h.b16 %v7390
    %v7543 = vunpack.c.l.b16 %v7391
    %v7544 = vunpack.c.h.b16 %v7391
    %v7545 = vunpack.c.l.b16 %v7392
    %v7546 = vunpack.c.h.b16 %v7392
    %v7547 = vunpack.c.l.b16 %v7393
    %v7548 = vunpack.c.h.b16 %v7393
    %v7549 = vunpack.c.l.b16 %v7394
    %v7550 = vunpack.c.h.b16 %v7394
    %v7551 = vunpack.c.l.b16 %v7395
    %v7552 = vunpack.c.h.b16 %v7395
    %v7553 = vunpack.c.l.b16 %v7396
    %v7554 = vunpack.c.h.b16 %v7396
    %v7555 = vpack.c.b16 %v7461, %v7459
    %v7556 = vpack.c.b16 %v7462, %v7460
    %v7557 = vpack.c.b16 %v7465, %v7463
    %v7558 = vpack.c.b16 %v7466, %v7464
    %v7559 = vpack.c.b16 %v7469, %v7467
    %v7560 = vpack.c.b16 %v7470, %v7468
    %v7561 = vpack.c.b16 %v7473, %v7471
    %v7562 = vpack.c.b16 %v7474, %v7472
    %v7563 = vpack.c.b16 %v7477, %v7475
    %v7564 = vpack.c.b16 %v7478, %v7476
    %v7565 = vpack.c.b16 %v7481, %v7479
    %v7566 = vpack.c.b16 %v7482, %v7480
    %v7567 = vpack.c.b16 %v7485, %v7483
    %v7568 = vpack.c.b16 %v7486, %v7484
    %v7569 = vpack.c.b16 %v7489, %v7487
    %v7570 = vpack.c.b16 %v7490, %v7488
    %v7571 = vpack.c.b16 %v7493, %v7491
    %v7572 = vpack.c.b16 %v7494, %v7492
    %v7573 = vpack.c.b16 %v7497, %v7495
    %v7574 = vpack.c.b16 %v7498, %v7496
    %v7575 = vpack.c.b16 %v7501, %v7499
    %v7576 = vpack.c.b16 %v7502, %v7500
    %v7577 = vpack.c.b16 %v7505, %v7503
    %v7578 = vpack.c.b16 %v7506, %v7504
    %v7579 = vpack.c.b16 %v7509, %v7507
    %v7580 = vpack.c.b16 %v7510, %v7508
    %v7581 = vpack.c.b16 %v7513, %v7511
    %v7582 = vpack.c.b16 %v7514, %v7512
    %v7583 = vpack.c.b16 %v7517, %v7515
    %v7584 = vpack.c.b16 %v7518, %v7516
    %v7585 = vpack.c.b16 %v7521, %v7519
    %v7586 = vpack.c.b16 %v7522, %v7520
    %v7587 = vpack.c.b16 %v7525, %v7523
    %v7588 = vpack.c.b16 %v7526, %v7524
    %v7589 = vpack.c.b16 %v7529, %v7527
    %v7590 = vpack.c.b16 %v7530, %v7528
    %v7591 = vpack.c.b16 %v7533, %v7531
    %v7592 = vpack.c.b16 %v7534, %v7532
    %v7593 = vpack.c.b16 %v7537, %v7535
    %v7594 = vpack.c.b16 %v7538, %v7536
    %v7595 = vpack.c.b16 %v7541, %v7539
    %v7596 = vpack.c.b16 %v7542, %v7540
    %v7597 = vpack.c.b16 %v7545, %v7543
    %v7598 = vpack.c.b16 %v7546, %v7544
    %v7599 = vpack.c.b16 %v7549, %v7547
    %v7600 = vpack.c.b16 %v7550, %v7548
    %v7601 = vpack.c.b16 %v7553, %v7551
    %v7602 = vpack.c.b16 %v7554, %v7552
    %7651 = vmatprep.subr.bf16.mxu0 %v7570
    %7652 = vmatpush1.bf16.msra.mxu0 %v7569
    %7653 = vmatprep.subr.bf16.mxu0 %v7568
    %7654 = vmatpush1.bf16.msra.mxu0 %v7567
    %7655 = vmatprep.subr.bf16.mxu0 %v7566
    %7656 = vmatpush1.bf16.msra.mxu0 %v7565
    %7657 = vmatprep.subr.bf16.mxu0 %v7564
    %7658 = vmatpush1.bf16.msra.mxu0 %v7563
    %7659 = vmatprep.subr.bf16.mxu0 %v7562
    %7660 = vmatpush1.bf16.msra.mxu0 %v7561
    %7661 = vmatprep.subr.bf16.mxu0 %v7560
    %7662 = vmatpush1.bf16.msra.mxu0 %v7559
    %7663 = vmatprep.subr.bf16.mxu0 %v7558
    %7664 = vmatpush1.bf16.msra.mxu0 %v7557
    %7665 = vmatprep.subr.bf16.mxu0 %v7556
    %7666 = vmatpush1.bf16.msra.mxu0 %v7555
    %7667 = vmatprep.subr.bf16.mxu0 %v7586
    %7668 = vmatpush2.bf16.msra.mxu0 %v7585
    %7669 = vmatprep.subr.bf16.mxu0 %v7584
    %7670 = vmatpush2.bf16.msra.mxu0 %v7583
    %7671 = vmatprep.subr.bf16.mxu0 %v7582
    %7672 = vmatpush2.bf16.msra.mxu0 %v7581
    %7673 = vmatprep.subr.bf16.mxu0 %v7580
    %7674 = vmatpush2.bf16.msra.mxu0 %v7579
    %7675 = vmatprep.subr.bf16.mxu0 %v7578
    %7676 = vmatpush2.bf16.msra.mxu0 %v7577
    %7677 = vmatprep.subr.bf16.mxu0 %v7576
    %7678 = vmatpush2.bf16.msra.mxu0 %v7575
    %7679 = vmatprep.subr.bf16.mxu0 %v7574
    %7680 = vmatpush2.bf16.msra.mxu0 %v7573
    %7681 = vmatprep.subr.bf16.mxu0 %v7572
    %7682 = vmatpush2.bf16.msra.mxu0 %v7571
    %7683 = vmatprep.mubr.bf16.mxu0 %v7406
    %7684 = vmatmul.mubr.bf16.gmra.mxu0 %v7405
    %v7685 = vpop.f32.mrf.mxu0
    %v7686 = vadd.f32 0.0, %v7685
    %v7687 = vpop.f32.mrf.mxu0
    %v7688 = vadd.f32 0.0, %v7687
    %v7689 = vpop.f32.mrf.mxu0
    %v7690 = vadd.f32 0.0, %v7689
    %v7691 = vpop.f32.mrf.mxu0
    %v7692 = vadd.f32 0.0, %v7691
    %7693 = vdwg.mxu0
    %7694 = vmatprep.subr.bf16.mxu0 %v7602
    %7695 = vmatpush1.bf16.msra.mxu0 %v7601
    %7696 = vmatprep.subr.bf16.mxu0 %v7600
    %7697 = vmatpush1.bf16.msra.mxu0 %v7599
    %7698 = vmatprep.subr.bf16.mxu0 %v7598
    %7699 = vmatpush1.bf16.msra.mxu0 %v7597
    %7700 = vmatprep.subr.bf16.mxu0 %v7596
    %7701 = vmatpush1.bf16.msra.mxu0 %v7595
    %7702 = vmatprep.subr.bf16.mxu0 %v7594
    %7703 = vmatpush1.bf16.msra.mxu0 %v7593
    %7704 = vmatprep.subr.bf16.mxu0 %v7592
    %7705 = vmatpush1.bf16.msra.mxu0 %v7591
    %7706 = vmatprep.subr.bf16.mxu0 %v7590
    %7707 = vmatpush1.bf16.msra.mxu0 %v7589
    %7708 = vmatprep.subr.bf16.mxu0 %v7588
    %7709 = vmatpush1.bf16.msra.mxu0 %v7587
    %7710 = vmatprep.subr.bf16.mxu0 0
    %7711 = vmatpush2.bf16.msra.mxu0 0
    %7712 = vmatprep.subr.bf16.mxu0 0
    %7713 = vmatpush2.bf16.msra.mxu0 0
    %7714 = vmatprep.subr.bf16.mxu0 0
    %7715 = vmatpush2.bf16.msra.mxu0 0
    %7716 = vmatprep.subr.bf16.mxu0 0
    %7717 = vmatpush2.bf16.msra.mxu0 0
    %7718 = vmatprep.subr.bf16.mxu0 0
    %7719 = vmatpush2.bf16.msra.mxu0 0
    %7720 = vmatprep.subr.bf16.mxu0 0
    %7721 = vmatpush2.bf16.msra.mxu0 0
    %7722 = vmatprep.subr.bf16.mxu0 0
    %7723 = vmatpush2.bf16.msra.mxu0 0
    %7724 = vmatprep.subr.bf16.mxu0 0
    %7725 = vmatpush2.bf16.msra.mxu0 0
    %7726 = vmatprep.mubr.bf16.mxu0 0
    %7727 = vmatmul.mubr.bf16.gmra.mxu0 %v7407
    %v7728 = vpop.f32.mrf.mxu0
    %v7729 = vadd.f32 %v7686, %v7728
    %v7730 = vpop.f32.mrf.mxu0
    %v7731 = vadd.f32 %v7688, %v7730
    %v7732 = vpop.f32.mrf.mxu0
    %v7733 = vadd.f32 %v7690, %v7732
    %v7734 = vpop.f32.mrf.mxu0
    %v7735 = vadd.f32 %v7692, %v7734
    %7736 = vdwg.mxu0
    %v7737 = vadd.f32 %v7338, %v7729
    %v7738 = vadd.f32 %v7340, %v7731
    %v7739 = vadd.f32 %v7342, %v7733
    %v7740 = vadd.f32 %v7344, %v7735
    %v7741 = vld [vmem:[#allocation33] sm:$0x3]
    %v7743 = vlaneseq
    %v7744 = vshrl.u32 %v7743, 7
    %v7745 = vsub.s32 0, %v7744
    %v7746 = vrot.slane %v7741, %v7745
    %v7747 = vlaneseq
    %v7748 = vshrl.u32 %v7747, 7
    %v7749 = vsub.s32 1, %v7748
    %v7750 = vrot.slane %v7741, %v7749
    %v7753 = vadd.f32 %v7737, %v7746
    %v7754 = vadd.f32 %v7738, %v7750
    %v7755 = vadd.f32 %v7739, %v7746
    %v7756 = vadd.f32 %v7740, %v7750
    %v7757 = vmax.f32 %v7753, 0.0
    %v7758 = vmax.f32 %v7754, 0.0
    %v7759 = vmax.f32 %v7755, 0.0
    %v7760 = vmax.f32 %v7756, 0.0
    %v7761 = vpack.c.bf16 %v7759, %v7757
    %v7762 = vpack.c.bf16 %v7760, %v7758
    %v7763 = vld [vmem:[#allocation34] sm:$0xf]
    %v7764 = vld [vmem:[#allocation34 + $0x4] sm:$0xf]
    %v7765 = vld [vmem:[#allocation34 + $0x8] sm:$0xf]
    %v7766 = vld [vmem:[#allocation34 + $0xc] sm:$0xf]
    %v7767 = vld [vmem:[#allocation34 + $0x10] sm:$0xf]
    %v7768 = vld [vmem:[#allocation34 + $0x14] sm:$0xf]
    %v7769 = vld [vmem:[#allocation34 + $0x18] sm:$0xf]
    %v7770 = vld [vmem:[#allocation34 + $0x1c] sm:$0xf]
    %v7771 = vld [vmem:[#allocation34 + $0x20] sm:$0xf]
    %v7772 = vld [vmem:[#allocation34 + $0x24] sm:$0xf]
    %v7773 = vld [vmem:[#allocation34 + $0x28] sm:$0xf]
    %v7774 = vld [vmem:[#allocation34 + $0x2c] sm:$0xf]
    %v7775 = vld [vmem:[#allocation34 + $0x30] sm:$0xf]
    %v7776 = vld [vmem:[#allocation34 + $0x34] sm:$0xf]
    %v7777 = vld [vmem:[#allocation34 + $0x38] sm:$0xf]
    %v7778 = vld [vmem:[#allocation34 + $0x3c] sm:$0xf]
    %v7779 = vld [vmem:[#allocation34 + $0x40] sm:$0xf]
    %v7780 = vld [vmem:[#allocation34 + $0x44] sm:$0xf]
    %v7781 = vld [vmem:[#allocation34 + $0x48] sm:$0xf]
    %v7782 = vld [vmem:[#allocation34 + $0x4c] sm:$0xf]
    %v7783 = vld [vmem:[#allocation34 + $0x50] sm:$0xf]
    %v7784 = vld [vmem:[#allocation34 + $0x54] sm:$0xf]
    %v7785 = vld [vmem:[#allocation34 + $0x58] sm:$0xf]
    %v7786 = vld [vmem:[#allocation34 + $0x5c] sm:$0xf]
    %v7787 = vld [vmem:[#allocation34 + $0x60] sm:$0xf]
    %v7788 = vld [vmem:[#allocation34 + $0x64] sm:$0xf]
    %v7789 = vld [vmem:[#allocation34 + $0x68] sm:$0xf]
    %v7790 = vld [vmem:[#allocation34 + $0x6c] sm:$0xf]
    %v7791 = vld [vmem:[#allocation34 + $0x70] sm:$0xf]
    %v7792 = vld [vmem:[#allocation34 + $0x74] sm:$0xf]
    %v7793 = vld [vmem:[#allocation34 + $0x78] sm:$0xf]
    %v7794 = vld [vmem:[#allocation34 + $0x7c] sm:$0xf]
    %v7827 = vunpack.c.l.b16 %v7763
    %v7828 = vunpack.c.l.b16 %v7764
    %v7829 = vunpack.c.l.b16 %v7765
    %v7830 = vunpack.c.l.b16 %v7766
    %v7831 = vunpack.c.l.b16 %v7767
    %v7832 = vunpack.c.l.b16 %v7768
    %v7833 = vunpack.c.l.b16 %v7769
    %v7834 = vunpack.c.l.b16 %v7770
    %v7835 = vunpack.c.l.b16 %v7771
    %v7836 = vunpack.c.l.b16 %v7772
    %v7837 = vunpack.c.l.b16 %v7773
    %v7838 = vunpack.c.l.b16 %v7774
    %v7839 = vunpack.c.l.b16 %v7775
    %v7840 = vunpack.c.l.b16 %v7776
    %v7841 = vunpack.c.l.b16 %v7777
    %v7842 = vunpack.c.l.b16 %v7778
    %v7843 = vunpack.c.l.b16 %v7779
    %v7844 = vunpack.c.l.b16 %v7780
    %v7845 = vunpack.c.l.b16 %v7781
    %v7846 = vunpack.c.l.b16 %v7782
    %v7847 = vunpack.c.l.b16 %v7783
    %v7848 = vunpack.c.l.b16 %v7784
    %v7849 = vunpack.c.l.b16 %v7785
    %v7850 = vunpack.c.l.b16 %v7786
    %v7851 = vunpack.c.l.b16 %v7787
    %v7852 = vunpack.c.l.b16 %v7788
    %v7853 = vunpack.c.l.b16 %v7789
    %v7854 = vunpack.c.l.b16 %v7790
    %v7855 = vunpack.c.l.b16 %v7791
    %v7856 = vunpack.c.l.b16 %v7792
    %v7857 = vunpack.c.l.b16 %v7793
    %v7858 = vunpack.c.l.b16 %v7794
    %v7859 = vpack.c.b16 %v7828, %v7827
    %v7860 = vpack.c.b16 %v7830, %v7829
    %v7861 = vpack.c.b16 %v7832, %v7831
    %v7862 = vpack.c.b16 %v7834, %v7833
    %v7863 = vpack.c.b16 %v7836, %v7835
    %v7864 = vpack.c.b16 %v7838, %v7837
    %v7865 = vpack.c.b16 %v7840, %v7839
    %v7866 = vpack.c.b16 %v7842, %v7841
    %v7867 = vpack.c.b16 %v7844, %v7843
    %v7868 = vpack.c.b16 %v7846, %v7845
    %v7869 = vpack.c.b16 %v7848, %v7847
    %v7870 = vpack.c.b16 %v7850, %v7849
    %v7871 = vpack.c.b16 %v7852, %v7851
    %v7872 = vpack.c.b16 %v7854, %v7853
    %v7873 = vpack.c.b16 %v7856, %v7855
    %v7874 = vpack.c.b16 %v7858, %v7857
    %7891 = vmatprep.subr.bf16.mxu0 0
    %7892 = vmatpush1.bf16.msra.mxu0 %v7866
    %7893 = vmatprep.subr.bf16.mxu0 0
    %7894 = vmatpush1.bf16.msra.mxu0 %v7865
    %7895 = vmatprep.subr.bf16.mxu0 0
    %7896 = vmatpush1.bf16.msra.mxu0 %v7864
    %7897 = vmatprep.subr.bf16.mxu0 0
    %7898 = vmatpush1.bf16.msra.mxu0 %v7863
    %7899 = vmatprep.subr.bf16.mxu0 0
    %7900 = vmatpush1.bf16.msra.mxu0 %v7862
    %7901 = vmatprep.subr.bf16.mxu0 0
    %7902 = vmatpush1.bf16.msra.mxu0 %v7861
    %7903 = vmatprep.subr.bf16.mxu0 0
    %7904 = vmatpush1.bf16.msra.mxu0 %v7860
    %7905 = vmatprep.subr.bf16.mxu0 0
    %7906 = vmatpush1.bf16.msra.mxu0 %v7859
    %7907 = vmatprep.subr.bf16.mxu0 0
    %7908 = vmatpush2.bf16.msra.mxu0 %v7874
    %7909 = vmatprep.subr.bf16.mxu0 0
    %7910 = vmatpush2.bf16.msra.mxu0 %v7873
    %7911 = vmatprep.subr.bf16.mxu0 0
    %7912 = vmatpush2.bf16.msra.mxu0 %v7872
    %7913 = vmatprep.subr.bf16.mxu0 0
    %7914 = vmatpush2.bf16.msra.mxu0 %v7871
    %7915 = vmatprep.subr.bf16.mxu0 0
    %7916 = vmatpush2.bf16.msra.mxu0 %v7870
    %7917 = vmatprep.subr.bf16.mxu0 0
    %7918 = vmatpush2.bf16.msra.mxu0 %v7869
    %7919 = vmatprep.subr.bf16.mxu0 0
    %7920 = vmatpush2.bf16.msra.mxu0 %v7868
    %7921 = vmatprep.subr.bf16.mxu0 0
    %7922 = vmatpush2.bf16.msra.mxu0 %v7867
    %7923 = vmatprep.mubr.bf16.mxu0 %v7762
    %7924 = vmatmul.mubr.bf16.gmra.mxu0 %v7761
    %v7925 = vpop.f32.mrf.mxu0
    %v7926 = vadd.f32 0.0, %v7925
    %v7927 = vpop.f32.mrf.mxu0
    %v7928 = vpop.f32.mrf.mxu0
    %v7929 = vadd.f32 0.0, %v7928
    %v7930 = vpop.f32.mrf.mxu0
    %7931 = vdwg.mxu0
    %s7932 = scalar_lea.vmem [#allocation34], 128
    %v7933 = vld [vmem:[%s7932] sm:$0xf]
    %v7934 = vld [vmem:[%s7932 + $0x4] sm:$0xf]
    %v7935 = vld [vmem:[%s7932 + $0x8] sm:$0xf]
    %v7936 = vld [vmem:[%s7932 + $0xc] sm:$0xf]
    %v7937 = vld [vmem:[%s7932 + $0x10] sm:$0xf]
    %v7938 = vld [vmem:[%s7932 + $0x14] sm:$0xf]
    %v7939 = vld [vmem:[%s7932 + $0x18] sm:$0xf]
    %v7940 = vld [vmem:[%s7932 + $0x1c] sm:$0xf]
    %v7941 = vld [vmem:[%s7932 + $0x20] sm:$0xf]
    %v7942 = vld [vmem:[%s7932 + $0x24] sm:$0xf]
    %v7943 = vld [vmem:[%s7932 + $0x28] sm:$0xf]
    %v7944 = vld [vmem:[%s7932 + $0x2c] sm:$0xf]
    %v7945 = vld [vmem:[%s7932 + $0x30] sm:$0xf]
    %v7946 = vld [vmem:[%s7932 + $0x34] sm:$0xf]
    %v7947 = vld [vmem:[%s7932 + $0x38] sm:$0xf]
    %v7948 = vld [vmem:[%s7932 + $0x3c] sm:$0xf]
    %v7949 = vld [vmem:[%s7932 + $0x40] sm:$0xf]
    %v7950 = vld [vmem:[%s7932 + $0x44] sm:$0xf]
    %v7951 = vld [vmem:[%s7932 + $0x48] sm:$0xf]
    %v7952 = vld [vmem:[%s7932 + $0x4c] sm:$0xf]
    %v7953 = vld [vmem:[%s7932 + $0x50] sm:$0xf]
    %v7954 = vld [vmem:[%s7932 + $0x54] sm:$0xf]
    %v7955 = vld [vmem:[%s7932 + $0x58] sm:$0xf]
    %v7956 = vld [vmem:[%s7932 + $0x5c] sm:$0xf]
    %v7957 = vld [vmem:[%s7932 + $0x60] sm:$0xf]
    %v7958 = vld [vmem:[%s7932 + $0x64] sm:$0xf]
    %v7959 = vld [vmem:[%s7932 + $0x68] sm:$0xf]
    %v7960 = vld [vmem:[%s7932 + $0x6c] sm:$0xf]
    %v7961 = vld [vmem:[%s7932 + $0x70] sm:$0xf]
    %v7962 = vld [vmem:[%s7932 + $0x74] sm:$0xf]
    %v7963 = vld [vmem:[%s7932 + $0x78] sm:$0xf]
    %v7964 = vld [vmem:[%s7932 + $0x7c] sm:$0xf]
    %v7997 = vunpack.c.l.b16 %v7933
    %v7998 = vunpack.c.l.b16 %v7934
    %v7999 = vunpack.c.l.b16 %v7935
    %v8000 = vunpack.c.l.b16 %v7936
    %v8001 = vunpack.c.l.b16 %v7937
    %v8002 = vunpack.c.l.b16 %v7938
    %v8003 = vunpack.c.l.b16 %v7939
    %v8004 = vunpack.c.l.b16 %v7940
    %v8005 = vunpack.c.l.b16 %v7941
    %v8006 = vunpack.c.l.b16 %v7942
    %v8007 = vunpack.c.l.b16 %v7943
    %v8008 = vunpack.c.l.b16 %v7944
    %v8009 = vunpack.c.l.b16 %v7945
    %v8010 = vunpack.c.l.b16 %v7946
    %v8011 = vunpack.c.l.b16 %v7947
    %v8012 = vunpack.c.l.b16 %v7948
    %v8013 = vunpack.c.l.b16 %v7949
    %v8014 = vunpack.c.l.b16 %v7950
    %v8015 = vunpack.c.l.b16 %v7951
    %v8016 = vunpack.c.l.b16 %v7952
    %v8017 = vunpack.c.l.b16 %v7953
    %v8018 = vunpack.c.l.b16 %v7954
    %v8019 = vunpack.c.l.b16 %v7955
    %v8020 = vunpack.c.l.b16 %v7956
    %v8021 = vunpack.c.l.b16 %v7957
    %v8022 = vunpack.c.l.b16 %v7958
    %v8023 = vunpack.c.l.b16 %v7959
    %v8024 = vunpack.c.l.b16 %v7960
    %v8025 = vunpack.c.l.b16 %v7961
    %v8026 = vunpack.c.l.b16 %v7962
    %v8027 = vunpack.c.l.b16 %v7963
    %v8028 = vunpack.c.l.b16 %v7964
    %v8029 = vpack.c.b16 %v7998, %v7997
    %v8030 = vpack.c.b16 %v8000, %v7999
    %v8031 = vpack.c.b16 %v8002, %v8001
    %v8032 = vpack.c.b16 %v8004, %v8003
    %v8033 = vpack.c.b16 %v8006, %v8005
    %v8034 = vpack.c.b16 %v8008, %v8007
    %v8035 = vpack.c.b16 %v8010, %v8009
    %v8036 = vpack.c.b16 %v8012, %v8011
    %v8037 = vpack.c.b16 %v8014, %v8013
    %v8038 = vpack.c.b16 %v8016, %v8015
    %v8039 = vpack.c.b16 %v8018, %v8017
    %v8040 = vpack.c.b16 %v8020, %v8019
    %v8041 = vpack.c.b16 %v8022, %v8021
    %v8042 = vpack.c.b16 %v8024, %v8023
    %v8043 = vpack.c.b16 %v8026, %v8025
    %v8044 = vpack.c.b16 %v8028, %v8027
    %8061 = vmatprep.subr.bf16.mxu0 0
    %8062 = vmatpush1.bf16.msra.mxu0 %v8036
    %8063 = vmatprep.subr.bf16.mxu0 0
    %8064 = vmatpush1.bf16.msra.mxu0 %v8035
    %8065 = vmatprep.subr.bf16.mxu0 0
    %8066 = vmatpush1.bf16.msra.mxu0 %v8034
    %8067 = vmatprep.subr.bf16.mxu0 0
    %8068 = vmatpush1.bf16.msra.mxu0 %v8033
    %8069 = vmatprep.subr.bf16.mxu0 0
    %8070 = vmatpush1.bf16.msra.mxu0 %v8032
    %8071 = vmatprep.subr.bf16.mxu0 0
    %8072 = vmatpush1.bf16.msra.mxu0 %v8031
    %8073 = vmatprep.subr.bf16.mxu0 0
    %8074 = vmatpush1.bf16.msra.mxu0 %v8030
    %8075 = vmatprep.subr.bf16.mxu0 0
    %8076 = vmatpush1.bf16.msra.mxu0 %v8029
    %8077 = vmatprep.subr.bf16.mxu0 0
    %8078 = vmatpush2.bf16.msra.mxu0 %v8044
    %8079 = vmatprep.subr.bf16.mxu0 0
    %8080 = vmatpush2.bf16.msra.mxu0 %v8043
    %8081 = vmatprep.subr.bf16.mxu0 0
    %8082 = vmatpush2.bf16.msra.mxu0 %v8042
    %8083 = vmatprep.subr.bf16.mxu0 0
    %8084 = vmatpush2.bf16.msra.mxu0 %v8041
    %8085 = vmatprep.subr.bf16.mxu0 0
    %8086 = vmatpush2.bf16.msra.mxu0 %v8040
    %8087 = vmatprep.subr.bf16.mxu0 0
    %8088 = vmatpush2.bf16.msra.mxu0 %v8039
    %8089 = vmatprep.subr.bf16.mxu0 0
    %8090 = vmatpush2.bf16.msra.mxu0 %v8038
    %8091 = vmatprep.subr.bf16.mxu0 0
    %8092 = vmatpush2.bf16.msra.mxu0 %v8037
    %8093 = vmatprep.mubr.bf16.mxu0 %v7762
    %8094 = vmatmul.mubr.bf16.gmra.mxu0 %v7761
    %v8095 = vpop.f32.mrf.mxu0
    %v8096 = vadd.f32 0.0, %v8095
    %v8097 = vpop.f32.mrf.mxu0
    %v8098 = vpop.f32.mrf.mxu0
    %v8099 = vadd.f32 0.0, %v8098
    %v8100 = vpop.f32.mrf.mxu0
    %8101 = vdwg.mxu0
    %v8102 = vmax.f32 %v7926, %v8096
    %v8103 = vmax.f32 %v7929, %v8099
    %v8104 = vpack.c.bf16 %v8103, %v8102
    %v8105 = vld [vmem:[%s41] sm:$0x3]
    %vm8106 = vcmask 80896
    %v8108 = vsel %vm8106, %v8105, 0
    %vm8110 = vcmask 1044480
    %v8112 = vsel %vm8110, %v8104, 0
    %8114 = vmatprep.subr.bf16.mxu0 0
    %8115 = vmatpush1.bf16.msra.mxu0 0
    %8116 = vmatprep.subr.bf16.mxu0 0
    %8117 = vmatpush1.bf16.msra.mxu0 0
    %8118 = vmatprep.subr.bf16.mxu0 0
    %8119 = vmatpush1.bf16.msra.mxu0 0
    %8120 = vmatprep.subr.bf16.mxu0 0
    %8121 = vmatpush1.bf16.msra.mxu0 0
    %8122 = vmatprep.subr.bf16.mxu0 0
    %8123 = vmatpush1.bf16.msra.mxu0 0
    %8124 = vmatprep.subr.bf16.mxu0 0
    %8125 = vmatpush1.bf16.msra.mxu0 0
    %8126 = vmatprep.subr.bf16.mxu0 0
    %8127 = vmatpush1.bf16.msra.mxu0 0
    %8128 = vmatprep.subr.bf16.mxu0 0
    %8129 = vmatpush1.bf16.msra.mxu0 %v8112
    %8130 = vmatprep.subr.bf16.mxu0 0
    %8131 = vmatpush2.bf16.msra.mxu0 0
    %8132 = vmatprep.subr.bf16.mxu0 0
    %8133 = vmatpush2.bf16.msra.mxu0 0
    %8134 = vmatprep.subr.bf16.mxu0 0
    %8135 = vmatpush2.bf16.msra.mxu0 0
    %8136 = vmatprep.subr.bf16.mxu0 0
    %8137 = vmatpush2.bf16.msra.mxu0 0
    %8138 = vmatprep.subr.bf16.mxu0 0
    %8139 = vmatpush2.bf16.msra.mxu0 0
    %8140 = vmatprep.subr.bf16.mxu0 0
    %8141 = vmatpush2.bf16.msra.mxu0 0
    %8142 = vmatprep.subr.bf16.mxu0 0
    %8143 = vmatpush2.bf16.msra.mxu0 0
    %8144 = vmatprep.subr.bf16.mxu0 0
    %8145 = vmatpush2.bf16.msra.mxu0 0
    %8146 = vmatprep.mubr.bf16.mxu0 0
    %8147 = vmatmul.mubr.bf16.gmra.mxu0 %v8108
    %v8148 = vpop.f32.mrf.mxu0
    %v8149 = vadd.f32 0.0, %v8148
    %v8150 = vpop.f32.mrf.mxu0
    %v8151 = vpop.f32.mrf.mxu0
    %v8152 = vpop.f32.mrf.mxu0
    %8153 = vdwg.mxu0
    %s8154 = scalar_lea.vmem %s41, 2
    %v8155 = vld [vmem:[%s8154] sm:$0x3]
    %v8157 = vsel %vm8106, %v8155, 0
    %8159 = vmatprep.subr.bf16.mxu0 0
    %8160 = vmatpush1.bf16.msra.mxu0 0
    %8161 = vmatprep.subr.bf16.mxu0 0
    %8162 = vmatpush1.bf16.msra.mxu0 0
    %8163 = vmatprep.subr.bf16.mxu0 0
    %8164 = vmatpush1.bf16.msra.mxu0 0
    %8165 = vmatprep.subr.bf16.mxu0 0
    %8166 = vmatpush1.bf16.msra.mxu0 0
    %8167 = vmatprep.subr.bf16.mxu0 0
    %8168 = vmatpush1.bf16.msra.mxu0 0
    %8169 = vmatprep.subr.bf16.mxu0 0
    %8170 = vmatpush1.bf16.msra.mxu0 0
    %8171 = vmatprep.subr.bf16.mxu0 0
    %8172 = vmatpush1.bf16.msra.mxu0 0
    %8173 = vmatprep.subr.bf16.mxu0 0
    %8174 = vmatpush1.bf16.msra.mxu0 %v8112
    %8175 = vmatprep.subr.bf16.mxu0 0
    %8176 = vmatpush2.bf16.msra.mxu0 0
    %8177 = vmatprep.subr.bf16.mxu0 0
    %8178 = vmatpush2.bf16.msra.mxu0 0
    %8179 = vmatprep.subr.bf16.mxu0 0
    %8180 = vmatpush2.bf16.msra.mxu0 0
    %8181 = vmatprep.subr.bf16.mxu0 0
    %8182 = vmatpush2.bf16.msra.mxu0 0
    %8183 = vmatprep.subr.bf16.mxu0 0
    %8184 = vmatpush2.bf16.msra.mxu0 0
    %8185 = vmatprep.subr.bf16.mxu0 0
    %8186 = vmatpush2.bf16.msra.mxu0 0
    %8187 = vmatprep.subr.bf16.mxu0 0
    %8188 = vmatpush2.bf16.msra.mxu0 0
    %8189 = vmatprep.subr.bf16.mxu0 0
    %8190 = vmatpush2.bf16.msra.mxu0 0
    %8191 = vmatprep.mubr.bf16.mxu0 0
    %8192 = vmatmul.mubr.bf16.gmra.mxu0 %v8157
    %v8193 = vpop.f32.mrf.mxu0
    %v8194 = vadd.f32 0.0, %v8193
    %v8195 = vpop.f32.mrf.mxu0
    %v8196 = vpop.f32.mrf.mxu0
    %v8197 = vpop.f32.mrf.mxu0
    %8198 = vdwg.mxu0
    %v8199 = vmax.f32 %v8149, %v8194
    %8200 = vst [vmem:[#allocation8] sm:$0xff] 0
    %v8201 = vpack.c.bf16 %v8199, %v8199
    %v8203 = vunpack.c.l.b16 %v8201
    %v8204 = vpack.c.b16 %v8203, %v8203
    %v8206 = vshrl.u32 %v8204, 16
    %v8208 = vrot.slane %v8206, 7
    %v8209 = vshll.u32 %v8204, 16
    %v8211 = vor.u32 %v8208, %v8209
    %8212 = vrot.lane.b32.xlu0 %v8211, 64
    %v8213 = vpop.permute.xlu0 %8212
    %v8214 = vrot.slane %v8213, 4
    %v8215 = vsel %vm6465, %v8214, %v8213
    %vm8217 = vsmask.f32 1282
    %vm8218 = vmand %vm6532, %vm8217
    %vm8219 = vcmask 521220
    %vm8220 = vsmask.f32 5394
    %vm8221 = vmand %vm8219, %vm8220
    %vm8222 = vmor %vm8221, %vm8218
    %v8223 = vld [vmem:[#allocation8] sm:$0x33]
    %v8224 = vsel %vm8222, %v8215, %v8223
    %8225 = vst [vmem:[#allocation8] sm:$0x33] %v8224
    %v8226 = vrot.slane %v8206, 6
    %v8227 = vrot.slane %v8209, 7
    %v8228 = vor.u32 %v8226, %v8227
    %8229 = vrot.lane.b32.xlu0 %v8228, 64
    %v8230 = vpop.permute.xlu0 %8229
    %v8231 = vrot.slane %v8230, 4
    %v8232 = vsel %vm6465, %v8231, %v8230
    %vm8234 = vcmask 1043970
    %vm8235 = vsmask.f32 3338
    %vm8236 = vmand %vm8234, %vm8235
    %vm8237 = vcmask 523270
    %vm8238 = vsmask.f32 7450
    %vm8239 = vmand %vm8237, %vm8238
    %vm8240 = vmor %vm8239, %vm8236
    %v8241 = vld [vmem:[#allocation8] sm:$0xcc]
    %v8242 = vsel %vm8240, %v8232, %v8241
    %8243 = vst [vmem:[#allocation8] sm:$0xcc] %v8242
    %v8244 = vld [vmem:[#allocation8] sm:$0x77]
    %v8245 = vld [vmem:[#allocation36] sm:$0xf]
    %v8246 = vld [vmem:[#allocation36 + $0x4] sm:$0xf]
    %v8247 = vld [vmem:[#allocation36 + $0x8] sm:$0xf]
    %v8248 = vld [vmem:[#allocation36 + $0xc] sm:$0xf]
    %v8249 = vld [vmem:[#allocation36 + $0x10] sm:$0xf]
    %v8250 = vld [vmem:[#allocation36 + $0x14] sm:$0xf]
    %v8251 = vld [vmem:[#allocation36 + $0x18] sm:$0xf]
    %v8252 = vld [vmem:[#allocation36 + $0x1c] sm:$0xf]
    %v8253 = vld [vmem:[#allocation36 + $0x20] sm:$0xf]
    %v8254 = vld [vmem:[#allocation36 + $0x24] sm:$0xf]
    %v8255 = vld [vmem:[#allocation36 + $0x28] sm:$0xf]
    %v8256 = vld [vmem:[#allocation36 + $0x2c] sm:$0xf]
    %v8257 = vld [vmem:[#allocation36 + $0x30] sm:$0xf]
    %v8258 = vld [vmem:[#allocation36 + $0x34] sm:$0xf]
    %v8259 = vld [vmem:[#allocation36 + $0x38] sm:$0xf]
    %v8260 = vld [vmem:[#allocation36 + $0x3c] sm:$0xf]
    %v8261 = vld [vmem:[#allocation36 + $0x40] sm:$0xf]
    %v8262 = vld [vmem:[#allocation36 + $0x44] sm:$0xf]
    %v8263 = vld [vmem:[#allocation36 + $0x48] sm:$0xf]
    %v8264 = vld [vmem:[#allocation36 + $0x4c] sm:$0xf]
    %v8265 = vld [vmem:[#allocation36 + $0x50] sm:$0xf]
    %v8266 = vld [vmem:[#allocation36 + $0x54] sm:$0xf]
    %v8267 = vld [vmem:[#allocation36 + $0x58] sm:$0xf]
    %v8268 = vld [vmem:[#allocation36 + $0x5c] sm:$0xf]
    %v8269 = vld [vmem:[#allocation36 + $0x60] sm:$0xf]
    %v8270 = vld [vmem:[#allocation36 + $0x64] sm:$0xf]
    %v8271 = vld [vmem:[#allocation36 + $0x68] sm:$0xf]
    %v8272 = vld [vmem:[#allocation36 + $0x6c] sm:$0xf]
    %v8273 = vld [vmem:[#allocation36 + $0x70] sm:$0xf]
    %v8274 = vld [vmem:[#allocation36 + $0x74] sm:$0xf]
    %v8275 = vld [vmem:[#allocation36 + $0x78] sm:$0xf]
    %v8276 = vld [vmem:[#allocation36 + $0x7c] sm:$0xf]
    %v8277 = vld [vmem:[#allocation8] sm:$0xff]
    %s8278 = scalar_lea.vmem [#allocation36], 128
    %v8279 = vld [vmem:[%s8278] sm:$0xf]
    %v8280 = vld [vmem:[%s8278 + $0x4] sm:$0xf]
    %v8281 = vld [vmem:[%s8278 + $0x8] sm:$0xf]
    %v8282 = vld [vmem:[%s8278 + $0xc] sm:$0xf]
    %v8283 = vld [vmem:[%s8278 + $0x10] sm:$0xf]
    %v8284 = vld [vmem:[%s8278 + $0x14] sm:$0xf]
    %v8285 = vld [vmem:[%s8278 + $0x18] sm:$0xf]
    %v8286 = vld [vmem:[%s8278 + $0x1c] sm:$0xf]
    %v8287 = vld [vmem:[%s8278 + $0x20] sm:$0xf]
    %v8288 = vld [vmem:[%s8278 + $0x24] sm:$0xf]
    %v8289 = vld [vmem:[%s8278 + $0x28] sm:$0xf]
    %v8290 = vld [vmem:[%s8278 + $0x2c] sm:$0xf]
    %v8291 = vld [vmem:[%s8278 + $0x30] sm:$0xf]
    %v8292 = vld [vmem:[%s8278 + $0x34] sm:$0xf]
    %v8293 = vld [vmem:[%s8278 + $0x38] sm:$0xf]
    %v8294 = vld [vmem:[%s8278 + $0x3c] sm:$0xf]
    %v8295 = vld [vmem:[%s8278 + $0x40] sm:$0xf]
    %v8296 = vld [vmem:[%s8278 + $0x44] sm:$0xf]
    %v8297 = vld [vmem:[%s8278 + $0x48] sm:$0xf]
    %v8298 = vld [vmem:[%s8278 + $0x4c] sm:$0xf]
    %v8299 = vld [vmem:[%s8278 + $0x50] sm:$0xf]
    %v8300 = vld [vmem:[%s8278 + $0x54] sm:$0xf]
    %v8301 = vld [vmem:[%s8278 + $0x58] sm:$0xf]
    %v8302 = vld [vmem:[%s8278 + $0x5c] sm:$0xf]
    %v8303 = vld [vmem:[%s8278 + $0x60] sm:$0xf]
    %v8304 = vld [vmem:[%s8278 + $0x64] sm:$0xf]
    %v8305 = vld [vmem:[%s8278 + $0x68] sm:$0xf]
    %v8306 = vld [vmem:[%s8278 + $0x6c] sm:$0xf]
    %v8307 = vld [vmem:[%s8278 + $0x70] sm:$0xf]
    %v8308 = vld [vmem:[%s8278 + $0x74] sm:$0xf]
    %v8309 = vld [vmem:[%s8278 + $0x78] sm:$0xf]
    %v8310 = vld [vmem:[%s8278 + $0x7c] sm:$0xf]
    %v8312 = vunpack.c.l.b16 %v8277
    %v8313 = vunpack.c.h.b16 %v8277
    %v8314 = vpack.c.b16 %v8312, %v8312
    %v8315 = vpack.c.b16 %v8313, %v8313
    %v8317 = vshrl.u32 %v8314, 16
    %v8319 = vshll.u32 %v8314, 16
    %v8321 = vrot.slane %v8319, 1
    %v8322 = vor.u32 %v8317, %v8321
    %v8324 = vshrl.u32 %v8315, 16
    %v8326 = vshll.u32 %v8315, 16
    %v8328 = vrot.slane %v8326, 1
    %v8329 = vor.u32 %v8324, %v8328
    %v8364 = vunpack.c.l.b16 %v8279
    %v8365 = vunpack.c.l.b16 %v8280
    %v8366 = vunpack.c.l.b16 %v8281
    %v8367 = vunpack.c.l.b16 %v8282
    %v8368 = vunpack.c.l.b16 %v8283
    %v8369 = vunpack.c.l.b16 %v8284
    %v8370 = vunpack.c.l.b16 %v8285
    %v8371 = vunpack.c.l.b16 %v8286
    %v8372 = vunpack.c.l.b16 %v8287
    %v8373 = vunpack.c.l.b16 %v8288
    %v8374 = vunpack.c.l.b16 %v8289
    %v8375 = vunpack.c.l.b16 %v8290
    %v8376 = vunpack.c.l.b16 %v8291
    %v8377 = vunpack.c.l.b16 %v8292
    %v8378 = vunpack.c.l.b16 %v8293
    %v8379 = vunpack.c.l.b16 %v8294
    %v8380 = vunpack.c.l.b16 %v8295
    %v8381 = vunpack.c.l.b16 %v8296
    %v8382 = vunpack.c.l.b16 %v8297
    %v8383 = vunpack.c.l.b16 %v8298
    %v8384 = vunpack.c.l.b16 %v8299
    %v8385 = vunpack.c.l.b16 %v8300
    %v8386 = vunpack.c.l.b16 %v8301
    %v8387 = vunpack.c.l.b16 %v8302
    %v8388 = vunpack.c.l.b16 %v8303
    %v8389 = vunpack.c.l.b16 %v8304
    %v8390 = vunpack.c.l.b16 %v8305
    %v8391 = vunpack.c.l.b16 %v8306
    %v8392 = vunpack.c.l.b16 %v8307
    %v8393 = vunpack.c.l.b16 %v8308
    %v8394 = vunpack.c.l.b16 %v8309
    %v8395 = vunpack.c.l.b16 %v8310
    %v8396 = vpack.c.b16 %v8365, %v8364
    %v8397 = vpack.c.b16 %v8367, %v8366
    %v8398 = vpack.c.b16 %v8369, %v8368
    %v8399 = vpack.c.b16 %v8371, %v8370
    %v8400 = vpack.c.b16 %v8373, %v8372
    %v8401 = vpack.c.b16 %v8375, %v8374
    %v8402 = vpack.c.b16 %v8377, %v8376
    %v8403 = vpack.c.b16 %v8379, %v8378
    %v8404 = vpack.c.b16 %v8381, %v8380
    %v8405 = vpack.c.b16 %v8383, %v8382
    %v8406 = vpack.c.b16 %v8385, %v8384
    %v8407 = vpack.c.b16 %v8387, %v8386
    %v8408 = vpack.c.b16 %v8389, %v8388
    %v8409 = vpack.c.b16 %v8391, %v8390
    %v8410 = vpack.c.b16 %v8393, %v8392
    %v8411 = vpack.c.b16 %v8395, %v8394
    %8428 = vmatprep.subr.bf16.mxu0 0
    %8429 = vmatpush1.bf16.msra.mxu0 %v8403
    %8430 = vmatprep.subr.bf16.mxu0 0
    %8431 = vmatpush1.bf16.msra.mxu0 %v8402
    %8432 = vmatprep.subr.bf16.mxu0 0
    %8433 = vmatpush1.bf16.msra.mxu0 %v8401
    %8434 = vmatprep.subr.bf16.mxu0 0
    %8435 = vmatpush1.bf16.msra.mxu0 %v8400
    %8436 = vmatprep.subr.bf16.mxu0 0
    %8437 = vmatpush1.bf16.msra.mxu0 %v8399
    %8438 = vmatprep.subr.bf16.mxu0 0
    %8439 = vmatpush1.bf16.msra.mxu0 %v8398
    %8440 = vmatprep.subr.bf16.mxu0 0
    %8441 = vmatpush1.bf16.msra.mxu0 %v8397
    %8442 = vmatprep.subr.bf16.mxu0 0
    %8443 = vmatpush1.bf16.msra.mxu0 %v8396
    %8444 = vmatprep.subr.bf16.mxu0 0
    %8445 = vmatpush2.bf16.msra.mxu0 %v8411
    %8446 = vmatprep.subr.bf16.mxu0 0
    %8447 = vmatpush2.bf16.msra.mxu0 %v8410
    %8448 = vmatprep.subr.bf16.mxu0 0
    %8449 = vmatpush2.bf16.msra.mxu0 %v8409
    %8450 = vmatprep.subr.bf16.mxu0 0
    %8451 = vmatpush2.bf16.msra.mxu0 %v8408
    %8452 = vmatprep.subr.bf16.mxu0 0
    %8453 = vmatpush2.bf16.msra.mxu0 %v8407
    %8454 = vmatprep.subr.bf16.mxu0 0
    %8455 = vmatpush2.bf16.msra.mxu0 %v8406
    %8456 = vmatprep.subr.bf16.mxu0 0
    %8457 = vmatpush2.bf16.msra.mxu0 %v8405
    %8458 = vmatprep.subr.bf16.mxu0 0
    %8459 = vmatpush2.bf16.msra.mxu0 %v8404
    %8460 = vmatprep.mubr.bf16.mxu0 %v8329
    %8461 = vmatmul.mubr.bf16.gmra.mxu0 %v8322
    %v8462 = vpop.f32.mrf.mxu0
    %v8463 = vadd.f32 0.0, %v8462
    %v8464 = vpop.f32.mrf.mxu0
    %v8465 = vpop.f32.mrf.mxu0
    %v8466 = vpop.f32.mrf.mxu0
    %8467 = vdwg.mxu0
    %v8469 = vunpack.c.l.b16 %v8244
    %v8470 = vunpack.c.h.b16 %v8244
    %v8471 = vpack.c.b16 %v8469, %v8469
    %v8472 = vpack.c.b16 %v8470, %v8470
    %v8507 = vunpack.c.l.b16 %v8245
    %v8508 = vunpack.c.l.b16 %v8246
    %v8509 = vunpack.c.l.b16 %v8247
    %v8510 = vunpack.c.l.b16 %v8248
    %v8511 = vunpack.c.l.b16 %v8249
    %v8512 = vunpack.c.l.b16 %v8250
    %v8513 = vunpack.c.l.b16 %v8251
    %v8514 = vunpack.c.l.b16 %v8252
    %v8515 = vunpack.c.l.b16 %v8253
    %v8516 = vunpack.c.l.b16 %v8254
    %v8517 = vunpack.c.l.b16 %v8255
    %v8518 = vunpack.c.l.b16 %v8256
    %v8519 = vunpack.c.l.b16 %v8257
    %v8520 = vunpack.c.l.b16 %v8258
    %v8521 = vunpack.c.l.b16 %v8259
    %v8522 = vunpack.c.l.b16 %v8260
    %v8523 = vunpack.c.l.b16 %v8261
    %v8524 = vunpack.c.l.b16 %v8262
    %v8525 = vunpack.c.l.b16 %v8263
    %v8526 = vunpack.c.l.b16 %v8264
    %v8527 = vunpack.c.l.b16 %v8265
    %v8528 = vunpack.c.l.b16 %v8266
    %v8529 = vunpack.c.l.b16 %v8267
    %v8530 = vunpack.c.l.b16 %v8268
    %v8531 = vunpack.c.l.b16 %v8269
    %v8532 = vunpack.c.l.b16 %v8270
    %v8533 = vunpack.c.l.b16 %v8271
    %v8534 = vunpack.c.l.b16 %v8272
    %v8535 = vunpack.c.l.b16 %v8273
    %v8536 = vunpack.c.l.b16 %v8274
    %v8537 = vunpack.c.l.b16 %v8275
    %v8538 = vunpack.c.l.b16 %v8276
    %v8539 = vpack.c.b16 %v8508, %v8507
    %v8540 = vpack.c.b16 %v8510, %v8509
    %v8541 = vpack.c.b16 %v8512, %v8511
    %v8542 = vpack.c.b16 %v8514, %v8513
    %v8543 = vpack.c.b16 %v8516, %v8515
    %v8544 = vpack.c.b16 %v8518, %v8517
    %v8545 = vpack.c.b16 %v8520, %v8519
    %v8546 = vpack.c.b16 %v8522, %v8521
    %v8547 = vpack.c.b16 %v8524, %v8523
    %v8548 = vpack.c.b16 %v8526, %v8525
    %v8549 = vpack.c.b16 %v8528, %v8527
    %v8550 = vpack.c.b16 %v8530, %v8529
    %v8551 = vpack.c.b16 %v8532, %v8531
    %v8552 = vpack.c.b16 %v8534, %v8533
    %v8553 = vpack.c.b16 %v8536, %v8535
    %v8554 = vpack.c.b16 %v8538, %v8537
    %8571 = vmatprep.subr.bf16.mxu0 0
    %8572 = vmatpush1.bf16.msra.mxu0 %v8546
    %8573 = vmatprep.subr.bf16.mxu0 0
    %8574 = vmatpush1.bf16.msra.mxu0 %v8545
    %8575 = vmatprep.subr.bf16.mxu0 0
    %8576 = vmatpush1.bf16.msra.mxu0 %v8544
    %8577 = vmatprep.subr.bf16.mxu0 0
    %8578 = vmatpush1.bf16.msra.mxu0 %v8543
    %8579 = vmatprep.subr.bf16.mxu0 0
    %8580 = vmatpush1.bf16.msra.mxu0 %v8542
    %8581 = vmatprep.subr.bf16.mxu0 0
    %8582 = vmatpush1.bf16.msra.mxu0 %v8541
    %8583 = vmatprep.subr.bf16.mxu0 0
    %8584 = vmatpush1.bf16.msra.mxu0 %v8540
    %8585 = vmatprep.subr.bf16.mxu0 0
    %8586 = vmatpush1.bf16.msra.mxu0 %v8539
    %8587 = vmatprep.subr.bf16.mxu0 0
    %8588 = vmatpush2.bf16.msra.mxu0 %v8554
    %8589 = vmatprep.subr.bf16.mxu0 0
    %8590 = vmatpush2.bf16.msra.mxu0 %v8553
    %8591 = vmatprep.subr.bf16.mxu0 0
    %8592 = vmatpush2.bf16.msra.mxu0 %v8552
    %8593 = vmatprep.subr.bf16.mxu0 0
    %8594 = vmatpush2.bf16.msra.mxu0 %v8551
    %8595 = vmatprep.subr.bf16.mxu0 0
    %8596 = vmatpush2.bf16.msra.mxu0 %v8550
    %8597 = vmatprep.subr.bf16.mxu0 0
    %8598 = vmatpush2.bf16.msra.mxu0 %v8549
    %8599 = vmatprep.subr.bf16.mxu0 0
    %8600 = vmatpush2.bf16.msra.mxu0 %v8548
    %8601 = vmatprep.subr.bf16.mxu0 0
    %8602 = vmatpush2.bf16.msra.mxu0 %v8547
    %8603 = vmatprep.mubr.bf16.mxu0 %v8472
    %8604 = vmatmul.mubr.bf16.gmra.mxu0 %v8471
    %v8605 = vpop.f32.mrf.mxu0
    %v8606 = vadd.f32 %v8463, %v8605
    %v8607 = vpop.f32.mrf.mxu0
    %v8608 = vpop.f32.mrf.mxu0
    %v8609 = vpop.f32.mrf.mxu0
    %8610 = vdwg.mxu0
    %v8611 = vld [vmem:[#allocation8] sm:$0xee]
    %s8612 = scalar_lea.vmem [#allocation36], 256
    %v8613 = vld [vmem:[%s8612] sm:$0xf]
    %v8614 = vld [vmem:[%s8612 + $0x4] sm:$0xf]
    %v8615 = vld [vmem:[%s8612 + $0x8] sm:$0xf]
    %v8616 = vld [vmem:[%s8612 + $0xc] sm:$0xf]
    %v8617 = vld [vmem:[%s8612 + $0x10] sm:$0xf]
    %v8618 = vld [vmem:[%s8612 + $0x14] sm:$0xf]
    %v8619 = vld [vmem:[%s8612 + $0x18] sm:$0xf]
    %v8620 = vld [vmem:[%s8612 + $0x1c] sm:$0xf]
    %v8621 = vld [vmem:[%s8612 + $0x20] sm:$0xf]
    %v8622 = vld [vmem:[%s8612 + $0x24] sm:$0xf]
    %v8623 = vld [vmem:[%s8612 + $0x28] sm:$0xf]
    %v8624 = vld [vmem:[%s8612 + $0x2c] sm:$0xf]
    %v8625 = vld [vmem:[%s8612 + $0x30] sm:$0xf]
    %v8626 = vld [vmem:[%s8612 + $0x34] sm:$0xf]
    %v8627 = vld [vmem:[%s8612 + $0x38] sm:$0xf]
    %v8628 = vld [vmem:[%s8612 + $0x3c] sm:$0xf]
    %v8629 = vld [vmem:[%s8612 + $0x40] sm:$0xf]
    %v8630 = vld [vmem:[%s8612 + $0x44] sm:$0xf]
    %v8631 = vld [vmem:[%s8612 + $0x48] sm:$0xf]
    %v8632 = vld [vmem:[%s8612 + $0x4c] sm:$0xf]
    %v8633 = vld [vmem:[%s8612 + $0x50] sm:$0xf]
    %v8634 = vld [vmem:[%s8612 + $0x54] sm:$0xf]
    %v8635 = vld [vmem:[%s8612 + $0x58] sm:$0xf]
    %v8636 = vld [vmem:[%s8612 + $0x5c] sm:$0xf]
    %v8637 = vld [vmem:[%s8612 + $0x60] sm:$0xf]
    %v8638 = vld [vmem:[%s8612 + $0x64] sm:$0xf]
    %v8639 = vld [vmem:[%s8612 + $0x68] sm:$0xf]
    %v8640 = vld [vmem:[%s8612 + $0x6c] sm:$0xf]
    %v8641 = vld [vmem:[%s8612 + $0x70] sm:$0xf]
    %v8642 = vld [vmem:[%s8612 + $0x74] sm:$0xf]
    %v8643 = vld [vmem:[%s8612 + $0x78] sm:$0xf]
    %v8644 = vld [vmem:[%s8612 + $0x7c] sm:$0xf]
    %v8646 = vunpack.c.l.b16 %v8611
    %v8647 = vunpack.c.h.b16 %v8611
    %v8648 = vpack.c.b16 %v8646, %v8646
    %v8649 = vpack.c.b16 %v8647, %v8647
    %v8650 = vrot.slane %v8648, 1
    %v8651 = vrot.slane %v8649, 1
    %v8686 = vunpack.c.l.b16 %v8613
    %v8687 = vunpack.c.l.b16 %v8614
    %v8688 = vunpack.c.l.b16 %v8615
    %v8689 = vunpack.c.l.b16 %v8616
    %v8690 = vunpack.c.l.b16 %v8617
    %v8691 = vunpack.c.l.b16 %v8618
    %v8692 = vunpack.c.l.b16 %v8619
    %v8693 = vunpack.c.l.b16 %v8620
    %v8694 = vunpack.c.l.b16 %v8621
    %v8695 = vunpack.c.l.b16 %v8622
    %v8696 = vunpack.c.l.b16 %v8623
    %v8697 = vunpack.c.l.b16 %v8624
    %v8698 = vunpack.c.l.b16 %v8625
    %v8699 = vunpack.c.l.b16 %v8626
    %v8700 = vunpack.c.l.b16 %v8627
    %v8701 = vunpack.c.l.b16 %v8628
    %v8702 = vunpack.c.l.b16 %v8629
    %v8703 = vunpack.c.l.b16 %v8630
    %v8704 = vunpack.c.l.b16 %v8631
    %v8705 = vunpack.c.l.b16 %v8632
    %v8706 = vunpack.c.l.b16 %v8633
    %v8707 = vunpack.c.l.b16 %v8634
    %v8708 = vunpack.c.l.b16 %v8635
    %v8709 = vunpack.c.l.b16 %v8636
    %v8710 = vunpack.c.l.b16 %v8637
    %v8711 = vunpack.c.l.b16 %v8638
    %v8712 = vunpack.c.l.b16 %v8639
    %v8713 = vunpack.c.l.b16 %v8640
    %v8714 = vunpack.c.l.b16 %v8641
    %v8715 = vunpack.c.l.b16 %v8642
    %v8716 = vunpack.c.l.b16 %v8643
    %v8717 = vunpack.c.l.b16 %v8644
    %v8718 = vpack.c.b16 %v8687, %v8686
    %v8719 = vpack.c.b16 %v8689, %v8688
    %v8720 = vpack.c.b16 %v8691, %v8690
    %v8721 = vpack.c.b16 %v8693, %v8692
    %v8722 = vpack.c.b16 %v8695, %v8694
    %v8723 = vpack.c.b16 %v8697, %v8696
    %v8724 = vpack.c.b16 %v8699, %v8698
    %v8725 = vpack.c.b16 %v8701, %v8700
    %v8726 = vpack.c.b16 %v8703, %v8702
    %v8727 = vpack.c.b16 %v8705, %v8704
    %v8728 = vpack.c.b16 %v8707, %v8706
    %v8729 = vpack.c.b16 %v8709, %v8708
    %v8730 = vpack.c.b16 %v8711, %v8710
    %v8731 = vpack.c.b16 %v8713, %v8712
    %v8732 = vpack.c.b16 %v8715, %v8714
    %v8733 = vpack.c.b16 %v8717, %v8716
    %8750 = vmatprep.subr.bf16.mxu0 0
    %8751 = vmatpush1.bf16.msra.mxu0 %v8725
    %8752 = vmatprep.subr.bf16.mxu0 0
    %8753 = vmatpush1.bf16.msra.mxu0 %v8724
    %8754 = vmatprep.subr.bf16.mxu0 0
    %8755 = vmatpush1.bf16.msra.mxu0 %v8723
    %8756 = vmatprep.subr.bf16.mxu0 0
    %8757 = vmatpush1.bf16.msra.mxu0 %v8722
    %8758 = vmatprep.subr.bf16.mxu0 0
    %8759 = vmatpush1.bf16.msra.mxu0 %v8721
    %8760 = vmatprep.subr.bf16.mxu0 0
    %8761 = vmatpush1.bf16.msra.mxu0 %v8720
    %8762 = vmatprep.subr.bf16.mxu0 0
    %8763 = vmatpush1.bf16.msra.mxu0 %v8719
    %8764 = vmatprep.subr.bf16.mxu0 0
    %8765 = vmatpush1.bf16.msra.mxu0 %v8718
    %8766 = vmatprep.subr.bf16.mxu0 0
    %8767 = vmatpush2.bf16.msra.mxu0 %v8733
    %8768 = vmatprep.subr.bf16.mxu0 0
    %8769 = vmatpush2.bf16.msra.mxu0 %v8732
    %8770 = vmatprep.subr.bf16.mxu0 0
    %8771 = vmatpush2.bf16.msra.mxu0 %v8731
    %8772 = vmatprep.subr.bf16.mxu0 0
    %8773 = vmatpush2.bf16.msra.mxu0 %v8730
    %8774 = vmatprep.subr.bf16.mxu0 0
    %8775 = vmatpush2.bf16.msra.mxu0 %v8729
    %8776 = vmatprep.subr.bf16.mxu0 0
    %8777 = vmatpush2.bf16.msra.mxu0 %v8728
    %8778 = vmatprep.subr.bf16.mxu0 0
    %8779 = vmatpush2.bf16.msra.mxu0 %v8727
    %8780 = vmatprep.subr.bf16.mxu0 0
    %8781 = vmatpush2.bf16.msra.mxu0 %v8726
    %8782 = vmatprep.mubr.bf16.mxu0 %v8651
    %8783 = vmatmul.mubr.bf16.gmra.mxu0 %v8650
    %v8784 = vpop.f32.mrf.mxu0
    %v8785 = vadd.f32 0.0, %v8784
    %v8786 = vpop.f32.mrf.mxu0
    %v8787 = vpop.f32.mrf.mxu0
    %v8788 = vpop.f32.mrf.mxu0
    %8789 = vdwg.mxu0
    %v8790 = vadd.f32 %v8606, %v8785
    %v8791 = vld [vmem:[#allocation37] sm:$0x1]
    %v8793 = vlaneseq
    %v8794 = vshrl.u32 %v8793, 7
    %v8795 = vsub.s32 0, %v8794
    %v8796 = vrot.slane %v8791, %v8795
    %v8798 = vadd.f32 %v8790, %v8796
    %v8799 = vmax.f32 %v8798, 0.0
    %8800 = vst [vmem:[#allocation9] sm:$0xff] 0
    %v8801 = vpack.c.bf16 %v8799, %v8799
    %v8803 = vunpack.c.l.b16 %v8801
    %v8804 = vpack.c.b16 %v8803, %v8803
    %v8806 = vshrl.u32 %v8804, 16
    %v8808 = vrot.slane %v8806, 7
    %v8809 = vshll.u32 %v8804, 16
    %v8811 = vor.u32 %v8808, %v8809
    %8812 = vrot.lane.b32.xlu0 %v8811, 64
    %v8813 = vpop.permute.xlu0 %8812
    %v8814 = vrot.slane %v8813, 4
    %v8815 = vsel %vm6465, %v8814, %v8813
    %v8817 = vld [vmem:[#allocation9] sm:$0x33]
    %v8818 = vsel %vm8222, %v8815, %v8817
    %8819 = vst [vmem:[#allocation9] sm:$0x33] %v8818
    %v8820 = vld [vmem:[#allocation9] sm:$0xcc]
    %v8821 = vsel %vm8240, %v8815, %v8820
    %8822 = vst [vmem:[#allocation9] sm:$0xcc] %v8821
    %v8823 = vld [vmem:[#allocation9] sm:$0x77]
    %v8824 = vld [vmem:[#allocation39] sm:$0xf]
    %v8825 = vld [vmem:[#allocation39 + $0x4] sm:$0xf]
    %v8826 = vld [vmem:[#allocation39 + $0x8] sm:$0xf]
    %v8827 = vld [vmem:[#allocation39 + $0xc] sm:$0xf]
    %v8828 = vld [vmem:[#allocation39 + $0x10] sm:$0xf]
    %v8829 = vld [vmem:[#allocation39 + $0x14] sm:$0xf]
    %v8830 = vld [vmem:[#allocation39 + $0x18] sm:$0xf]
    %v8831 = vld [vmem:[#allocation39 + $0x1c] sm:$0xf]
    %v8832 = vld [vmem:[#allocation39 + $0x20] sm:$0xf]
    %v8833 = vld [vmem:[#allocation39 + $0x24] sm:$0xf]
    %v8834 = vld [vmem:[#allocation39 + $0x28] sm:$0xf]
    %v8835 = vld [vmem:[#allocation39 + $0x2c] sm:$0xf]
    %v8836 = vld [vmem:[#allocation39 + $0x30] sm:$0xf]
    %v8837 = vld [vmem:[#allocation39 + $0x34] sm:$0xf]
    %v8838 = vld [vmem:[#allocation39 + $0x38] sm:$0xf]
    %v8839 = vld [vmem:[#allocation39 + $0x3c] sm:$0xf]
    %v8840 = vld [vmem:[#allocation39 + $0x40] sm:$0xf]
    %v8841 = vld [vmem:[#allocation39 + $0x44] sm:$0xf]
    %v8842 = vld [vmem:[#allocation39 + $0x48] sm:$0xf]
    %v8843 = vld [vmem:[#allocation39 + $0x4c] sm:$0xf]
    %v8844 = vld [vmem:[#allocation39 + $0x50] sm:$0xf]
    %v8845 = vld [vmem:[#allocation39 + $0x54] sm:$0xf]
    %v8846 = vld [vmem:[#allocation39 + $0x58] sm:$0xf]
    %v8847 = vld [vmem:[#allocation39 + $0x5c] sm:$0xf]
    %v8848 = vld [vmem:[#allocation39 + $0x60] sm:$0xf]
    %v8849 = vld [vmem:[#allocation39 + $0x64] sm:$0xf]
    %v8850 = vld [vmem:[#allocation39 + $0x68] sm:$0xf]
    %v8851 = vld [vmem:[#allocation39 + $0x6c] sm:$0xf]
    %v8852 = vld [vmem:[#allocation39 + $0x70] sm:$0xf]
    %v8853 = vld [vmem:[#allocation39 + $0x74] sm:$0xf]
    %v8854 = vld [vmem:[#allocation39 + $0x78] sm:$0xf]
    %v8855 = vld [vmem:[#allocation39 + $0x7c] sm:$0xf]
    %v8856 = vld [vmem:[#allocation9] sm:$0xff]
    %s8857 = scalar_lea.vmem [#allocation39], 128
    %v8858 = vld [vmem:[%s8857] sm:$0xf]
    %v8859 = vld [vmem:[%s8857 + $0x4] sm:$0xf]
    %v8860 = vld [vmem:[%s8857 + $0x8] sm:$0xf]
    %v8861 = vld [vmem:[%s8857 + $0xc] sm:$0xf]
    %v8862 = vld [vmem:[%s8857 + $0x10] sm:$0xf]
    %v8863 = vld [vmem:[%s8857 + $0x14] sm:$0xf]
    %v8864 = vld [vmem:[%s8857 + $0x18] sm:$0xf]
    %v8865 = vld [vmem:[%s8857 + $0x1c] sm:$0xf]
    %v8866 = vld [vmem:[%s8857 + $0x20] sm:$0xf]
    %v8867 = vld [vmem:[%s8857 + $0x24] sm:$0xf]
    %v8868 = vld [vmem:[%s8857 + $0x28] sm:$0xf]
    %v8869 = vld [vmem:[%s8857 + $0x2c] sm:$0xf]
    %v8870 = vld [vmem:[%s8857 + $0x30] sm:$0xf]
    %v8871 = vld [vmem:[%s8857 + $0x34] sm:$0xf]
    %v8872 = vld [vmem:[%s8857 + $0x38] sm:$0xf]
    %v8873 = vld [vmem:[%s8857 + $0x3c] sm:$0xf]
    %v8874 = vld [vmem:[%s8857 + $0x40] sm:$0xf]
    %v8875 = vld [vmem:[%s8857 + $0x44] sm:$0xf]
    %v8876 = vld [vmem:[%s8857 + $0x48] sm:$0xf]
    %v8877 = vld [vmem:[%s8857 + $0x4c] sm:$0xf]
    %v8878 = vld [vmem:[%s8857 + $0x50] sm:$0xf]
    %v8879 = vld [vmem:[%s8857 + $0x54] sm:$0xf]
    %v8880 = vld [vmem:[%s8857 + $0x58] sm:$0xf]
    %v8881 = vld [vmem:[%s8857 + $0x5c] sm:$0xf]
    %v8882 = vld [vmem:[%s8857 + $0x60] sm:$0xf]
    %v8883 = vld [vmem:[%s8857 + $0x64] sm:$0xf]
    %v8884 = vld [vmem:[%s8857 + $0x68] sm:$0xf]
    %v8885 = vld [vmem:[%s8857 + $0x6c] sm:$0xf]
    %v8886 = vld [vmem:[%s8857 + $0x70] sm:$0xf]
    %v8887 = vld [vmem:[%s8857 + $0x74] sm:$0xf]
    %v8888 = vld [vmem:[%s8857 + $0x78] sm:$0xf]
    %v8889 = vld [vmem:[%s8857 + $0x7c] sm:$0xf]
    %v8891 = vunpack.c.l.b16 %v8856
    %v8892 = vunpack.c.h.b16 %v8856
    %v8893 = vpack.c.b16 %v8891, %v8891
    %v8894 = vpack.c.b16 %v8892, %v8892
    %v8896 = vshrl.u32 %v8893, 16
    %v8898 = vshll.u32 %v8893, 16
    %v8900 = vrot.slane %v8898, 1
    %v8901 = vor.u32 %v8896, %v8900
    %v8903 = vshrl.u32 %v8894, 16
    %v8905 = vshll.u32 %v8894, 16
    %v8907 = vrot.slane %v8905, 1
    %v8908 = vor.u32 %v8903, %v8907
    %v8943 = vunpack.c.l.b16 %v8858
    %v8944 = vunpack.c.l.b16 %v8859
    %v8945 = vunpack.c.l.b16 %v8860
    %v8946 = vunpack.c.l.b16 %v8861
    %v8947 = vunpack.c.l.b16 %v8862
    %v8948 = vunpack.c.l.b16 %v8863
    %v8949 = vunpack.c.l.b16 %v8864
    %v8950 = vunpack.c.l.b16 %v8865
    %v8951 = vunpack.c.l.b16 %v8866
    %v8952 = vunpack.c.l.b16 %v8867
    %v8953 = vunpack.c.l.b16 %v8868
    %v8954 = vunpack.c.l.b16 %v8869
    %v8955 = vunpack.c.l.b16 %v8870
    %v8956 = vunpack.c.l.b16 %v8871
    %v8957 = vunpack.c.l.b16 %v8872
    %v8958 = vunpack.c.l.b16 %v8873
    %v8959 = vunpack.c.l.b16 %v8874
    %v8960 = vunpack.c.l.b16 %v8875
    %v8961 = vunpack.c.l.b16 %v8876
    %v8962 = vunpack.c.l.b16 %v8877
    %v8963 = vunpack.c.l.b16 %v8878
    %v8964 = vunpack.c.l.b16 %v8879
    %v8965 = vunpack.c.l.b16 %v8880
    %v8966 = vunpack.c.l.b16 %v8881
    %v8967 = vunpack.c.l.b16 %v8882
    %v8968 = vunpack.c.l.b16 %v8883
    %v8969 = vunpack.c.l.b16 %v8884
    %v8970 = vunpack.c.l.b16 %v8885
    %v8971 = vunpack.c.l.b16 %v8886
    %v8972 = vunpack.c.l.b16 %v8887
    %v8973 = vunpack.c.l.b16 %v8888
    %v8974 = vunpack.c.l.b16 %v8889
    %v8975 = vpack.c.b16 %v8944, %v8943
    %v8976 = vpack.c.b16 %v8946, %v8945
    %v8977 = vpack.c.b16 %v8948, %v8947
    %v8978 = vpack.c.b16 %v8950, %v8949
    %v8979 = vpack.c.b16 %v8952, %v8951
    %v8980 = vpack.c.b16 %v8954, %v8953
    %v8981 = vpack.c.b16 %v8956, %v8955
    %v8982 = vpack.c.b16 %v8958, %v8957
    %v8983 = vpack.c.b16 %v8960, %v8959
    %v8984 = vpack.c.b16 %v8962, %v8961
    %v8985 = vpack.c.b16 %v8964, %v8963
    %v8986 = vpack.c.b16 %v8966, %v8965
    %v8987 = vpack.c.b16 %v8968, %v8967
    %v8988 = vpack.c.b16 %v8970, %v8969
    %v8989 = vpack.c.b16 %v8972, %v8971
    %v8990 = vpack.c.b16 %v8974, %v8973
    %9007 = vmatprep.subr.bf16.mxu0 0
    %9008 = vmatpush1.bf16.msra.mxu0 %v8982
    %9009 = vmatprep.subr.bf16.mxu0 0
    %9010 = vmatpush1.bf16.msra.mxu0 %v8981
    %9011 = vmatprep.subr.bf16.mxu0 0
    %9012 = vmatpush1.bf16.msra.mxu0 %v8980
    %9013 = vmatprep.subr.bf16.mxu0 0
    %9014 = vmatpush1.bf16.msra.mxu0 %v8979
    %9015 = vmatprep.subr.bf16.mxu0 0
    %9016 = vmatpush1.bf16.msra.mxu0 %v8978
    %9017 = vmatprep.subr.bf16.mxu0 0
    %9018 = vmatpush1.bf16.msra.mxu0 %v8977
    %9019 = vmatprep.subr.bf16.mxu0 0
    %9020 = vmatpush1.bf16.msra.mxu0 %v8976
    %9021 = vmatprep.subr.bf16.mxu0 0
    %9022 = vmatpush1.bf16.msra.mxu0 %v8975
    %9023 = vmatprep.subr.bf16.mxu0 0
    %9024 = vmatpush2.bf16.msra.mxu0 %v8990
    %9025 = vmatprep.subr.bf16.mxu0 0
    %9026 = vmatpush2.bf16.msra.mxu0 %v8989
    %9027 = vmatprep.subr.bf16.mxu0 0
    %9028 = vmatpush2.bf16.msra.mxu0 %v8988
    %9029 = vmatprep.subr.bf16.mxu0 0
    %9030 = vmatpush2.bf16.msra.mxu0 %v8987
    %9031 = vmatprep.subr.bf16.mxu0 0
    %9032 = vmatpush2.bf16.msra.mxu0 %v8986
    %9033 = vmatprep.subr.bf16.mxu0 0
    %9034 = vmatpush2.bf16.msra.mxu0 %v8985
    %9035 = vmatprep.subr.bf16.mxu0 0
    %9036 = vmatpush2.bf16.msra.mxu0 %v8984
    %9037 = vmatprep.subr.bf16.mxu0 0
    %9038 = vmatpush2.bf16.msra.mxu0 %v8983
    %9039 = vmatprep.mubr.bf16.mxu0 %v8908
    %9040 = vmatmul.mubr.bf16.gmra.mxu0 %v8901
    %v9041 = vpop.f32.mrf.mxu0
    %v9042 = vadd.f32 0.0, %v9041
    %v9043 = vpop.f32.mrf.mxu0
    %v9044 = vpop.f32.mrf.mxu0
    %v9045 = vpop.f32.mrf.mxu0
    %9046 = vdwg.mxu0
    %v9048 = vunpack.c.l.b16 %v8823
    %v9049 = vunpack.c.h.b16 %v8823
    %v9050 = vpack.c.b16 %v9048, %v9048
    %v9051 = vpack.c.b16 %v9049, %v9049
    %v9086 = vunpack.c.l.b16 %v8824
    %v9087 = vunpack.c.l.b16 %v8825
    %v9088 = vunpack.c.l.b16 %v8826
    %v9089 = vunpack.c.l.b16 %v8827
    %v9090 = vunpack.c.l.b16 %v8828
    %v9091 = vunpack.c.l.b16 %v8829
    %v9092 = vunpack.c.l.b16 %v8830
    %v9093 = vunpack.c.l.b16 %v8831
    %v9094 = vunpack.c.l.b16 %v8832
    %v9095 = vunpack.c.l.b16 %v8833
    %v9096 = vunpack.c.l.b16 %v8834
    %v9097 = vunpack.c.l.b16 %v8835
    %v9098 = vunpack.c.l.b16 %v8836
    %v9099 = vunpack.c.l.b16 %v8837
    %v9100 = vunpack.c.l.b16 %v8838
    %v9101 = vunpack.c.l.b16 %v8839
    %v9102 = vunpack.c.l.b16 %v8840
    %v9103 = vunpack.c.l.b16 %v8841
    %v9104 = vunpack.c.l.b16 %v8842
    %v9105 = vunpack.c.l.b16 %v8843
    %v9106 = vunpack.c.l.b16 %v8844
    %v9107 = vunpack.c.l.b16 %v8845
    %v9108 = vunpack.c.l.b16 %v8846
    %v9109 = vunpack.c.l.b16 %v8847
    %v9110 = vunpack.c.l.b16 %v8848
    %v9111 = vunpack.c.l.b16 %v8849
    %v9112 = vunpack.c.l.b16 %v8850
    %v9113 = vunpack.c.l.b16 %v8851
    %v9114 = vunpack.c.l.b16 %v8852
    %v9115 = vunpack.c.l.b16 %v8853
    %v9116 = vunpack.c.l.b16 %v8854
    %v9117 = vunpack.c.l.b16 %v8855
    %v9118 = vpack.c.b16 %v9087, %v9086
    %v9119 = vpack.c.b16 %v9089, %v9088
    %v9120 = vpack.c.b16 %v9091, %v9090
    %v9121 = vpack.c.b16 %v9093, %v9092
    %v9122 = vpack.c.b16 %v9095, %v9094
    %v9123 = vpack.c.b16 %v9097, %v9096
    %v9124 = vpack.c.b16 %v9099, %v9098
    %v9125 = vpack.c.b16 %v9101, %v9100
    %v9126 = vpack.c.b16 %v9103, %v9102
    %v9127 = vpack.c.b16 %v9105, %v9104
    %v9128 = vpack.c.b16 %v9107, %v9106
    %v9129 = vpack.c.b16 %v9109, %v9108
    %v9130 = vpack.c.b16 %v9111, %v9110
    %v9131 = vpack.c.b16 %v9113, %v9112
    %v9132 = vpack.c.b16 %v9115, %v9114
    %v9133 = vpack.c.b16 %v9117, %v9116
    %9150 = vmatprep.subr.bf16.mxu0 0
    %9151 = vmatpush1.bf16.msra.mxu0 %v9125
    %9152 = vmatprep.subr.bf16.mxu0 0
    %9153 = vmatpush1.bf16.msra.mxu0 %v9124
    %9154 = vmatprep.subr.bf16.mxu0 0
    %9155 = vmatpush1.bf16.msra.mxu0 %v9123
    %9156 = vmatprep.subr.bf16.mxu0 0
    %9157 = vmatpush1.bf16.msra.mxu0 %v9122
    %9158 = vmatprep.subr.bf16.mxu0 0
    %9159 = vmatpush1.bf16.msra.mxu0 %v9121
    %9160 = vmatprep.subr.bf16.mxu0 0
    %9161 = vmatpush1.bf16.msra.mxu0 %v9120
    %9162 = vmatprep.subr.bf16.mxu0 0
    %9163 = vmatpush1.bf16.msra.mxu0 %v9119
    %9164 = vmatprep.subr.bf16.mxu0 0
    %9165 = vmatpush1.bf16.msra.mxu0 %v9118
    %9166 = vmatprep.subr.bf16.mxu0 0
    %9167 = vmatpush2.bf16.msra.mxu0 %v9133
    %9168 = vmatprep.subr.bf16.mxu0 0
    %9169 = vmatpush2.bf16.msra.mxu0 %v9132
    %9170 = vmatprep.subr.bf16.mxu0 0
    %9171 = vmatpush2.bf16.msra.mxu0 %v9131
    %9172 = vmatprep.subr.bf16.mxu0 0
    %9173 = vmatpush2.bf16.msra.mxu0 %v9130
    %9174 = vmatprep.subr.bf16.mxu0 0
    %9175 = vmatpush2.bf16.msra.mxu0 %v9129
    %9176 = vmatprep.subr.bf16.mxu0 0
    %9177 = vmatpush2.bf16.msra.mxu0 %v9128
    %9178 = vmatprep.subr.bf16.mxu0 0
    %9179 = vmatpush2.bf16.msra.mxu0 %v9127
    %9180 = vmatprep.subr.bf16.mxu0 0
    %9181 = vmatpush2.bf16.msra.mxu0 %v9126
    %9182 = vmatprep.mubr.bf16.mxu0 %v9051
    %9183 = vmatmul.mubr.bf16.gmra.mxu0 %v9050
    %v9184 = vpop.f32.mrf.mxu0
    %v9185 = vadd.f32 %v9042, %v9184
    %v9186 = vpop.f32.mrf.mxu0
    %v9187 = vpop.f32.mrf.mxu0
    %v9188 = vpop.f32.mrf.mxu0
    %9189 = vdwg.mxu0
    %v9190 = vld [vmem:[#allocation9] sm:$0xee]
    %s9191 = scalar_lea.vmem [#allocation39], 256
    %v9192 = vld [vmem:[%s9191] sm:$0xf]
    %v9193 = vld [vmem:[%s9191 + $0x4] sm:$0xf]
    %v9194 = vld [vmem:[%s9191 + $0x8] sm:$0xf]
    %v9195 = vld [vmem:[%s9191 + $0xc] sm:$0xf]
    %v9196 = vld [vmem:[%s9191 + $0x10] sm:$0xf]
    %v9197 = vld [vmem:[%s9191 + $0x14] sm:$0xf]
    %v9198 = vld [vmem:[%s9191 + $0x18] sm:$0xf]
    %v9199 = vld [vmem:[%s9191 + $0x1c] sm:$0xf]
    %v9200 = vld [vmem:[%s9191 + $0x20] sm:$0xf]
    %v9201 = vld [vmem:[%s9191 + $0x24] sm:$0xf]
    %v9202 = vld [vmem:[%s9191 + $0x28] sm:$0xf]
    %v9203 = vld [vmem:[%s9191 + $0x2c] sm:$0xf]
    %v9204 = vld [vmem:[%s9191 + $0x30] sm:$0xf]
    %v9205 = vld [vmem:[%s9191 + $0x34] sm:$0xf]
    %v9206 = vld [vmem:[%s9191 + $0x38] sm:$0xf]
    %v9207 = vld [vmem:[%s9191 + $0x3c] sm:$0xf]
    %v9208 = vld [vmem:[%s9191 + $0x40] sm:$0xf]
    %v9209 = vld [vmem:[%s9191 + $0x44] sm:$0xf]
    %v9210 = vld [vmem:[%s9191 + $0x48] sm:$0xf]
    %v9211 = vld [vmem:[%s9191 + $0x4c] sm:$0xf]
    %v9212 = vld [vmem:[%s9191 + $0x50] sm:$0xf]
    %v9213 = vld [vmem:[%s9191 + $0x54] sm:$0xf]
    %v9214 = vld [vmem:[%s9191 + $0x58] sm:$0xf]
    %v9215 = vld [vmem:[%s9191 + $0x5c] sm:$0xf]
    %v9216 = vld [vmem:[%s9191 + $0x60] sm:$0xf]
    %v9217 = vld [vmem:[%s9191 + $0x64] sm:$0xf]
    %v9218 = vld [vmem:[%s9191 + $0x68] sm:$0xf]
    %v9219 = vld [vmem:[%s9191 + $0x6c] sm:$0xf]
    %v9220 = vld [vmem:[%s9191 + $0x70] sm:$0xf]
    %v9221 = vld [vmem:[%s9191 + $0x74] sm:$0xf]
    %v9222 = vld [vmem:[%s9191 + $0x78] sm:$0xf]
    %v9223 = vld [vmem:[%s9191 + $0x7c] sm:$0xf]
    %v9225 = vunpack.c.l.b16 %v9190
    %v9226 = vunpack.c.h.b16 %v9190
    %v9227 = vpack.c.b16 %v9225, %v9225
    %v9228 = vpack.c.b16 %v9226, %v9226
    %v9229 = vrot.slane %v9227, 1
    %v9230 = vrot.slane %v9228, 1
    %v9265 = vunpack.c.l.b16 %v9192
    %v9266 = vunpack.c.l.b16 %v9193
    %v9267 = vunpack.c.l.b16 %v9194
    %v9268 = vunpack.c.l.b16 %v9195
    %v9269 = vunpack.c.l.b16 %v9196
    %v9270 = vunpack.c.l.b16 %v9197
    %v9271 = vunpack.c.l.b16 %v9198
    %v9272 = vunpack.c.l.b16 %v9199
    %v9273 = vunpack.c.l.b16 %v9200
    %v9274 = vunpack.c.l.b16 %v9201
    %v9275 = vunpack.c.l.b16 %v9202
    %v9276 = vunpack.c.l.b16 %v9203
    %v9277 = vunpack.c.l.b16 %v9204
    %v9278 = vunpack.c.l.b16 %v9205
    %v9279 = vunpack.c.l.b16 %v9206
    %v9280 = vunpack.c.l.b16 %v9207
    %v9281 = vunpack.c.l.b16 %v9208
    %v9282 = vunpack.c.l.b16 %v9209
    %v9283 = vunpack.c.l.b16 %v9210
    %v9284 = vunpack.c.l.b16 %v9211
    %v9285 = vunpack.c.l.b16 %v9212
    %v9286 = vunpack.c.l.b16 %v9213
    %v9287 = vunpack.c.l.b16 %v9214
    %v9288 = vunpack.c.l.b16 %v9215
    %v9289 = vunpack.c.l.b16 %v9216
    %v9290 = vunpack.c.l.b16 %v9217
    %v9291 = vunpack.c.l.b16 %v9218
    %v9292 = vunpack.c.l.b16 %v9219
    %v9293 = vunpack.c.l.b16 %v9220
    %v9294 = vunpack.c.l.b16 %v9221
    %v9295 = vunpack.c.l.b16 %v9222
    %v9296 = vunpack.c.l.b16 %v9223
    %v9297 = vpack.c.b16 %v9266, %v9265
    %v9298 = vpack.c.b16 %v9268, %v9267
    %v9299 = vpack.c.b16 %v9270, %v9269
    %v9300 = vpack.c.b16 %v9272, %v9271
    %v9301 = vpack.c.b16 %v9274, %v9273
    %v9302 = vpack.c.b16 %v9276, %v9275
    %v9303 = vpack.c.b16 %v9278, %v9277
    %v9304 = vpack.c.b16 %v9280, %v9279
    %v9305 = vpack.c.b16 %v9282, %v9281
    %v9306 = vpack.c.b16 %v9284, %v9283
    %v9307 = vpack.c.b16 %v9286, %v9285
    %v9308 = vpack.c.b16 %v9288, %v9287
    %v9309 = vpack.c.b16 %v9290, %v9289
    %v9310 = vpack.c.b16 %v9292, %v9291
    %v9311 = vpack.c.b16 %v9294, %v9293
    %v9312 = vpack.c.b16 %v9296, %v9295
    %9329 = vmatprep.subr.bf16.mxu0 0
    %9330 = vmatpush1.bf16.msra.mxu0 %v9304
    %9331 = vmatprep.subr.bf16.mxu0 0
    %9332 = vmatpush1.bf16.msra.mxu0 %v9303
    %9333 = vmatprep.subr.bf16.mxu0 0
    %9334 = vmatpush1.bf16.msra.mxu0 %v9302
    %9335 = vmatprep.subr.bf16.mxu0 0
    %9336 = vmatpush1.bf16.msra.mxu0 %v9301
    %9337 = vmatprep.subr.bf16.mxu0 0
    %9338 = vmatpush1.bf16.msra.mxu0 %v9300
    %9339 = vmatprep.subr.bf16.mxu0 0
    %9340 = vmatpush1.bf16.msra.mxu0 %v9299
    %9341 = vmatprep.subr.bf16.mxu0 0
    %9342 = vmatpush1.bf16.msra.mxu0 %v9298
    %9343 = vmatprep.subr.bf16.mxu0 0
    %9344 = vmatpush1.bf16.msra.mxu0 %v9297
    %9345 = vmatprep.subr.bf16.mxu0 0
    %9346 = vmatpush2.bf16.msra.mxu0 %v9312
    %9347 = vmatprep.subr.bf16.mxu0 0
    %9348 = vmatpush2.bf16.msra.mxu0 %v9311
    %9349 = vmatprep.subr.bf16.mxu0 0
    %9350 = vmatpush2.bf16.msra.mxu0 %v9310
    %9351 = vmatprep.subr.bf16.mxu0 0
    %9352 = vmatpush2.bf16.msra.mxu0 %v9309
    %9353 = vmatprep.subr.bf16.mxu0 0
    %9354 = vmatpush2.bf16.msra.mxu0 %v9308
    %9355 = vmatprep.subr.bf16.mxu0 0
    %9356 = vmatpush2.bf16.msra.mxu0 %v9307
    %9357 = vmatprep.subr.bf16.mxu0 0
    %9358 = vmatpush2.bf16.msra.mxu0 %v9306
    %9359 = vmatprep.subr.bf16.mxu0 0
    %9360 = vmatpush2.bf16.msra.mxu0 %v9305
    %9361 = vmatprep.mubr.bf16.mxu0 %v9230
    %9362 = vmatmul.mubr.bf16.gmra.mxu0 %v9229
    %v9363 = vpop.f32.mrf.mxu0
    %v9364 = vadd.f32 0.0, %v9363
    %v9365 = vpop.f32.mrf.mxu0
    %v9366 = vpop.f32.mrf.mxu0
    %v9367 = vpop.f32.mrf.mxu0
    %9368 = vdwg.mxu0
    %v9369 = vadd.f32 %v9185, %v9364
    %v9370 = vld [vmem:[#allocation40] sm:$0x1]
    %v9372 = vlaneseq
    %v9373 = vshrl.u32 %v9372, 7
    %v9374 = vsub.s32 0, %v9373
    %v9375 = vrot.slane %v9370, %v9374
    %v9377 = vadd.f32 %v9369, %v9375
    %v9378 = vmax.f32 %v9377, 0.0
    %v9379 = vpack.c.bf16 %v9378, %v9378
    %v9380 = vld [vmem:[%s51] sm:$0xf]
    %v9381 = vld [vmem:[%s51 + $0x4] sm:$0xf]
    %v9382 = vld [vmem:[%s51 + $0x8] sm:$0xf]
    %v9383 = vld [vmem:[%s51 + $0xc] sm:$0xf]
    %v9384 = vld [vmem:[%s51 + $0x10] sm:$0xf]
    %v9385 = vld [vmem:[%s51 + $0x14] sm:$0xf]
    %v9386 = vld [vmem:[%s51 + $0x18] sm:$0xf]
    %v9387 = vld [vmem:[%s51 + $0x1c] sm:$0xf]
    %v9388 = vld [vmem:[%s51 + $0x20] sm:$0xf]
    %v9389 = vld [vmem:[%s51 + $0x24] sm:$0xf]
    %v9390 = vld [vmem:[%s51 + $0x28] sm:$0xf]
    %v9391 = vld [vmem:[%s51 + $0x2c] sm:$0xf]
    %v9392 = vld [vmem:[%s51 + $0x30] sm:$0xf]
    %v9393 = vld [vmem:[%s51 + $0x34] sm:$0xf]
    %v9394 = vld [vmem:[%s51 + $0x38] sm:$0xf]
    %v9395 = vld [vmem:[%s51 + $0x3c] sm:$0xf]
    %v9412 = vunpack.c.l.b16 %v9380
    %v9413 = vunpack.c.l.b16 %v9381
    %v9414 = vunpack.c.l.b16 %v9382
    %v9415 = vunpack.c.l.b16 %v9383
    %v9416 = vunpack.c.l.b16 %v9384
    %v9417 = vunpack.c.l.b16 %v9385
    %v9418 = vunpack.c.l.b16 %v9386
    %v9419 = vunpack.c.l.b16 %v9387
    %v9420 = vunpack.c.l.b16 %v9388
    %v9421 = vunpack.c.l.b16 %v9389
    %v9422 = vunpack.c.l.b16 %v9390
    %v9423 = vunpack.c.l.b16 %v9391
    %v9424 = vunpack.c.l.b16 %v9392
    %v9425 = vunpack.c.l.b16 %v9393
    %v9426 = vunpack.c.l.b16 %v9394
    %v9427 = vunpack.c.l.b16 %v9395
    %v9428 = vpack.c.b16 %v9413, %v9412
    %v9429 = vpack.c.b16 %v9415, %v9414
    %v9430 = vpack.c.b16 %v9417, %v9416
    %v9431 = vpack.c.b16 %v9419, %v9418
    %v9432 = vpack.c.b16 %v9421, %v9420
    %v9433 = vpack.c.b16 %v9423, %v9422
    %v9434 = vpack.c.b16 %v9425, %v9424
    %v9435 = vpack.c.b16 %v9427, %v9426
    %9444 = vmatprep.subr.bf16.mxu0 0
    %9445 = vmatpush1.bf16.msra.mxu0 %v9435
    %9446 = vmatprep.subr.bf16.mxu0 0
    %9447 = vmatpush1.bf16.msra.mxu0 %v9434
    %9448 = vmatprep.subr.bf16.mxu0 0
    %9449 = vmatpush1.bf16.msra.mxu0 %v9433
    %9450 = vmatprep.subr.bf16.mxu0 0
    %9451 = vmatpush1.bf16.msra.mxu0 %v9432
    %9452 = vmatprep.subr.bf16.mxu0 0
    %9453 = vmatpush1.bf16.msra.mxu0 %v9431
    %9454 = vmatprep.subr.bf16.mxu0 0
    %9455 = vmatpush1.bf16.msra.mxu0 %v9430
    %9456 = vmatprep.subr.bf16.mxu0 0
    %9457 = vmatpush1.bf16.msra.mxu0 %v9429
    %9458 = vmatprep.subr.bf16.mxu0 0
    %9459 = vmatpush1.bf16.msra.mxu0 %v9428
    %9460 = vmatprep.subr.bf16.mxu0 0
    %9461 = vmatpush2.bf16.msra.mxu0 0
    %9462 = vmatprep.subr.bf16.mxu0 0
    %9463 = vmatpush2.bf16.msra.mxu0 0
    %9464 = vmatprep.subr.bf16.mxu0 0
    %9465 = vmatpush2.bf16.msra.mxu0 0
    %9466 = vmatprep.subr.bf16.mxu0 0
    %9467 = vmatpush2.bf16.msra.mxu0 0
    %9468 = vmatprep.subr.bf16.mxu0 0
    %9469 = vmatpush2.bf16.msra.mxu0 0
    %9470 = vmatprep.subr.bf16.mxu0 0
    %9471 = vmatpush2.bf16.msra.mxu0 0
    %9472 = vmatprep.subr.bf16.mxu0 0
    %9473 = vmatpush2.bf16.msra.mxu0 0
    %9474 = vmatprep.subr.bf16.mxu0 0
    %9475 = vmatpush2.bf16.msra.mxu0 0
    %9476 = vmatprep.mubr.bf16.mxu0 0
    %9477 = vmatmul.mubr.bf16.gmra.mxu0 %v9379
    %v9478 = vpop.f32.mrf.mxu0
    %v9479 = vadd.f32 0.0, %v9478
    %v9480 = vpop.f32.mrf.mxu0
    %v9481 = vpop.f32.mrf.mxu0
    %v9482 = vpop.f32.mrf.mxu0
    %9483 = vdwg.mxu0
    %s9484 = scalar_lea.vmem %s51, 64
    %v9485 = vld [vmem:[%s9484] sm:$0xf]
    %v9486 = vld [vmem:[%s9484 + $0x4] sm:$0xf]
    %v9487 = vld [vmem:[%s9484 + $0x8] sm:$0xf]
    %v9488 = vld [vmem:[%s9484 + $0xc] sm:$0xf]
    %v9489 = vld [vmem:[%s9484 + $0x10] sm:$0xf]
    %v9490 = vld [vmem:[%s9484 + $0x14] sm:$0xf]
    %v9491 = vld [vmem:[%s9484 + $0x18] sm:$0xf]
    %v9492 = vld [vmem:[%s9484 + $0x1c] sm:$0xf]
    %v9493 = vld [vmem:[%s9484 + $0x20] sm:$0xf]
    %v9494 = vld [vmem:[%s9484 + $0x24] sm:$0xf]
    %v9495 = vld [vmem:[%s9484 + $0x28] sm:$0xf]
    %v9496 = vld [vmem:[%s9484 + $0x2c] sm:$0xf]
    %v9497 = vld [vmem:[%s9484 + $0x30] sm:$0xf]
    %v9498 = vld [vmem:[%s9484 + $0x34] sm:$0xf]
    %v9499 = vld [vmem:[%s9484 + $0x38] sm:$0xf]
    %v9500 = vld [vmem:[%s9484 + $0x3c] sm:$0xf]
    %v9517 = vunpack.c.l.b16 %v9485
    %v9518 = vunpack.c.l.b16 %v9486
    %v9519 = vunpack.c.l.b16 %v9487
    %v9520 = vunpack.c.l.b16 %v9488
    %v9521 = vunpack.c.l.b16 %v9489
    %v9522 = vunpack.c.l.b16 %v9490
    %v9523 = vunpack.c.l.b16 %v9491
    %v9524 = vunpack.c.l.b16 %v9492
    %v9525 = vunpack.c.l.b16 %v9493
    %v9526 = vunpack.c.l.b16 %v9494
    %v9527 = vunpack.c.l.b16 %v9495
    %v9528 = vunpack.c.l.b16 %v9496
    %v9529 = vunpack.c.l.b16 %v9497
    %v9530 = vunpack.c.l.b16 %v9498
    %v9531 = vunpack.c.l.b16 %v9499
    %v9532 = vunpack.c.l.b16 %v9500
    %v9533 = vpack.c.b16 %v9518, %v9517
    %v9534 = vpack.c.b16 %v9520, %v9519
    %v9535 = vpack.c.b16 %v9522, %v9521
    %v9536 = vpack.c.b16 %v9524, %v9523
    %v9537 = vpack.c.b16 %v9526, %v9525
    %v9538 = vpack.c.b16 %v9528, %v9527
    %v9539 = vpack.c.b16 %v9530, %v9529
    %v9540 = vpack.c.b16 %v9532, %v9531
    %9549 = vmatprep.subr.bf16.mxu0 0
    %9550 = vmatpush1.bf16.msra.mxu0 %v9540
    %9551 = vmatprep.subr.bf16.mxu0 0
    %9552 = vmatpush1.bf16.msra.mxu0 %v9539
    %9553 = vmatprep.subr.bf16.mxu0 0
    %9554 = vmatpush1.bf16.msra.mxu0 %v9538
    %9555 = vmatprep.subr.bf16.mxu0 0
    %9556 = vmatpush1.bf16.msra.mxu0 %v9537
    %9557 = vmatprep.subr.bf16.mxu0 0
    %9558 = vmatpush1.bf16.msra.mxu0 %v9536
    %9559 = vmatprep.subr.bf16.mxu0 0
    %9560 = vmatpush1.bf16.msra.mxu0 %v9535
    %9561 = vmatprep.subr.bf16.mxu0 0
    %9562 = vmatpush1.bf16.msra.mxu0 %v9534
    %9563 = vmatprep.subr.bf16.mxu0 0
    %9564 = vmatpush1.bf16.msra.mxu0 %v9533
    %9565 = vmatprep.subr.bf16.mxu0 0
    %9566 = vmatpush2.bf16.msra.mxu0 0
    %9567 = vmatprep.subr.bf16.mxu0 0
    %9568 = vmatpush2.bf16.msra.mxu0 0
    %9569 = vmatprep.subr.bf16.mxu0 0
    %9570 = vmatpush2.bf16.msra.mxu0 0
    %9571 = vmatprep.subr.bf16.mxu0 0
    %9572 = vmatpush2.bf16.msra.mxu0 0
    %9573 = vmatprep.subr.bf16.mxu0 0
    %9574 = vmatpush2.bf16.msra.mxu0 0
    %9575 = vmatprep.subr.bf16.mxu0 0
    %9576 = vmatpush2.bf16.msra.mxu0 0
    %9577 = vmatprep.subr.bf16.mxu0 0
    %9578 = vmatpush2.bf16.msra.mxu0 0
    %9579 = vmatprep.subr.bf16.mxu0 0
    %9580 = vmatpush2.bf16.msra.mxu0 0
    %9581 = vmatprep.mubr.bf16.mxu0 0
    %9582 = vmatmul.mubr.bf16.gmra.mxu0 %v9379
    %v9583 = vpop.f32.mrf.mxu0
    %v9584 = vadd.f32 0.0, %v9583
    %v9585 = vpop.f32.mrf.mxu0
    %v9586 = vpop.f32.mrf.mxu0
    %v9587 = vpop.f32.mrf.mxu0
    %9588 = vdwg.mxu0
    %v9589 = vmax.f32 %v9479, %v9584
    %v9590 = vpack.c.bf16 %v9589, %v9589
    %v9591 = vld [vmem:[#allocation42] sm:$0x1]
    %vm9592 = vcmask 48128
    %v9594 = vsel %vm9592, %v9591, 0
    %v9597 = vsel %vm865, %v9590, 0
    %9599 = vmatprep.subr.bf16.mxu0 0
    %9600 = vmatpush1.bf16.msra.mxu0 0
    %9601 = vmatprep.subr.bf16.mxu0 0
    %9602 = vmatpush1.bf16.msra.mxu0 0
    %9603 = vmatprep.subr.bf16.mxu0 0
    %9604 = vmatpush1.bf16.msra.mxu0 0
    %9605 = vmatprep.subr.bf16.mxu0 0
    %9606 = vmatpush1.bf16.msra.mxu0 0
    %9607 = vmatprep.subr.bf16.mxu0 0
    %9608 = vmatpush1.bf16.msra.mxu0 0
    %9609 = vmatprep.subr.bf16.mxu0 0
    %9610 = vmatpush1.bf16.msra.mxu0 0
    %9611 = vmatprep.subr.bf16.mxu0 0
    %9612 = vmatpush1.bf16.msra.mxu0 0
    %9613 = vmatprep.subr.bf16.mxu0 0
    %9614 = vmatpush1.bf16.msra.mxu0 %v9597
    %9615 = vmatprep.subr.bf16.mxu0 0
    %9616 = vmatpush2.bf16.msra.mxu0 0
    %9617 = vmatprep.subr.bf16.mxu0 0
    %9618 = vmatpush2.bf16.msra.mxu0 0
    %9619 = vmatprep.subr.bf16.mxu0 0
    %9620 = vmatpush2.bf16.msra.mxu0 0
    %9621 = vmatprep.subr.bf16.mxu0 0
    %9622 = vmatpush2.bf16.msra.mxu0 0
    %9623 = vmatprep.subr.bf16.mxu0 0
    %9624 = vmatpush2.bf16.msra.mxu0 0
    %9625 = vmatprep.subr.bf16.mxu0 0
    %9626 = vmatpush2.bf16.msra.mxu0 0
    %9627 = vmatprep.subr.bf16.mxu0 0
    %9628 = vmatpush2.bf16.msra.mxu0 0
    %9629 = vmatprep.subr.bf16.mxu0 0
    %9630 = vmatpush2.bf16.msra.mxu0 0
    %9631 = vmatprep.mubr.bf16.mxu0 0
    %9632 = vmatmul.mubr.bf16.gmra.mxu0 %v9594
    %v9633 = vpop.f32.mrf.mxu0
    %v9634 = vadd.f32 0.0, %v9633
    %v9635 = vpop.f32.mrf.mxu0
    %v9636 = vpop.f32.mrf.mxu0
    %v9637 = vpop.f32.mrf.mxu0
    %9638 = vdwg.mxu0
    %s9639 = scalar_lea.vmem [#allocation42], 1
    %v9640 = vld [vmem:[%s9639] sm:$0x1]
    %v9642 = vsel %vm9592, %v9640, 0
    %9644 = vmatprep.subr.bf16.mxu0 0
    %9645 = vmatpush1.bf16.msra.mxu0 0
    %9646 = vmatprep.subr.bf16.mxu0 0
    %9647 = vmatpush1.bf16.msra.mxu0 0
    %9648 = vmatprep.subr.bf16.mxu0 0
    %9649 = vmatpush1.bf16.msra.mxu0 0
    %9650 = vmatprep.subr.bf16.mxu0 0
    %9651 = vmatpush1.bf16.msra.mxu0 0
    %9652 = vmatprep.subr.bf16.mxu0 0
    %9653 = vmatpush1.bf16.msra.mxu0 0
    %9654 = vmatprep.subr.bf16.mxu0 0
    %9655 = vmatpush1.bf16.msra.mxu0 0
    %9656 = vmatprep.subr.bf16.mxu0 0
    %9657 = vmatpush1.bf16.msra.mxu0 0
    %9658 = vmatprep.subr.bf16.mxu0 0
    %9659 = vmatpush1.bf16.msra.mxu0 %v9597
    %9660 = vmatprep.subr.bf16.mxu0 0
    %9661 = vmatpush2.bf16.msra.mxu0 0
    %9662 = vmatprep.subr.bf16.mxu0 0
    %9663 = vmatpush2.bf16.msra.mxu0 0
    %9664 = vmatprep.subr.bf16.mxu0 0
    %9665 = vmatpush2.bf16.msra.mxu0 0
    %9666 = vmatprep.subr.bf16.mxu0 0
    %9667 = vmatpush2.bf16.msra.mxu0 0
    %9668 = vmatprep.subr.bf16.mxu0 0
    %9669 = vmatpush2.bf16.msra.mxu0 0
    %9670 = vmatprep.subr.bf16.mxu0 0
    %9671 = vmatpush2.bf16.msra.mxu0 0
    %9672 = vmatprep.subr.bf16.mxu0 0
    %9673 = vmatpush2.bf16.msra.mxu0 0
    %9674 = vmatprep.subr.bf16.mxu0 0
    %9675 = vmatpush2.bf16.msra.mxu0 0
    %9676 = vmatprep.mubr.bf16.mxu0 0
    %9677 = vmatmul.mubr.bf16.gmra.mxu0 %v9642
    %v9678 = vpop.f32.mrf.mxu0
    %v9679 = vadd.f32 0.0, %v9678
    %v9680 = vpop.f32.mrf.mxu0
    %v9681 = vpop.f32.mrf.mxu0
    %v9682 = vpop.f32.mrf.mxu0
    %9683 = vdwg.mxu0
    %v9684 = vmax.f32 %v9634, %v9679
    %v9685 = vpack.c.bf16 %v9684, %v9684
    %v9686 = vld [vmem:[#allocation43] sm:$0xff]
    %v9687 = vld [vmem:[#allocation43 + $0x8] sm:$0xff]
    %v9688 = vld [vmem:[#allocation43 + $0x10] sm:$0xff]
    %v9689 = vld [vmem:[#allocation43 + $0x18] sm:$0xff]
    %v9690 = vld [vmem:[#allocation43 + $0x20] sm:$0xff]
    %v9691 = vld [vmem:[#allocation43 + $0x28] sm:$0xff]
    %v9692 = vld [vmem:[#allocation43 + $0x30] sm:$0xff]
    %v9693 = vld [vmem:[#allocation43 + $0x38] sm:$0xff]
    %v9694 = vld [vmem:[#allocation45] sm:$0x3]
    %v9696 = vlaneseq
    %v9697 = vshrl.u32 %v9696, 7
    %v9698 = vsub.s32 0, %v9697
    %v9699 = vrot.slane %v9694, %v9698
    %v9700 = vlaneseq
    %v9701 = vshrl.u32 %v9700, 7
    %v9702 = vsub.s32 1, %v9701
    %v9703 = vrot.slane %v9694, %v9702
    %v9714 = vunpack.c.l.b16 %v9686
    %v9715 = vunpack.c.h.b16 %v9686
    %v9716 = vunpack.c.l.b16 %v9687
    %v9717 = vunpack.c.h.b16 %v9687
    %v9718 = vunpack.c.l.b16 %v9688
    %v9719 = vunpack.c.h.b16 %v9688
    %v9720 = vunpack.c.l.b16 %v9689
    %v9721 = vunpack.c.h.b16 %v9689
    %v9722 = vunpack.c.l.b16 %v9690
    %v9723 = vunpack.c.h.b16 %v9690
    %v9724 = vunpack.c.l.b16 %v9691
    %v9725 = vunpack.c.h.b16 %v9691
    %v9726 = vunpack.c.l.b16 %v9692
    %v9727 = vunpack.c.h.b16 %v9692
    %v9728 = vunpack.c.l.b16 %v9693
    %v9729 = vunpack.c.h.b16 %v9693
    %v9730 = vpack.c.b16 %v9716, %v9714
    %v9731 = vpack.c.b16 %v9717, %v9715
    %v9732 = vpack.c.b16 %v9720, %v9718
    %v9733 = vpack.c.b16 %v9721, %v9719
    %v9734 = vpack.c.b16 %v9724, %v9722
    %v9735 = vpack.c.b16 %v9725, %v9723
    %v9736 = vpack.c.b16 %v9728, %v9726
    %v9737 = vpack.c.b16 %v9729, %v9727
    %v9747 = vsel %vm4459, %v9685, 0
    %9749 = vmatprep.subr.bf16.mxu0 0
    %9750 = vmatpush1.bf16.msra.mxu0 0
    %9751 = vmatprep.subr.bf16.mxu0 0
    %9752 = vmatpush1.bf16.msra.mxu0 0
    %9753 = vmatprep.subr.bf16.mxu0 0
    %9754 = vmatpush1.bf16.msra.mxu0 0
    %9755 = vmatprep.subr.bf16.mxu0 0
    %9756 = vmatpush1.bf16.msra.mxu0 0
    %9757 = vmatprep.subr.bf16.mxu0 %v9737
    %9758 = vmatpush1.bf16.msra.mxu0 %v9736
    %9759 = vmatprep.subr.bf16.mxu0 %v9735
    %9760 = vmatpush1.bf16.msra.mxu0 %v9734
    %9761 = vmatprep.subr.bf16.mxu0 %v9733
    %9762 = vmatpush1.bf16.msra.mxu0 %v9732
    %9763 = vmatprep.subr.bf16.mxu0 %v9731
    %9764 = vmatpush1.bf16.msra.mxu0 %v9730
    %9765 = vmatprep.subr.bf16.mxu0 0
    %9766 = vmatpush2.bf16.msra.mxu0 0
    %9767 = vmatprep.subr.bf16.mxu0 0
    %9768 = vmatpush2.bf16.msra.mxu0 0
    %9769 = vmatprep.subr.bf16.mxu0 0
    %9770 = vmatpush2.bf16.msra.mxu0 0
    %9771 = vmatprep.subr.bf16.mxu0 0
    %9772 = vmatpush2.bf16.msra.mxu0 0
    %9773 = vmatprep.subr.bf16.mxu0 0
    %9774 = vmatpush2.bf16.msra.mxu0 0
    %9775 = vmatprep.subr.bf16.mxu0 0
    %9776 = vmatpush2.bf16.msra.mxu0 0
    %9777 = vmatprep.subr.bf16.mxu0 0
    %9778 = vmatpush2.bf16.msra.mxu0 0
    %9779 = vmatprep.subr.bf16.mxu0 0
    %9780 = vmatpush2.bf16.msra.mxu0 0
    %9781 = vmatprep.mubr.bf16.mxu0 0
    %9782 = vmatmul.mubr.bf16.gmra.mxu0 %v9747
    %v9783 = vpop.f32.mrf.mxu0
    %v9784 = vadd.f32 %v9699, %v9783
    %v9785 = vpop.f32.mrf.mxu0
    %v9786 = vadd.f32 %v9703, %v9785
    %v9787 = vpop.f32.mrf.mxu0
    %v9788 = vpop.f32.mrf.mxu0
    %9789 = vdwg.mxu0
    %v9790 = vmax.f32 %v9784, 0.0
    %v9791 = vmax.f32 %v9786, 0.0
    %v9792 = vpack.c.bf16 %v9790, %v9790
    %v9793 = vpack.c.bf16 %v9791, %v9791
    %v9794 = vld [vmem:[#allocation46] sm:$0xff]
    %v9795 = vld [vmem:[#allocation46 + $0x8] sm:$0xff]
    %v9796 = vld [vmem:[#allocation46 + $0x10] sm:$0xff]
    %v9797 = vld [vmem:[#allocation46 + $0x18] sm:$0xff]
    %v9798 = vld [vmem:[#allocation46 + $0x20] sm:$0xff]
    %v9799 = vld [vmem:[#allocation46 + $0x28] sm:$0xff]
    %v9800 = vld [vmem:[#allocation46 + $0x30] sm:$0xff]
    %v9801 = vld [vmem:[#allocation46 + $0x38] sm:$0xff]
    %v9802 = vld [vmem:[#allocation46 + $0x40] sm:$0xff]
    %v9803 = vld [vmem:[#allocation46 + $0x48] sm:$0xff]
    %v9804 = vld [vmem:[#allocation46 + $0x50] sm:$0xff]
    %v9805 = vld [vmem:[#allocation46 + $0x58] sm:$0xff]
    %v9806 = vld [vmem:[#allocation46 + $0x60] sm:$0xff]
    %v9807 = vld [vmem:[#allocation46 + $0x68] sm:$0xff]
    %v9808 = vld [vmem:[#allocation46 + $0x70] sm:$0xff]
    %v9809 = vld [vmem:[#allocation46 + $0x78] sm:$0xff]
    %v9810 = vld [vmem:[#allocation46 + $0x80] sm:$0xff]
    %v9811 = vld [vmem:[#allocation46 + $0x88] sm:$0xff]
    %v9812 = vld [vmem:[#allocation46 + $0x90] sm:$0xff]
    %v9813 = vld [vmem:[#allocation46 + $0x98] sm:$0xff]
    %v9814 = vld [vmem:[#allocation46 + $0xa0] sm:$0xff]
    %v9815 = vld [vmem:[#allocation46 + $0xa8] sm:$0xff]
    %v9816 = vld [vmem:[#allocation46 + $0xb0] sm:$0xff]
    %v9817 = vld [vmem:[#allocation46 + $0xb8] sm:$0xff]
    %v9818 = vld [vmem:[#allocation46 + $0xc0] sm:$0xff]
    %v9819 = vld [vmem:[#allocation46 + $0xc8] sm:$0xff]
    %v9820 = vld [vmem:[#allocation46 + $0xd0] sm:$0xff]
    %v9821 = vld [vmem:[#allocation46 + $0xd8] sm:$0xff]
    %v9822 = vld [vmem:[#allocation46 + $0xe0] sm:$0xff]
    %v9823 = vld [vmem:[#allocation46 + $0xe8] sm:$0xff]
    %v9824 = vld [vmem:[#allocation46 + $0xf0] sm:$0xff]
    %v9825 = vld [vmem:[#allocation46 + $0xf8] sm:$0xff]
    %v9826 = vld [vmem:[#allocation48] sm:$0x3]
    %v9828 = vlaneseq
    %v9829 = vshrl.u32 %v9828, 7
    %v9830 = vsub.s32 0, %v9829
    %v9831 = vrot.slane %v9826, %v9830
    %v9832 = vlaneseq
    %v9833 = vshrl.u32 %v9832, 7
    %v9834 = vsub.s32 1, %v9833
    %v9835 = vrot.slane %v9826, %v9834
    %v9870 = vunpack.c.l.b16 %v9794
    %v9871 = vunpack.c.h.b16 %v9794
    %v9872 = vunpack.c.l.b16 %v9795
    %v9873 = vunpack.c.h.b16 %v9795
    %v9874 = vunpack.c.l.b16 %v9796
    %v9875 = vunpack.c.h.b16 %v9796
    %v9876 = vunpack.c.l.b16 %v9797
    %v9877 = vunpack.c.h.b16 %v9797
    %v9878 = vunpack.c.l.b16 %v9798
    %v9879 = vunpack.c.h.b16 %v9798
    %v9880 = vunpack.c.l.b16 %v9799
    %v9881 = vunpack.c.h.b16 %v9799
    %v9882 = vunpack.c.l.b16 %v9800
    %v9883 = vunpack.c.h.b16 %v9800
    %v9884 = vunpack.c.l.b16 %v9801
    %v9885 = vunpack.c.h.b16 %v9801
    %v9886 = vunpack.c.l.b16 %v9802
    %v9887 = vunpack.c.h.b16 %v9802
    %v9888 = vunpack.c.l.b16 %v9803
    %v9889 = vunpack.c.h.b16 %v9803
    %v9890 = vunpack.c.l.b16 %v9804
    %v9891 = vunpack.c.h.b16 %v9804
    %v9892 = vunpack.c.l.b16 %v9805
    %v9893 = vunpack.c.h.b16 %v9805
    %v9894 = vunpack.c.l.b16 %v9806
    %v9895 = vunpack.c.h.b16 %v9806
    %v9896 = vunpack.c.l.b16 %v9807
    %v9897 = vunpack.c.h.b16 %v9807
    %v9898 = vunpack.c.l.b16 %v9808
    %v9899 = vunpack.c.h.b16 %v9808
    %v9900 = vunpack.c.l.b16 %v9809
    %v9901 = vunpack.c.h.b16 %v9809
    %v9902 = vunpack.c.l.b16 %v9810
    %v9903 = vunpack.c.h.b16 %v9810
    %v9904 = vunpack.c.l.b16 %v9811
    %v9905 = vunpack.c.h.b16 %v9811
    %v9906 = vunpack.c.l.b16 %v9812
    %v9907 = vunpack.c.h.b16 %v9812
    %v9908 = vunpack.c.l.b16 %v9813
    %v9909 = vunpack.c.h.b16 %v9813
    %v9910 = vunpack.c.l.b16 %v9814
    %v9911 = vunpack.c.h.b16 %v9814
    %v9912 = vunpack.c.l.b16 %v9815
    %v9913 = vunpack.c.h.b16 %v9815
    %v9914 = vunpack.c.l.b16 %v9816
    %v9915 = vunpack.c.h.b16 %v9816
    %v9916 = vunpack.c.l.b16 %v9817
    %v9917 = vunpack.c.h.b16 %v9817
    %v9918 = vunpack.c.l.b16 %v9818
    %v9919 = vunpack.c.h.b16 %v9818
    %v9920 = vunpack.c.l.b16 %v9819
    %v9921 = vunpack.c.h.b16 %v9819
    %v9922 = vunpack.c.l.b16 %v9820
    %v9923 = vunpack.c.h.b16 %v9820
    %v9924 = vunpack.c.l.b16 %v9821
    %v9925 = vunpack.c.h.b16 %v9821
    %v9926 = vunpack.c.l.b16 %v9822
    %v9927 = vunpack.c.h.b16 %v9822
    %v9928 = vunpack.c.l.b16 %v9823
    %v9929 = vunpack.c.h.b16 %v9823
    %v9930 = vunpack.c.l.b16 %v9824
    %v9931 = vunpack.c.h.b16 %v9824
    %v9932 = vunpack.c.l.b16 %v9825
    %v9933 = vunpack.c.h.b16 %v9825
    %v9934 = vpack.c.b16 %v9872, %v9870
    %v9935 = vpack.c.b16 %v9873, %v9871
    %v9936 = vpack.c.b16 %v9876, %v9874
    %v9937 = vpack.c.b16 %v9877, %v9875
    %v9938 = vpack.c.b16 %v9880, %v9878
    %v9939 = vpack.c.b16 %v9881, %v9879
    %v9940 = vpack.c.b16 %v9884, %v9882
    %v9941 = vpack.c.b16 %v9885, %v9883
    %v9942 = vpack.c.b16 %v9888, %v9886
    %v9943 = vpack.c.b16 %v9889, %v9887
    %v9944 = vpack.c.b16 %v9892, %v9890
    %v9945 = vpack.c.b16 %v9893, %v9891
    %v9946 = vpack.c.b16 %v9896, %v9894
    %v9947 = vpack.c.b16 %v9897, %v9895
    %v9948 = vpack.c.b16 %v9900, %v9898
    %v9949 = vpack.c.b16 %v9901, %v9899
    %v9950 = vpack.c.b16 %v9904, %v9902
    %v9951 = vpack.c.b16 %v9905, %v9903
    %v9952 = vpack.c.b16 %v9908, %v9906
    %v9953 = vpack.c.b16 %v9909, %v9907
    %v9954 = vpack.c.b16 %v9912, %v9910
    %v9955 = vpack.c.b16 %v9913, %v9911
    %v9956 = vpack.c.b16 %v9916, %v9914
    %v9957 = vpack.c.b16 %v9917, %v9915
    %v9958 = vpack.c.b16 %v9920, %v9918
    %v9959 = vpack.c.b16 %v9921, %v9919
    %v9960 = vpack.c.b16 %v9924, %v9922
    %v9961 = vpack.c.b16 %v9925, %v9923
    %v9962 = vpack.c.b16 %v9928, %v9926
    %v9963 = vpack.c.b16 %v9929, %v9927
    %v9964 = vpack.c.b16 %v9932, %v9930
    %v9965 = vpack.c.b16 %v9933, %v9931
    %9998 = vmatprep.subr.bf16.mxu0 %v9949
    %9999 = vmatpush1.bf16.msra.mxu0 %v9948
    %10000 = vmatprep.subr.bf16.mxu0 %v9947
    %10001 = vmatpush1.bf16.msra.mxu0 %v9946
    %10002 = vmatprep.subr.bf16.mxu0 %v9945
    %10003 = vmatpush1.bf16.msra.mxu0 %v9944
    %10004 = vmatprep.subr.bf16.mxu0 %v9943
    %10005 = vmatpush1.bf16.msra.mxu0 %v9942
    %10006 = vmatprep.subr.bf16.mxu0 %v9941
    %10007 = vmatpush1.bf16.msra.mxu0 %v9940
    %10008 = vmatprep.subr.bf16.mxu0 %v9939
    %10009 = vmatpush1.bf16.msra.mxu0 %v9938
    %10010 = vmatprep.subr.bf16.mxu0 %v9937
    %10011 = vmatpush1.bf16.msra.mxu0 %v9936
    %10012 = vmatprep.subr.bf16.mxu0 %v9935
    %10013 = vmatpush1.bf16.msra.mxu0 %v9934
    %10014 = vmatprep.subr.bf16.mxu0 %v9965
    %10015 = vmatpush2.bf16.msra.mxu0 %v9964
    %10016 = vmatprep.subr.bf16.mxu0 %v9963
    %10017 = vmatpush2.bf16.msra.mxu0 %v9962
    %10018 = vmatprep.subr.bf16.mxu0 %v9961
    %10019 = vmatpush2.bf16.msra.mxu0 %v9960
    %10020 = vmatprep.subr.bf16.mxu0 %v9959
    %10021 = vmatpush2.bf16.msra.mxu0 %v9958
    %10022 = vmatprep.subr.bf16.mxu0 %v9957
    %10023 = vmatpush2.bf16.msra.mxu0 %v9956
    %10024 = vmatprep.subr.bf16.mxu0 %v9955
    %10025 = vmatpush2.bf16.msra.mxu0 %v9954
    %10026 = vmatprep.subr.bf16.mxu0 %v9953
    %10027 = vmatpush2.bf16.msra.mxu0 %v9952
    %10028 = vmatprep.subr.bf16.mxu0 %v9951
    %10029 = vmatpush2.bf16.msra.mxu0 %v9950
    %10030 = vmatprep.mubr.bf16.mxu0 %v9793
    %10031 = vmatmul.mubr.bf16.gmra.mxu0 %v9792
    %v10032 = vpop.f32.mrf.mxu0
    %v10033 = vadd.f32 %v9831, %v10032
    %v10034 = vpop.f32.mrf.mxu0
    %v10035 = vadd.f32 %v9835, %v10034
    %v10036 = vpop.f32.mrf.mxu0
    %v10037 = vpop.f32.mrf.mxu0
    %10038 = vdwg.mxu0
    %v10039 = vmax.f32 %v10033, 0.0
    %v10040 = vmax.f32 %v10035, 0.0
    %v10041 = vpack.c.bf16 %v10039, %v10039
    %v10042 = vpack.c.bf16 %v10040, %v10040
    %v10043 = vld [vmem:[%s63] sm:$0xf]
    %v10044 = vld [vmem:[%s63 + $0x4] sm:$0xf]
    %v10045 = vld [vmem:[%s63 + $0x8] sm:$0xf]
    %v10046 = vld [vmem:[%s63 + $0xc] sm:$0xf]
    %v10047 = vld [vmem:[%s63 + $0x10] sm:$0xf]
    %v10048 = vld [vmem:[%s63 + $0x14] sm:$0xf]
    %v10049 = vld [vmem:[%s63 + $0x18] sm:$0xf]
    %v10050 = vld [vmem:[%s63 + $0x1c] sm:$0xf]
    %v10051 = vld [vmem:[%s63 + $0x20] sm:$0xf]
    %v10052 = vld [vmem:[%s63 + $0x24] sm:$0xf]
    %v10053 = vld [vmem:[%s63 + $0x28] sm:$0xf]
    %v10054 = vld [vmem:[%s63 + $0x2c] sm:$0xf]
    %v10055 = vld [vmem:[%s63 + $0x30] sm:$0xf]
    %v10056 = vld [vmem:[%s63 + $0x34] sm:$0xf]
    %v10057 = vld [vmem:[%s63 + $0x38] sm:$0xf]
    %v10058 = vld [vmem:[%s63 + $0x3c] sm:$0xf]
    %v10059 = vld [vmem:[%s63 + $0x40] sm:$0xf]
    %v10060 = vld [vmem:[%s63 + $0x44] sm:$0xf]
    %v10061 = vld [vmem:[%s63 + $0x48] sm:$0xf]
    %v10062 = vld [vmem:[%s63 + $0x4c] sm:$0xf]
    %v10063 = vld [vmem:[%s63 + $0x50] sm:$0xf]
    %v10064 = vld [vmem:[%s63 + $0x54] sm:$0xf]
    %v10065 = vld [vmem:[%s63 + $0x58] sm:$0xf]
    %v10066 = vld [vmem:[%s63 + $0x5c] sm:$0xf]
    %v10067 = vld [vmem:[%s63 + $0x60] sm:$0xf]
    %v10068 = vld [vmem:[%s63 + $0x64] sm:$0xf]
    %v10069 = vld [vmem:[%s63 + $0x68] sm:$0xf]
    %v10070 = vld [vmem:[%s63 + $0x6c] sm:$0xf]
    %v10071 = vld [vmem:[%s63 + $0x70] sm:$0xf]
    %v10072 = vld [vmem:[%s63 + $0x74] sm:$0xf]
    %v10073 = vld [vmem:[%s63 + $0x78] sm:$0xf]
    %v10074 = vld [vmem:[%s63 + $0x7c] sm:$0xf]
    %v10075 = vld [vmem:[#allocation49] sm:$0x1]
    %v10077 = vlaneseq
    %v10078 = vshrl.u32 %v10077, 7
    %v10079 = vsub.s32 0, %v10078
    %v10080 = vrot.slane %v10075, %v10079
    %v10114 = vunpack.c.l.b16 %v10043
    %v10115 = vunpack.c.l.b16 %v10044
    %v10116 = vunpack.c.l.b16 %v10045
    %v10117 = vunpack.c.l.b16 %v10046
    %v10118 = vunpack.c.l.b16 %v10047
    %v10119 = vunpack.c.l.b16 %v10048
    %v10120 = vunpack.c.l.b16 %v10049
    %v10121 = vunpack.c.l.b16 %v10050
    %v10122 = vunpack.c.l.b16 %v10051
    %v10123 = vunpack.c.l.b16 %v10052
    %v10124 = vunpack.c.l.b16 %v10053
    %v10125 = vunpack.c.l.b16 %v10054
    %v10126 = vunpack.c.l.b16 %v10055
    %v10127 = vunpack.c.l.b16 %v10056
    %v10128 = vunpack.c.l.b16 %v10057
    %v10129 = vunpack.c.l.b16 %v10058
    %v10130 = vunpack.c.l.b16 %v10059
    %v10131 = vunpack.c.l.b16 %v10060
    %v10132 = vunpack.c.l.b16 %v10061
    %v10133 = vunpack.c.l.b16 %v10062
    %v10134 = vunpack.c.l.b16 %v10063
    %v10135 = vunpack.c.l.b16 %v10064
    %v10136 = vunpack.c.l.b16 %v10065
    %v10137 = vunpack.c.l.b16 %v10066
    %v10138 = vunpack.c.l.b16 %v10067
    %v10139 = vunpack.c.l.b16 %v10068
    %v10140 = vunpack.c.l.b16 %v10069
    %v10141 = vunpack.c.l.b16 %v10070
    %v10142 = vunpack.c.l.b16 %v10071
    %v10143 = vunpack.c.l.b16 %v10072
    %v10144 = vunpack.c.l.b16 %v10073
    %v10145 = vunpack.c.l.b16 %v10074
    %v10146 = vpack.c.b16 %v10115, %v10114
    %v10147 = vpack.c.b16 %v10117, %v10116
    %v10148 = vpack.c.b16 %v10119, %v10118
    %v10149 = vpack.c.b16 %v10121, %v10120
    %v10150 = vpack.c.b16 %v10123, %v10122
    %v10151 = vpack.c.b16 %v10125, %v10124
    %v10152 = vpack.c.b16 %v10127, %v10126
    %v10153 = vpack.c.b16 %v10129, %v10128
    %v10154 = vpack.c.b16 %v10131, %v10130
    %v10155 = vpack.c.b16 %v10133, %v10132
    %v10156 = vpack.c.b16 %v10135, %v10134
    %v10157 = vpack.c.b16 %v10137, %v10136
    %v10158 = vpack.c.b16 %v10139, %v10138
    %v10159 = vpack.c.b16 %v10141, %v10140
    %v10160 = vpack.c.b16 %v10143, %v10142
    %v10161 = vpack.c.b16 %v10145, %v10144
    %10178 = vmatprep.subr.bf16.mxu0 0
    %10179 = vmatpush1.bf16.msra.mxu0 %v10153
    %10180 = vmatprep.subr.bf16.mxu0 0
    %10181 = vmatpush1.bf16.msra.mxu0 %v10152
    %10182 = vmatprep.subr.bf16.mxu0 0
    %10183 = vmatpush1.bf16.msra.mxu0 %v10151
    %10184 = vmatprep.subr.bf16.mxu0 0
    %10185 = vmatpush1.bf16.msra.mxu0 %v10150
    %10186 = vmatprep.subr.bf16.mxu0 0
    %10187 = vmatpush1.bf16.msra.mxu0 %v10149
    %10188 = vmatprep.subr.bf16.mxu0 0
    %10189 = vmatpush1.bf16.msra.mxu0 %v10148
    %10190 = vmatprep.subr.bf16.mxu0 0
    %10191 = vmatpush1.bf16.msra.mxu0 %v10147
    %10192 = vmatprep.subr.bf16.mxu0 0
    %10193 = vmatpush1.bf16.msra.mxu0 %v10146
    %10194 = vmatprep.subr.bf16.mxu0 0
    %10195 = vmatpush2.bf16.msra.mxu0 %v10161
    %10196 = vmatprep.subr.bf16.mxu0 0
    %10197 = vmatpush2.bf16.msra.mxu0 %v10160
    %10198 = vmatprep.subr.bf16.mxu0 0
    %10199 = vmatpush2.bf16.msra.mxu0 %v10159
    %10200 = vmatprep.subr.bf16.mxu0 0
    %10201 = vmatpush2.bf16.msra.mxu0 %v10158
    %10202 = vmatprep.subr.bf16.mxu0 0
    %10203 = vmatpush2.bf16.msra.mxu0 %v10157
    %10204 = vmatprep.subr.bf16.mxu0 0
    %10205 = vmatpush2.bf16.msra.mxu0 %v10156
    %10206 = vmatprep.subr.bf16.mxu0 0
    %10207 = vmatpush2.bf16.msra.mxu0 %v10155
    %10208 = vmatprep.subr.bf16.mxu0 0
    %10209 = vmatpush2.bf16.msra.mxu0 %v10154
    %10210 = vmatprep.mubr.bf16.mxu0 %v10042
    %10211 = vmatmul.mubr.bf16.gmra.mxu0 %v10041
    %v10212 = vpop.f32.mrf.mxu0
    %v10213 = vadd.f32 %v10080, %v10212
    %v10214 = vpop.f32.mrf.mxu0
    %v10215 = vpop.f32.mrf.mxu0
    %v10216 = vpop.f32.mrf.mxu0
    %10217 = vdwg.mxu0
    %vm10218 = vcmask 254976
    %v10219 = vsel %vm10218, %v10213, 0.0
    %v10220 = vrot.slane %v10219, 4
    %v10221 = vadd.f32 %v10219, %v10220
    %v10222 = vrot.slane %v10221, 2
    %v10223 = vadd.f32 %v10221, %v10222
    %v10224 = vrot.slane %v10223, 1
    %v10225 = vadd.f32 %v10223, %v10224
    %v10226 = vrcp.pop 2.0
    %v10227 = vmul.f32 %v10225, %v10226
    %v10228 = vsub.f32 %v10213, %v10227
    %v10229 = vmul.f32 %v10228, %v10228
    %v10230 = vsel %vm10218, %v10229, 0.0
    %v10231 = vrot.slane %v10230, 4
    %v10232 = vadd.f32 %v10230, %v10231
    %v10233 = vrot.slane %v10232, 2
    %v10234 = vadd.f32 %v10232, %v10233
    %v10235 = vrot.slane %v10234, 1
    %v10236 = vadd.f32 %v10234, %v10235
    %v10237 = vmul.f32 %v10236, %v10226
    %v10238 = vadd.f32 %v10237, 1e-05
    %v10239 = vrsqrt.pop %v10238
    %v10240 = vmul.f32 %v10228, %v10239
    %v10241 = vld [vmem:[#allocation51] sm:$0x1]
    %v10243 = vlaneseq
    %v10244 = vshrl.u32 %v10243, 7
    %v10245 = vsub.s32 0, %v10244
    %v10246 = vrot.slane %v10241, %v10245
    %v10248 = vmul.f32 %v10240, %v10246
    %v10249 = vld [vmem:[#allocation52] sm:$0x1]
    %v10251 = vlaneseq
    %v10252 = vshrl.u32 %v10251, 7
    %v10253 = vsub.s32 0, %v10252
    %v10254 = vrot.slane %v10249, %v10253
    %v10256 = vadd.f32 %v10248, %v10254
    %10257 = vst.msk [vmem:[#allocation54] sm:$0x3] %vm10218, %v10256
    // Predicated region
    $region254: #{image_encoder_cnn_forward.1} parent=1 // pred_check
      _
    $region255: #{image_encoder_cnn_forward.1} parent=1 // pred_check_branch
      %10259 = sbr.rel (0) target = $region257
    $region256: #{image_encoder_cnn_forward.1} parent=1 // pred_region
      %s10261 = ssub.s32 32, 32
      %10262 = vsyncadd [#allocation12], %s10261
      %s10264 = sshll.u32 [#allocation54], 4
      %s10265 = int_to_ptr.vmem [resolvable:$true] %s10264
      %10267 = dma.vmem_to_hbm [thread:$0]  %s10265, 32, %s71, [#allocation12]
    $region257: #{image_encoder_cnn_forward.1} parent=1 // pred_fallthru
      _
    // Predicated region
    $region258: #{image_encoder_cnn_forward.1} parent=1 // pred_check
      _
    $region259: #{image_encoder_cnn_forward.1} parent=1 // pred_check_branch
      %10269 = sbr.rel (0) target = $region261
    $region260: #{image_encoder_cnn_forward.1} parent=1 // pred_region
      %10270 = dma.done [#allocation12], 32
    $region261: #{image_encoder_cnn_forward.1} parent=1 // pred_fallthru
      _
    %10271 = vsyncpa [#allocation11], 1
    %10272 = vsyncpa [#allocation14], 1
    %10273 = vsyncpa [#allocation17], 1
    %10274 = vsyncpa [#allocation20], 1
    %10275 = vsyncpa [#allocation23], 1
    %10276 = vsyncpa [#allocation26], 1
    %10277 = vsyncpa [#allocation29], 1
    %10278 = vsyncpa [#allocation32], 1
    %10279 = vsyncpa [#allocation35], 1
    %10280 = vsyncpa [#allocation38], 1
    %10281 = vsyncpa [#allocation41], 1
    %10282 = vsyncpa [#allocation44], 1
    %10283 = vsyncpa [#allocation47], 1
    %10284 = vsyncpa [#allocation50], 1
    %10285 = vsyncpa [#allocation53], 1
    %10286 = vsyncpa [#allocation12], 1

</llo_original>
